<compile_context>
chip_gen: v7x
topology: tpu7x:2x2x1
jax: 0.10.0
libtpu: 0.0.40
codegen_flags: <defaults>
</compile_context>

<pallas_src>
import math

import jax
import jax.numpy as jnp
from jax import lax
from jax.experimental import pallas as pl
from jax.experimental.pallas import tpu as pltpu

# ---------------- configuration (small, deterministic, synthetic) -------------
B = 2                     # batch
IMG_C, IMG_HW, PATCH = 3, 16, 8
N_PATCH = (IMG_HW // PATCH) ** 2          # 4 patches
VIS_LEN = N_PATCH + 1                     # + CLS token = 5
PATCH_DIM = IMG_C * PATCH * PATCH         # 192
VISION_WIDTH = 48                         # config['vision_width']
VISION_LAYERS = 2                         # CLIP visual transformer depth
VISION_HEADS = 4
HIDDEN = 32                               # BERT hidden_size (!= vision_width -> large=True)
TEXT_HEADS = 4
DECODE_LAYERS = 2                         # text_decode_layers
FFN_MULT = 4
VOCAB = 64
SEQ = 8                                   # answer sequence length
PAD_ID = 0                                # tokenizer.pad_token_id
NEG_INF = -1e9

VIS_DH = VISION_WIDTH // VISION_HEADS     # 12
VIS_DH_PAD = 16                           # lane-aligned padded head dim (zero-padded, exact)
VIS_SEG = VISION_HEADS * VIS_DH_PAD       # 64
TXT_DH = HIDDEN // TEXT_HEADS             # 8 (already aligned, no padding)
TXT_SEG = TEXT_HEADS * TXT_DH             # 32
SLAB_LANES = 192                          # widest packed row (vision qkv / fc1 / patch cols)

_VMEM = pl.BlockSpec(memory_space=pltpu.MemorySpace.VMEM)


def _round_up(x, m):
    return ((x + m - 1) // m) * m


# ---------------- static slab layouts (weights: bf16; rows/biases: f32) --------

def _weight_entries():
    ent = [('patch_w', PATCH_DIM, VISION_WIDTH)]
    for l in range(VISION_LAYERS):
        ent += [(f'v{l}a_qkv', VISION_WIDTH, 3 * VIS_SEG),
                (f'v{l}a_o', VIS_SEG, VISION_WIDTH),
                (f'v{l}_fc1', VISION_WIDTH, FFN_MULT * VISION_WIDTH),
                (f'v{l}_fc2', FFN_MULT * VISION_WIDTH, VISION_WIDTH)]
    ent += [('visn_fc', VISION_WIDTH, HIDDEN), ('word_emb', VOCAB, HIDDEN)]
    for l in range(DECODE_LAYERS):
        ent += [(f'd{l}s_qkv', HIDDEN, 3 * TXT_SEG),
                (f'd{l}s_o', TXT_SEG, HIDDEN),
                (f'd{l}c_q', HIDDEN, TXT_SEG),
                (f'd{l}c_kv', HIDDEN, 2 * TXT_SEG),
                (f'd{l}c_o', TXT_SEG, HIDDEN),
                (f'd{l}_inter', HIDDEN, FFN_MULT * HIDDEN),
                (f'd{l}_out', FFN_MULT * HIDDEN, HIDDEN)]
    ent += [('lm_transform', HIDDEN, HIDDEN), ('lm_decoder', HIDDEN, VOCAB)]
    return ent


def _row_entries():
    ent = [('cls_pos', B * VIS_LEN, VISION_WIDTH), ('ln_pre', 2, VISION_WIDTH)]
    for l in range(VISION_LAYERS):
        ent += [(f'v{l}_ln1', 2, VISION_WIDTH),
                (f'v{l}a_qkv_b', 1, 3 * VIS_SEG),
                (f'v{l}a_o_b', 1, VISION_WIDTH),
                (f'v{l}_ln2', 2, VISION_WIDTH),
                (f'v{l}_fc1_b', 1, FFN_MULT * VISION_WIDTH),
                (f'v{l}_fc2_b', 1, VISION_WIDTH)]
    ent += [('visn_fc_b', 1, HIDDEN), ('visn_ln', 2, HIDDEN),
            ('txt_pos', B * SEQ, HIDDEN), ('emb_ln', 2, HIDDEN)]
    for l in range(DECODE_LAYERS):
        ent += [(f'd{l}s_qkv_b', 1, 3 * TXT_SEG),
                (f'd{l}s_o_b', 1, HIDDEN),
                (f'd{l}_sln', 2, HIDDEN),
                (f'd{l}c_q_b', 1, TXT_SEG),
                (f'd{l}c_kv_b', 1, 2 * TXT_SEG),
                (f'd{l}c_o_b', 1, HIDDEN),
                (f'd{l}_cln', 2, HIDDEN),
                (f'd{l}_inter_b', 1, FFN_MULT * HIDDEN),
                (f'd{l}_out_b', 1, HIDDEN),
                (f'd{l}_fln', 2, HIDDEN)]
    ent += [('lm_transform_b', 1, HIDDEN), ('lm_ln', 2, HIDDEN), ('lm_decoder_b', 1, VOCAB)]
    return ent


def _build_index(entries, align):
    idx, off = {}, 0
    for name, r, c in entries:
        assert c <= SLAB_LANES
        idx[name] = (off, r, c)
        off += _round_up(r, align)
    return idx, off


W_INDEX, W_ROWS = _build_index(_weight_entries(), 16)   # bf16 slab: 16-row (sublane-pair tile) aligned
B_INDEX, B_ROWS = _build_index(_row_entries(), 8)        # f32 slab: 8-row (sublane tile) aligned


# ---------------- in-kernel value helpers --------------------------------------

def _mm(a, b, trans_b=False):
    """MXU matmul: bf16 operands, f32 accumulation (weights are pre-cast bf16)."""
    a = a.astype(jnp.bfloat16)
    if b.dtype != jnp.bfloat16:
        b = b.astype(jnp.bfloat16)
    dims = (((1,), (1,)), ((), ())) if trans_b else (((1,), (0,)), ((), ()))
    return lax.dot_general(a, b, dims, preferred_element_type=jnp.float32)


def _softmax(s):
    m = jnp.max(s, axis=-1, keepdims=True)
    p = jnp.exp(s - m)
    return p / jnp.sum(p, axis=-1, keepdims=True)        # exact normalization


def _same_batch_mask(lq, blk_q, lk, blk_k):
    """Block-diagonal same-batch mask built from iota compares (no vector int-div)."""
    qi = lax.broadcasted_iota(jnp.int32, (lq, lk), 0)
    ki = lax.broadcasted_iota(jnp.int32, (lq, lk), 1)
    same = None
    for b in range(B):
        t = ((qi >= b * blk_q) & (qi < (b + 1) * blk_q) &
             (ki >= b * blk_k) & (ki < (b + 1) * blk_k))
        same = t if same is None else jnp.logical_or(same, t)
    return qi, ki, same


# ---------------- the single fused forward kernel ------------------------------

def _mplug_kernel(vis_ref, tok_ref, mask_ref, wslab_ref, bslab_ref, out_ref):
    LV = B * VIS_LEN
    LT = B * SEQ
    f32 = jnp.float32

    def W(name):                                  # static slice into the bf16 weight slab
        r, nr, nc = W_INDEX[name]
        return wslab_ref[r:r + nr, :nc]

    def V(name):                                  # static slice into the f32 bias/row slab
        r, nr, nc = B_INDEX[name]
        return bslab_ref[r:r + nr, :nc]

    def layernorm(x, name, eps):
        gb = V(name)                              # row 0 = gamma, row 1 = beta
        mu = jnp.mean(x, axis=-1, keepdims=True)
        var = jnp.mean(jnp.square(x - mu), axis=-1, keepdims=True)
        return (x - mu) * lax.rsqrt(var + eps) * gb[0:1, :] + gb[1:2, :]

    def dense(x, base, act=None):
        y = _mm(x, W(base)) + V(base + '_b')
        if act == 'quick_gelu':                   # CLIP QuickGELU
            y = y * jax.nn.sigmoid(1.702 * y)
        elif act == 'gelu':
            # TODO(synk): torch BERT uses exact erf-GELU; tanh approximation kept for lowering safety.
            y = jax.nn.gelu(y, approximate=True)
        return y

    def mha(q_all, k_all, v_all, n_heads, dh, dh_pad, bias, o_base):
        scale = 1.0 / math.sqrt(dh)
        parts = []
        for h in range(n_heads):                  # static per-head loop, lane-aligned slices
            sl = slice(h * dh_pad, (h + 1) * dh_pad)
            s = _mm(q_all[:, sl], k_all[:, sl], trans_b=True) * scale + bias
            parts.append(_mm(_softmax(s), v_all[:, sl]))
        ctx = jnp.concatenate(parts, axis=-1)     # (L, H*dh_pad): single merged output proj
        return _mm(ctx, W(o_base)) + V(o_base + '_b')

    def self_attn(x, base, n_heads, dh, dh_pad, bias):
        seg = n_heads * dh_pad
        qkv = _mm(x, W(base + '_qkv')) + V(base + '_qkv_b')          # one fused QKV matmul
        return mha(qkv[:, :seg], qkv[:, seg:2 * seg], qkv[:, 2 * seg:3 * seg],
                   n_heads, dh, dh_pad, bias, base + '_o')

    def cross_attn(x, enc, base, n_heads, dh, dh_pad, bias):
        seg = n_heads * dh_pad
        q = _mm(x, W(base + '_q')) + V(base + '_q_b')
        kv = _mm(enc, W(base + '_kv')) + V(base + '_kv_b')           # fused K/V matmul
        return mha(q, kv[:, :seg], kv[:, seg:2 * seg],
                   n_heads, dh, dh_pad, bias, base + '_o')

    # ---- block-diagonal attention biases (built once, shared across layers/heads) ----
    _, _, vsame = _same_batch_mask(LV, VIS_LEN, LV, VIS_LEN)
    vis_bias = jnp.where(vsame, 0.0, NEG_INF)                        # keep batches independent

    tq, tk, tsame = _same_batch_mask(LT, SEQ, LT, SEQ)
    key_ok = mask_ref[...] > 0.5                                     # (1, B*SEQ) key padding
    self_bias = jnp.where(tsame & (tk <= tq) & key_ok, 0.0, NEG_INF)

    _, _, csame = _same_batch_mask(LT, SEQ, LV, VIS_LEN)
    cross_bias = jnp.where(csame, 0.0, NEG_INF)                      # image_atts is all-ones

    # ---- CLIP visual encoder (skip_last_layer=True), both batches stacked ----
    x = _mm(vis_ref[...], W('patch_w')) + V('cls_pos')               # conv-as-matmul + CLS/pos
    x = layernorm(x, 'ln_pre', 1e-5)
    for l in range(VISION_LAYERS):                                   # pre-LN residual blocks
        h = layernorm(x, f'v{l}_ln1', 1e-5)
        x = x + self_attn(h, f'v{l}a', VISION_HEADS, VIS_DH, VIS_DH_PAD, vis_bias)
        h = layernorm(x, f'v{l}_ln2', 1e-5)
        x = x + dense(dense(h, f'v{l}_fc1', act='quick_gelu'), f'v{l}_fc2')
    # skip_last_layer=True: no ln_post / visual projection.
    # large=True branch: visn_fc -> LayerNorm -> dropout(identity)
    enc = layernorm(dense(x, 'visn_fc'), 'visn_ln', 1e-12)           # (B*VIS_LEN, HIDDEN)

    # ---- BertPrefixModel text decoder, both batches stacked ----
    ids = tok_ref[:, 0:1]                                            # current token ids
    nxt = tok_ref[:, 1:2]                                            # shifted (label) ids
    viota = lax.broadcasted_iota(jnp.int32, (LT, VOCAB), 1)
    onehot = (viota == ids).astype(f32)
    x = _mm(onehot, W('word_emb')) + V('txt_pos')                    # word + pos + token-type-0
    x = layernorm(x, 'emb_ln', 1e-12)
    for l in range(DECODE_LAYERS):                                   # post-LN blocks w/ cross-attn
        h = self_attn(x, f'd{l}s', TEXT_HEADS, TXT_DH, TXT_DH, self_bias)
        x = layernorm(x + h, f'd{l}_sln', 1e-12)
        h = cross_attn(x, enc, f'd{l}c', TEXT_HEADS, TXT_DH, TXT_DH, cross_bias)
        x = layernorm(x + h, f'd{l}_cln', 1e-12)
        h = dense(dense(x, f'd{l}_inter', act='gelu'), f'd{l}_out')
        x = layernorm(x + h, f'd{l}_fln', 1e-12)

    # ---- LM head + fused shifted causal-LM loss (logits never leave VMEM) ----
    h = layernorm(dense(x, 'lm_transform', act='gelu'), 'lm_ln', 1e-12)
    logits = _mm(h, W('lm_decoder')) + V('lm_decoder_b')             # (B*SEQ, VOCAB)

    m = jnp.max(logits, axis=-1, keepdims=True)
    z = logits - m
    logp = z - jnp.log(jnp.sum(jnp.exp(z), axis=-1, keepdims=True))  # exact log-softmax
    label_oh = (viota == nxt).astype(f32)
    nll = -jnp.sum(label_oh * logp, axis=-1, keepdims=True)          # (B*SEQ, 1)

    # valid = not the last position of its batch block AND next token is not PAD (ignore_index)
    row1 = lax.broadcasted_iota(jnp.int32, (LT, 1), 0)
    is_last = None
    for b in range(B):
        t = row1 == ((b + 1) * SEQ - 1)
        is_last = t if is_last is None else jnp.logical_or(is_last, t)
    valid = jnp.logical_and(jnp.logical_not(is_last), nxt != PAD_ID)

    # per-sample sum over non-ignored shifted tokens -> (1, B)
    rows2 = lax.broadcasted_iota(jnp.int32, (LT, B), 0)
    cols2 = lax.broadcasted_iota(jnp.int32, (LT, B), 1)
    bsel = None
    for b in range(B):
        t = (rows2 >= b * SEQ) & (rows2 < (b + 1) * SEQ) & (cols2 == b)
        bsel = t if bsel is None else jnp.logical_or(bsel, t)

    out_ref[...] = jnp.sum(jnp.where(valid, nll, 0.0) * bsel.astype(f32),
                           axis=0, keepdims=True)


# ---------------- deterministic parameter construction + slab packing ----------

def _padded_qkv(key, d, n_heads, dh_pad):
    """Fused QKV weight in padded-head layout: [Q_heads | K_heads | V_heads],
    each head occupying dh_pad lanes (zero columns beyond the real dh)."""
    dh = d // n_heads
    segs = []
    for kk in jax.random.split(key, 3):
        w = 0.02 * jax.random.normal(kk, (d, n_heads, dh), jnp.float32)
        w = jnp.pad(w, ((0, 0), (0, 0), (0, dh_pad - dh)))
        segs.append(w.reshape(d, n_heads * dh_pad))
    w = jnp.concatenate(segs, axis=1)
    b = jnp.zeros((1, 3 * n_heads * dh_pad), jnp.float32)
    return w, b


def _padded_o(key, d, n_heads, dh_pad):
    """Output projection with zero rows for the padded head dims (exact)."""
    dh = d // n_heads
    w = 0.02 * jax.random.normal(key, (n_heads, dh, d), jnp.float32)
    w = jnp.pad(w, ((0, 0), (0, dh_pad - dh), (0, 0))).reshape(n_heads * dh_pad, d)
    b = jnp.zeros((1, d), jnp.float32)
    return w, b


def _pack_slab(index, total_rows, arrays, dtype):
    assert set(arrays.keys()) == set(index.keys())
    slab = jnp.zeros((total_rows, SLAB_LANES), dtype)
    for name, arr in arrays.items():
        r, nr, nc = index[name]
        assert arr.shape == (nr, nc), (name, arr.shape, (nr, nc))
        slab = slab.at[r:r + nr, :nc].set(arr.astype(dtype))
    return slab


def init_params(key):
    keys = iter(jax.random.split(key, 64))

    def rnd(*shape):
        return 0.02 * jax.random.normal(next(keys), shape, jnp.float32)

    def zeros(*shape):
        return jnp.zeros(shape, jnp.float32)

    def ln_rows(d):
        return jnp.concatenate([jnp.ones((1, d), jnp.float32),
                                jnp.zeros((1, d), jnp.float32)], axis=0)

    w, v = {}, {}
    # CLIP-style visual encoder (conv1 has bias=False -> no patch bias)
    w['patch_w'] = rnd(PATCH_DIM, VISION_WIDTH)
    cls = rnd(1, VISION_WIDTH)
    pos = rnd(VIS_LEN, VISION_WIDTH)
    v['cls_pos'] = jnp.tile(pos.at[0:1, :].add(cls), (B, 1))   # CLS folded into row 0, pre-tiled per batch
    v['ln_pre'] = ln_rows(VISION_WIDTH)
    for l in range(VISION_LAYERS):
        v[f'v{l}_ln1'] = ln_rows(VISION_WIDTH)
        w[f'v{l}a_qkv'], v[f'v{l}a_qkv_b'] = _padded_qkv(next(keys), VISION_WIDTH, VISION_HEADS, VIS_DH_PAD)
        w[f'v{l}a_o'], v[f'v{l}a_o_b'] = _padded_o(next(keys), VISION_WIDTH, VISION_HEADS, VIS_DH_PAD)
        v[f'v{l}_ln2'] = ln_rows(VISION_WIDTH)
        w[f'v{l}_fc1'] = rnd(VISION_WIDTH, FFN_MULT * VISION_WIDTH)
        v[f'v{l}_fc1_b'] = zeros(1, FFN_MULT * VISION_WIDTH)
        w[f'v{l}_fc2'] = rnd(FFN_MULT * VISION_WIDTH, VISION_WIDTH)
        v[f'v{l}_fc2_b'] = zeros(1, VISION_WIDTH)
    # large=True branch (hidden_size != vision_width): visn_fc + LayerNorm (+ dropout identity)
    w['visn_fc'] = rnd(VISION_WIDTH, HIDDEN)
    v['visn_fc_b'] = zeros(1, HIDDEN)
    v['visn_ln'] = ln_rows(HIDDEN)
    # BertPrefixModel embeddings
    w['word_emb'] = rnd(VOCAB, HIDDEN)
    pos_emb = rnd(SEQ, HIDDEN)
    tok_emb = rnd(2, HIDDEN)
    v['txt_pos'] = jnp.tile(pos_emb + tok_emb[0:1, :], (B, 1))  # pos + token-type-0, pre-tiled per batch
    v['emb_ln'] = ln_rows(HIDDEN)
    for l in range(DECODE_LAYERS):
        w[f'd{l}s_qkv'], v[f'd{l}s_qkv_b'] = _padded_qkv(next(keys), HIDDEN, TEXT_HEADS, TXT_DH)
        w[f'd{l}s_o'], v[f'd{l}s_o_b'] = _padded_o(next(keys), HIDDEN, TEXT_HEADS, TXT_DH)
        v[f'd{l}_sln'] = ln_rows(HIDDEN)
        w[f'd{l}c_q'] = rnd(HIDDEN, TXT_SEG)
        v[f'd{l}c_q_b'] = zeros(1, TXT_SEG)
        w[f'd{l}c_kv'] = rnd(HIDDEN, 2 * TXT_SEG)
        v[f'd{l}c_kv_b'] = zeros(1, 2 * TXT_SEG)
        w[f'd{l}c_o'] = rnd(TXT_SEG, HIDDEN)
        v[f'd{l}c_o_b'] = zeros(1, HIDDEN)
        v[f'd{l}_cln'] = ln_rows(HIDDEN)
        w[f'd{l}_inter'] = rnd(HIDDEN, FFN_MULT * HIDDEN)
        v[f'd{l}_inter_b'] = zeros(1, FFN_MULT * HIDDEN)
        w[f'd{l}_out'] = rnd(FFN_MULT * HIDDEN, HIDDEN)
        v[f'd{l}_out_b'] = zeros(1, HIDDEN)
        v[f'd{l}_fln'] = ln_rows(HIDDEN)
    # LM head
    w['lm_transform'] = rnd(HIDDEN, HIDDEN)
    v['lm_transform_b'] = zeros(1, HIDDEN)
    v['lm_ln'] = ln_rows(HIDDEN)
    w['lm_decoder'] = rnd(HIDDEN, VOCAB)
    v['lm_decoder_b'] = zeros(1, VOCAB)

    return {'wslab': _pack_slab(W_INDEX, W_ROWS, w, jnp.bfloat16),   # pre-cast bf16 weight slab
            'bslab': _pack_slab(B_INDEX, B_ROWS, v, jnp.float32)}    # f32 bias/LN/pos slab


# ---------------- wrapper: layout plumbing + the single pallas_call ------------

def mplug_forward(p, image, answer_ids, answer_mask):
    """MPLUG.forward(image, answer, train=True) -> per-sample loss (B,)."""
    Bn = image.shape[0]
    assert Bn == B, "batch size is baked into the packed positional rows"

    # Patch-conv (stride = kernel = PATCH, bias=False) == unfold + matmul.  Row 0 of each
    # batch block is zeros for the CLS slot (zeros @ W == 0; CLS emb folded into cls_pos).
    x = image.reshape(Bn, IMG_C, IMG_HW // PATCH, PATCH, IMG_HW // PATCH, PATCH)
    x = x.transpose(0, 2, 4, 1, 3, 5).reshape(Bn, N_PATCH, PATCH_DIM)
    vis_in = jnp.concatenate([jnp.zeros((Bn, 1, PATCH_DIM), jnp.float32),
                              x.astype(jnp.float32)], axis=1).reshape(Bn * VIS_LEN, PATCH_DIM)

    ids = answer_ids.astype(jnp.int32)                                   # (B, SEQ)
    nxt = jnp.concatenate([ids[:, 1:], jnp.full((Bn, 1), PAD_ID, jnp.int32)], axis=1)
    tok = jnp.stack([ids.reshape(-1), nxt.reshape(-1)], axis=1)          # (B*SEQ, 2) int32
    mask = answer_mask.astype(jnp.float32).reshape(1, Bn * SEQ)          # (1, B*SEQ)

    out = pl.pallas_call(
        _mplug_kernel,
        out_shape=jax.ShapeDtypeStruct((1, Bn), jnp.float32),
        in_specs=[_VMEM] * 5,
        out_specs=_VMEM,
    )(vis_in, tok, mask, p['wslab'], p['bslab'])
    return out[0]                                                        # (B,)


if __name__ == "__main__":
    key = jax.random.PRNGKey(0)
    k_param, k_img, k_ids = jax.random.split(key, 3)
    params = init_params(k_param)

    image = jax.random.normal(k_img, (B, IMG_C, IMG_HW, IMG_HW), jnp.float32)   # NCHW
    answer_ids = jax.random.randint(k_ids, (B, SEQ), 1, VOCAB).astype(jnp.int32)
    answer_ids = answer_ids.at[1, 6:].set(PAD_ID)                               # some padding
    answer_mask = (answer_ids != PAD_ID).astype(jnp.int32)

    loss = jax.jit(mplug_forward)(params, image, answer_ids, answer_mask)
    jax.block_until_ready(loss)
    assert loss.shape == (B,) and bool(jnp.all(jnp.isfinite(loss)))
    print("KERNEL_OK")
</pallas_src>

<mosaic_0001>
module attributes {stable_mosaic.version = 11 : i64} {
  func.func @_mplug_kernel(%arg0: memref<10x192xf32, #tpu.memory_space<vmem>>, %arg1: memref<16x2xi32, #tpu.memory_space<vmem>>, %arg2: memref<1x16xf32, #tpu.memory_space<vmem>>, %arg3: memref<1712x192xbf16, #tpu.memory_space<vmem>>, %arg4: memref<344x192xf32, #tpu.memory_space<vmem>>, %arg5: memref<1x2xf32, #tpu.memory_space<vmem>>) attributes {dimension_semantics = [], scalar_prefetch = 0 : i64, scratch_operands = 0 : i64, tpu.core_type = #tpu.core_type<tc>} {
    %0 = tpu.iota {dimensions = array<i32: 0>} : vector<10x10xi32>
    %1 = tpu.iota {dimensions = array<i32: 1>} : vector<10x10xi32>
    %c0_i32 = arith.constant 0 : i32
    %2 = vector.broadcast %c0_i32 : i32 to vector<10x10xi32>
    %3 = arith.cmpi sge, %0, %2 : vector<10x10xi32>
    %c5_i32 = arith.constant 5 : i32
    %4 = vector.broadcast %c5_i32 : i32 to vector<10x10xi32>
    %5 = arith.cmpi slt, %0, %4 : vector<10x10xi32>
    %6 = arith.andi %3, %5 : vector<10x10xi1>
    %c0_i32_0 = arith.constant 0 : i32
    %7 = vector.broadcast %c0_i32_0 : i32 to vector<10x10xi32>
    %8 = arith.cmpi sge, %1, %7 : vector<10x10xi32>
    %9 = arith.andi %6, %8 : vector<10x10xi1>
    %c5_i32_1 = arith.constant 5 : i32
    %10 = vector.broadcast %c5_i32_1 : i32 to vector<10x10xi32>
    %11 = arith.cmpi slt, %1, %10 : vector<10x10xi32>
    %12 = arith.andi %9, %11 : vector<10x10xi1>
    %c5_i32_2 = arith.constant 5 : i32
    %13 = vector.broadcast %c5_i32_2 : i32 to vector<10x10xi32>
    %14 = arith.cmpi sge, %0, %13 : vector<10x10xi32>
    %c10_i32 = arith.constant 10 : i32
    %15 = vector.broadcast %c10_i32 : i32 to vector<10x10xi32>
    %16 = arith.cmpi slt, %0, %15 : vector<10x10xi32>
    %17 = arith.andi %14, %16 : vector<10x10xi1>
    %c5_i32_3 = arith.constant 5 : i32
    %18 = vector.broadcast %c5_i32_3 : i32 to vector<10x10xi32>
    %19 = arith.cmpi sge, %1, %18 : vector<10x10xi32>
    %20 = arith.andi %17, %19 : vector<10x10xi1>
    %c10_i32_4 = arith.constant 10 : i32
    %21 = vector.broadcast %c10_i32_4 : i32 to vector<10x10xi32>
    %22 = arith.cmpi slt, %1, %21 : vector<10x10xi32>
    %23 = arith.andi %20, %22 : vector<10x10xi1>
    %24 = arith.ori %12, %23 : vector<10x10xi1>
    %cst = arith.constant 0.000000e+00 : f32
    %cst_5 = arith.constant -1.000000e+09 : f32
    %25 = vector.broadcast %cst : f32 to vector<10x10xf32>
    %26 = vector.broadcast %cst_5 : f32 to vector<10x10xf32>
    %27 = arith.select %24, %25, %26 : vector<10x10xi1>, vector<10x10xf32>
    %28 = tpu.iota {dimensions = array<i32: 0>} : vector<16x16xi32>
    %29 = tpu.iota {dimensions = array<i32: 1>} : vector<16x16xi32>
    %c0_i32_6 = arith.constant 0 : i32
    %30 = vector.broadcast %c0_i32_6 : i32 to vector<16x16xi32>
    %31 = arith.cmpi sge, %28, %30 : vector<16x16xi32>
    %c8_i32 = arith.constant 8 : i32
    %32 = vector.broadcast %c8_i32 : i32 to vector<16x16xi32>
    %33 = arith.cmpi slt, %28, %32 : vector<16x16xi32>
    %34 = arith.andi %31, %33 : vector<16x16xi1>
    %c0_i32_7 = arith.constant 0 : i32
    %35 = vector.broadcast %c0_i32_7 : i32 to vector<16x16xi32>
    %36 = arith.cmpi sge, %29, %35 : vector<16x16xi32>
    %37 = arith.andi %34, %36 : vector<16x16xi1>
    %c8_i32_8 = arith.constant 8 : i32
    %38 = vector.broadcast %c8_i32_8 : i32 to vector<16x16xi32>
    %39 = arith.cmpi slt, %29, %38 : vector<16x16xi32>
    %40 = arith.andi %37, %39 : vector<16x16xi1>
    %c8_i32_9 = arith.constant 8 : i32
    %41 = vector.broadcast %c8_i32_9 : i32 to vector<16x16xi32>
    %42 = arith.cmpi sge, %28, %41 : vector<16x16xi32>
    %c16_i32 = arith.constant 16 : i32
    %43 = vector.broadcast %c16_i32 : i32 to vector<16x16xi32>
    %44 = arith.cmpi slt, %28, %43 : vector<16x16xi32>
    %45 = arith.andi %42, %44 : vector<16x16xi1>
    %c8_i32_10 = arith.constant 8 : i32
    %46 = vector.broadcast %c8_i32_10 : i32 to vector<16x16xi32>
    %47 = arith.cmpi sge, %29, %46 : vector<16x16xi32>
    %48 = arith.andi %45, %47 : vector<16x16xi1>
    %c16_i32_11 = arith.constant 16 : i32
    %49 = vector.broadcast %c16_i32_11 : i32 to vector<16x16xi32>
    %50 = arith.cmpi slt, %29, %49 : vector<16x16xi32>
    %51 = arith.andi %48, %50 : vector<16x16xi1>
    %52 = arith.ori %40, %51 : vector<16x16xi1>
    %c0 = arith.constant 0 : index
    %c0_12 = arith.constant 0 : index
    %53 = vector.load %arg2[%c0, %c0_12] : memref<1x16xf32, #tpu.memory_space<vmem>>, vector<1x16xf32>
    %cst_13 = arith.constant 5.000000e-01 : f32
    %54 = vector.broadcast %cst_13 : f32 to vector<1x16xf32>
    %55 = arith.cmpf ogt, %53, %54 : vector<1x16xf32>
    %56 = arith.cmpi sle, %29, %28 : vector<16x16xi32>
    %57 = arith.andi %52, %56 : vector<16x16xi1>
    %58 = vector.broadcast %55 : vector<1x16xi1> to vector<16x16xi1>
    %59 = arith.andi %57, %58 : vector<16x16xi1>
    %cst_14 = arith.constant 0.000000e+00 : f32
    %cst_15 = arith.constant -1.000000e+09 : f32
    %60 = vector.broadcast %cst_14 : f32 to vector<16x16xf32>
    %61 = vector.broadcast %cst_15 : f32 to vector<16x16xf32>
    %62 = arith.select %59, %60, %61 : vector<16x16xi1>, vector<16x16xf32>
    %63 = tpu.iota {dimensions = array<i32: 0>} : vector<16x10xi32>
    %64 = tpu.iota {dimensions = array<i32: 1>} : vector<16x10xi32>
    %c0_i32_16 = arith.constant 0 : i32
    %65 = vector.broadcast %c0_i32_16 : i32 to vector<16x10xi32>
    %66 = arith.cmpi sge, %63, %65 : vector<16x10xi32>
    %c8_i32_17 = arith.constant 8 : i32
    %67 = vector.broadcast %c8_i32_17 : i32 to vector<16x10xi32>
    %68 = arith.cmpi slt, %63, %67 : vector<16x10xi32>
    %69 = arith.andi %66, %68 : vector<16x10xi1>
    %c0_i32_18 = arith.constant 0 : i32
    %70 = vector.broadcast %c0_i32_18 : i32 to vector<16x10xi32>
    %71 = arith.cmpi sge, %64, %70 : vector<16x10xi32>
    %72 = arith.andi %69, %71 : vector<16x10xi1>
    %c5_i32_19 = arith.constant 5 : i32
    %73 = vector.broadcast %c5_i32_19 : i32 to vector<16x10xi32>
    %74 = arith.cmpi slt, %64, %73 : vector<16x10xi32>
    %75 = arith.andi %72, %74 : vector<16x10xi1>
    %c8_i32_20 = arith.constant 8 : i32
    %76 = vector.broadcast %c8_i32_20 : i32 to vector<16x10xi32>
    %77 = arith.cmpi sge, %63, %76 : vector<16x10xi32>
    %c16_i32_21 = arith.constant 16 : i32
    %78 = vector.broadcast %c16_i32_21 : i32 to vector<16x10xi32>
    %79 = arith.cmpi slt, %63, %78 : vector<16x10xi32>
    %80 = arith.andi %77, %79 : vector<16x10xi1>
    %c5_i32_22 = arith.constant 5 : i32
    %81 = vector.broadcast %c5_i32_22 : i32 to vector<16x10xi32>
    %82 = arith.cmpi sge, %64, %81 : vector<16x10xi32>
    %83 = arith.andi %80, %82 : vector<16x10xi1>
    %c10_i32_23 = arith.constant 10 : i32
    %84 = vector.broadcast %c10_i32_23 : i32 to vector<16x10xi32>
    %85 = arith.cmpi slt, %64, %84 : vector<16x10xi32>
    %86 = arith.andi %83, %85 : vector<16x10xi1>
    %87 = arith.ori %75, %86 : vector<16x10xi1>
    %cst_24 = arith.constant 0.000000e+00 : f32
    %cst_25 = arith.constant -1.000000e+09 : f32
    %88 = vector.broadcast %cst_24 : f32 to vector<16x10xf32>
    %89 = vector.broadcast %cst_25 : f32 to vector<16x10xf32>
    %90 = arith.select %87, %88, %89 : vector<16x10xi1>, vector<16x10xf32>
    %c0_26 = arith.constant 0 : index
    %c0_27 = arith.constant 0 : index
    %91 = vector.load %arg0[%c0_26, %c0_27] : memref<10x192xf32, #tpu.memory_space<vmem>>, vector<10x192xf32>
    %c0_28 = arith.constant 0 : index
    %c0_29 = arith.constant 0 : index
    %92 = vector.load %arg3[%c0_28, %c0_29] : memref<1712x192xbf16, #tpu.memory_space<vmem>>, vector<192x48xbf16>
    %93 = arith.truncf %91 : vector<10x192xf32> to vector<10x192xbf16>
    %cst_30 = arith.constant dense<0.000000e+00> : vector<10x48xf32>
    %94 = tpu.matmul %93, %92, %cst_30 {dimension_numbers = #tpu.dot_dimension_numbers<[1], [0], [0], [1], [0, 0, 1, 1], [], []>} : vector<10x192xbf16>, vector<192x48xbf16>, vector<10x48xf32> -> vector<10x48xf32>
    %c0_31 = arith.constant 0 : index
    %c0_32 = arith.constant 0 : index
    %95 = vector.load %arg4[%c0_31, %c0_32] : memref<344x192xf32, #tpu.memory_space<vmem>>, vector<10x48xf32>
    %96 = arith.addf %94, %95 : vector<10x48xf32>
    %c16 = arith.constant 16 : index
    %c0_33 = arith.constant 0 : index
    %97 = vector.load %arg4[%c16, %c0_33] : memref<344x192xf32, #tpu.memory_space<vmem>>, vector<2x48xf32>
    %cst_34 = arith.constant dense<0.000000e+00> : vector<10xf32>
    %98 = vector.multi_reduction <add>, %96, %cst_34 [1] : vector<10x48xf32> to vector<10xf32>
    %99 = vector.shape_cast %98 : vector<10xf32> to vector<10x1xf32>
    %cst_35 = arith.constant 4.800000e+01 : f32
    %100 = vector.broadcast %cst_35 : f32 to vector<10x1xf32>
    %101 = arith.divf %99, %100 : vector<10x1xf32>
    %102 = vector.broadcast %101 : vector<10x1xf32> to vector<10x48xf32>
    %103 = arith.subf %96, %102 : vector<10x48xf32>
    %104 = arith.mulf %103, %103 : vector<10x48xf32>
    %cst_36 = arith.constant dense<0.000000e+00> : vector<10xf32>
    %105 = vector.multi_reduction <add>, %104, %cst_36 [1] : vector<10x48xf32> to vector<10xf32>
    %106 = vector.shape_cast %105 : vector<10xf32> to vector<10x1xf32>
    %cst_37 = arith.constant 4.800000e+01 : f32
    %107 = vector.broadcast %cst_37 : f32 to vector<10x1xf32>
    %108 = arith.divf %106, %107 : vector<10x1xf32>
    %109 = vector.broadcast %101 : vector<10x1xf32> to vector<10x48xf32>
    %110 = arith.subf %96, %109 : vector<10x48xf32>
    %cst_38 = arith.constant 9.99999974E-6 : f32
    %111 = vector.broadcast %cst_38 : f32 to vector<10x1xf32>
    %112 = arith.addf %108, %111 : vector<10x1xf32>
    %113 = math.rsqrt %112 : vector<10x1xf32>
    %114 = vector.broadcast %113 : vector<10x1xf32> to vector<10x48xf32>
    %115 = arith.mulf %110, %114 : vector<10x48xf32>
    %116 = vector.extract_strided_slice %97 {offsets = [0, 0], sizes = [1, 48], strides = [1, 1]} : vector<2x48xf32> to vector<1x48xf32>
    %117 = vector.broadcast %116 : vector<1x48xf32> to vector<10x48xf32>
    %118 = arith.mulf %115, %117 : vector<10x48xf32>
    %119 = vector.extract_strided_slice %97 {offsets = [1, 0], sizes = [1, 48], strides = [1, 1]} : vector<2x48xf32> to vector<1x48xf32>
    %120 = vector.broadcast %119 : vector<1x48xf32> to vector<10x48xf32>
    %121 = arith.addf %118, %120 : vector<10x48xf32>
    %c24 = arith.constant 24 : index
    %c0_39 = arith.constant 0 : index
    %122 = vector.load %arg4[%c24, %c0_39] : memref<344x192xf32, #tpu.memory_space<vmem>>, vector<2x48xf32>
    %cst_40 = arith.constant dense<0.000000e+00> : vector<10xf32>
    %123 = vector.multi_reduction <add>, %121, %cst_40 [1] : vector<10x48xf32> to vector<10xf32>
    %124 = vector.shape_cast %123 : vector<10xf32> to vector<10x1xf32>
    %cst_41 = arith.constant 4.800000e+01 : f32
    %125 = vector.broadcast %cst_41 : f32 to vector<10x1xf32>
    %126 = arith.divf %124, %125 : vector<10x1xf32>
    %127 = vector.broadcast %126 : vector<10x1xf32> to vector<10x48xf32>
    %128 = arith.subf %121, %127 : vector<10x48xf32>
    %129 = arith.mulf %128, %128 : vector<10x48xf32>
    %cst_42 = arith.constant dense<0.000000e+00> : vector<10xf32>
    %130 = vector.multi_reduction <add>, %129, %cst_42 [1] : vector<10x48xf32> to vector<10xf32>
    %131 = vector.shape_cast %130 : vector<10xf32> to vector<10x1xf32>
    %cst_43 = arith.constant 4.800000e+01 : f32
    %132 = vector.broadcast %cst_43 : f32 to vector<10x1xf32>
    %133 = arith.divf %131, %132 : vector<10x1xf32>
    %134 = vector.broadcast %126 : vector<10x1xf32> to vector<10x48xf32>
    %135 = arith.subf %121, %134 : vector<10x48xf32>
    %cst_44 = arith.constant 9.99999974E-6 : f32
    %136 = vector.broadcast %cst_44 : f32 to vector<10x1xf32>
    %137 = arith.addf %133, %136 : vector<10x1xf32>
    %138 = math.rsqrt %137 : vector<10x1xf32>
    %139 = vector.broadcast %138 : vector<10x1xf32> to vector<10x48xf32>
    %140 = arith.mulf %135, %139 : vector<10x48xf32>
    %141 = vector.extract_strided_slice %122 {offsets = [0, 0], sizes = [1, 48], strides = [1, 1]} : vector<2x48xf32> to vector<1x48xf32>
    %142 = vector.broadcast %141 : vector<1x48xf32> to vector<10x48xf32>
    %143 = arith.mulf %140, %142 : vector<10x48xf32>
    %144 = vector.extract_strided_slice %122 {offsets = [1, 0], sizes = [1, 48], strides = [1, 1]} : vector<2x48xf32> to vector<1x48xf32>
    %145 = vector.broadcast %144 : vector<1x48xf32> to vector<10x48xf32>
    %146 = arith.addf %143, %145 : vector<10x48xf32>
    %c192 = arith.constant 192 : index
    %c0_45 = arith.constant 0 : index
    %147 = vector.load %arg3[%c192, %c0_45] : memref<1712x192xbf16, #tpu.memory_space<vmem>>, vector<48x192xbf16>
    %148 = arith.truncf %146 : vector<10x48xf32> to vector<10x48xbf16>
    %cst_46 = arith.constant dense<0.000000e+00> : vector<10x192xf32>
    %149 = tpu.matmul %148, %147, %cst_46 {dimension_numbers = #tpu.dot_dimension_numbers<[1], [0], [0], [1], [0, 0, 1, 1], [], []>} : vector<10x48xbf16>, vector<48x192xbf16>, vector<10x192xf32> -> vector<10x192xf32>
    %c32 = arith.constant 32 : index
    %c0_47 = arith.constant 0 : index
    %150 = vector.load %arg4[%c32, %c0_47] : memref<344x192xf32, #tpu.memory_space<vmem>>, vector<1x192xf32>
    %151 = vector.broadcast %150 : vector<1x192xf32> to vector<10x192xf32>
    %152 = arith.addf %149, %151 : vector<10x192xf32>
    %153 = vector.extract_strided_slice %152 {offsets = [0, 0], sizes = [10, 64], strides = [1, 1]} : vector<10x192xf32> to vector<10x64xf32>
    %154 = vector.extract_strided_slice %152 {offsets = [0, 64], sizes = [10, 64], strides = [1, 1]} : vector<10x192xf32> to vector<10x64xf32>
    %155 = vector.extract_strided_slice %152 {offsets = [0, 128], sizes = [10, 64], strides = [1, 1]} : vector<10x192xf32> to vector<10x64xf32>
    %156 = vector.extract_strided_slice %153 {offsets = [0, 0], sizes = [10, 16], strides = [1, 1]} : vector<10x64xf32> to vector<10x16xf32>
    %157 = vector.extract_strided_slice %154 {offsets = [0, 0], sizes = [10, 16], strides = [1, 1]} : vector<10x64xf32> to vector<10x16xf32>
    %158 = arith.truncf %156 : vector<10x16xf32> to vector<10x16xbf16>
    %159 = arith.truncf %157 : vector<10x16xf32> to vector<10x16xbf16>
    %cst_48 = arith.constant dense<0.000000e+00> : vector<10x10xf32>
    %160 = tpu.matmul %158, %159, %cst_48 {dimension_numbers = #tpu.dot_dimension_numbers<[1], [1], [0], [0], [0, 0, 1, 0], [], []>} : vector<10x16xbf16>, vector<10x16xbf16>, vector<10x10xf32> -> vector<10x10xf32>
    %cst_49 = arith.constant 0.288675129 : f32
    %161 = vector.broadcast %cst_49 : f32 to vector<10x10xf32>
    %162 = arith.mulf %160, %161 : vector<10x10xf32>
    %163 = arith.addf %162, %27 : vector<10x10xf32>
    %cst_50 = arith.constant dense<0xFF800000> : vector<10xf32>
    %164 = vector.multi_reduction <maximumf>, %163, %cst_50 [1] : vector<10x10xf32> to vector<10xf32>
    %165 = vector.shape_cast %164 : vector<10xf32> to vector<10x1xf32>
    %166 = vector.broadcast %165 : vector<10x1xf32> to vector<10x10xf32>
    %167 = arith.subf %163, %166 : vector<10x10xf32>
    %168 = math.exp %167 : vector<10x10xf32>
    %cst_51 = arith.constant dense<0.000000e+00> : vector<10xf32>
    %169 = vector.multi_reduction <add>, %168, %cst_51 [1] : vector<10x10xf32> to vector<10xf32>
    %170 = vector.shape_cast %169 : vector<10xf32> to vector<10x1xf32>
    %171 = vector.broadcast %170 : vector<10x1xf32> to vector<10x10xf32>
    %172 = arith.divf %168, %171 : vector<10x10xf32>
    %173 = vector.extract_strided_slice %155 {offsets = [0, 0], sizes = [10, 16], strides = [1, 1]} : vector<10x64xf32> to vector<10x16xf32>
    %174 = arith.truncf %172 : vector<10x10xf32> to vector<10x10xbf16>
    %175 = arith.truncf %173 : vector<10x16xf32> to vector<10x16xbf16>
    %cst_52 = arith.constant dense<0.000000e+00> : vector<10x16xf32>
    %176 = tpu.matmul %174, %175, %cst_52 {dimension_numbers = #tpu.dot_dimension_numbers<[1], [0], [0], [1], [0, 0, 1, 1], [], []>} : vector<10x10xbf16>, vector<10x16xbf16>, vector<10x16xf32> -> vector<10x16xf32>
    %177 = vector.extract_strided_slice %153 {offsets = [0, 16], sizes = [10, 16], strides = [1, 1]} : vector<10x64xf32> to vector<10x16xf32>
    %178 = vector.extract_strided_slice %154 {offsets = [0, 16], sizes = [10, 16], strides = [1, 1]} : vector<10x64xf32> to vector<10x16xf32>
    %179 = arith.truncf %177 : vector<10x16xf32> to vector<10x16xbf16>
    %180 = arith.truncf %178 : vector<10x16xf32> to vector<10x16xbf16>
    %cst_53 = arith.constant dense<0.000000e+00> : vector<10x10xf32>
    %181 = tpu.matmul %179, %180, %cst_53 {dimension_numbers = #tpu.dot_dimension_numbers<[1], [1], [0], [0], [0, 0, 1, 0], [], []>} : vector<10x16xbf16>, vector<10x16xbf16>, vector<10x10xf32> -> vector<10x10xf32>
    %cst_54 = arith.constant 0.288675129 : f32
    %182 = vector.broadcast %cst_54 : f32 to vector<10x10xf32>
    %183 = arith.mulf %181, %182 : vector<10x10xf32>
    %184 = arith.addf %183, %27 : vector<10x10xf32>
    %cst_55 = arith.constant dense<0xFF800000> : vector<10xf32>
    %185 = vector.multi_reduction <maximumf>, %184, %cst_55 [1] : vector<10x10xf32> to vector<10xf32>
    %186 = vector.shape_cast %185 : vector<10xf32> to vector<10x1xf32>
    %187 = vector.broadcast %186 : vector<10x1xf32> to vector<10x10xf32>
    %188 = arith.subf %184, %187 : vector<10x10xf32>
    %189 = math.exp %188 : vector<10x10xf32>
    %cst_56 = arith.constant dense<0.000000e+00> : vector<10xf32>
    %190 = vector.multi_reduction <add>, %189, %cst_56 [1] : vector<10x10xf32> to vector<10xf32>
    %191 = vector.shape_cast %190 : vector<10xf32> to vector<10x1xf32>
    %192 = vector.broadcast %191 : vector<10x1xf32> to vector<10x10xf32>
    %193 = arith.divf %189, %192 : vector<10x10xf32>
    %194 = vector.extract_strided_slice %155 {offsets = [0, 16], sizes = [10, 16], strides = [1, 1]} : vector<10x64xf32> to vector<10x16xf32>
    %195 = arith.truncf %193 : vector<10x10xf32> to vector<10x10xbf16>
    %196 = arith.truncf %194 : vector<10x16xf32> to vector<10x16xbf16>
    %cst_57 = arith.constant dense<0.000000e+00> : vector<10x16xf32>
    %197 = tpu.matmul %195, %196, %cst_57 {dimension_numbers = #tpu.dot_dimension_numbers<[1], [0], [0], [1], [0, 0, 1, 1], [], []>} : vector<10x10xbf16>, vector<10x16xbf16>, vector<10x16xf32> -> vector<10x16xf32>
    %198 = vector.extract_strided_slice %153 {offsets = [0, 32], sizes = [10, 16], strides = [1, 1]} : vector<10x64xf32> to vector<10x16xf32>
    %199 = vector.extract_strided_slice %154 {offsets = [0, 32], sizes = [10, 16], strides = [1, 1]} : vector<10x64xf32> to vector<10x16xf32>
    %200 = arith.truncf %198 : vector<10x16xf32> to vector<10x16xbf16>
    %201 = arith.truncf %199 : vector<10x16xf32> to vector<10x16xbf16>
    %cst_58 = arith.constant dense<0.000000e+00> : vector<10x10xf32>
    %202 = tpu.matmul %200, %201, %cst_58 {dimension_numbers = #tpu.dot_dimension_numbers<[1], [1], [0], [0], [0, 0, 1, 0], [], []>} : vector<10x16xbf16>, vector<10x16xbf16>, vector<10x10xf32> -> vector<10x10xf32>
    %cst_59 = arith.constant 0.288675129 : f32
    %203 = vector.broadcast %cst_59 : f32 to vector<10x10xf32>
    %204 = arith.mulf %202, %203 : vector<10x10xf32>
    %205 = arith.addf %204, %27 : vector<10x10xf32>
    %cst_60 = arith.constant dense<0xFF800000> : vector<10xf32>
    %206 = vector.multi_reduction <maximumf>, %205, %cst_60 [1] : vector<10x10xf32> to vector<10xf32>
    %207 = vector.shape_cast %206 : vector<10xf32> to vector<10x1xf32>
    %208 = vector.broadcast %207 : vector<10x1xf32> to vector<10x10xf32>
    %209 = arith.subf %205, %208 : vector<10x10xf32>
    %210 = math.exp %209 : vector<10x10xf32>
    %cst_61 = arith.constant dense<0.000000e+00> : vector<10xf32>
    %211 = vector.multi_reduction <add>, %210, %cst_61 [1] : vector<10x10xf32> to vector<10xf32>
    %212 = vector.shape_cast %211 : vector<10xf32> to vector<10x1xf32>
    %213 = vector.broadcast %212 : vector<10x1xf32> to vector<10x10xf32>
    %214 = arith.divf %210, %213 : vector<10x10xf32>
    %215 = vector.extract_strided_slice %155 {offsets = [0, 32], sizes = [10, 16], strides = [1, 1]} : vector<10x64xf32> to vector<10x16xf32>
    %216 = arith.truncf %214 : vector<10x10xf32> to vector<10x10xbf16>
    %217 = arith.truncf %215 : vector<10x16xf32> to vector<10x16xbf16>
    %cst_62 = arith.constant dense<0.000000e+00> : vector<10x16xf32>
    %218 = tpu.matmul %216, %217, %cst_62 {dimension_numbers = #tpu.dot_dimension_numbers<[1], [0], [0], [1], [0, 0, 1, 1], [], []>} : vector<10x10xbf16>, vector<10x16xbf16>, vector<10x16xf32> -> vector<10x16xf32>
    %219 = vector.extract_strided_slice %153 {offsets = [0, 48], sizes = [10, 16], strides = [1, 1]} : vector<10x64xf32> to vector<10x16xf32>
    %220 = vector.extract_strided_slice %154 {offsets = [0, 48], sizes = [10, 16], strides = [1, 1]} : vector<10x64xf32> to vector<10x16xf32>
    %221 = arith.truncf %219 : vector<10x16xf32> to vector<10x16xbf16>
    %222 = arith.truncf %220 : vector<10x16xf32> to vector<10x16xbf16>
    %cst_63 = arith.constant dense<0.000000e+00> : vector<10x10xf32>
    %223 = tpu.matmul %221, %222, %cst_63 {dimension_numbers = #tpu.dot_dimension_numbers<[1], [1], [0], [0], [0, 0, 1, 0], [], []>} : vector<10x16xbf16>, vector<10x16xbf16>, vector<10x10xf32> -> vector<10x10xf32>
    %cst_64 = arith.constant 0.288675129 : f32
    %224 = vector.broadcast %cst_64 : f32 to vector<10x10xf32>
    %225 = arith.mulf %223, %224 : vector<10x10xf32>
    %226 = arith.addf %225, %27 : vector<10x10xf32>
    %cst_65 = arith.constant dense<0xFF800000> : vector<10xf32>
    %227 = vector.multi_reduction <maximumf>, %226, %cst_65 [1] : vector<10x10xf32> to vector<10xf32>
    %228 = vector.shape_cast %227 : vector<10xf32> to vector<10x1xf32>
    %229 = vector.broadcast %228 : vector<10x1xf32> to vector<10x10xf32>
    %230 = arith.subf %226, %229 : vector<10x10xf32>
    %231 = math.exp %230 : vector<10x10xf32>
    %cst_66 = arith.constant dense<0.000000e+00> : vector<10xf32>
    %232 = vector.multi_reduction <add>, %231, %cst_66 [1] : vector<10x10xf32> to vector<10xf32>
    %233 = vector.shape_cast %232 : vector<10xf32> to vector<10x1xf32>
    %234 = vector.broadcast %233 : vector<10x1xf32> to vector<10x10xf32>
    %235 = arith.divf %231, %234 : vector<10x10xf32>
    %236 = vector.extract_strided_slice %155 {offsets = [0, 48], sizes = [10, 16], strides = [1, 1]} : vector<10x64xf32> to vector<10x16xf32>
    %237 = arith.truncf %235 : vector<10x10xf32> to vector<10x10xbf16>
    %238 = arith.truncf %236 : vector<10x16xf32> to vector<10x16xbf16>
    %cst_67 = arith.constant dense<0.000000e+00> : vector<10x16xf32>
    %239 = tpu.matmul %237, %238, %cst_67 {dimension_numbers = #tpu.dot_dimension_numbers<[1], [0], [0], [1], [0, 0, 1, 1], [], []>} : vector<10x10xbf16>, vector<10x16xbf16>, vector<10x16xf32> -> vector<10x16xf32>
    %240 = tpu.concatenate %176, %197, %218, %239 in 1 : vector<10x16xf32>, vector<10x16xf32>, vector<10x16xf32>, vector<10x16xf32> -> vector<10x64xf32>
    %c240 = arith.constant 240 : index
    %c0_68 = arith.constant 0 : index
    %241 = vector.load %arg3[%c240, %c0_68] : memref<1712x192xbf16, #tpu.memory_space<vmem>>, vector<64x48xbf16>
    %242 = arith.truncf %240 : vector<10x64xf32> to vector<10x64xbf16>
    %cst_69 = arith.constant dense<0.000000e+00> : vector<10x48xf32>
    %243 = tpu.matmul %242, %241, %cst_69 {dimension_numbers = #tpu.dot_dimension_numbers<[1], [0], [0], [1], [0, 0, 1, 1], [], []>} : vector<10x64xbf16>, vector<64x48xbf16>, vector<10x48xf32> -> vector<10x48xf32>
    %c40 = arith.constant 40 : index
    %c0_70 = arith.constant 0 : index
    %244 = vector.load %arg4[%c40, %c0_70] : memref<344x192xf32, #tpu.memory_space<vmem>>, vector<1x48xf32>
    %245 = vector.broadcast %244 : vector<1x48xf32> to vector<10x48xf32>
    %246 = arith.addf %243, %245 : vector<10x48xf32>
    %247 = arith.addf %121, %246 : vector<10x48xf32>
    %c48 = arith.constant 48 : index
    %c0_71 = arith.constant 0 : index
    %248 = vector.load %arg4[%c48, %c0_71] : memref<344x192xf32, #tpu.memory_space<vmem>>, vector<2x48xf32>
    %cst_72 = arith.constant dense<0.000000e+00> : vector<10xf32>
    %249 = vector.multi_reduction <add>, %247, %cst_72 [1] : vector<10x48xf32> to vector<10xf32>
    %250 = vector.shape_cast %249 : vector<10xf32> to vector<10x1xf32>
    %cst_73 = arith.constant 4.800000e+01 : f32
    %251 = vector.broadcast %cst_73 : f32 to vector<10x1xf32>
    %252 = arith.divf %250, %251 : vector<10x1xf32>
    %253 = vector.broadcast %252 : vector<10x1xf32> to vector<10x48xf32>
    %254 = arith.subf %247, %253 : vector<10x48xf32>
    %255 = arith.mulf %254, %254 : vector<10x48xf32>
    %cst_74 = arith.constant dense<0.000000e+00> : vector<10xf32>
    %256 = vector.multi_reduction <add>, %255, %cst_74 [1] : vector<10x48xf32> to vector<10xf32>
    %257 = vector.shape_cast %256 : vector<10xf32> to vector<10x1xf32>
    %cst_75 = arith.constant 4.800000e+01 : f32
    %258 = vector.broadcast %cst_75 : f32 to vector<10x1xf32>
    %259 = arith.divf %257, %258 : vector<10x1xf32>
    %260 = vector.broadcast %252 : vector<10x1xf32> to vector<10x48xf32>
    %261 = arith.subf %247, %260 : vector<10x48xf32>
    %cst_76 = arith.constant 9.99999974E-6 : f32
    %262 = vector.broadcast %cst_76 : f32 to vector<10x1xf32>
    %263 = arith.addf %259, %262 : vector<10x1xf32>
    %264 = math.rsqrt %263 : vector<10x1xf32>
    %265 = vector.broadcast %264 : vector<10x1xf32> to vector<10x48xf32>
    %266 = arith.mulf %261, %265 : vector<10x48xf32>
    %267 = vector.extract_strided_slice %248 {offsets = [0, 0], sizes = [1, 48], strides = [1, 1]} : vector<2x48xf32> to vector<1x48xf32>
    %268 = vector.broadcast %267 : vector<1x48xf32> to vector<10x48xf32>
    %269 = arith.mulf %266, %268 : vector<10x48xf32>
    %270 = vector.extract_strided_slice %248 {offsets = [1, 0], sizes = [1, 48], strides = [1, 1]} : vector<2x48xf32> to vector<1x48xf32>
    %271 = vector.broadcast %270 : vector<1x48xf32> to vector<10x48xf32>
    %272 = arith.addf %269, %271 : vector<10x48xf32>
    %c304 = arith.constant 304 : index
    %c0_77 = arith.constant 0 : index
    %273 = vector.load %arg3[%c304, %c0_77] : memref<1712x192xbf16, #tpu.memory_space<vmem>>, vector<48x192xbf16>
    %274 = arith.truncf %272 : vector<10x48xf32> to vector<10x48xbf16>
    %cst_78 = arith.constant dense<0.000000e+00> : vector<10x192xf32>
    %275 = tpu.matmul %274, %273, %cst_78 {dimension_numbers = #tpu.dot_dimension_numbers<[1], [0], [0], [1], [0, 0, 1, 1], [], []>} : vector<10x48xbf16>, vector<48x192xbf16>, vector<10x192xf32> -> vector<10x192xf32>
    %c56 = arith.constant 56 : index
    %c0_79 = arith.constant 0 : index
    %276 = vector.load %arg4[%c56, %c0_79] : memref<344x192xf32, #tpu.memory_space<vmem>>, vector<1x192xf32>
    %277 = vector.broadcast %276 : vector<1x192xf32> to vector<10x192xf32>
    %278 = arith.addf %275, %277 : vector<10x192xf32>
    %cst_80 = arith.constant 1.702000e+00 : f32
    %279 = vector.broadcast %cst_80 : f32 to vector<10x192xf32>
    %280 = arith.mulf %279, %278 : vector<10x192xf32>
    %281 = arith.negf %280 : vector<10x192xf32>
    %282 = math.exp %281 : vector<10x192xf32>
    %cst_81 = arith.constant 1.000000e+00 : f32
    %283 = vector.broadcast %cst_81 : f32 to vector<10x192xf32>
    %284 = arith.addf %283, %282 : vector<10x192xf32>
    %285 = arith.divf %283, %284 : vector<10x192xf32>
    %286 = arith.mulf %278, %285 : vector<10x192xf32>
    %c352 = arith.constant 352 : index
    %c0_82 = arith.constant 0 : index
    %287 = vector.load %arg3[%c352, %c0_82] : memref<1712x192xbf16, #tpu.memory_space<vmem>>, vector<192x48xbf16>
    %288 = arith.truncf %286 : vector<10x192xf32> to vector<10x192xbf16>
    %cst_83 = arith.constant dense<0.000000e+00> : vector<10x48xf32>
    %289 = tpu.matmul %288, %287, %cst_83 {dimension_numbers = #tpu.dot_dimension_numbers<[1], [0], [0], [1], [0, 0, 1, 1], [], []>} : vector<10x192xbf16>, vector<192x48xbf16>, vector<10x48xf32> -> vector<10x48xf32>
    %c64 = arith.constant 64 : index
    %c0_84 = arith.constant 0 : index
    %290 = vector.load %arg4[%c64, %c0_84] : memref<344x192xf32, #tpu.memory_space<vmem>>, vector<1x48xf32>
    %291 = vector.broadcast %290 : vector<1x48xf32> to vector<10x48xf32>
    %292 = arith.addf %289, %291 : vector<10x48xf32>
    %293 = arith.addf %247, %292 : vector<10x48xf32>
    %c72 = arith.constant 72 : index
    %c0_85 = arith.constant 0 : index
    %294 = vector.load %arg4[%c72, %c0_85] : memref<344x192xf32, #tpu.memory_space<vmem>>, vector<2x48xf32>
    %cst_86 = arith.constant dense<0.000000e+00> : vector<10xf32>
    %295 = vector.multi_reduction <add>, %293, %cst_86 [1] : vector<10x48xf32> to vector<10xf32>
    %296 = vector.shape_cast %295 : vector<10xf32> to vector<10x1xf32>
    %cst_87 = arith.constant 4.800000e+01 : f32
    %297 = vector.broadcast %cst_87 : f32 to vector<10x1xf32>
    %298 = arith.divf %296, %297 : vector<10x1xf32>
    %299 = vector.broadcast %298 : vector<10x1xf32> to vector<10x48xf32>
    %300 = arith.subf %293, %299 : vector<10x48xf32>
    %301 = arith.mulf %300, %300 : vector<10x48xf32>
    %cst_88 = arith.constant dense<0.000000e+00> : vector<10xf32>
    %302 = vector.multi_reduction <add>, %301, %cst_88 [1] : vector<10x48xf32> to vector<10xf32>
    %303 = vector.shape_cast %302 : vector<10xf32> to vector<10x1xf32>
    %cst_89 = arith.constant 4.800000e+01 : f32
    %304 = vector.broadcast %cst_89 : f32 to vector<10x1xf32>
    %305 = arith.divf %303, %304 : vector<10x1xf32>
    %306 = vector.broadcast %298 : vector<10x1xf32> to vector<10x48xf32>
    %307 = arith.subf %293, %306 : vector<10x48xf32>
    %cst_90 = arith.constant 9.99999974E-6 : f32
    %308 = vector.broadcast %cst_90 : f32 to vector<10x1xf32>
    %309 = arith.addf %305, %308 : vector<10x1xf32>
    %310 = math.rsqrt %309 : vector<10x1xf32>
    %311 = vector.broadcast %310 : vector<10x1xf32> to vector<10x48xf32>
    %312 = arith.mulf %307, %311 : vector<10x48xf32>
    %313 = vector.extract_strided_slice %294 {offsets = [0, 0], sizes = [1, 48], strides = [1, 1]} : vector<2x48xf32> to vector<1x48xf32>
    %314 = vector.broadcast %313 : vector<1x48xf32> to vector<10x48xf32>
    %315 = arith.mulf %312, %314 : vector<10x48xf32>
    %316 = vector.extract_strided_slice %294 {offsets = [1, 0], sizes = [1, 48], strides = [1, 1]} : vector<2x48xf32> to vector<1x48xf32>
    %317 = vector.broadcast %316 : vector<1x48xf32> to vector<10x48xf32>
    %318 = arith.addf %315, %317 : vector<10x48xf32>
    %c544 = arith.constant 544 : index
    %c0_91 = arith.constant 0 : index
    %319 = vector.load %arg3[%c544, %c0_91] : memref<1712x192xbf16, #tpu.memory_space<vmem>>, vector<48x192xbf16>
    %320 = arith.truncf %318 : vector<10x48xf32> to vector<10x48xbf16>
    %cst_92 = arith.constant dense<0.000000e+00> : vector<10x192xf32>
    %321 = tpu.matmul %320, %319, %cst_92 {dimension_numbers = #tpu.dot_dimension_numbers<[1], [0], [0], [1], [0, 0, 1, 1], [], []>} : vector<10x48xbf16>, vector<48x192xbf16>, vector<10x192xf32> -> vector<10x192xf32>
    %c80 = arith.constant 80 : index
    %c0_93 = arith.constant 0 : index
    %322 = vector.load %arg4[%c80, %c0_93] : memref<344x192xf32, #tpu.memory_space<vmem>>, vector<1x192xf32>
    %323 = vector.broadcast %322 : vector<1x192xf32> to vector<10x192xf32>
    %324 = arith.addf %321, %323 : vector<10x192xf32>
    %325 = vector.extract_strided_slice %324 {offsets = [0, 0], sizes = [10, 64], strides = [1, 1]} : vector<10x192xf32> to vector<10x64xf32>
    %326 = vector.extract_strided_slice %324 {offsets = [0, 64], sizes = [10, 64], strides = [1, 1]} : vector<10x192xf32> to vector<10x64xf32>
    %327 = vector.extract_strided_slice %324 {offsets = [0, 128], sizes = [10, 64], strides = [1, 1]} : vector<10x192xf32> to vector<10x64xf32>
    %328 = vector.extract_strided_slice %325 {offsets = [0, 0], sizes = [10, 16], strides = [1, 1]} : vector<10x64xf32> to vector<10x16xf32>
    %329 = vector.extract_strided_slice %326 {offsets = [0, 0], sizes = [10, 16], strides = [1, 1]} : vector<10x64xf32> to vector<10x16xf32>
    %330 = arith.truncf %328 : vector<10x16xf32> to vector<10x16xbf16>
    %331 = arith.truncf %329 : vector<10x16xf32> to vector<10x16xbf16>
    %cst_94 = arith.constant dense<0.000000e+00> : vector<10x10xf32>
    %332 = tpu.matmul %330, %331, %cst_94 {dimension_numbers = #tpu.dot_dimension_numbers<[1], [1], [0], [0], [0, 0, 1, 0], [], []>} : vector<10x16xbf16>, vector<10x16xbf16>, vector<10x10xf32> -> vector<10x10xf32>
    %cst_95 = arith.constant 0.288675129 : f32
    %333 = vector.broadcast %cst_95 : f32 to vector<10x10xf32>
    %334 = arith.mulf %332, %333 : vector<10x10xf32>
    %335 = arith.addf %334, %27 : vector<10x10xf32>
    %cst_96 = arith.constant dense<0xFF800000> : vector<10xf32>
    %336 = vector.multi_reduction <maximumf>, %335, %cst_96 [1] : vector<10x10xf32> to vector<10xf32>
    %337 = vector.shape_cast %336 : vector<10xf32> to vector<10x1xf32>
    %338 = vector.broadcast %337 : vector<10x1xf32> to vector<10x10xf32>
    %339 = arith.subf %335, %338 : vector<10x10xf32>
    %340 = math.exp %339 : vector<10x10xf32>
    %cst_97 = arith.constant dense<0.000000e+00> : vector<10xf32>
    %341 = vector.multi_reduction <add>, %340, %cst_97 [1] : vector<10x10xf32> to vector<10xf32>
    %342 = vector.shape_cast %341 : vector<10xf32> to vector<10x1xf32>
    %343 = vector.broadcast %342 : vector<10x1xf32> to vector<10x10xf32>
    %344 = arith.divf %340, %343 : vector<10x10xf32>
    %345 = vector.extract_strided_slice %327 {offsets = [0, 0], sizes = [10, 16], strides = [1, 1]} : vector<10x64xf32> to vector<10x16xf32>
    %346 = arith.truncf %344 : vector<10x10xf32> to vector<10x10xbf16>
    %347 = arith.truncf %345 : vector<10x16xf32> to vector<10x16xbf16>
    %cst_98 = arith.constant dense<0.000000e+00> : vector<10x16xf32>
    %348 = tpu.matmul %346, %347, %cst_98 {dimension_numbers = #tpu.dot_dimension_numbers<[1], [0], [0], [1], [0, 0, 1, 1], [], []>} : vector<10x10xbf16>, vector<10x16xbf16>, vector<10x16xf32> -> vector<10x16xf32>
    %349 = vector.extract_strided_slice %325 {offsets = [0, 16], sizes = [10, 16], strides = [1, 1]} : vector<10x64xf32> to vector<10x16xf32>
    %350 = vector.extract_strided_slice %326 {offsets = [0, 16], sizes = [10, 16], strides = [1, 1]} : vector<10x64xf32> to vector<10x16xf32>
    %351 = arith.truncf %349 : vector<10x16xf32> to vector<10x16xbf16>
    %352 = arith.truncf %350 : vector<10x16xf32> to vector<10x16xbf16>
    %cst_99 = arith.constant dense<0.000000e+00> : vector<10x10xf32>
    %353 = tpu.matmul %351, %352, %cst_99 {dimension_numbers = #tpu.dot_dimension_numbers<[1], [1], [0], [0], [0, 0, 1, 0], [], []>} : vector<10x16xbf16>, vector<10x16xbf16>, vector<10x10xf32> -> vector<10x10xf32>
    %cst_100 = arith.constant 0.288675129 : f32
    %354 = vector.broadcast %cst_100 : f32 to vector<10x10xf32>
    %355 = arith.mulf %353, %354 : vector<10x10xf32>
    %356 = arith.addf %355, %27 : vector<10x10xf32>
    %cst_101 = arith.constant dense<0xFF800000> : vector<10xf32>
    %357 = vector.multi_reduction <maximumf>, %356, %cst_101 [1] : vector<10x10xf32> to vector<10xf32>
    %358 = vector.shape_cast %357 : vector<10xf32> to vector<10x1xf32>
    %359 = vector.broadcast %358 : vector<10x1xf32> to vector<10x10xf32>
    %360 = arith.subf %356, %359 : vector<10x10xf32>
    %361 = math.exp %360 : vector<10x10xf32>
    %cst_102 = arith.constant dense<0.000000e+00> : vector<10xf32>
    %362 = vector.multi_reduction <add>, %361, %cst_102 [1] : vector<10x10xf32> to vector<10xf32>
    %363 = vector.shape_cast %362 : vector<10xf32> to vector<10x1xf32>
    %364 = vector.broadcast %363 : vector<10x1xf32> to vector<10x10xf32>
    %365 = arith.divf %361, %364 : vector<10x10xf32>
    %366 = vector.extract_strided_slice %327 {offsets = [0, 16], sizes = [10, 16], strides = [1, 1]} : vector<10x64xf32> to vector<10x16xf32>
    %367 = arith.truncf %365 : vector<10x10xf32> to vector<10x10xbf16>
    %368 = arith.truncf %366 : vector<10x16xf32> to vector<10x16xbf16>
    %cst_103 = arith.constant dense<0.000000e+00> : vector<10x16xf32>
    %369 = tpu.matmul %367, %368, %cst_103 {dimension_numbers = #tpu.dot_dimension_numbers<[1], [0], [0], [1], [0, 0, 1, 1], [], []>} : vector<10x10xbf16>, vector<10x16xbf16>, vector<10x16xf32> -> vector<10x16xf32>
    %370 = vector.extract_strided_slice %325 {offsets = [0, 32], sizes = [10, 16], strides = [1, 1]} : vector<10x64xf32> to vector<10x16xf32>
    %371 = vector.extract_strided_slice %326 {offsets = [0, 32], sizes = [10, 16], strides = [1, 1]} : vector<10x64xf32> to vector<10x16xf32>
    %372 = arith.truncf %370 : vector<10x16xf32> to vector<10x16xbf16>
    %373 = arith.truncf %371 : vector<10x16xf32> to vector<10x16xbf16>
    %cst_104 = arith.constant dense<0.000000e+00> : vector<10x10xf32>
    %374 = tpu.matmul %372, %373, %cst_104 {dimension_numbers = #tpu.dot_dimension_numbers<[1], [1], [0], [0], [0, 0, 1, 0], [], []>} : vector<10x16xbf16>, vector<10x16xbf16>, vector<10x10xf32> -> vector<10x10xf32>
    %cst_105 = arith.constant 0.288675129 : f32
    %375 = vector.broadcast %cst_105 : f32 to vector<10x10xf32>
    %376 = arith.mulf %374, %375 : vector<10x10xf32>
    %377 = arith.addf %376, %27 : vector<10x10xf32>
    %cst_106 = arith.constant dense<0xFF800000> : vector<10xf32>
    %378 = vector.multi_reduction <maximumf>, %377, %cst_106 [1] : vector<10x10xf32> to vector<10xf32>
    %379 = vector.shape_cast %378 : vector<10xf32> to vector<10x1xf32>
    %380 = vector.broadcast %379 : vector<10x1xf32> to vector<10x10xf32>
    %381 = arith.subf %377, %380 : vector<10x10xf32>
    %382 = math.exp %381 : vector<10x10xf32>
    %cst_107 = arith.constant dense<0.000000e+00> : vector<10xf32>
    %383 = vector.multi_reduction <add>, %382, %cst_107 [1] : vector<10x10xf32> to vector<10xf32>
    %384 = vector.shape_cast %383 : vector<10xf32> to vector<10x1xf32>
    %385 = vector.broadcast %384 : vector<10x1xf32> to vector<10x10xf32>
    %386 = arith.divf %382, %385 : vector<10x10xf32>
    %387 = vector.extract_strided_slice %327 {offsets = [0, 32], sizes = [10, 16], strides = [1, 1]} : vector<10x64xf32> to vector<10x16xf32>
    %388 = arith.truncf %386 : vector<10x10xf32> to vector<10x10xbf16>
    %389 = arith.truncf %387 : vector<10x16xf32> to vector<10x16xbf16>
    %cst_108 = arith.constant dense<0.000000e+00> : vector<10x16xf32>
    %390 = tpu.matmul %388, %389, %cst_108 {dimension_numbers = #tpu.dot_dimension_numbers<[1], [0], [0], [1], [0, 0, 1, 1], [], []>} : vector<10x10xbf16>, vector<10x16xbf16>, vector<10x16xf32> -> vector<10x16xf32>
    %391 = vector.extract_strided_slice %325 {offsets = [0, 48], sizes = [10, 16], strides = [1, 1]} : vector<10x64xf32> to vector<10x16xf32>
    %392 = vector.extract_strided_slice %326 {offsets = [0, 48], sizes = [10, 16], strides = [1, 1]} : vector<10x64xf32> to vector<10x16xf32>
    %393 = arith.truncf %391 : vector<10x16xf32> to vector<10x16xbf16>
    %394 = arith.truncf %392 : vector<10x16xf32> to vector<10x16xbf16>
    %cst_109 = arith.constant dense<0.000000e+00> : vector<10x10xf32>
    %395 = tpu.matmul %393, %394, %cst_109 {dimension_numbers = #tpu.dot_dimension_numbers<[1], [1], [0], [0], [0, 0, 1, 0], [], []>} : vector<10x16xbf16>, vector<10x16xbf16>, vector<10x10xf32> -> vector<10x10xf32>
    %cst_110 = arith.constant 0.288675129 : f32
    %396 = vector.broadcast %cst_110 : f32 to vector<10x10xf32>
    %397 = arith.mulf %395, %396 : vector<10x10xf32>
    %398 = arith.addf %397, %27 : vector<10x10xf32>
    %cst_111 = arith.constant dense<0xFF800000> : vector<10xf32>
    %399 = vector.multi_reduction <maximumf>, %398, %cst_111 [1] : vector<10x10xf32> to vector<10xf32>
    %400 = vector.shape_cast %399 : vector<10xf32> to vector<10x1xf32>
    %401 = vector.broadcast %400 : vector<10x1xf32> to vector<10x10xf32>
    %402 = arith.subf %398, %401 : vector<10x10xf32>
    %403 = math.exp %402 : vector<10x10xf32>
    %cst_112 = arith.constant dense<0.000000e+00> : vector<10xf32>
    %404 = vector.multi_reduction <add>, %403, %cst_112 [1] : vector<10x10xf32> to vector<10xf32>
    %405 = vector.shape_cast %404 : vector<10xf32> to vector<10x1xf32>
    %406 = vector.broadcast %405 : vector<10x1xf32> to vector<10x10xf32>
    %407 = arith.divf %403, %406 : vector<10x10xf32>
    %408 = vector.extract_strided_slice %327 {offsets = [0, 48], sizes = [10, 16], strides = [1, 1]} : vector<10x64xf32> to vector<10x16xf32>
    %409 = arith.truncf %407 : vector<10x10xf32> to vector<10x10xbf16>
    %410 = arith.truncf %408 : vector<10x16xf32> to vector<10x16xbf16>
    %cst_113 = arith.constant dense<0.000000e+00> : vector<10x16xf32>
    %411 = tpu.matmul %409, %410, %cst_113 {dimension_numbers = #tpu.dot_dimension_numbers<[1], [0], [0], [1], [0, 0, 1, 1], [], []>} : vector<10x10xbf16>, vector<10x16xbf16>, vector<10x16xf32> -> vector<10x16xf32>
    %412 = tpu.concatenate %348, %369, %390, %411 in 1 : vector<10x16xf32>, vector<10x16xf32>, vector<10x16xf32>, vector<10x16xf32> -> vector<10x64xf32>
    %c592 = arith.constant 592 : index
    %c0_114 = arith.constant 0 : index
    %413 = vector.load %arg3[%c592, %c0_114] : memref<1712x192xbf16, #tpu.memory_space<vmem>>, vector<64x48xbf16>
    %414 = arith.truncf %412 : vector<10x64xf32> to vector<10x64xbf16>
    %cst_115 = arith.constant dense<0.000000e+00> : vector<10x48xf32>
    %415 = tpu.matmul %414, %413, %cst_115 {dimension_numbers = #tpu.dot_dimension_numbers<[1], [0], [0], [1], [0, 0, 1, 1], [], []>} : vector<10x64xbf16>, vector<64x48xbf16>, vector<10x48xf32> -> vector<10x48xf32>
    %c88 = arith.constant 88 : index
    %c0_116 = arith.constant 0 : index
    %416 = vector.load %arg4[%c88, %c0_116] : memref<344x192xf32, #tpu.memory_space<vmem>>, vector<1x48xf32>
    %417 = vector.broadcast %416 : vector<1x48xf32> to vector<10x48xf32>
    %418 = arith.addf %415, %417 : vector<10x48xf32>
    %419 = arith.addf %293, %418 : vector<10x48xf32>
    %c96 = arith.constant 96 : index
    %c0_117 = arith.constant 0 : index
    %420 = vector.load %arg4[%c96, %c0_117] : memref<344x192xf32, #tpu.memory_space<vmem>>, vector<2x48xf32>
    %cst_118 = arith.constant dense<0.000000e+00> : vector<10xf32>
    %421 = vector.multi_reduction <add>, %419, %cst_118 [1] : vector<10x48xf32> to vector<10xf32>
    %422 = vector.shape_cast %421 : vector<10xf32> to vector<10x1xf32>
    %cst_119 = arith.constant 4.800000e+01 : f32
    %423 = vector.broadcast %cst_119 : f32 to vector<10x1xf32>
    %424 = arith.divf %422, %423 : vector<10x1xf32>
    %425 = vector.broadcast %424 : vector<10x1xf32> to vector<10x48xf32>
    %426 = arith.subf %419, %425 : vector<10x48xf32>
    %427 = arith.mulf %426, %426 : vector<10x48xf32>
    %cst_120 = arith.constant dense<0.000000e+00> : vector<10xf32>
    %428 = vector.multi_reduction <add>, %427, %cst_120 [1] : vector<10x48xf32> to vector<10xf32>
    %429 = vector.shape_cast %428 : vector<10xf32> to vector<10x1xf32>
    %cst_121 = arith.constant 4.800000e+01 : f32
    %430 = vector.broadcast %cst_121 : f32 to vector<10x1xf32>
    %431 = arith.divf %429, %430 : vector<10x1xf32>
    %432 = vector.broadcast %424 : vector<10x1xf32> to vector<10x48xf32>
    %433 = arith.subf %419, %432 : vector<10x48xf32>
    %cst_122 = arith.constant 9.99999974E-6 : f32
    %434 = vector.broadcast %cst_122 : f32 to vector<10x1xf32>
    %435 = arith.addf %431, %434 : vector<10x1xf32>
    %436 = math.rsqrt %435 : vector<10x1xf32>
    %437 = vector.broadcast %436 : vector<10x1xf32> to vector<10x48xf32>
    %438 = arith.mulf %433, %437 : vector<10x48xf32>
    %439 = vector.extract_strided_slice %420 {offsets = [0, 0], sizes = [1, 48], strides = [1, 1]} : vector<2x48xf32> to vector<1x48xf32>
    %440 = vector.broadcast %439 : vector<1x48xf32> to vector<10x48xf32>
    %441 = arith.mulf %438, %440 : vector<10x48xf32>
    %442 = vector.extract_strided_slice %420 {offsets = [1, 0], sizes = [1, 48], strides = [1, 1]} : vector<2x48xf32> to vector<1x48xf32>
    %443 = vector.broadcast %442 : vector<1x48xf32> to vector<10x48xf32>
    %444 = arith.addf %441, %443 : vector<10x48xf32>
    %c656 = arith.constant 656 : index
    %c0_123 = arith.constant 0 : index
    %445 = vector.load %arg3[%c656, %c0_123] : memref<1712x192xbf16, #tpu.memory_space<vmem>>, vector<48x192xbf16>
    %446 = arith.truncf %444 : vector<10x48xf32> to vector<10x48xbf16>
    %cst_124 = arith.constant dense<0.000000e+00> : vector<10x192xf32>
    %447 = tpu.matmul %446, %445, %cst_124 {dimension_numbers = #tpu.dot_dimension_numbers<[1], [0], [0], [1], [0, 0, 1, 1], [], []>} : vector<10x48xbf16>, vector<48x192xbf16>, vector<10x192xf32> -> vector<10x192xf32>
    %c104 = arith.constant 104 : index
    %c0_125 = arith.constant 0 : index
    %448 = vector.load %arg4[%c104, %c0_125] : memref<344x192xf32, #tpu.memory_space<vmem>>, vector<1x192xf32>
    %449 = vector.broadcast %448 : vector<1x192xf32> to vector<10x192xf32>
    %450 = arith.addf %447, %449 : vector<10x192xf32>
    %cst_126 = arith.constant 1.702000e+00 : f32
    %451 = vector.broadcast %cst_126 : f32 to vector<10x192xf32>
    %452 = arith.mulf %451, %450 : vector<10x192xf32>
    %453 = arith.negf %452 : vector<10x192xf32>
    %454 = math.exp %453 : vector<10x192xf32>
    %cst_127 = arith.constant 1.000000e+00 : f32
    %455 = vector.broadcast %cst_127 : f32 to vector<10x192xf32>
    %456 = arith.addf %455, %454 : vector<10x192xf32>
    %457 = arith.divf %455, %456 : vector<10x192xf32>
    %458 = arith.mulf %450, %457 : vector<10x192xf32>
    %c704 = arith.constant 704 : index
    %c0_128 = arith.constant 0 : index
    %459 = vector.load %arg3[%c704, %c0_128] : memref<1712x192xbf16, #tpu.memory_space<vmem>>, vector<192x48xbf16>
    %460 = arith.truncf %458 : vector<10x192xf32> to vector<10x192xbf16>
    %cst_129 = arith.constant dense<0.000000e+00> : vector<10x48xf32>
    %461 = tpu.matmul %460, %459, %cst_129 {dimension_numbers = #tpu.dot_dimension_numbers<[1], [0], [0], [1], [0, 0, 1, 1], [], []>} : vector<10x192xbf16>, vector<192x48xbf16>, vector<10x48xf32> -> vector<10x48xf32>
    %c112 = arith.constant 112 : index
    %c0_130 = arith.constant 0 : index
    %462 = vector.load %arg4[%c112, %c0_130] : memref<344x192xf32, #tpu.memory_space<vmem>>, vector<1x48xf32>
    %463 = vector.broadcast %462 : vector<1x48xf32> to vector<10x48xf32>
    %464 = arith.addf %461, %463 : vector<10x48xf32>
    %465 = arith.addf %419, %464 : vector<10x48xf32>
    %c896 = arith.constant 896 : index
    %c0_131 = arith.constant 0 : index
    %466 = vector.load %arg3[%c896, %c0_131] : memref<1712x192xbf16, #tpu.memory_space<vmem>>, vector<48x32xbf16>
    %467 = arith.truncf %465 : vector<10x48xf32> to vector<10x48xbf16>
    %cst_132 = arith.constant dense<0.000000e+00> : vector<10x32xf32>
    %468 = tpu.matmul %467, %466, %cst_132 {dimension_numbers = #tpu.dot_dimension_numbers<[1], [0], [0], [1], [0, 0, 1, 1], [], []>} : vector<10x48xbf16>, vector<48x32xbf16>, vector<10x32xf32> -> vector<10x32xf32>
    %c120 = arith.constant 120 : index
    %c0_133 = arith.constant 0 : index
    %469 = vector.load %arg4[%c120, %c0_133] : memref<344x192xf32, #tpu.memory_space<vmem>>, vector<1x32xf32>
    %470 = vector.broadcast %469 : vector<1x32xf32> to vector<10x32xf32>
    %471 = arith.addf %468, %470 : vector<10x32xf32>
    %c128 = arith.constant 128 : index
    %c0_134 = arith.constant 0 : index
    %472 = vector.load %arg4[%c128, %c0_134] : memref<344x192xf32, #tpu.memory_space<vmem>>, vector<2x32xf32>
    %cst_135 = arith.constant dense<0.000000e+00> : vector<10xf32>
    %473 = vector.multi_reduction <add>, %471, %cst_135 [1] : vector<10x32xf32> to vector<10xf32>
    %474 = vector.shape_cast %473 : vector<10xf32> to vector<10x1xf32>
    %cst_136 = arith.constant 3.200000e+01 : f32
    %475 = vector.broadcast %cst_136 : f32 to vector<10x1xf32>
    %476 = arith.divf %474, %475 : vector<10x1xf32>
    %477 = vector.broadcast %476 : vector<10x1xf32> to vector<10x32xf32>
    %478 = arith.subf %471, %477 : vector<10x32xf32>
    %479 = arith.mulf %478, %478 : vector<10x32xf32>
    %cst_137 = arith.constant dense<0.000000e+00> : vector<10xf32>
    %480 = vector.multi_reduction <add>, %479, %cst_137 [1] : vector<10x32xf32> to vector<10xf32>
    %481 = vector.shape_cast %480 : vector<10xf32> to vector<10x1xf32>
    %cst_138 = arith.constant 3.200000e+01 : f32
    %482 = vector.broadcast %cst_138 : f32 to vector<10x1xf32>
    %483 = arith.divf %481, %482 : vector<10x1xf32>
    %484 = vector.broadcast %476 : vector<10x1xf32> to vector<10x32xf32>
    %485 = arith.subf %471, %484 : vector<10x32xf32>
    %cst_139 = arith.constant 9.99999996E-13 : f32
    %486 = vector.broadcast %cst_139 : f32 to vector<10x1xf32>
    %487 = arith.addf %483, %486 : vector<10x1xf32>
    %488 = math.rsqrt %487 : vector<10x1xf32>
    %489 = vector.broadcast %488 : vector<10x1xf32> to vector<10x32xf32>
    %490 = arith.mulf %485, %489 : vector<10x32xf32>
    %491 = vector.extract_strided_slice %472 {offsets = [0, 0], sizes = [1, 32], strides = [1, 1]} : vector<2x32xf32> to vector<1x32xf32>
    %492 = vector.broadcast %491 : vector<1x32xf32> to vector<10x32xf32>
    %493 = arith.mulf %490, %492 : vector<10x32xf32>
    %494 = vector.extract_strided_slice %472 {offsets = [1, 0], sizes = [1, 32], strides = [1, 1]} : vector<2x32xf32> to vector<1x32xf32>
    %495 = vector.broadcast %494 : vector<1x32xf32> to vector<10x32xf32>
    %496 = arith.addf %493, %495 : vector<10x32xf32>
    %c0_140 = arith.constant 0 : index
    %c0_141 = arith.constant 0 : index
    %497 = vector.load %arg1[%c0_140, %c0_141] : memref<16x2xi32, #tpu.memory_space<vmem>>, vector<16x1xi32>
    %c0_142 = arith.constant 0 : index
    %c1 = arith.constant 1 : index
    %498 = vector.load %arg1[%c0_142, %c1] : memref<16x2xi32, #tpu.memory_space<vmem>>, vector<16x1xi32>
    %499 = tpu.iota {dimensions = array<i32: 1>} : vector<16x64xi32>
    %500 = vector.broadcast %497 : vector<16x1xi32> to vector<16x64xi32>
    %501 = arith.cmpi eq, %499, %500 : vector<16x64xi32>
    %502 = arith.extui %501 : vector<16x64xi1> to vector<16x64xi32>
    %503 = arith.sitofp %502 : vector<16x64xi32> to vector<16x64xf32>
    %c944 = arith.constant 944 : index
    %c0_143 = arith.constant 0 : index
    %504 = vector.load %arg3[%c944, %c0_143] : memref<1712x192xbf16, #tpu.memory_space<vmem>>, vector<64x32xbf16>
    %505 = arith.truncf %503 : vector<16x64xf32> to vector<16x64xbf16>
    %cst_144 = arith.constant dense<0.000000e+00> : vector<16x32xf32>
    %506 = tpu.matmul %505, %504, %cst_144 {dimension_numbers = #tpu.dot_dimension_numbers<[1], [0], [0], [1], [0, 0, 1, 1], [], []>} : vector<16x64xbf16>, vector<64x32xbf16>, vector<16x32xf32> -> vector<16x32xf32>
    %c136 = arith.constant 136 : index
    %c0_145 = arith.constant 0 : index
    %507 = vector.load %arg4[%c136, %c0_145] : memref<344x192xf32, #tpu.memory_space<vmem>>, vector<16x32xf32>
    %508 = arith.addf %506, %507 : vector<16x32xf32>
    %c152 = arith.constant 152 : index
    %c0_146 = arith.constant 0 : index
    %509 = vector.load %arg4[%c152, %c0_146] : memref<344x192xf32, #tpu.memory_space<vmem>>, vector<2x32xf32>
    %cst_147 = arith.constant dense<0.000000e+00> : vector<16xf32>
    %510 = vector.multi_reduction <add>, %508, %cst_147 [1] : vector<16x32xf32> to vector<16xf32>
    %511 = vector.shape_cast %510 : vector<16xf32> to vector<16x1xf32>
    %cst_148 = arith.constant 3.200000e+01 : f32
    %512 = vector.broadcast %cst_148 : f32 to vector<16x1xf32>
    %513 = arith.divf %511, %512 : vector<16x1xf32>
    %514 = vector.broadcast %513 : vector<16x1xf32> to vector<16x32xf32>
    %515 = arith.subf %508, %514 : vector<16x32xf32>
    %516 = arith.mulf %515, %515 : vector<16x32xf32>
    %cst_149 = arith.constant dense<0.000000e+00> : vector<16xf32>
    %517 = vector.multi_reduction <add>, %516, %cst_149 [1] : vector<16x32xf32> to vector<16xf32>
    %518 = vector.shape_cast %517 : vector<16xf32> to vector<16x1xf32>
    %cst_150 = arith.constant 3.200000e+01 : f32
    %519 = vector.broadcast %cst_150 : f32 to vector<16x1xf32>
    %520 = arith.divf %518, %519 : vector<16x1xf32>
    %521 = vector.broadcast %513 : vector<16x1xf32> to vector<16x32xf32>
    %522 = arith.subf %508, %521 : vector<16x32xf32>
    %cst_151 = arith.constant 9.99999996E-13 : f32
    %523 = vector.broadcast %cst_151 : f32 to vector<16x1xf32>
    %524 = arith.addf %520, %523 : vector<16x1xf32>
    %525 = math.rsqrt %524 : vector<16x1xf32>
    %526 = vector.broadcast %525 : vector<16x1xf32> to vector<16x32xf32>
    %527 = arith.mulf %522, %526 : vector<16x32xf32>
    %528 = vector.extract_strided_slice %509 {offsets = [0, 0], sizes = [1, 32], strides = [1, 1]} : vector<2x32xf32> to vector<1x32xf32>
    %529 = vector.broadcast %528 : vector<1x32xf32> to vector<16x32xf32>
    %530 = arith.mulf %527, %529 : vector<16x32xf32>
    %531 = vector.extract_strided_slice %509 {offsets = [1, 0], sizes = [1, 32], strides = [1, 1]} : vector<2x32xf32> to vector<1x32xf32>
    %532 = vector.broadcast %531 : vector<1x32xf32> to vector<16x32xf32>
    %533 = arith.addf %530, %532 : vector<16x32xf32>
    %c1008 = arith.constant 1008 : index
    %c0_152 = arith.constant 0 : index
    %534 = vector.load %arg3[%c1008, %c0_152] : memref<1712x192xbf16, #tpu.memory_space<vmem>>, vector<32x96xbf16>
    %535 = arith.truncf %533 : vector<16x32xf32> to vector<16x32xbf16>
    %cst_153 = arith.constant dense<0.000000e+00> : vector<16x96xf32>
    %536 = tpu.matmul %535, %534, %cst_153 {dimension_numbers = #tpu.dot_dimension_numbers<[1], [0], [0], [1], [0, 0, 1, 1], [], []>} : vector<16x32xbf16>, vector<32x96xbf16>, vector<16x96xf32> -> vector<16x96xf32>
    %c160 = arith.constant 160 : index
    %c0_154 = arith.constant 0 : index
    %537 = vector.load %arg4[%c160, %c0_154] : memref<344x192xf32, #tpu.memory_space<vmem>>, vector<1x96xf32>
    %538 = vector.broadcast %537 : vector<1x96xf32> to vector<16x96xf32>
    %539 = arith.addf %536, %538 : vector<16x96xf32>
    %540 = vector.extract_strided_slice %539 {offsets = [0, 0], sizes = [16, 32], strides = [1, 1]} : vector<16x96xf32> to vector<16x32xf32>
    %541 = vector.extract_strided_slice %539 {offsets = [0, 32], sizes = [16, 32], strides = [1, 1]} : vector<16x96xf32> to vector<16x32xf32>
    %542 = vector.extract_strided_slice %539 {offsets = [0, 64], sizes = [16, 32], strides = [1, 1]} : vector<16x96xf32> to vector<16x32xf32>
    %543 = vector.extract_strided_slice %540 {offsets = [0, 0], sizes = [16, 8], strides = [1, 1]} : vector<16x32xf32> to vector<16x8xf32>
    %544 = vector.extract_strided_slice %541 {offsets = [0, 0], sizes = [16, 8], strides = [1, 1]} : vector<16x32xf32> to vector<16x8xf32>
    %545 = arith.truncf %543 : vector<16x8xf32> to vector<16x8xbf16>
    %546 = arith.truncf %544 : vector<16x8xf32> to vector<16x8xbf16>
    %cst_155 = arith.constant dense<0.000000e+00> : vector<16x16xf32>
    %547 = tpu.matmul %545, %546, %cst_155 {dimension_numbers = #tpu.dot_dimension_numbers<[1], [1], [0], [0], [0, 0, 1, 0], [], []>} : vector<16x8xbf16>, vector<16x8xbf16>, vector<16x16xf32> -> vector<16x16xf32>
    %cst_156 = arith.constant 0.353553385 : f32
    %548 = vector.broadcast %cst_156 : f32 to vector<16x16xf32>
    %549 = arith.mulf %547, %548 : vector<16x16xf32>
    %550 = arith.addf %549, %62 : vector<16x16xf32>
    %cst_157 = arith.constant dense<0xFF800000> : vector<16xf32>
    %551 = vector.multi_reduction <maximumf>, %550, %cst_157 [1] : vector<16x16xf32> to vector<16xf32>
    %552 = vector.shape_cast %551 : vector<16xf32> to vector<16x1xf32>
    %553 = vector.broadcast %552 : vector<16x1xf32> to vector<16x16xf32>
    %554 = arith.subf %550, %553 : vector<16x16xf32>
    %555 = math.exp %554 : vector<16x16xf32>
    %cst_158 = arith.constant dense<0.000000e+00> : vector<16xf32>
    %556 = vector.multi_reduction <add>, %555, %cst_158 [1] : vector<16x16xf32> to vector<16xf32>
    %557 = vector.shape_cast %556 : vector<16xf32> to vector<16x1xf32>
    %558 = vector.broadcast %557 : vector<16x1xf32> to vector<16x16xf32>
    %559 = arith.divf %555, %558 : vector<16x16xf32>
    %560 = vector.extract_strided_slice %542 {offsets = [0, 0], sizes = [16, 8], strides = [1, 1]} : vector<16x32xf32> to vector<16x8xf32>
    %561 = arith.truncf %559 : vector<16x16xf32> to vector<16x16xbf16>
    %562 = arith.truncf %560 : vector<16x8xf32> to vector<16x8xbf16>
    %cst_159 = arith.constant dense<0.000000e+00> : vector<16x8xf32>
    %563 = tpu.matmul %561, %562, %cst_159 {dimension_numbers = #tpu.dot_dimension_numbers<[1], [0], [0], [1], [0, 0, 1, 1], [], []>} : vector<16x16xbf16>, vector<16x8xbf16>, vector<16x8xf32> -> vector<16x8xf32>
    %564 = vector.extract_strided_slice %540 {offsets = [0, 8], sizes = [16, 8], strides = [1, 1]} : vector<16x32xf32> to vector<16x8xf32>
    %565 = vector.extract_strided_slice %541 {offsets = [0, 8], sizes = [16, 8], strides = [1, 1]} : vector<16x32xf32> to vector<16x8xf32>
    %566 = arith.truncf %564 : vector<16x8xf32> to vector<16x8xbf16>
    %567 = arith.truncf %565 : vector<16x8xf32> to vector<16x8xbf16>
    %cst_160 = arith.constant dense<0.000000e+00> : vector<16x16xf32>
    %568 = tpu.matmul %566, %567, %cst_160 {dimension_numbers = #tpu.dot_dimension_numbers<[1], [1], [0], [0], [0, 0, 1, 0], [], []>} : vector<16x8xbf16>, vector<16x8xbf16>, vector<16x16xf32> -> vector<16x16xf32>
    %cst_161 = arith.constant 0.353553385 : f32
    %569 = vector.broadcast %cst_161 : f32 to vector<16x16xf32>
    %570 = arith.mulf %568, %569 : vector<16x16xf32>
    %571 = arith.addf %570, %62 : vector<16x16xf32>
    %cst_162 = arith.constant dense<0xFF800000> : vector<16xf32>
    %572 = vector.multi_reduction <maximumf>, %571, %cst_162 [1] : vector<16x16xf32> to vector<16xf32>
    %573 = vector.shape_cast %572 : vector<16xf32> to vector<16x1xf32>
    %574 = vector.broadcast %573 : vector<16x1xf32> to vector<16x16xf32>
    %575 = arith.subf %571, %574 : vector<16x16xf32>
    %576 = math.exp %575 : vector<16x16xf32>
    %cst_163 = arith.constant dense<0.000000e+00> : vector<16xf32>
    %577 = vector.multi_reduction <add>, %576, %cst_163 [1] : vector<16x16xf32> to vector<16xf32>
    %578 = vector.shape_cast %577 : vector<16xf32> to vector<16x1xf32>
    %579 = vector.broadcast %578 : vector<16x1xf32> to vector<16x16xf32>
    %580 = arith.divf %576, %579 : vector<16x16xf32>
    %581 = vector.extract_strided_slice %542 {offsets = [0, 8], sizes = [16, 8], strides = [1, 1]} : vector<16x32xf32> to vector<16x8xf32>
    %582 = arith.truncf %580 : vector<16x16xf32> to vector<16x16xbf16>
    %583 = arith.truncf %581 : vector<16x8xf32> to vector<16x8xbf16>
    %cst_164 = arith.constant dense<0.000000e+00> : vector<16x8xf32>
    %584 = tpu.matmul %582, %583, %cst_164 {dimension_numbers = #tpu.dot_dimension_numbers<[1], [0], [0], [1], [0, 0, 1, 1], [], []>} : vector<16x16xbf16>, vector<16x8xbf16>, vector<16x8xf32> -> vector<16x8xf32>
    %585 = vector.extract_strided_slice %540 {offsets = [0, 16], sizes = [16, 8], strides = [1, 1]} : vector<16x32xf32> to vector<16x8xf32>
    %586 = vector.extract_strided_slice %541 {offsets = [0, 16], sizes = [16, 8], strides = [1, 1]} : vector<16x32xf32> to vector<16x8xf32>
    %587 = arith.truncf %585 : vector<16x8xf32> to vector<16x8xbf16>
    %588 = arith.truncf %586 : vector<16x8xf32> to vector<16x8xbf16>
    %cst_165 = arith.constant dense<0.000000e+00> : vector<16x16xf32>
    %589 = tpu.matmul %587, %588, %cst_165 {dimension_numbers = #tpu.dot_dimension_numbers<[1], [1], [0], [0], [0, 0, 1, 0], [], []>} : vector<16x8xbf16>, vector<16x8xbf16>, vector<16x16xf32> -> vector<16x16xf32>
    %cst_166 = arith.constant 0.353553385 : f32
    %590 = vector.broadcast %cst_166 : f32 to vector<16x16xf32>
    %591 = arith.mulf %589, %590 : vector<16x16xf32>
    %592 = arith.addf %591, %62 : vector<16x16xf32>
    %cst_167 = arith.constant dense<0xFF800000> : vector<16xf32>
    %593 = vector.multi_reduction <maximumf>, %592, %cst_167 [1] : vector<16x16xf32> to vector<16xf32>
    %594 = vector.shape_cast %593 : vector<16xf32> to vector<16x1xf32>
    %595 = vector.broadcast %594 : vector<16x1xf32> to vector<16x16xf32>
    %596 = arith.subf %592, %595 : vector<16x16xf32>
    %597 = math.exp %596 : vector<16x16xf32>
    %cst_168 = arith.constant dense<0.000000e+00> : vector<16xf32>
    %598 = vector.multi_reduction <add>, %597, %cst_168 [1] : vector<16x16xf32> to vector<16xf32>
    %599 = vector.shape_cast %598 : vector<16xf32> to vector<16x1xf32>
    %600 = vector.broadcast %599 : vector<16x1xf32> to vector<16x16xf32>
    %601 = arith.divf %597, %600 : vector<16x16xf32>
    %602 = vector.extract_strided_slice %542 {offsets = [0, 16], sizes = [16, 8], strides = [1, 1]} : vector<16x32xf32> to vector<16x8xf32>
    %603 = arith.truncf %601 : vector<16x16xf32> to vector<16x16xbf16>
    %604 = arith.truncf %602 : vector<16x8xf32> to vector<16x8xbf16>
    %cst_169 = arith.constant dense<0.000000e+00> : vector<16x8xf32>
    %605 = tpu.matmul %603, %604, %cst_169 {dimension_numbers = #tpu.dot_dimension_numbers<[1], [0], [0], [1], [0, 0, 1, 1], [], []>} : vector<16x16xbf16>, vector<16x8xbf16>, vector<16x8xf32> -> vector<16x8xf32>
    %606 = vector.extract_strided_slice %540 {offsets = [0, 24], sizes = [16, 8], strides = [1, 1]} : vector<16x32xf32> to vector<16x8xf32>
    %607 = vector.extract_strided_slice %541 {offsets = [0, 24], sizes = [16, 8], strides = [1, 1]} : vector<16x32xf32> to vector<16x8xf32>
    %608 = arith.truncf %606 : vector<16x8xf32> to vector<16x8xbf16>
    %609 = arith.truncf %607 : vector<16x8xf32> to vector<16x8xbf16>
    %cst_170 = arith.constant dense<0.000000e+00> : vector<16x16xf32>
    %610 = tpu.matmul %608, %609, %cst_170 {dimension_numbers = #tpu.dot_dimension_numbers<[1], [1], [0], [0], [0, 0, 1, 0], [], []>} : vector<16x8xbf16>, vector<16x8xbf16>, vector<16x16xf32> -> vector<16x16xf32>
    %cst_171 = arith.constant 0.353553385 : f32
    %611 = vector.broadcast %cst_171 : f32 to vector<16x16xf32>
    %612 = arith.mulf %610, %611 : vector<16x16xf32>
    %613 = arith.addf %612, %62 : vector<16x16xf32>
    %cst_172 = arith.constant dense<0xFF800000> : vector<16xf32>
    %614 = vector.multi_reduction <maximumf>, %613, %cst_172 [1] : vector<16x16xf32> to vector<16xf32>
    %615 = vector.shape_cast %614 : vector<16xf32> to vector<16x1xf32>
    %616 = vector.broadcast %615 : vector<16x1xf32> to vector<16x16xf32>
    %617 = arith.subf %613, %616 : vector<16x16xf32>
    %618 = math.exp %617 : vector<16x16xf32>
    %cst_173 = arith.constant dense<0.000000e+00> : vector<16xf32>
    %619 = vector.multi_reduction <add>, %618, %cst_173 [1] : vector<16x16xf32> to vector<16xf32>
    %620 = vector.shape_cast %619 : vector<16xf32> to vector<16x1xf32>
    %621 = vector.broadcast %620 : vector<16x1xf32> to vector<16x16xf32>
    %622 = arith.divf %618, %621 : vector<16x16xf32>
    %623 = vector.extract_strided_slice %542 {offsets = [0, 24], sizes = [16, 8], strides = [1, 1]} : vector<16x32xf32> to vector<16x8xf32>
    %624 = arith.truncf %622 : vector<16x16xf32> to vector<16x16xbf16>
    %625 = arith.truncf %623 : vector<16x8xf32> to vector<16x8xbf16>
    %cst_174 = arith.constant dense<0.000000e+00> : vector<16x8xf32>
    %626 = tpu.matmul %624, %625, %cst_174 {dimension_numbers = #tpu.dot_dimension_numbers<[1], [0], [0], [1], [0, 0, 1, 1], [], []>} : vector<16x16xbf16>, vector<16x8xbf16>, vector<16x8xf32> -> vector<16x8xf32>
    %627 = tpu.concatenate %563, %584, %605, %626 in 1 : vector<16x8xf32>, vector<16x8xf32>, vector<16x8xf32>, vector<16x8xf32> -> vector<16x32xf32>
    %c1040 = arith.constant 1040 : index
    %c0_175 = arith.constant 0 : index
    %628 = vector.load %arg3[%c1040, %c0_175] : memref<1712x192xbf16, #tpu.memory_space<vmem>>, vector<32x32xbf16>
    %629 = arith.truncf %627 : vector<16x32xf32> to vector<16x32xbf16>
    %cst_176 = arith.constant dense<0.000000e+00> : vector<16x32xf32>
    %630 = tpu.matmul %629, %628, %cst_176 {dimension_numbers = #tpu.dot_dimension_numbers<[1], [0], [0], [1], [0, 0, 1, 1], [], []>} : vector<16x32xbf16>, vector<32x32xbf16>, vector<16x32xf32> -> vector<16x32xf32>
    %c168 = arith.constant 168 : index
    %c0_177 = arith.constant 0 : index
    %631 = vector.load %arg4[%c168, %c0_177] : memref<344x192xf32, #tpu.memory_space<vmem>>, vector<1x32xf32>
    %632 = vector.broadcast %631 : vector<1x32xf32> to vector<16x32xf32>
    %633 = arith.addf %630, %632 : vector<16x32xf32>
    %634 = arith.addf %533, %633 : vector<16x32xf32>
    %c176 = arith.constant 176 : index
    %c0_178 = arith.constant 0 : index
    %635 = vector.load %arg4[%c176, %c0_178] : memref<344x192xf32, #tpu.memory_space<vmem>>, vector<2x32xf32>
    %cst_179 = arith.constant dense<0.000000e+00> : vector<16xf32>
    %636 = vector.multi_reduction <add>, %634, %cst_179 [1] : vector<16x32xf32> to vector<16xf32>
    %637 = vector.shape_cast %636 : vector<16xf32> to vector<16x1xf32>
    %cst_180 = arith.constant 3.200000e+01 : f32
    %638 = vector.broadcast %cst_180 : f32 to vector<16x1xf32>
    %639 = arith.divf %637, %638 : vector<16x1xf32>
    %640 = vector.broadcast %639 : vector<16x1xf32> to vector<16x32xf32>
    %641 = arith.subf %634, %640 : vector<16x32xf32>
    %642 = arith.mulf %641, %641 : vector<16x32xf32>
    %cst_181 = arith.constant dense<0.000000e+00> : vector<16xf32>
    %643 = vector.multi_reduction <add>, %642, %cst_181 [1] : vector<16x32xf32> to vector<16xf32>
    %644 = vector.shape_cast %643 : vector<16xf32> to vector<16x1xf32>
    %cst_182 = arith.constant 3.200000e+01 : f32
    %645 = vector.broadcast %cst_182 : f32 to vector<16x1xf32>
    %646 = arith.divf %644, %645 : vector<16x1xf32>
    %647 = vector.broadcast %639 : vector<16x1xf32> to vector<16x32xf32>
    %648 = arith.subf %634, %647 : vector<16x32xf32>
    %cst_183 = arith.constant 9.99999996E-13 : f32
    %649 = vector.broadcast %cst_183 : f32 to vector<16x1xf32>
    %650 = arith.addf %646, %649 : vector<16x1xf32>
    %651 = math.rsqrt %650 : vector<16x1xf32>
    %652 = vector.broadcast %651 : vector<16x1xf32> to vector<16x32xf32>
    %653 = arith.mulf %648, %652 : vector<16x32xf32>
    %654 = vector.extract_strided_slice %635 {offsets = [0, 0], sizes = [1, 32], strides = [1, 1]} : vector<2x32xf32> to vector<1x32xf32>
    %655 = vector.broadcast %654 : vector<1x32xf32> to vector<16x32xf32>
    %656 = arith.mulf %653, %655 : vector<16x32xf32>
    %657 = vector.extract_strided_slice %635 {offsets = [1, 0], sizes = [1, 32], strides = [1, 1]} : vector<2x32xf32> to vector<1x32xf32>
    %658 = vector.broadcast %657 : vector<1x32xf32> to vector<16x32xf32>
    %659 = arith.addf %656, %658 : vector<16x32xf32>
    %c1072 = arith.constant 1072 : index
    %c0_184 = arith.constant 0 : index
    %660 = vector.load %arg3[%c1072, %c0_184] : memref<1712x192xbf16, #tpu.memory_space<vmem>>, vector<32x32xbf16>
    %661 = arith.truncf %659 : vector<16x32xf32> to vector<16x32xbf16>
    %cst_185 = arith.constant dense<0.000000e+00> : vector<16x32xf32>
    %662 = tpu.matmul %661, %660, %cst_185 {dimension_numbers = #tpu.dot_dimension_numbers<[1], [0], [0], [1], [0, 0, 1, 1], [], []>} : vector<16x32xbf16>, vector<32x32xbf16>, vector<16x32xf32> -> vector<16x32xf32>
    %c184 = arith.constant 184 : index
    %c0_186 = arith.constant 0 : index
    %663 = vector.load %arg4[%c184, %c0_186] : memref<344x192xf32, #tpu.memory_space<vmem>>, vector<1x32xf32>
    %664 = vector.broadcast %663 : vector<1x32xf32> to vector<16x32xf32>
    %665 = arith.addf %662, %664 : vector<16x32xf32>
    %c1104 = arith.constant 1104 : index
    %c0_187 = arith.constant 0 : index
    %666 = vector.load %arg3[%c1104, %c0_187] : memref<1712x192xbf16, #tpu.memory_space<vmem>>, vector<32x64xbf16>
    %667 = arith.truncf %496 : vector<10x32xf32> to vector<10x32xbf16>
    %cst_188 = arith.constant dense<0.000000e+00> : vector<10x64xf32>
    %668 = tpu.matmul %667, %666, %cst_188 {dimension_numbers = #tpu.dot_dimension_numbers<[1], [0], [0], [1], [0, 0, 1, 1], [], []>} : vector<10x32xbf16>, vector<32x64xbf16>, vector<10x64xf32> -> vector<10x64xf32>
    %c192_189 = arith.constant 192 : index
    %c0_190 = arith.constant 0 : index
    %669 = vector.load %arg4[%c192_189, %c0_190] : memref<344x192xf32, #tpu.memory_space<vmem>>, vector<1x64xf32>
    %670 = vector.broadcast %669 : vector<1x64xf32> to vector<10x64xf32>
    %671 = arith.addf %668, %670 : vector<10x64xf32>
    %672 = vector.extract_strided_slice %671 {offsets = [0, 0], sizes = [10, 32], strides = [1, 1]} : vector<10x64xf32> to vector<10x32xf32>
    %673 = vector.extract_strided_slice %671 {offsets = [0, 32], sizes = [10, 32], strides = [1, 1]} : vector<10x64xf32> to vector<10x32xf32>
    %674 = vector.extract_strided_slice %665 {offsets = [0, 0], sizes = [16, 8], strides = [1, 1]} : vector<16x32xf32> to vector<16x8xf32>
    %675 = vector.extract_strided_slice %672 {offsets = [0, 0], sizes = [10, 8], strides = [1, 1]} : vector<10x32xf32> to vector<10x8xf32>
    %676 = arith.truncf %674 : vector<16x8xf32> to vector<16x8xbf16>
    %677 = arith.truncf %675 : vector<10x8xf32> to vector<10x8xbf16>
    %cst_191 = arith.constant dense<0.000000e+00> : vector<16x10xf32>
    %678 = tpu.matmul %676, %677, %cst_191 {dimension_numbers = #tpu.dot_dimension_numbers<[1], [1], [0], [0], [0, 0, 1, 0], [], []>} : vector<16x8xbf16>, vector<10x8xbf16>, vector<16x10xf32> -> vector<16x10xf32>
    %cst_192 = arith.constant 0.353553385 : f32
    %679 = vector.broadcast %cst_192 : f32 to vector<16x10xf32>
    %680 = arith.mulf %678, %679 : vector<16x10xf32>
    %681 = arith.addf %680, %90 : vector<16x10xf32>
    %cst_193 = arith.constant dense<0xFF800000> : vector<16xf32>
    %682 = vector.multi_reduction <maximumf>, %681, %cst_193 [1] : vector<16x10xf32> to vector<16xf32>
    %683 = vector.shape_cast %682 : vector<16xf32> to vector<16x1xf32>
    %684 = vector.broadcast %683 : vector<16x1xf32> to vector<16x10xf32>
    %685 = arith.subf %681, %684 : vector<16x10xf32>
    %686 = math.exp %685 : vector<16x10xf32>
    %cst_194 = arith.constant dense<0.000000e+00> : vector<16xf32>
    %687 = vector.multi_reduction <add>, %686, %cst_194 [1] : vector<16x10xf32> to vector<16xf32>
    %688 = vector.shape_cast %687 : vector<16xf32> to vector<16x1xf32>
    %689 = vector.broadcast %688 : vector<16x1xf32> to vector<16x10xf32>
    %690 = arith.divf %686, %689 : vector<16x10xf32>
    %691 = vector.extract_strided_slice %673 {offsets = [0, 0], sizes = [10, 8], strides = [1, 1]} : vector<10x32xf32> to vector<10x8xf32>
    %692 = arith.truncf %690 : vector<16x10xf32> to vector<16x10xbf16>
    %693 = arith.truncf %691 : vector<10x8xf32> to vector<10x8xbf16>
    %cst_195 = arith.constant dense<0.000000e+00> : vector<16x8xf32>
    %694 = tpu.matmul %692, %693, %cst_195 {dimension_numbers = #tpu.dot_dimension_numbers<[1], [0], [0], [1], [0, 0, 1, 1], [], []>} : vector<16x10xbf16>, vector<10x8xbf16>, vector<16x8xf32> -> vector<16x8xf32>
    %695 = vector.extract_strided_slice %665 {offsets = [0, 8], sizes = [16, 8], strides = [1, 1]} : vector<16x32xf32> to vector<16x8xf32>
    %696 = vector.extract_strided_slice %672 {offsets = [0, 8], sizes = [10, 8], strides = [1, 1]} : vector<10x32xf32> to vector<10x8xf32>
    %697 = arith.truncf %695 : vector<16x8xf32> to vector<16x8xbf16>
    %698 = arith.truncf %696 : vector<10x8xf32> to vector<10x8xbf16>
    %cst_196 = arith.constant dense<0.000000e+00> : vector<16x10xf32>
    %699 = tpu.matmul %697, %698, %cst_196 {dimension_numbers = #tpu.dot_dimension_numbers<[1], [1], [0], [0], [0, 0, 1, 0], [], []>} : vector<16x8xbf16>, vector<10x8xbf16>, vector<16x10xf32> -> vector<16x10xf32>
    %cst_197 = arith.constant 0.353553385 : f32
    %700 = vector.broadcast %cst_197 : f32 to vector<16x10xf32>
    %701 = arith.mulf %699, %700 : vector<16x10xf32>
    %702 = arith.addf %701, %90 : vector<16x10xf32>
    %cst_198 = arith.constant dense<0xFF800000> : vector<16xf32>
    %703 = vector.multi_reduction <maximumf>, %702, %cst_198 [1] : vector<16x10xf32> to vector<16xf32>
    %704 = vector.shape_cast %703 : vector<16xf32> to vector<16x1xf32>
    %705 = vector.broadcast %704 : vector<16x1xf32> to vector<16x10xf32>
    %706 = arith.subf %702, %705 : vector<16x10xf32>
    %707 = math.exp %706 : vector<16x10xf32>
    %cst_199 = arith.constant dense<0.000000e+00> : vector<16xf32>
    %708 = vector.multi_reduction <add>, %707, %cst_199 [1] : vector<16x10xf32> to vector<16xf32>
    %709 = vector.shape_cast %708 : vector<16xf32> to vector<16x1xf32>
    %710 = vector.broadcast %709 : vector<16x1xf32> to vector<16x10xf32>
    %711 = arith.divf %707, %710 : vector<16x10xf32>
    %712 = vector.extract_strided_slice %673 {offsets = [0, 8], sizes = [10, 8], strides = [1, 1]} : vector<10x32xf32> to vector<10x8xf32>
    %713 = arith.truncf %711 : vector<16x10xf32> to vector<16x10xbf16>
    %714 = arith.truncf %712 : vector<10x8xf32> to vector<10x8xbf16>
    %cst_200 = arith.constant dense<0.000000e+00> : vector<16x8xf32>
    %715 = tpu.matmul %713, %714, %cst_200 {dimension_numbers = #tpu.dot_dimension_numbers<[1], [0], [0], [1], [0, 0, 1, 1], [], []>} : vector<16x10xbf16>, vector<10x8xbf16>, vector<16x8xf32> -> vector<16x8xf32>
    %716 = vector.extract_strided_slice %665 {offsets = [0, 16], sizes = [16, 8], strides = [1, 1]} : vector<16x32xf32> to vector<16x8xf32>
    %717 = vector.extract_strided_slice %672 {offsets = [0, 16], sizes = [10, 8], strides = [1, 1]} : vector<10x32xf32> to vector<10x8xf32>
    %718 = arith.truncf %716 : vector<16x8xf32> to vector<16x8xbf16>
    %719 = arith.truncf %717 : vector<10x8xf32> to vector<10x8xbf16>
    %cst_201 = arith.constant dense<0.000000e+00> : vector<16x10xf32>
    %720 = tpu.matmul %718, %719, %cst_201 {dimension_numbers = #tpu.dot_dimension_numbers<[1], [1], [0], [0], [0, 0, 1, 0], [], []>} : vector<16x8xbf16>, vector<10x8xbf16>, vector<16x10xf32> -> vector<16x10xf32>
    %cst_202 = arith.constant 0.353553385 : f32
    %721 = vector.broadcast %cst_202 : f32 to vector<16x10xf32>
    %722 = arith.mulf %720, %721 : vector<16x10xf32>
    %723 = arith.addf %722, %90 : vector<16x10xf32>
    %cst_203 = arith.constant dense<0xFF800000> : vector<16xf32>
    %724 = vector.multi_reduction <maximumf>, %723, %cst_203 [1] : vector<16x10xf32> to vector<16xf32>
    %725 = vector.shape_cast %724 : vector<16xf32> to vector<16x1xf32>
    %726 = vector.broadcast %725 : vector<16x1xf32> to vector<16x10xf32>
    %727 = arith.subf %723, %726 : vector<16x10xf32>
    %728 = math.exp %727 : vector<16x10xf32>
    %cst_204 = arith.constant dense<0.000000e+00> : vector<16xf32>
    %729 = vector.multi_reduction <add>, %728, %cst_204 [1] : vector<16x10xf32> to vector<16xf32>
    %730 = vector.shape_cast %729 : vector<16xf32> to vector<16x1xf32>
    %731 = vector.broadcast %730 : vector<16x1xf32> to vector<16x10xf32>
    %732 = arith.divf %728, %731 : vector<16x10xf32>
    %733 = vector.extract_strided_slice %673 {offsets = [0, 16], sizes = [10, 8], strides = [1, 1]} : vector<10x32xf32> to vector<10x8xf32>
    %734 = arith.truncf %732 : vector<16x10xf32> to vector<16x10xbf16>
    %735 = arith.truncf %733 : vector<10x8xf32> to vector<10x8xbf16>
    %cst_205 = arith.constant dense<0.000000e+00> : vector<16x8xf32>
    %736 = tpu.matmul %734, %735, %cst_205 {dimension_numbers = #tpu.dot_dimension_numbers<[1], [0], [0], [1], [0, 0, 1, 1], [], []>} : vector<16x10xbf16>, vector<10x8xbf16>, vector<16x8xf32> -> vector<16x8xf32>
    %737 = vector.extract_strided_slice %665 {offsets = [0, 24], sizes = [16, 8], strides = [1, 1]} : vector<16x32xf32> to vector<16x8xf32>
    %738 = vector.extract_strided_slice %672 {offsets = [0, 24], sizes = [10, 8], strides = [1, 1]} : vector<10x32xf32> to vector<10x8xf32>
    %739 = arith.truncf %737 : vector<16x8xf32> to vector<16x8xbf16>
    %740 = arith.truncf %738 : vector<10x8xf32> to vector<10x8xbf16>
    %cst_206 = arith.constant dense<0.000000e+00> : vector<16x10xf32>
    %741 = tpu.matmul %739, %740, %cst_206 {dimension_numbers = #tpu.dot_dimension_numbers<[1], [1], [0], [0], [0, 0, 1, 0], [], []>} : vector<16x8xbf16>, vector<10x8xbf16>, vector<16x10xf32> -> vector<16x10xf32>
    %cst_207 = arith.constant 0.353553385 : f32
    %742 = vector.broadcast %cst_207 : f32 to vector<16x10xf32>
    %743 = arith.mulf %741, %742 : vector<16x10xf32>
    %744 = arith.addf %743, %90 : vector<16x10xf32>
    %cst_208 = arith.constant dense<0xFF800000> : vector<16xf32>
    %745 = vector.multi_reduction <maximumf>, %744, %cst_208 [1] : vector<16x10xf32> to vector<16xf32>
    %746 = vector.shape_cast %745 : vector<16xf32> to vector<16x1xf32>
    %747 = vector.broadcast %746 : vector<16x1xf32> to vector<16x10xf32>
    %748 = arith.subf %744, %747 : vector<16x10xf32>
    %749 = math.exp %748 : vector<16x10xf32>
    %cst_209 = arith.constant dense<0.000000e+00> : vector<16xf32>
    %750 = vector.multi_reduction <add>, %749, %cst_209 [1] : vector<16x10xf32> to vector<16xf32>
    %751 = vector.shape_cast %750 : vector<16xf32> to vector<16x1xf32>
    %752 = vector.broadcast %751 : vector<16x1xf32> to vector<16x10xf32>
    %753 = arith.divf %749, %752 : vector<16x10xf32>
    %754 = vector.extract_strided_slice %673 {offsets = [0, 24], sizes = [10, 8], strides = [1, 1]} : vector<10x32xf32> to vector<10x8xf32>
    %755 = arith.truncf %753 : vector<16x10xf32> to vector<16x10xbf16>
    %756 = arith.truncf %754 : vector<10x8xf32> to vector<10x8xbf16>
    %cst_210 = arith.constant dense<0.000000e+00> : vector<16x8xf32>
    %757 = tpu.matmul %755, %756, %cst_210 {dimension_numbers = #tpu.dot_dimension_numbers<[1], [0], [0], [1], [0, 0, 1, 1], [], []>} : vector<16x10xbf16>, vector<10x8xbf16>, vector<16x8xf32> -> vector<16x8xf32>
    %758 = tpu.concatenate %694, %715, %736, %757 in 1 : vector<16x8xf32>, vector<16x8xf32>, vector<16x8xf32>, vector<16x8xf32> -> vector<16x32xf32>
    %c1136 = arith.constant 1136 : index
    %c0_211 = arith.constant 0 : index
    %759 = vector.load %arg3[%c1136, %c0_211] : memref<1712x192xbf16, #tpu.memory_space<vmem>>, vector<32x32xbf16>
    %760 = arith.truncf %758 : vector<16x32xf32> to vector<16x32xbf16>
    %cst_212 = arith.constant dense<0.000000e+00> : vector<16x32xf32>
    %761 = tpu.matmul %760, %759, %cst_212 {dimension_numbers = #tpu.dot_dimension_numbers<[1], [0], [0], [1], [0, 0, 1, 1], [], []>} : vector<16x32xbf16>, vector<32x32xbf16>, vector<16x32xf32> -> vector<16x32xf32>
    %c200 = arith.constant 200 : index
    %c0_213 = arith.constant 0 : index
    %762 = vector.load %arg4[%c200, %c0_213] : memref<344x192xf32, #tpu.memory_space<vmem>>, vector<1x32xf32>
    %763 = vector.broadcast %762 : vector<1x32xf32> to vector<16x32xf32>
    %764 = arith.addf %761, %763 : vector<16x32xf32>
    %765 = arith.addf %659, %764 : vector<16x32xf32>
    %c208 = arith.constant 208 : index
    %c0_214 = arith.constant 0 : index
    %766 = vector.load %arg4[%c208, %c0_214] : memref<344x192xf32, #tpu.memory_space<vmem>>, vector<2x32xf32>
    %cst_215 = arith.constant dense<0.000000e+00> : vector<16xf32>
    %767 = vector.multi_reduction <add>, %765, %cst_215 [1] : vector<16x32xf32> to vector<16xf32>
    %768 = vector.shape_cast %767 : vector<16xf32> to vector<16x1xf32>
    %cst_216 = arith.constant 3.200000e+01 : f32
    %769 = vector.broadcast %cst_216 : f32 to vector<16x1xf32>
    %770 = arith.divf %768, %769 : vector<16x1xf32>
    %771 = vector.broadcast %770 : vector<16x1xf32> to vector<16x32xf32>
    %772 = arith.subf %765, %771 : vector<16x32xf32>
    %773 = arith.mulf %772, %772 : vector<16x32xf32>
    %cst_217 = arith.constant dense<0.000000e+00> : vector<16xf32>
    %774 = vector.multi_reduction <add>, %773, %cst_217 [1] : vector<16x32xf32> to vector<16xf32>
    %775 = vector.shape_cast %774 : vector<16xf32> to vector<16x1xf32>
    %cst_218 = arith.constant 3.200000e+01 : f32
    %776 = vector.broadcast %cst_218 : f32 to vector<16x1xf32>
    %777 = arith.divf %775, %776 : vector<16x1xf32>
    %778 = vector.broadcast %770 : vector<16x1xf32> to vector<16x32xf32>
    %779 = arith.subf %765, %778 : vector<16x32xf32>
    %cst_219 = arith.constant 9.99999996E-13 : f32
    %780 = vector.broadcast %cst_219 : f32 to vector<16x1xf32>
    %781 = arith.addf %777, %780 : vector<16x1xf32>
    %782 = math.rsqrt %781 : vector<16x1xf32>
    %783 = vector.broadcast %782 : vector<16x1xf32> to vector<16x32xf32>
    %784 = arith.mulf %779, %783 : vector<16x32xf32>
    %785 = vector.extract_strided_slice %766 {offsets = [0, 0], sizes = [1, 32], strides = [1, 1]} : vector<2x32xf32> to vector<1x32xf32>
    %786 = vector.broadcast %785 : vector<1x32xf32> to vector<16x32xf32>
    %787 = arith.mulf %784, %786 : vector<16x32xf32>
    %788 = vector.extract_strided_slice %766 {offsets = [1, 0], sizes = [1, 32], strides = [1, 1]} : vector<2x32xf32> to vector<1x32xf32>
    %789 = vector.broadcast %788 : vector<1x32xf32> to vector<16x32xf32>
    %790 = arith.addf %787, %789 : vector<16x32xf32>
    %c1168 = arith.constant 1168 : index
    %c0_220 = arith.constant 0 : index
    %791 = vector.load %arg3[%c1168, %c0_220] : memref<1712x192xbf16, #tpu.memory_space<vmem>>, vector<32x128xbf16>
    %792 = arith.truncf %790 : vector<16x32xf32> to vector<16x32xbf16>
    %cst_221 = arith.constant dense<0.000000e+00> : vector<16x128xf32>
    %793 = tpu.matmul %792, %791, %cst_221 {dimension_numbers = #tpu.dot_dimension_numbers<[1], [0], [0], [1], [0, 0, 1, 1], [], []>} : vector<16x32xbf16>, vector<32x128xbf16>, vector<16x128xf32> -> vector<16x128xf32>
    %c216 = arith.constant 216 : index
    %c0_222 = arith.constant 0 : index
    %794 = vector.load %arg4[%c216, %c0_222] : memref<344x192xf32, #tpu.memory_space<vmem>>, vector<1x128xf32>
    %795 = vector.broadcast %794 : vector<1x128xf32> to vector<16x128xf32>
    %796 = arith.addf %793, %795 : vector<16x128xf32>
    %797 = arith.mulf %796, %796 : vector<16x128xf32>
    %798 = arith.mulf %796, %797 : vector<16x128xf32>
    %cst_223 = arith.constant 4.471500e-02 : f32
    %799 = vector.broadcast %cst_223 : f32 to vector<16x128xf32>
    %800 = arith.mulf %799, %798 : vector<16x128xf32>
    %801 = arith.addf %796, %800 : vector<16x128xf32>
    %cst_224 = arith.constant 0.797884583 : f32
    %802 = vector.broadcast %cst_224 : f32 to vector<16x128xf32>
    %803 = arith.mulf %802, %801 : vector<16x128xf32>
    %804 = math.tanh %803 : vector<16x128xf32>
    %cst_225 = arith.constant 1.000000e+00 : f32
    %805 = vector.broadcast %cst_225 : f32 to vector<16x128xf32>
    %806 = arith.addf %805, %804 : vector<16x128xf32>
    %cst_226 = arith.constant 5.000000e-01 : f32
    %807 = vector.broadcast %cst_226 : f32 to vector<16x128xf32>
    %808 = arith.mulf %807, %806 : vector<16x128xf32>
    %809 = arith.mulf %796, %808 : vector<16x128xf32>
    %c1200 = arith.constant 1200 : index
    %c0_227 = arith.constant 0 : index
    %810 = vector.load %arg3[%c1200, %c0_227] : memref<1712x192xbf16, #tpu.memory_space<vmem>>, vector<128x32xbf16>
    %811 = arith.truncf %809 : vector<16x128xf32> to vector<16x128xbf16>
    %cst_228 = arith.constant dense<0.000000e+00> : vector<16x32xf32>
    %812 = tpu.matmul %811, %810, %cst_228 {dimension_numbers = #tpu.dot_dimension_numbers<[1], [0], [0], [1], [0, 0, 1, 1], [], []>} : vector<16x128xbf16>, vector<128x32xbf16>, vector<16x32xf32> -> vector<16x32xf32>
    %c224 = arith.constant 224 : index
    %c0_229 = arith.constant 0 : index
    %813 = vector.load %arg4[%c224, %c0_229] : memref<344x192xf32, #tpu.memory_space<vmem>>, vector<1x32xf32>
    %814 = vector.broadcast %813 : vector<1x32xf32> to vector<16x32xf32>
    %815 = arith.addf %812, %814 : vector<16x32xf32>
    %816 = arith.addf %790, %815 : vector<16x32xf32>
    %c232 = arith.constant 232 : index
    %c0_230 = arith.constant 0 : index
    %817 = vector.load %arg4[%c232, %c0_230] : memref<344x192xf32, #tpu.memory_space<vmem>>, vector<2x32xf32>
    %cst_231 = arith.constant dense<0.000000e+00> : vector<16xf32>
    %818 = vector.multi_reduction <add>, %816, %cst_231 [1] : vector<16x32xf32> to vector<16xf32>
    %819 = vector.shape_cast %818 : vector<16xf32> to vector<16x1xf32>
    %cst_232 = arith.constant 3.200000e+01 : f32
    %820 = vector.broadcast %cst_232 : f32 to vector<16x1xf32>
    %821 = arith.divf %819, %820 : vector<16x1xf32>
    %822 = vector.broadcast %821 : vector<16x1xf32> to vector<16x32xf32>
    %823 = arith.subf %816, %822 : vector<16x32xf32>
    %824 = arith.mulf %823, %823 : vector<16x32xf32>
    %cst_233 = arith.constant dense<0.000000e+00> : vector<16xf32>
    %825 = vector.multi_reduction <add>, %824, %cst_233 [1] : vector<16x32xf32> to vector<16xf32>
    %826 = vector.shape_cast %825 : vector<16xf32> to vector<16x1xf32>
    %cst_234 = arith.constant 3.200000e+01 : f32
    %827 = vector.broadcast %cst_234 : f32 to vector<16x1xf32>
    %828 = arith.divf %826, %827 : vector<16x1xf32>
    %829 = vector.broadcast %821 : vector<16x1xf32> to vector<16x32xf32>
    %830 = arith.subf %816, %829 : vector<16x32xf32>
    %cst_235 = arith.constant 9.99999996E-13 : f32
    %831 = vector.broadcast %cst_235 : f32 to vector<16x1xf32>
    %832 = arith.addf %828, %831 : vector<16x1xf32>
    %833 = math.rsqrt %832 : vector<16x1xf32>
    %834 = vector.broadcast %833 : vector<16x1xf32> to vector<16x32xf32>
    %835 = arith.mulf %830, %834 : vector<16x32xf32>
    %836 = vector.extract_strided_slice %817 {offsets = [0, 0], sizes = [1, 32], strides = [1, 1]} : vector<2x32xf32> to vector<1x32xf32>
    %837 = vector.broadcast %836 : vector<1x32xf32> to vector<16x32xf32>
    %838 = arith.mulf %835, %837 : vector<16x32xf32>
    %839 = vector.extract_strided_slice %817 {offsets = [1, 0], sizes = [1, 32], strides = [1, 1]} : vector<2x32xf32> to vector<1x32xf32>
    %840 = vector.broadcast %839 : vector<1x32xf32> to vector<16x32xf32>
    %841 = arith.addf %838, %840 : vector<16x32xf32>
    %c1328 = arith.constant 1328 : index
    %c0_236 = arith.constant 0 : index
    %842 = vector.load %arg3[%c1328, %c0_236] : memref<1712x192xbf16, #tpu.memory_space<vmem>>, vector<32x96xbf16>
    %843 = arith.truncf %841 : vector<16x32xf32> to vector<16x32xbf16>
    %cst_237 = arith.constant dense<0.000000e+00> : vector<16x96xf32>
    %844 = tpu.matmul %843, %842, %cst_237 {dimension_numbers = #tpu.dot_dimension_numbers<[1], [0], [0], [1], [0, 0, 1, 1], [], []>} : vector<16x32xbf16>, vector<32x96xbf16>, vector<16x96xf32> -> vector<16x96xf32>
    %c240_238 = arith.constant 240 : index
    %c0_239 = arith.constant 0 : index
    %845 = vector.load %arg4[%c240_238, %c0_239] : memref<344x192xf32, #tpu.memory_space<vmem>>, vector<1x96xf32>
    %846 = vector.broadcast %845 : vector<1x96xf32> to vector<16x96xf32>
    %847 = arith.addf %844, %846 : vector<16x96xf32>
    %848 = vector.extract_strided_slice %847 {offsets = [0, 0], sizes = [16, 32], strides = [1, 1]} : vector<16x96xf32> to vector<16x32xf32>
    %849 = vector.extract_strided_slice %847 {offsets = [0, 32], sizes = [16, 32], strides = [1, 1]} : vector<16x96xf32> to vector<16x32xf32>
    %850 = vector.extract_strided_slice %847 {offsets = [0, 64], sizes = [16, 32], strides = [1, 1]} : vector<16x96xf32> to vector<16x32xf32>
    %851 = vector.extract_strided_slice %848 {offsets = [0, 0], sizes = [16, 8], strides = [1, 1]} : vector<16x32xf32> to vector<16x8xf32>
    %852 = vector.extract_strided_slice %849 {offsets = [0, 0], sizes = [16, 8], strides = [1, 1]} : vector<16x32xf32> to vector<16x8xf32>
    %853 = arith.truncf %851 : vector<16x8xf32> to vector<16x8xbf16>
    %854 = arith.truncf %852 : vector<16x8xf32> to vector<16x8xbf16>
    %cst_240 = arith.constant dense<0.000000e+00> : vector<16x16xf32>
    %855 = tpu.matmul %853, %854, %cst_240 {dimension_numbers = #tpu.dot_dimension_numbers<[1], [1], [0], [0], [0, 0, 1, 0], [], []>} : vector<16x8xbf16>, vector<16x8xbf16>, vector<16x16xf32> -> vector<16x16xf32>
    %cst_241 = arith.constant 0.353553385 : f32
    %856 = vector.broadcast %cst_241 : f32 to vector<16x16xf32>
    %857 = arith.mulf %855, %856 : vector<16x16xf32>
    %858 = arith.addf %857, %62 : vector<16x16xf32>
    %cst_242 = arith.constant dense<0xFF800000> : vector<16xf32>
    %859 = vector.multi_reduction <maximumf>, %858, %cst_242 [1] : vector<16x16xf32> to vector<16xf32>
    %860 = vector.shape_cast %859 : vector<16xf32> to vector<16x1xf32>
    %861 = vector.broadcast %860 : vector<16x1xf32> to vector<16x16xf32>
    %862 = arith.subf %858, %861 : vector<16x16xf32>
    %863 = math.exp %862 : vector<16x16xf32>
    %cst_243 = arith.constant dense<0.000000e+00> : vector<16xf32>
    %864 = vector.multi_reduction <add>, %863, %cst_243 [1] : vector<16x16xf32> to vector<16xf32>
    %865 = vector.shape_cast %864 : vector<16xf32> to vector<16x1xf32>
    %866 = vector.broadcast %865 : vector<16x1xf32> to vector<16x16xf32>
    %867 = arith.divf %863, %866 : vector<16x16xf32>
    %868 = vector.extract_strided_slice %850 {offsets = [0, 0], sizes = [16, 8], strides = [1, 1]} : vector<16x32xf32> to vector<16x8xf32>
    %869 = arith.truncf %867 : vector<16x16xf32> to vector<16x16xbf16>
    %870 = arith.truncf %868 : vector<16x8xf32> to vector<16x8xbf16>
    %cst_244 = arith.constant dense<0.000000e+00> : vector<16x8xf32>
    %871 = tpu.matmul %869, %870, %cst_244 {dimension_numbers = #tpu.dot_dimension_numbers<[1], [0], [0], [1], [0, 0, 1, 1], [], []>} : vector<16x16xbf16>, vector<16x8xbf16>, vector<16x8xf32> -> vector<16x8xf32>
    %872 = vector.extract_strided_slice %848 {offsets = [0, 8], sizes = [16, 8], strides = [1, 1]} : vector<16x32xf32> to vector<16x8xf32>
    %873 = vector.extract_strided_slice %849 {offsets = [0, 8], sizes = [16, 8], strides = [1, 1]} : vector<16x32xf32> to vector<16x8xf32>
    %874 = arith.truncf %872 : vector<16x8xf32> to vector<16x8xbf16>
    %875 = arith.truncf %873 : vector<16x8xf32> to vector<16x8xbf16>
    %cst_245 = arith.constant dense<0.000000e+00> : vector<16x16xf32>
    %876 = tpu.matmul %874, %875, %cst_245 {dimension_numbers = #tpu.dot_dimension_numbers<[1], [1], [0], [0], [0, 0, 1, 0], [], []>} : vector<16x8xbf16>, vector<16x8xbf16>, vector<16x16xf32> -> vector<16x16xf32>
    %cst_246 = arith.constant 0.353553385 : f32
    %877 = vector.broadcast %cst_246 : f32 to vector<16x16xf32>
    %878 = arith.mulf %876, %877 : vector<16x16xf32>
    %879 = arith.addf %878, %62 : vector<16x16xf32>
    %cst_247 = arith.constant dense<0xFF800000> : vector<16xf32>
    %880 = vector.multi_reduction <maximumf>, %879, %cst_247 [1] : vector<16x16xf32> to vector<16xf32>
    %881 = vector.shape_cast %880 : vector<16xf32> to vector<16x1xf32>
    %882 = vector.broadcast %881 : vector<16x1xf32> to vector<16x16xf32>
    %883 = arith.subf %879, %882 : vector<16x16xf32>
    %884 = math.exp %883 : vector<16x16xf32>
    %cst_248 = arith.constant dense<0.000000e+00> : vector<16xf32>
    %885 = vector.multi_reduction <add>, %884, %cst_248 [1] : vector<16x16xf32> to vector<16xf32>
    %886 = vector.shape_cast %885 : vector<16xf32> to vector<16x1xf32>
    %887 = vector.broadcast %886 : vector<16x1xf32> to vector<16x16xf32>
    %888 = arith.divf %884, %887 : vector<16x16xf32>
    %889 = vector.extract_strided_slice %850 {offsets = [0, 8], sizes = [16, 8], strides = [1, 1]} : vector<16x32xf32> to vector<16x8xf32>
    %890 = arith.truncf %888 : vector<16x16xf32> to vector<16x16xbf16>
    %891 = arith.truncf %889 : vector<16x8xf32> to vector<16x8xbf16>
    %cst_249 = arith.constant dense<0.000000e+00> : vector<16x8xf32>
    %892 = tpu.matmul %890, %891, %cst_249 {dimension_numbers = #tpu.dot_dimension_numbers<[1], [0], [0], [1], [0, 0, 1, 1], [], []>} : vector<16x16xbf16>, vector<16x8xbf16>, vector<16x8xf32> -> vector<16x8xf32>
    %893 = vector.extract_strided_slice %848 {offsets = [0, 16], sizes = [16, 8], strides = [1, 1]} : vector<16x32xf32> to vector<16x8xf32>
    %894 = vector.extract_strided_slice %849 {offsets = [0, 16], sizes = [16, 8], strides = [1, 1]} : vector<16x32xf32> to vector<16x8xf32>
    %895 = arith.truncf %893 : vector<16x8xf32> to vector<16x8xbf16>
    %896 = arith.truncf %894 : vector<16x8xf32> to vector<16x8xbf16>
    %cst_250 = arith.constant dense<0.000000e+00> : vector<16x16xf32>
    %897 = tpu.matmul %895, %896, %cst_250 {dimension_numbers = #tpu.dot_dimension_numbers<[1], [1], [0], [0], [0, 0, 1, 0], [], []>} : vector<16x8xbf16>, vector<16x8xbf16>, vector<16x16xf32> -> vector<16x16xf32>
    %cst_251 = arith.constant 0.353553385 : f32
    %898 = vector.broadcast %cst_251 : f32 to vector<16x16xf32>
    %899 = arith.mulf %897, %898 : vector<16x16xf32>
    %900 = arith.addf %899, %62 : vector<16x16xf32>
    %cst_252 = arith.constant dense<0xFF800000> : vector<16xf32>
    %901 = vector.multi_reduction <maximumf>, %900, %cst_252 [1] : vector<16x16xf32> to vector<16xf32>
    %902 = vector.shape_cast %901 : vector<16xf32> to vector<16x1xf32>
    %903 = vector.broadcast %902 : vector<16x1xf32> to vector<16x16xf32>
    %904 = arith.subf %900, %903 : vector<16x16xf32>
    %905 = math.exp %904 : vector<16x16xf32>
    %cst_253 = arith.constant dense<0.000000e+00> : vector<16xf32>
    %906 = vector.multi_reduction <add>, %905, %cst_253 [1] : vector<16x16xf32> to vector<16xf32>
    %907 = vector.shape_cast %906 : vector<16xf32> to vector<16x1xf32>
    %908 = vector.broadcast %907 : vector<16x1xf32> to vector<16x16xf32>
    %909 = arith.divf %905, %908 : vector<16x16xf32>
    %910 = vector.extract_strided_slice %850 {offsets = [0, 16], sizes = [16, 8], strides = [1, 1]} : vector<16x32xf32> to vector<16x8xf32>
    %911 = arith.truncf %909 : vector<16x16xf32> to vector<16x16xbf16>
    %912 = arith.truncf %910 : vector<16x8xf32> to vector<16x8xbf16>
    %cst_254 = arith.constant dense<0.000000e+00> : vector<16x8xf32>
    %913 = tpu.matmul %911, %912, %cst_254 {dimension_numbers = #tpu.dot_dimension_numbers<[1], [0], [0], [1], [0, 0, 1, 1], [], []>} : vector<16x16xbf16>, vector<16x8xbf16>, vector<16x8xf32> -> vector<16x8xf32>
    %914 = vector.extract_strided_slice %848 {offsets = [0, 24], sizes = [16, 8], strides = [1, 1]} : vector<16x32xf32> to vector<16x8xf32>
    %915 = vector.extract_strided_slice %849 {offsets = [0, 24], sizes = [16, 8], strides = [1, 1]} : vector<16x32xf32> to vector<16x8xf32>
    %916 = arith.truncf %914 : vector<16x8xf32> to vector<16x8xbf16>
    %917 = arith.truncf %915 : vector<16x8xf32> to vector<16x8xbf16>
    %cst_255 = arith.constant dense<0.000000e+00> : vector<16x16xf32>
    %918 = tpu.matmul %916, %917, %cst_255 {dimension_numbers = #tpu.dot_dimension_numbers<[1], [1], [0], [0], [0, 0, 1, 0], [], []>} : vector<16x8xbf16>, vector<16x8xbf16>, vector<16x16xf32> -> vector<16x16xf32>
    %cst_256 = arith.constant 0.353553385 : f32
    %919 = vector.broadcast %cst_256 : f32 to vector<16x16xf32>
    %920 = arith.mulf %918, %919 : vector<16x16xf32>
    %921 = arith.addf %920, %62 : vector<16x16xf32>
    %cst_257 = arith.constant dense<0xFF800000> : vector<16xf32>
    %922 = vector.multi_reduction <maximumf>, %921, %cst_257 [1] : vector<16x16xf32> to vector<16xf32>
    %923 = vector.shape_cast %922 : vector<16xf32> to vector<16x1xf32>
    %924 = vector.broadcast %923 : vector<16x1xf32> to vector<16x16xf32>
    %925 = arith.subf %921, %924 : vector<16x16xf32>
    %926 = math.exp %925 : vector<16x16xf32>
    %cst_258 = arith.constant dense<0.000000e+00> : vector<16xf32>
    %927 = vector.multi_reduction <add>, %926, %cst_258 [1] : vector<16x16xf32> to vector<16xf32>
    %928 = vector.shape_cast %927 : vector<16xf32> to vector<16x1xf32>
    %929 = vector.broadcast %928 : vector<16x1xf32> to vector<16x16xf32>
    %930 = arith.divf %926, %929 : vector<16x16xf32>
    %931 = vector.extract_strided_slice %850 {offsets = [0, 24], sizes = [16, 8], strides = [1, 1]} : vector<16x32xf32> to vector<16x8xf32>
    %932 = arith.truncf %930 : vector<16x16xf32> to vector<16x16xbf16>
    %933 = arith.truncf %931 : vector<16x8xf32> to vector<16x8xbf16>
    %cst_259 = arith.constant dense<0.000000e+00> : vector<16x8xf32>
    %934 = tpu.matmul %932, %933, %cst_259 {dimension_numbers = #tpu.dot_dimension_numbers<[1], [0], [0], [1], [0, 0, 1, 1], [], []>} : vector<16x16xbf16>, vector<16x8xbf16>, vector<16x8xf32> -> vector<16x8xf32>
    %935 = tpu.concatenate %871, %892, %913, %934 in 1 : vector<16x8xf32>, vector<16x8xf32>, vector<16x8xf32>, vector<16x8xf32> -> vector<16x32xf32>
    %c1360 = arith.constant 1360 : index
    %c0_260 = arith.constant 0 : index
    %936 = vector.load %arg3[%c1360, %c0_260] : memref<1712x192xbf16, #tpu.memory_space<vmem>>, vector<32x32xbf16>
    %937 = arith.truncf %935 : vector<16x32xf32> to vector<16x32xbf16>
    %cst_261 = arith.constant dense<0.000000e+00> : vector<16x32xf32>
    %938 = tpu.matmul %937, %936, %cst_261 {dimension_numbers = #tpu.dot_dimension_numbers<[1], [0], [0], [1], [0, 0, 1, 1], [], []>} : vector<16x32xbf16>, vector<32x32xbf16>, vector<16x32xf32> -> vector<16x32xf32>
    %c248 = arith.constant 248 : index
    %c0_262 = arith.constant 0 : index
    %939 = vector.load %arg4[%c248, %c0_262] : memref<344x192xf32, #tpu.memory_space<vmem>>, vector<1x32xf32>
    %940 = vector.broadcast %939 : vector<1x32xf32> to vector<16x32xf32>
    %941 = arith.addf %938, %940 : vector<16x32xf32>
    %942 = arith.addf %841, %941 : vector<16x32xf32>
    %c256 = arith.constant 256 : index
    %c0_263 = arith.constant 0 : index
    %943 = vector.load %arg4[%c256, %c0_263] : memref<344x192xf32, #tpu.memory_space<vmem>>, vector<2x32xf32>
    %cst_264 = arith.constant dense<0.000000e+00> : vector<16xf32>
    %944 = vector.multi_reduction <add>, %942, %cst_264 [1] : vector<16x32xf32> to vector<16xf32>
    %945 = vector.shape_cast %944 : vector<16xf32> to vector<16x1xf32>
    %cst_265 = arith.constant 3.200000e+01 : f32
    %946 = vector.broadcast %cst_265 : f32 to vector<16x1xf32>
    %947 = arith.divf %945, %946 : vector<16x1xf32>
    %948 = vector.broadcast %947 : vector<16x1xf32> to vector<16x32xf32>
    %949 = arith.subf %942, %948 : vector<16x32xf32>
    %950 = arith.mulf %949, %949 : vector<16x32xf32>
    %cst_266 = arith.constant dense<0.000000e+00> : vector<16xf32>
    %951 = vector.multi_reduction <add>, %950, %cst_266 [1] : vector<16x32xf32> to vector<16xf32>
    %952 = vector.shape_cast %951 : vector<16xf32> to vector<16x1xf32>
    %cst_267 = arith.constant 3.200000e+01 : f32
    %953 = vector.broadcast %cst_267 : f32 to vector<16x1xf32>
    %954 = arith.divf %952, %953 : vector<16x1xf32>
    %955 = vector.broadcast %947 : vector<16x1xf32> to vector<16x32xf32>
    %956 = arith.subf %942, %955 : vector<16x32xf32>
    %cst_268 = arith.constant 9.99999996E-13 : f32
    %957 = vector.broadcast %cst_268 : f32 to vector<16x1xf32>
    %958 = arith.addf %954, %957 : vector<16x1xf32>
    %959 = math.rsqrt %958 : vector<16x1xf32>
    %960 = vector.broadcast %959 : vector<16x1xf32> to vector<16x32xf32>
    %961 = arith.mulf %956, %960 : vector<16x32xf32>
    %962 = vector.extract_strided_slice %943 {offsets = [0, 0], sizes = [1, 32], strides = [1, 1]} : vector<2x32xf32> to vector<1x32xf32>
    %963 = vector.broadcast %962 : vector<1x32xf32> to vector<16x32xf32>
    %964 = arith.mulf %961, %963 : vector<16x32xf32>
    %965 = vector.extract_strided_slice %943 {offsets = [1, 0], sizes = [1, 32], strides = [1, 1]} : vector<2x32xf32> to vector<1x32xf32>
    %966 = vector.broadcast %965 : vector<1x32xf32> to vector<16x32xf32>
    %967 = arith.addf %964, %966 : vector<16x32xf32>
    %c1392 = arith.constant 1392 : index
    %c0_269 = arith.constant 0 : index
    %968 = vector.load %arg3[%c1392, %c0_269] : memref<1712x192xbf16, #tpu.memory_space<vmem>>, vector<32x32xbf16>
    %969 = arith.truncf %967 : vector<16x32xf32> to vector<16x32xbf16>
    %cst_270 = arith.constant dense<0.000000e+00> : vector<16x32xf32>
    %970 = tpu.matmul %969, %968, %cst_270 {dimension_numbers = #tpu.dot_dimension_numbers<[1], [0], [0], [1], [0, 0, 1, 1], [], []>} : vector<16x32xbf16>, vector<32x32xbf16>, vector<16x32xf32> -> vector<16x32xf32>
    %c264 = arith.constant 264 : index
    %c0_271 = arith.constant 0 : index
    %971 = vector.load %arg4[%c264, %c0_271] : memref<344x192xf32, #tpu.memory_space<vmem>>, vector<1x32xf32>
    %972 = vector.broadcast %971 : vector<1x32xf32> to vector<16x32xf32>
    %973 = arith.addf %970, %972 : vector<16x32xf32>
    %c1424 = arith.constant 1424 : index
    %c0_272 = arith.constant 0 : index
    %974 = vector.load %arg3[%c1424, %c0_272] : memref<1712x192xbf16, #tpu.memory_space<vmem>>, vector<32x64xbf16>
    %975 = arith.truncf %496 : vector<10x32xf32> to vector<10x32xbf16>
    %cst_273 = arith.constant dense<0.000000e+00> : vector<10x64xf32>
    %976 = tpu.matmul %975, %974, %cst_273 {dimension_numbers = #tpu.dot_dimension_numbers<[1], [0], [0], [1], [0, 0, 1, 1], [], []>} : vector<10x32xbf16>, vector<32x64xbf16>, vector<10x64xf32> -> vector<10x64xf32>
    %c272 = arith.constant 272 : index
    %c0_274 = arith.constant 0 : index
    %977 = vector.load %arg4[%c272, %c0_274] : memref<344x192xf32, #tpu.memory_space<vmem>>, vector<1x64xf32>
    %978 = vector.broadcast %977 : vector<1x64xf32> to vector<10x64xf32>
    %979 = arith.addf %976, %978 : vector<10x64xf32>
    %980 = vector.extract_strided_slice %979 {offsets = [0, 0], sizes = [10, 32], strides = [1, 1]} : vector<10x64xf32> to vector<10x32xf32>
    %981 = vector.extract_strided_slice %979 {offsets = [0, 32], sizes = [10, 32], strides = [1, 1]} : vector<10x64xf32> to vector<10x32xf32>
    %982 = vector.extract_strided_slice %973 {offsets = [0, 0], sizes = [16, 8], strides = [1, 1]} : vector<16x32xf32> to vector<16x8xf32>
    %983 = vector.extract_strided_slice %980 {offsets = [0, 0], sizes = [10, 8], strides = [1, 1]} : vector<10x32xf32> to vector<10x8xf32>
    %984 = arith.truncf %982 : vector<16x8xf32> to vector<16x8xbf16>
    %985 = arith.truncf %983 : vector<10x8xf32> to vector<10x8xbf16>
    %cst_275 = arith.constant dense<0.000000e+00> : vector<16x10xf32>
    %986 = tpu.matmul %984, %985, %cst_275 {dimension_numbers = #tpu.dot_dimension_numbers<[1], [1], [0], [0], [0, 0, 1, 0], [], []>} : vector<16x8xbf16>, vector<10x8xbf16>, vector<16x10xf32> -> vector<16x10xf32>
    %cst_276 = arith.constant 0.353553385 : f32
    %987 = vector.broadcast %cst_276 : f32 to vector<16x10xf32>
    %988 = arith.mulf %986, %987 : vector<16x10xf32>
    %989 = arith.addf %988, %90 : vector<16x10xf32>
    %cst_277 = arith.constant dense<0xFF800000> : vector<16xf32>
    %990 = vector.multi_reduction <maximumf>, %989, %cst_277 [1] : vector<16x10xf32> to vector<16xf32>
    %991 = vector.shape_cast %990 : vector<16xf32> to vector<16x1xf32>
    %992 = vector.broadcast %991 : vector<16x1xf32> to vector<16x10xf32>
    %993 = arith.subf %989, %992 : vector<16x10xf32>
    %994 = math.exp %993 : vector<16x10xf32>
    %cst_278 = arith.constant dense<0.000000e+00> : vector<16xf32>
    %995 = vector.multi_reduction <add>, %994, %cst_278 [1] : vector<16x10xf32> to vector<16xf32>
    %996 = vector.shape_cast %995 : vector<16xf32> to vector<16x1xf32>
    %997 = vector.broadcast %996 : vector<16x1xf32> to vector<16x10xf32>
    %998 = arith.divf %994, %997 : vector<16x10xf32>
    %999 = vector.extract_strided_slice %981 {offsets = [0, 0], sizes = [10, 8], strides = [1, 1]} : vector<10x32xf32> to vector<10x8xf32>
    %1000 = arith.truncf %998 : vector<16x10xf32> to vector<16x10xbf16>
    %1001 = arith.truncf %999 : vector<10x8xf32> to vector<10x8xbf16>
    %cst_279 = arith.constant dense<0.000000e+00> : vector<16x8xf32>
    %1002 = tpu.matmul %1000, %1001, %cst_279 {dimension_numbers = #tpu.dot_dimension_numbers<[1], [0], [0], [1], [0, 0, 1, 1], [], []>} : vector<16x10xbf16>, vector<10x8xbf16>, vector<16x8xf32> -> vector<16x8xf32>
    %1003 = vector.extract_strided_slice %973 {offsets = [0, 8], sizes = [16, 8], strides = [1, 1]} : vector<16x32xf32> to vector<16x8xf32>
    %1004 = vector.extract_strided_slice %980 {offsets = [0, 8], sizes = [10, 8], strides = [1, 1]} : vector<10x32xf32> to vector<10x8xf32>
    %1005 = arith.truncf %1003 : vector<16x8xf32> to vector<16x8xbf16>
    %1006 = arith.truncf %1004 : vector<10x8xf32> to vector<10x8xbf16>
    %cst_280 = arith.constant dense<0.000000e+00> : vector<16x10xf32>
    %1007 = tpu.matmul %1005, %1006, %cst_280 {dimension_numbers = #tpu.dot_dimension_numbers<[1], [1], [0], [0], [0, 0, 1, 0], [], []>} : vector<16x8xbf16>, vector<10x8xbf16>, vector<16x10xf32> -> vector<16x10xf32>
    %cst_281 = arith.constant 0.353553385 : f32
    %1008 = vector.broadcast %cst_281 : f32 to vector<16x10xf32>
    %1009 = arith.mulf %1007, %1008 : vector<16x10xf32>
    %1010 = arith.addf %1009, %90 : vector<16x10xf32>
    %cst_282 = arith.constant dense<0xFF800000> : vector<16xf32>
    %1011 = vector.multi_reduction <maximumf>, %1010, %cst_282 [1] : vector<16x10xf32> to vector<16xf32>
    %1012 = vector.shape_cast %1011 : vector<16xf32> to vector<16x1xf32>
    %1013 = vector.broadcast %1012 : vector<16x1xf32> to vector<16x10xf32>
    %1014 = arith.subf %1010, %1013 : vector<16x10xf32>
    %1015 = math.exp %1014 : vector<16x10xf32>
    %cst_283 = arith.constant dense<0.000000e+00> : vector<16xf32>
    %1016 = vector.multi_reduction <add>, %1015, %cst_283 [1] : vector<16x10xf32> to vector<16xf32>
    %1017 = vector.shape_cast %1016 : vector<16xf32> to vector<16x1xf32>
    %1018 = vector.broadcast %1017 : vector<16x1xf32> to vector<16x10xf32>
    %1019 = arith.divf %1015, %1018 : vector<16x10xf32>
    %1020 = vector.extract_strided_slice %981 {offsets = [0, 8], sizes = [10, 8], strides = [1, 1]} : vector<10x32xf32> to vector<10x8xf32>
    %1021 = arith.truncf %1019 : vector<16x10xf32> to vector<16x10xbf16>
    %1022 = arith.truncf %1020 : vector<10x8xf32> to vector<10x8xbf16>
    %cst_284 = arith.constant dense<0.000000e+00> : vector<16x8xf32>
    %1023 = tpu.matmul %1021, %1022, %cst_284 {dimension_numbers = #tpu.dot_dimension_numbers<[1], [0], [0], [1], [0, 0, 1, 1], [], []>} : vector<16x10xbf16>, vector<10x8xbf16>, vector<16x8xf32> -> vector<16x8xf32>
    %1024 = vector.extract_strided_slice %973 {offsets = [0, 16], sizes = [16, 8], strides = [1, 1]} : vector<16x32xf32> to vector<16x8xf32>
    %1025 = vector.extract_strided_slice %980 {offsets = [0, 16], sizes = [10, 8], strides = [1, 1]} : vector<10x32xf32> to vector<10x8xf32>
    %1026 = arith.truncf %1024 : vector<16x8xf32> to vector<16x8xbf16>
    %1027 = arith.truncf %1025 : vector<10x8xf32> to vector<10x8xbf16>
    %cst_285 = arith.constant dense<0.000000e+00> : vector<16x10xf32>
    %1028 = tpu.matmul %1026, %1027, %cst_285 {dimension_numbers = #tpu.dot_dimension_numbers<[1], [1], [0], [0], [0, 0, 1, 0], [], []>} : vector<16x8xbf16>, vector<10x8xbf16>, vector<16x10xf32> -> vector<16x10xf32>
    %cst_286 = arith.constant 0.353553385 : f32
    %1029 = vector.broadcast %cst_286 : f32 to vector<16x10xf32>
    %1030 = arith.mulf %1028, %1029 : vector<16x10xf32>
    %1031 = arith.addf %1030, %90 : vector<16x10xf32>
    %cst_287 = arith.constant dense<0xFF800000> : vector<16xf32>
    %1032 = vector.multi_reduction <maximumf>, %1031, %cst_287 [1] : vector<16x10xf32> to vector<16xf32>
    %1033 = vector.shape_cast %1032 : vector<16xf32> to vector<16x1xf32>
    %1034 = vector.broadcast %1033 : vector<16x1xf32> to vector<16x10xf32>
    %1035 = arith.subf %1031, %1034 : vector<16x10xf32>
    %1036 = math.exp %1035 : vector<16x10xf32>
    %cst_288 = arith.constant dense<0.000000e+00> : vector<16xf32>
    %1037 = vector.multi_reduction <add>, %1036, %cst_288 [1] : vector<16x10xf32> to vector<16xf32>
    %1038 = vector.shape_cast %1037 : vector<16xf32> to vector<16x1xf32>
    %1039 = vector.broadcast %1038 : vector<16x1xf32> to vector<16x10xf32>
    %1040 = arith.divf %1036, %1039 : vector<16x10xf32>
    %1041 = vector.extract_strided_slice %981 {offsets = [0, 16], sizes = [10, 8], strides = [1, 1]} : vector<10x32xf32> to vector<10x8xf32>
    %1042 = arith.truncf %1040 : vector<16x10xf32> to vector<16x10xbf16>
    %1043 = arith.truncf %1041 : vector<10x8xf32> to vector<10x8xbf16>
    %cst_289 = arith.constant dense<0.000000e+00> : vector<16x8xf32>
    %1044 = tpu.matmul %1042, %1043, %cst_289 {dimension_numbers = #tpu.dot_dimension_numbers<[1], [0], [0], [1], [0, 0, 1, 1], [], []>} : vector<16x10xbf16>, vector<10x8xbf16>, vector<16x8xf32> -> vector<16x8xf32>
    %1045 = vector.extract_strided_slice %973 {offsets = [0, 24], sizes = [16, 8], strides = [1, 1]} : vector<16x32xf32> to vector<16x8xf32>
    %1046 = vector.extract_strided_slice %980 {offsets = [0, 24], sizes = [10, 8], strides = [1, 1]} : vector<10x32xf32> to vector<10x8xf32>
    %1047 = arith.truncf %1045 : vector<16x8xf32> to vector<16x8xbf16>
    %1048 = arith.truncf %1046 : vector<10x8xf32> to vector<10x8xbf16>
    %cst_290 = arith.constant dense<0.000000e+00> : vector<16x10xf32>
    %1049 = tpu.matmul %1047, %1048, %cst_290 {dimension_numbers = #tpu.dot_dimension_numbers<[1], [1], [0], [0], [0, 0, 1, 0], [], []>} : vector<16x8xbf16>, vector<10x8xbf16>, vector<16x10xf32> -> vector<16x10xf32>
    %cst_291 = arith.constant 0.353553385 : f32
    %1050 = vector.broadcast %cst_291 : f32 to vector<16x10xf32>
    %1051 = arith.mulf %1049, %1050 : vector<16x10xf32>
    %1052 = arith.addf %1051, %90 : vector<16x10xf32>
    %cst_292 = arith.constant dense<0xFF800000> : vector<16xf32>
    %1053 = vector.multi_reduction <maximumf>, %1052, %cst_292 [1] : vector<16x10xf32> to vector<16xf32>
    %1054 = vector.shape_cast %1053 : vector<16xf32> to vector<16x1xf32>
    %1055 = vector.broadcast %1054 : vector<16x1xf32> to vector<16x10xf32>
    %1056 = arith.subf %1052, %1055 : vector<16x10xf32>
    %1057 = math.exp %1056 : vector<16x10xf32>
    %cst_293 = arith.constant dense<0.000000e+00> : vector<16xf32>
    %1058 = vector.multi_reduction <add>, %1057, %cst_293 [1] : vector<16x10xf32> to vector<16xf32>
    %1059 = vector.shape_cast %1058 : vector<16xf32> to vector<16x1xf32>
    %1060 = vector.broadcast %1059 : vector<16x1xf32> to vector<16x10xf32>
    %1061 = arith.divf %1057, %1060 : vector<16x10xf32>
    %1062 = vector.extract_strided_slice %981 {offsets = [0, 24], sizes = [10, 8], strides = [1, 1]} : vector<10x32xf32> to vector<10x8xf32>
    %1063 = arith.truncf %1061 : vector<16x10xf32> to vector<16x10xbf16>
    %1064 = arith.truncf %1062 : vector<10x8xf32> to vector<10x8xbf16>
    %cst_294 = arith.constant dense<0.000000e+00> : vector<16x8xf32>
    %1065 = tpu.matmul %1063, %1064, %cst_294 {dimension_numbers = #tpu.dot_dimension_numbers<[1], [0], [0], [1], [0, 0, 1, 1], [], []>} : vector<16x10xbf16>, vector<10x8xbf16>, vector<16x8xf32> -> vector<16x8xf32>
    %1066 = tpu.concatenate %1002, %1023, %1044, %1065 in 1 : vector<16x8xf32>, vector<16x8xf32>, vector<16x8xf32>, vector<16x8xf32> -> vector<16x32xf32>
    %c1456 = arith.constant 1456 : index
    %c0_295 = arith.constant 0 : index
    %1067 = vector.load %arg3[%c1456, %c0_295] : memref<1712x192xbf16, #tpu.memory_space<vmem>>, vector<32x32xbf16>
    %1068 = arith.truncf %1066 : vector<16x32xf32> to vector<16x32xbf16>
    %cst_296 = arith.constant dense<0.000000e+00> : vector<16x32xf32>
    %1069 = tpu.matmul %1068, %1067, %cst_296 {dimension_numbers = #tpu.dot_dimension_numbers<[1], [0], [0], [1], [0, 0, 1, 1], [], []>} : vector<16x32xbf16>, vector<32x32xbf16>, vector<16x32xf32> -> vector<16x32xf32>
    %c280 = arith.constant 280 : index
    %c0_297 = arith.constant 0 : index
    %1070 = vector.load %arg4[%c280, %c0_297] : memref<344x192xf32, #tpu.memory_space<vmem>>, vector<1x32xf32>
    %1071 = vector.broadcast %1070 : vector<1x32xf32> to vector<16x32xf32>
    %1072 = arith.addf %1069, %1071 : vector<16x32xf32>
    %1073 = arith.addf %967, %1072 : vector<16x32xf32>
    %c288 = arith.constant 288 : index
    %c0_298 = arith.constant 0 : index
    %1074 = vector.load %arg4[%c288, %c0_298] : memref<344x192xf32, #tpu.memory_space<vmem>>, vector<2x32xf32>
    %cst_299 = arith.constant dense<0.000000e+00> : vector<16xf32>
    %1075 = vector.multi_reduction <add>, %1073, %cst_299 [1] : vector<16x32xf32> to vector<16xf32>
    %1076 = vector.shape_cast %1075 : vector<16xf32> to vector<16x1xf32>
    %cst_300 = arith.constant 3.200000e+01 : f32
    %1077 = vector.broadcast %cst_300 : f32 to vector<16x1xf32>
    %1078 = arith.divf %1076, %1077 : vector<16x1xf32>
    %1079 = vector.broadcast %1078 : vector<16x1xf32> to vector<16x32xf32>
    %1080 = arith.subf %1073, %1079 : vector<16x32xf32>
    %1081 = arith.mulf %1080, %1080 : vector<16x32xf32>
    %cst_301 = arith.constant dense<0.000000e+00> : vector<16xf32>
    %1082 = vector.multi_reduction <add>, %1081, %cst_301 [1] : vector<16x32xf32> to vector<16xf32>
    %1083 = vector.shape_cast %1082 : vector<16xf32> to vector<16x1xf32>
    %cst_302 = arith.constant 3.200000e+01 : f32
    %1084 = vector.broadcast %cst_302 : f32 to vector<16x1xf32>
    %1085 = arith.divf %1083, %1084 : vector<16x1xf32>
    %1086 = vector.broadcast %1078 : vector<16x1xf32> to vector<16x32xf32>
    %1087 = arith.subf %1073, %1086 : vector<16x32xf32>
    %cst_303 = arith.constant 9.99999996E-13 : f32
    %1088 = vector.broadcast %cst_303 : f32 to vector<16x1xf32>
    %1089 = arith.addf %1085, %1088 : vector<16x1xf32>
    %1090 = math.rsqrt %1089 : vector<16x1xf32>
    %1091 = vector.broadcast %1090 : vector<16x1xf32> to vector<16x32xf32>
    %1092 = arith.mulf %1087, %1091 : vector<16x32xf32>
    %1093 = vector.extract_strided_slice %1074 {offsets = [0, 0], sizes = [1, 32], strides = [1, 1]} : vector<2x32xf32> to vector<1x32xf32>
    %1094 = vector.broadcast %1093 : vector<1x32xf32> to vector<16x32xf32>
    %1095 = arith.mulf %1092, %1094 : vector<16x32xf32>
    %1096 = vector.extract_strided_slice %1074 {offsets = [1, 0], sizes = [1, 32], strides = [1, 1]} : vector<2x32xf32> to vector<1x32xf32>
    %1097 = vector.broadcast %1096 : vector<1x32xf32> to vector<16x32xf32>
    %1098 = arith.addf %1095, %1097 : vector<16x32xf32>
    %c1488 = arith.constant 1488 : index
    %c0_304 = arith.constant 0 : index
    %1099 = vector.load %arg3[%c1488, %c0_304] : memref<1712x192xbf16, #tpu.memory_space<vmem>>, vector<32x128xbf16>
    %1100 = arith.truncf %1098 : vector<16x32xf32> to vector<16x32xbf16>
    %cst_305 = arith.constant dense<0.000000e+00> : vector<16x128xf32>
    %1101 = tpu.matmul %1100, %1099, %cst_305 {dimension_numbers = #tpu.dot_dimension_numbers<[1], [0], [0], [1], [0, 0, 1, 1], [], []>} : vector<16x32xbf16>, vector<32x128xbf16>, vector<16x128xf32> -> vector<16x128xf32>
    %c296 = arith.constant 296 : index
    %c0_306 = arith.constant 0 : index
    %1102 = vector.load %arg4[%c296, %c0_306] : memref<344x192xf32, #tpu.memory_space<vmem>>, vector<1x128xf32>
    %1103 = vector.broadcast %1102 : vector<1x128xf32> to vector<16x128xf32>
    %1104 = arith.addf %1101, %1103 : vector<16x128xf32>
    %1105 = arith.mulf %1104, %1104 : vector<16x128xf32>
    %1106 = arith.mulf %1104, %1105 : vector<16x128xf32>
    %cst_307 = arith.constant 4.471500e-02 : f32
    %1107 = vector.broadcast %cst_307 : f32 to vector<16x128xf32>
    %1108 = arith.mulf %1107, %1106 : vector<16x128xf32>
    %1109 = arith.addf %1104, %1108 : vector<16x128xf32>
    %cst_308 = arith.constant 0.797884583 : f32
    %1110 = vector.broadcast %cst_308 : f32 to vector<16x128xf32>
    %1111 = arith.mulf %1110, %1109 : vector<16x128xf32>
    %1112 = math.tanh %1111 : vector<16x128xf32>
    %cst_309 = arith.constant 1.000000e+00 : f32
    %1113 = vector.broadcast %cst_309 : f32 to vector<16x128xf32>
    %1114 = arith.addf %1113, %1112 : vector<16x128xf32>
    %cst_310 = arith.constant 5.000000e-01 : f32
    %1115 = vector.broadcast %cst_310 : f32 to vector<16x128xf32>
    %1116 = arith.mulf %1115, %1114 : vector<16x128xf32>
    %1117 = arith.mulf %1104, %1116 : vector<16x128xf32>
    %c1520 = arith.constant 1520 : index
    %c0_311 = arith.constant 0 : index
    %1118 = vector.load %arg3[%c1520, %c0_311] : memref<1712x192xbf16, #tpu.memory_space<vmem>>, vector<128x32xbf16>
    %1119 = arith.truncf %1117 : vector<16x128xf32> to vector<16x128xbf16>
    %cst_312 = arith.constant dense<0.000000e+00> : vector<16x32xf32>
    %1120 = tpu.matmul %1119, %1118, %cst_312 {dimension_numbers = #tpu.dot_dimension_numbers<[1], [0], [0], [1], [0, 0, 1, 1], [], []>} : vector<16x128xbf16>, vector<128x32xbf16>, vector<16x32xf32> -> vector<16x32xf32>
    %c304_313 = arith.constant 304 : index
    %c0_314 = arith.constant 0 : index
    %1121 = vector.load %arg4[%c304_313, %c0_314] : memref<344x192xf32, #tpu.memory_space<vmem>>, vector<1x32xf32>
    %1122 = vector.broadcast %1121 : vector<1x32xf32> to vector<16x32xf32>
    %1123 = arith.addf %1120, %1122 : vector<16x32xf32>
    %1124 = arith.addf %1098, %1123 : vector<16x32xf32>
    %c312 = arith.constant 312 : index
    %c0_315 = arith.constant 0 : index
    %1125 = vector.load %arg4[%c312, %c0_315] : memref<344x192xf32, #tpu.memory_space<vmem>>, vector<2x32xf32>
    %cst_316 = arith.constant dense<0.000000e+00> : vector<16xf32>
    %1126 = vector.multi_reduction <add>, %1124, %cst_316 [1] : vector<16x32xf32> to vector<16xf32>
    %1127 = vector.shape_cast %1126 : vector<16xf32> to vector<16x1xf32>
    %cst_317 = arith.constant 3.200000e+01 : f32
    %1128 = vector.broadcast %cst_317 : f32 to vector<16x1xf32>
    %1129 = arith.divf %1127, %1128 : vector<16x1xf32>
    %1130 = vector.broadcast %1129 : vector<16x1xf32> to vector<16x32xf32>
    %1131 = arith.subf %1124, %1130 : vector<16x32xf32>
    %1132 = arith.mulf %1131, %1131 : vector<16x32xf32>
    %cst_318 = arith.constant dense<0.000000e+00> : vector<16xf32>
    %1133 = vector.multi_reduction <add>, %1132, %cst_318 [1] : vector<16x32xf32> to vector<16xf32>
    %1134 = vector.shape_cast %1133 : vector<16xf32> to vector<16x1xf32>
    %cst_319 = arith.constant 3.200000e+01 : f32
    %1135 = vector.broadcast %cst_319 : f32 to vector<16x1xf32>
    %1136 = arith.divf %1134, %1135 : vector<16x1xf32>
    %1137 = vector.broadcast %1129 : vector<16x1xf32> to vector<16x32xf32>
    %1138 = arith.subf %1124, %1137 : vector<16x32xf32>
    %cst_320 = arith.constant 9.99999996E-13 : f32
    %1139 = vector.broadcast %cst_320 : f32 to vector<16x1xf32>
    %1140 = arith.addf %1136, %1139 : vector<16x1xf32>
    %1141 = math.rsqrt %1140 : vector<16x1xf32>
    %1142 = vector.broadcast %1141 : vector<16x1xf32> to vector<16x32xf32>
    %1143 = arith.mulf %1138, %1142 : vector<16x32xf32>
    %1144 = vector.extract_strided_slice %1125 {offsets = [0, 0], sizes = [1, 32], strides = [1, 1]} : vector<2x32xf32> to vector<1x32xf32>
    %1145 = vector.broadcast %1144 : vector<1x32xf32> to vector<16x32xf32>
    %1146 = arith.mulf %1143, %1145 : vector<16x32xf32>
    %1147 = vector.extract_strided_slice %1125 {offsets = [1, 0], sizes = [1, 32], strides = [1, 1]} : vector<2x32xf32> to vector<1x32xf32>
    %1148 = vector.broadcast %1147 : vector<1x32xf32> to vector<16x32xf32>
    %1149 = arith.addf %1146, %1148 : vector<16x32xf32>
    %c1648 = arith.constant 1648 : index
    %c0_321 = arith.constant 0 : index
    %1150 = vector.load %arg3[%c1648, %c0_321] : memref<1712x192xbf16, #tpu.memory_space<vmem>>, vector<32x32xbf16>
    %1151 = arith.truncf %1149 : vector<16x32xf32> to vector<16x32xbf16>
    %cst_322 = arith.constant dense<0.000000e+00> : vector<16x32xf32>
    %1152 = tpu.matmul %1151, %1150, %cst_322 {dimension_numbers = #tpu.dot_dimension_numbers<[1], [0], [0], [1], [0, 0, 1, 1], [], []>} : vector<16x32xbf16>, vector<32x32xbf16>, vector<16x32xf32> -> vector<16x32xf32>
    %c320 = arith.constant 320 : index
    %c0_323 = arith.constant 0 : index
    %1153 = vector.load %arg4[%c320, %c0_323] : memref<344x192xf32, #tpu.memory_space<vmem>>, vector<1x32xf32>
    %1154 = vector.broadcast %1153 : vector<1x32xf32> to vector<16x32xf32>
    %1155 = arith.addf %1152, %1154 : vector<16x32xf32>
    %1156 = arith.mulf %1155, %1155 : vector<16x32xf32>
    %1157 = arith.mulf %1155, %1156 : vector<16x32xf32>
    %cst_324 = arith.constant 4.471500e-02 : f32
    %1158 = vector.broadcast %cst_324 : f32 to vector<16x32xf32>
    %1159 = arith.mulf %1158, %1157 : vector<16x32xf32>
    %1160 = arith.addf %1155, %1159 : vector<16x32xf32>
    %cst_325 = arith.constant 0.797884583 : f32
    %1161 = vector.broadcast %cst_325 : f32 to vector<16x32xf32>
    %1162 = arith.mulf %1161, %1160 : vector<16x32xf32>
    %1163 = math.tanh %1162 : vector<16x32xf32>
    %cst_326 = arith.constant 1.000000e+00 : f32
    %1164 = vector.broadcast %cst_326 : f32 to vector<16x32xf32>
    %1165 = arith.addf %1164, %1163 : vector<16x32xf32>
    %cst_327 = arith.constant 5.000000e-01 : f32
    %1166 = vector.broadcast %cst_327 : f32 to vector<16x32xf32>
    %1167 = arith.mulf %1166, %1165 : vector<16x32xf32>
    %1168 = arith.mulf %1155, %1167 : vector<16x32xf32>
    %c328 = arith.constant 328 : index
    %c0_328 = arith.constant 0 : index
    %1169 = vector.load %arg4[%c328, %c0_328] : memref<344x192xf32, #tpu.memory_space<vmem>>, vector<2x32xf32>
    %cst_329 = arith.constant dense<0.000000e+00> : vector<16xf32>
    %1170 = vector.multi_reduction <add>, %1168, %cst_329 [1] : vector<16x32xf32> to vector<16xf32>
    %1171 = vector.shape_cast %1170 : vector<16xf32> to vector<16x1xf32>
    %cst_330 = arith.constant 3.200000e+01 : f32
    %1172 = vector.broadcast %cst_330 : f32 to vector<16x1xf32>
    %1173 = arith.divf %1171, %1172 : vector<16x1xf32>
    %1174 = vector.broadcast %1173 : vector<16x1xf32> to vector<16x32xf32>
    %1175 = arith.subf %1168, %1174 : vector<16x32xf32>
    %1176 = arith.mulf %1175, %1175 : vector<16x32xf32>
    %cst_331 = arith.constant dense<0.000000e+00> : vector<16xf32>
    %1177 = vector.multi_reduction <add>, %1176, %cst_331 [1] : vector<16x32xf32> to vector<16xf32>
    %1178 = vector.shape_cast %1177 : vector<16xf32> to vector<16x1xf32>
    %cst_332 = arith.constant 3.200000e+01 : f32
    %1179 = vector.broadcast %cst_332 : f32 to vector<16x1xf32>
    %1180 = arith.divf %1178, %1179 : vector<16x1xf32>
    %1181 = vector.broadcast %1173 : vector<16x1xf32> to vector<16x32xf32>
    %1182 = arith.subf %1168, %1181 : vector<16x32xf32>
    %cst_333 = arith.constant 9.99999996E-13 : f32
    %1183 = vector.broadcast %cst_333 : f32 to vector<16x1xf32>
    %1184 = arith.addf %1180, %1183 : vector<16x1xf32>
    %1185 = math.rsqrt %1184 : vector<16x1xf32>
    %1186 = vector.broadcast %1185 : vector<16x1xf32> to vector<16x32xf32>
    %1187 = arith.mulf %1182, %1186 : vector<16x32xf32>
    %1188 = vector.extract_strided_slice %1169 {offsets = [0, 0], sizes = [1, 32], strides = [1, 1]} : vector<2x32xf32> to vector<1x32xf32>
    %1189 = vector.broadcast %1188 : vector<1x32xf32> to vector<16x32xf32>
    %1190 = arith.mulf %1187, %1189 : vector<16x32xf32>
    %1191 = vector.extract_strided_slice %1169 {offsets = [1, 0], sizes = [1, 32], strides = [1, 1]} : vector<2x32xf32> to vector<1x32xf32>
    %1192 = vector.broadcast %1191 : vector<1x32xf32> to vector<16x32xf32>
    %1193 = arith.addf %1190, %1192 : vector<16x32xf32>
    %c1680 = arith.constant 1680 : index
    %c0_334 = arith.constant 0 : index
    %1194 = vector.load %arg3[%c1680, %c0_334] : memref<1712x192xbf16, #tpu.memory_space<vmem>>, vector<32x64xbf16>
    %1195 = arith.truncf %1193 : vector<16x32xf32> to vector<16x32xbf16>
    %cst_335 = arith.constant dense<0.000000e+00> : vector<16x64xf32>
    %1196 = tpu.matmul %1195, %1194, %cst_335 {dimension_numbers = #tpu.dot_dimension_numbers<[1], [0], [0], [1], [0, 0, 1, 1], [], []>} : vector<16x32xbf16>, vector<32x64xbf16>, vector<16x64xf32> -> vector<16x64xf32>
    %c336 = arith.constant 336 : index
    %c0_336 = arith.constant 0 : index
    %1197 = vector.load %arg4[%c336, %c0_336] : memref<344x192xf32, #tpu.memory_space<vmem>>, vector<1x64xf32>
    %1198 = vector.broadcast %1197 : vector<1x64xf32> to vector<16x64xf32>
    %1199 = arith.addf %1196, %1198 : vector<16x64xf32>
    %cst_337 = arith.constant dense<0xFF800000> : vector<16xf32>
    %1200 = vector.multi_reduction <maximumf>, %1199, %cst_337 [1] : vector<16x64xf32> to vector<16xf32>
    %1201 = vector.shape_cast %1200 : vector<16xf32> to vector<16x1xf32>
    %1202 = vector.broadcast %1201 : vector<16x1xf32> to vector<16x64xf32>
    %1203 = arith.subf %1199, %1202 : vector<16x64xf32>
    %1204 = math.exp %1203 : vector<16x64xf32>
    %cst_338 = arith.constant dense<0.000000e+00> : vector<16xf32>
    %1205 = vector.multi_reduction <add>, %1204, %cst_338 [1] : vector<16x64xf32> to vector<16xf32>
    %1206 = vector.shape_cast %1205 : vector<16xf32> to vector<16x1xf32>
    %1207 = math.log %1206 : vector<16x1xf32>
    %1208 = vector.broadcast %1207 : vector<16x1xf32> to vector<16x64xf32>
    %1209 = arith.subf %1203, %1208 : vector<16x64xf32>
    %1210 = vector.broadcast %498 : vector<16x1xi32> to vector<16x64xi32>
    %1211 = arith.cmpi eq, %499, %1210 : vector<16x64xi32>
    %1212 = arith.extui %1211 : vector<16x64xi1> to vector<16x64xi32>
    %1213 = arith.sitofp %1212 : vector<16x64xi32> to vector<16x64xf32>
    %1214 = arith.mulf %1213, %1209 : vector<16x64xf32>
    %cst_339 = arith.constant dense<0.000000e+00> : vector<16xf32>
    %1215 = vector.multi_reduction <add>, %1214, %cst_339 [1] : vector<16x64xf32> to vector<16xf32>
    %1216 = vector.shape_cast %1215 : vector<16xf32> to vector<16x1xf32>
    %cst_340 = arith.constant 0.000000e+00 : f32
    %1217 = vector.broadcast %cst_340 : f32 to vector<16x1xf32>
    %1218 = arith.subf %1217, %1216 : vector<16x1xf32>
    %1219 = tpu.iota {dimensions = array<i32: 0>} : vector<16x1xi32>
    %c7_i32 = arith.constant 7 : i32
    %1220 = vector.broadcast %c7_i32 : i32 to vector<16x1xi32>
    %1221 = arith.cmpi eq, %1219, %1220 : vector<16x1xi32>
    %c15_i32 = arith.constant 15 : i32
    %1222 = vector.broadcast %c15_i32 : i32 to vector<16x1xi32>
    %1223 = arith.cmpi eq, %1219, %1222 : vector<16x1xi32>
    %1224 = arith.ori %1221, %1223 : vector<16x1xi1>
    %cst_341 = arith.constant dense<true> : vector<16x1xi1>
    %1225 = arith.xori %1224, %cst_341 : vector<16x1xi1>
    %c0_i32_342 = arith.constant 0 : i32
    %1226 = vector.broadcast %c0_i32_342 : i32 to vector<16x1xi32>
    %1227 = arith.cmpi ne, %498, %1226 : vector<16x1xi32>
    %1228 = arith.andi %1225, %1227 : vector<16x1xi1>
    %1229 = tpu.iota {dimensions = array<i32: 0>} : vector<16x2xi32>
    %1230 = tpu.iota {dimensions = array<i32: 1>} : vector<16x2xi32>
    %c0_i32_343 = arith.constant 0 : i32
    %1231 = vector.broadcast %c0_i32_343 : i32 to vector<16x2xi32>
    %1232 = arith.cmpi sge, %1229, %1231 : vector<16x2xi32>
    %c8_i32_344 = arith.constant 8 : i32
    %1233 = vector.broadcast %c8_i32_344 : i32 to vector<16x2xi32>
    %1234 = arith.cmpi slt, %1229, %1233 : vector<16x2xi32>
    %1235 = arith.andi %1232, %1234 : vector<16x2xi1>
    %c0_i32_345 = arith.constant 0 : i32
    %1236 = vector.broadcast %c0_i32_345 : i32 to vector<16x2xi32>
    %1237 = arith.cmpi eq, %1230, %1236 : vector<16x2xi32>
    %1238 = arith.andi %1235, %1237 : vector<16x2xi1>
    %c8_i32_346 = arith.constant 8 : i32
    %1239 = vector.broadcast %c8_i32_346 : i32 to vector<16x2xi32>
    %1240 = arith.cmpi sge, %1229, %1239 : vector<16x2xi32>
    %c16_i32_347 = arith.constant 16 : i32
    %1241 = vector.broadcast %c16_i32_347 : i32 to vector<16x2xi32>
    %1242 = arith.cmpi slt, %1229, %1241 : vector<16x2xi32>
    %1243 = arith.andi %1240, %1242 : vector<16x2xi1>
    %c1_i32 = arith.constant 1 : i32
    %1244 = vector.broadcast %c1_i32 : i32 to vector<16x2xi32>
    %1245 = arith.cmpi eq, %1230, %1244 : vector<16x2xi32>
    %1246 = arith.andi %1243, %1245 : vector<16x2xi1>
    %1247 = arith.ori %1238, %1246 : vector<16x2xi1>
    %cst_348 = arith.constant 0.000000e+00 : f32
    %1248 = vector.broadcast %cst_348 : f32 to vector<16x1xf32>
    %1249 = arith.select %1228, %1218, %1248 : vector<16x1xi1>, vector<16x1xf32>
    %1250 = arith.extui %1247 : vector<16x2xi1> to vector<16x2xi32>
    %1251 = arith.sitofp %1250 : vector<16x2xi32> to vector<16x2xf32>
    %1252 = vector.broadcast %1249 : vector<16x1xf32> to vector<16x2xf32>
    %1253 = arith.mulf %1252, %1251 : vector<16x2xf32>
    %cst_349 = arith.constant dense<0.000000e+00> : vector<2xf32>
    %1254 = vector.multi_reduction <add>, %1253, %cst_349 [0] : vector<16x2xf32> to vector<2xf32>
    %1255 = vector.shape_cast %1254 : vector<2xf32> to vector<1x2xf32>
    %c0_350 = arith.constant 0 : index
    %c0_351 = arith.constant 0 : index
    %1256 = vector.load %arg5[%c0_350, %c0_351] : memref<1x2xf32, #tpu.memory_space<vmem>>, vector<1x2xf32>
    tpu.vector_store %arg5[%c0_350, %c0_351], %1255 {strides = array<i32>} : memref<1x2xf32, #tpu.memory_space<vmem>>, vector<1x2xf32>,
    return
  }
}

</mosaic_0001>

<llo_original>
// kernel: mplug_forward.1
$region0: #{mplug_forward.1}
  #allocation0 [shape = 'u32[]', space=smem, size = 0x4, offset = 0x4, fixed_abs, tag = 'smem constant byte address 0x4 - core index']
  #allocation1 [shape = 'u32[144,128]{1,0:T(1,128)}', space=vmem, size = 0x12000, scoped, tag = 'internal scratch']
  %s0 = inlined_call_operand.vmem [shape: f32[10,192], index: 0, kind: input, shape index: {}]
  %s1 = inlined_call_operand.vmem [shape: s32[16,2], index: 1, kind: input, shape index: {}]
  %s2 = inlined_call_operand.vmem [shape: f32[1,16], index: 2, kind: input, shape index: {}]
  %s3 = inlined_call_operand.vmem [shape: bf16[1712,192], index: 3, kind: input, shape index: {}]
  %s4 = inlined_call_operand.vmem [shape: f32[344,192], index: 4, kind: input, shape index: {}]
  %s5 = inlined_call_operand.hbm [shape: f32[1,2], index: 5, kind: output, shape index: {}]
  %s6 = sld [smem:[#allocation0]]
  $region30: #{mplug_forward.1} parent=0
    _
  %s8 = ssub.s32 1, %s6
  %s9 = scalar_select 0, %s8, %s6
  $region1: #{mplug_forward.1} parent=0
    #allocation2 [shape = 'u8[512]{0}', space=vmem, size = 0x400, scoped, tag = 'output window, operand 0, single buffered']
    #allocation3 [shape = 's32[1]{0}', space=sflag, size = 0x4, scoped, tag = 'scoped memory for mplug_forward.1']
    %10 = vsyncpa [#allocation3], 0
    // Predicated region
    $region2: #{mplug_forward.1} parent=1 // pred_check
      _
    $region3: #{mplug_forward.1} parent=1 // pred_check_branch
      %12 = sbr.rel (0) target = $region5
    $region4: #{mplug_forward.1} parent=1 // pred_region
      _
    $region5: #{mplug_forward.1} parent=1 // pred_fallthru
      _
    // Predicated region
    $region6: #{mplug_forward.1} parent=1 // pred_check
      _
    $region7: #{mplug_forward.1} parent=1 // pred_check_branch
      %14 = sbr.rel (0) target = $region9
    $region8: #{mplug_forward.1} parent=1 // pred_region
      _
    $region9: #{mplug_forward.1} parent=1 // pred_fallthru
      _
    // Predicated region
    $region10: #{mplug_forward.1} parent=1 // pred_check
      _
    $region11: #{mplug_forward.1} parent=1 // pred_check_branch
      %16 = sbr.rel (0) target = $region13
    $region12: #{mplug_forward.1} parent=1 // pred_region
      _
    $region13: #{mplug_forward.1} parent=1 // pred_fallthru
      _
    // Predicated region
    $region14: #{mplug_forward.1} parent=1 // pred_check
      _
    $region15: #{mplug_forward.1} parent=1 // pred_check_branch
      %18 = sbr.rel (0) target = $region17
    $region16: #{mplug_forward.1} parent=1 // pred_region
      _
    $region17: #{mplug_forward.1} parent=1 // pred_fallthru
      _
    // Predicated region
    $region18: #{mplug_forward.1} parent=1 // pred_check
      _
    $region19: #{mplug_forward.1} parent=1 // pred_check_branch
      %20 = sbr.rel (0) target = $region21
    $region20: #{mplug_forward.1} parent=1 // pred_region
      _
    $region21: #{mplug_forward.1} parent=1 // pred_fallthru
      _
    %v22 = vlaneseq
    %v23 = vshrl.u32 %v22, 7
    %v24 = vadd.s32 %v23, 8
    %v25 = vlaneseq
    %v26 = vand.u32 %v25, 127
    %vm27 = vcmp.ge.s32.totalorder %v23, 0
    %vm28 = vcmp.ge.s32.totalorder %v24, 0
    %vm29 = vcmp.lt.s32.totalorder %v23, 5
    %vm30 = vcmp.lt.s32.totalorder %v24, 5
    %vm31 = vmand %vm27, %vm29
    %vm32 = vmand %vm28, %vm30
    %vm33 = vcmp.ge.s32.totalorder %v26, 0
    %vm34 = vmand %vm31, %vm33
    %vm35 = vmand %vm32, %vm33
    %vm36 = vcmp.lt.s32.totalorder %v26, 5
    %vm37 = vmand %vm34, %vm36
    %vm38 = vmand %vm35, %vm36
    %vm39 = vcmp.ge.s32.totalorder %v23, 5
    %vm40 = vcmp.ge.s32.totalorder %v24, 5
    %vm41 = vcmp.lt.s32.totalorder %v23, 10
    %vm42 = vcmp.lt.s32.totalorder %v24, 10
    %vm43 = vmand %vm39, %vm41
    %vm44 = vmand %vm40, %vm42
    %vm45 = vcmp.ge.s32.totalorder %v26, 5
    %vm46 = vmand %vm43, %vm45
    %vm47 = vmand %vm44, %vm45
    %vm48 = vcmp.lt.s32.totalorder %v26, 10
    %vm49 = vmand %vm46, %vm48
    %vm50 = vmand %vm47, %vm48
    %vm51 = vmor %vm37, %vm49
    %vm52 = vmor %vm38, %vm50
    %v53 = vsel %vm51, 0.0, -1e+09
    %v54 = vsel %vm52, 0.0, -1e+09
    %vm55 = vcmp.lt.s32.totalorder %v23, 8
    %vm56 = vcmp.lt.s32.totalorder %v24, 8
    %vm57 = vmand %vm27, %vm55
    %vm58 = vmand %vm28, %vm56
    %vm59 = vmand %vm57, %vm33
    %vm60 = vmand %vm58, %vm33
    %vm61 = vcmp.lt.s32.totalorder %v26, 8
    %vm62 = vmand %vm59, %vm61
    %vm63 = vmand %vm60, %vm61
    %vm64 = vcmp.ge.s32.totalorder %v23, 8
    %vm65 = vcmp.ge.s32.totalorder %v24, 8
    %vm66 = vcmp.lt.s32.totalorder %v23, 16
    %vm67 = vcmp.lt.s32.totalorder %v24, 16
    %vm68 = vmand %vm64, %vm66
    %vm69 = vmand %vm65, %vm67
    %vm70 = vcmp.ge.s32.totalorder %v26, 8
    %vm71 = vmand %vm68, %vm70
    %vm72 = vmand %vm69, %vm70
    %vm73 = vcmp.lt.s32.totalorder %v26, 16
    %vm74 = vmand %vm71, %vm73
    %vm75 = vmand %vm72, %vm73
    %vm76 = vmor %vm62, %vm74
    %vm77 = vmor %vm63, %vm75
    %v78 = vld [vmem:[%s2] sm:$0x1]
    %vm79 = vcmp.gt.f32.partialorder %v78, 0.5
    %vm80 = vcmp.le.s32.totalorder %v26, %v23
    %vm81 = vcmp.le.s32.totalorder %v26, %v24
    %vm82 = vmand %vm76, %vm80
    %vm83 = vmand %vm77, %vm81
    %v84 = vsel %vm79, 1, 0
    %v85 = vlaneseq
    %v86 = vshrl.u32 %v85, 7
    %v87 = vsub.s32 0, %v86
    %v88 = vrot.slane %v84, %v87
    %vm89 = vcmp.eq.s32.totalorder %v88, 1
    %vm90 = vmand %vm82, %vm89
    %vm91 = vmand %vm83, %vm89
    %v92 = vsel %vm90, 0.0, -1e+09
    %v93 = vsel %vm91, 0.0, -1e+09
    %vm94 = vmand %vm59, %vm36
    %vm95 = vmand %vm60, %vm36
    %vm96 = vmand %vm68, %vm45
    %vm97 = vmand %vm69, %vm45
    %vm98 = vmand %vm96, %vm48
    %vm99 = vmand %vm97, %vm48
    %vm100 = vmor %vm94, %vm98
    %vm101 = vmor %vm95, %vm99
    %v102 = vsel %vm100, 0.0, -1e+09
    %v103 = vsel %vm101, 0.0, -1e+09
    %v104 = vld [vmem:[%s0] sm:$0xff]
    %v105 = vld [vmem:[%s0 + $0x8] sm:$0xff]
    %v106 = vld [vmem:[%s0 + $0x10] sm:$0x3]
    %v107 = vld [vmem:[%s0 + $0x18] sm:$0x3]
    %v108 = vld [vmem:[%s3] sm:$0xf]
    %v109 = vld [vmem:[%s3 + $0x8] sm:$0xf]
    %v110 = vld [vmem:[%s3 + $0x10] sm:$0xf]
    %v111 = vld [vmem:[%s3 + $0x18] sm:$0xf]
    %v112 = vld [vmem:[%s3 + $0x20] sm:$0xf]
    %v113 = vld [vmem:[%s3 + $0x28] sm:$0xf]
    %v114 = vld [vmem:[%s3 + $0x30] sm:$0xf]
    %v115 = vld [vmem:[%s3 + $0x38] sm:$0xf]
    %v116 = vld [vmem:[%s3 + $0x40] sm:$0xf]
    %v117 = vld [vmem:[%s3 + $0x48] sm:$0xf]
    %v118 = vld [vmem:[%s3 + $0x50] sm:$0xf]
    %v119 = vld [vmem:[%s3 + $0x58] sm:$0xf]
    %v120 = vld [vmem:[%s3 + $0x60] sm:$0xf]
    %v121 = vld [vmem:[%s3 + $0x68] sm:$0xf]
    %v122 = vld [vmem:[%s3 + $0x70] sm:$0xf]
    %v123 = vld [vmem:[%s3 + $0x78] sm:$0xf]
    %v124 = vld [vmem:[%s3 + $0x80] sm:$0xf]
    %v125 = vld [vmem:[%s3 + $0x88] sm:$0xf]
    %v126 = vld [vmem:[%s3 + $0x90] sm:$0xf]
    %v127 = vld [vmem:[%s3 + $0x98] sm:$0xf]
    %v128 = vld [vmem:[%s3 + $0xa0] sm:$0xf]
    %v129 = vld [vmem:[%s3 + $0xa8] sm:$0xf]
    %v130 = vld [vmem:[%s3 + $0xb0] sm:$0xf]
    %v131 = vld [vmem:[%s3 + $0xb8] sm:$0xf]
    %v132 = vpack.c.bf16 %v106, %v104
    %v133 = vpack.c.bf16 %v107, %v105
    %v134 = vld [vmem:[%s4] sm:$0xff]
    %v135 = vld [vmem:[%s4 + $0x10] sm:$0x3]
    %v160 = vunpack.c.l.b16 %v108
    %v161 = vunpack.c.l.b16 %v109
    %v162 = vunpack.c.l.b16 %v110
    %v163 = vunpack.c.l.b16 %v111
    %v164 = vunpack.c.l.b16 %v112
    %v165 = vunpack.c.l.b16 %v113
    %v166 = vunpack.c.l.b16 %v114
    %v167 = vunpack.c.l.b16 %v115
    %v168 = vunpack.c.l.b16 %v116
    %v169 = vunpack.c.l.b16 %v117
    %v170 = vunpack.c.l.b16 %v118
    %v171 = vunpack.c.l.b16 %v119
    %v172 = vunpack.c.l.b16 %v120
    %v173 = vunpack.c.l.b16 %v121
    %v174 = vunpack.c.l.b16 %v122
    %v175 = vunpack.c.l.b16 %v123
    %v176 = vunpack.c.l.b16 %v124
    %v177 = vunpack.c.l.b16 %v125
    %v178 = vunpack.c.l.b16 %v126
    %v179 = vunpack.c.l.b16 %v127
    %v180 = vunpack.c.l.b16 %v128
    %v181 = vunpack.c.l.b16 %v129
    %v182 = vunpack.c.l.b16 %v130
    %v183 = vunpack.c.l.b16 %v131
    %v184 = vpack.c.b16 %v161, %v160
    %v185 = vpack.c.b16 %v163, %v162
    %v186 = vpack.c.b16 %v165, %v164
    %v187 = vpack.c.b16 %v167, %v166
    %v188 = vpack.c.b16 %v169, %v168
    %v189 = vpack.c.b16 %v171, %v170
    %v190 = vpack.c.b16 %v173, %v172
    %v191 = vpack.c.b16 %v175, %v174
    %v192 = vpack.c.b16 %v177, %v176
    %v193 = vpack.c.b16 %v179, %v178
    %v194 = vpack.c.b16 %v181, %v180
    %v195 = vpack.c.b16 %v183, %v182
    %vm208 = vcmask 523264
    %v210 = vsel %vm208, %v133, 0
    %212 = vmatprep.subr.bf16.mxu0 0
    %213 = vmatpush1.bf16.msra.mxu0 %v184
    %214 = vmatprep.subr.bf16.mxu0 0
    %215 = vmatpush1.bf16.msra.mxu0 %v185
    %216 = vmatprep.subr.bf16.mxu0 0
    %217 = vmatpush1.bf16.msra.mxu0 %v186
    %218 = vmatprep.subr.bf16.mxu0 0
    %219 = vmatpush1.bf16.msra.mxu0 %v187
    %220 = vmatprep.subr.bf16.mxu0 0
    %221 = vmatpush1.bf16.msra.mxu0 %v188
    %222 = vmatprep.subr.bf16.mxu0 0
    %223 = vmatpush1.bf16.msra.mxu0 %v189
    %224 = vmatprep.subr.bf16.mxu0 0
    %225 = vmatpush1.bf16.msra.mxu0 %v190
    %226 = vmatprep.subr.bf16.mxu0 0
    %227 = vmatpush1.bf16.msra.mxu0 %v191
    %228 = vmatprep.subr.bf16.mxu0 0
    %229 = vmatpush1.bf16.msra.mxu0 %v192
    %230 = vmatprep.subr.bf16.mxu0 0
    %231 = vmatpush1.bf16.msra.mxu0 %v193
    %232 = vmatprep.subr.bf16.mxu0 0
    %233 = vmatpush1.bf16.msra.mxu0 %v194
    %234 = vmatprep.subr.bf16.mxu0 0
    %235 = vmatpush1.bf16.msra.mxu0 %v195
    %236 = vmatprep.subr.bf16.mxu0 0
    %237 = vmatpush1.bf16.msra.mxu0 0
    %238 = vmatprep.subr.bf16.mxu0 0
    %239 = vmatpush1.bf16.msra.mxu0 0
    %240 = vmatprep.subr.bf16.mxu0 0
    %241 = vmatpush1.bf16.msra.mxu0 0
    %242 = vmatprep.subr.bf16.mxu0 0
    %243 = vmatpush1.bf16.msra.mxu0 0
    %244 = vmatprep.mubr.bf16.mxu0 %v210
    %245 = vmatmul.mubr.bf16.gmra.mrb[0].mxu0 %v132
    %v246 = vpop.f32.mrb[0].mxu0
    %v247 = vadd.f32 %v134, %v246
    %v248 = vpop.f32.mrb[0].mxu0
    %v249 = vpop.f32.mrb[0].mxu0
    %v250 = vadd.f32 %v135, %v249
    %v251 = vpop.f32.mrb[0].mxu0
    %252 = vdwg.mxu0
    %v253 = vld [vmem:[%s4 + $0x20] sm:$0x3]
    %vm254 = vcmask 392192
    %v255 = vsel %vm254, %v247, 0.0
    %256 = vadd.xlane.f32.xlu0 %v255
    %v257 = vpop.xlane.xlu0 %256
    %vm258 = vcmask 386048
    %v259 = vsel %vm258, %v250, 0.0
    %260 = vadd.xlane.f32.xlu0 %v259
    %v261 = vpop.xlane.xlu0 %260
    %v262 = vrcp.pop 48.0
    %v263 = vmul.f32 %v257, %v262
    %v264 = vmul.f32 %v261, %v262
    %v265 = vsub.f32 %v247, %v263
    %v266 = vsub.f32 %v250, %v264
    %v267 = vmul.f32 %v265, %v265
    %v268 = vmul.f32 %v266, %v266
    %v269 = vsel %vm254, %v267, 0.0
    %270 = vadd.xlane.f32.xlu0 %v269
    %v271 = vpop.xlane.xlu0 %270
    %v272 = vsel %vm258, %v268, 0.0
    %273 = vadd.xlane.f32.xlu0 %v272
    %v274 = vpop.xlane.xlu0 %273
    %v275 = vmul.f32 %v271, %v262
    %v276 = vmul.f32 %v274, %v262
    %v277 = vadd.f32 %v275, 1e-05
    %v278 = vadd.f32 %v276, 1e-05
    %v279 = vrsqrt.pop %v277
    %v280 = vrsqrt.pop %v278
    %v281 = vmul.f32 %v265, %v279
    %v282 = vmul.f32 %v266, %v280
    %v283 = vlaneseq
    %v284 = vshrl.u32 %v283, 7
    %v285 = vsub.s32 0, %v284
    %v286 = vrot.slane %v253, %v285
    %v287 = vmul.f32 %v281, %v286
    %v288 = vmul.f32 %v282, %v286
    %v289 = vlaneseq
    %v290 = vshrl.u32 %v289, 7
    %v291 = vsub.s32 1, %v290
    %v292 = vrot.slane %v253, %v291
    %v293 = vadd.f32 %v287, %v292
    %v294 = vadd.f32 %v288, %v292
    %v295 = vld [vmem:[%s4 + $0x30] sm:$0x3]
    %v296 = vsel %vm254, %v293, 0.0
    %297 = vadd.xlane.f32.xlu0 %v296
    %v298 = vpop.xlane.xlu0 %297
    %v299 = vsel %vm258, %v294, 0.0
    %300 = vadd.xlane.f32.xlu0 %v299
    %v301 = vpop.xlane.xlu0 %300
    %v302 = vmul.f32 %v298, %v262
    %v303 = vmul.f32 %v301, %v262
    %v304 = vsub.f32 %v293, %v302
    %v305 = vsub.f32 %v294, %v303
    %v306 = vmul.f32 %v304, %v304
    %v307 = vmul.f32 %v305, %v305
    %v308 = vsel %vm254, %v306, 0.0
    %309 = vadd.xlane.f32.xlu0 %v308
    %v310 = vpop.xlane.xlu0 %309
    %v311 = vsel %vm258, %v307, 0.0
    %312 = vadd.xlane.f32.xlu0 %v311
    %v313 = vpop.xlane.xlu0 %312
    %v314 = vmul.f32 %v310, %v262
    %v315 = vmul.f32 %v313, %v262
    %v316 = vadd.f32 %v314, 1e-05
    %v317 = vadd.f32 %v315, 1e-05
    %v318 = vrsqrt.pop %v316
    %v319 = vrsqrt.pop %v317
    %v320 = vmul.f32 %v304, %v318
    %v321 = vmul.f32 %v305, %v319
    %v322 = vlaneseq
    %v323 = vshrl.u32 %v322, 7
    %v324 = vsub.s32 0, %v323
    %v325 = vrot.slane %v295, %v324
    %v326 = vmul.f32 %v320, %v325
    %v327 = vmul.f32 %v321, %v325
    %v328 = vlaneseq
    %v329 = vshrl.u32 %v328, 7
    %v330 = vsub.s32 1, %v329
    %v331 = vrot.slane %v295, %v330
    %v332 = vadd.f32 %v326, %v331
    %v333 = vadd.f32 %v327, %v331
    %v334 = vld [vmem:[%s3 + $0xc0] sm:$0xff]
    %v335 = vld [vmem:[%s3 + $0xc8] sm:$0xff]
    %v336 = vld [vmem:[%s3 + $0xd0] sm:$0xff]
    %v337 = vld [vmem:[%s3 + $0xd8] sm:$0xff]
    %v338 = vld [vmem:[%s3 + $0xe0] sm:$0xff]
    %v339 = vld [vmem:[%s3 + $0xe8] sm:$0xff]
    %v340 = vpack.c.bf16 %v333, %v332
    %s341 = scalar_lea.vmem %s4, 64
    %v342 = vld [vmem:[%s341] ss:$8 sm:$0x3]
    %v344 = vlaneseq
    %v345 = vshrl.u32 %v344, 7
    %v346 = vsub.s32 0, %v345
    %v347 = vrot.slane %v342, %v346
    %v348 = vlaneseq
    %v349 = vshrl.u32 %v348, 7
    %v350 = vsub.s32 1, %v349
    %v351 = vrot.slane %v342, %v350
    %v360 = vunpack.c.l.b16 %v334
    %v361 = vunpack.c.h.b16 %v334
    %v362 = vunpack.c.l.b16 %v335
    %v363 = vunpack.c.h.b16 %v335
    %v364 = vunpack.c.l.b16 %v336
    %v365 = vunpack.c.h.b16 %v336
    %v366 = vunpack.c.l.b16 %v337
    %v367 = vunpack.c.h.b16 %v337
    %v368 = vunpack.c.l.b16 %v338
    %v369 = vunpack.c.h.b16 %v338
    %v370 = vunpack.c.l.b16 %v339
    %v371 = vunpack.c.h.b16 %v339
    %v372 = vpack.c.b16 %v362, %v360
    %v373 = vpack.c.b16 %v363, %v361
    %v374 = vpack.c.b16 %v366, %v364
    %v375 = vpack.c.b16 %v367, %v365
    %v376 = vpack.c.b16 %v370, %v368
    %v377 = vpack.c.b16 %v371, %v369
    %v385 = vsel %vm254, %v340, 0
    %387 = vmatprep.subr.bf16.mxu0 %v373
    %388 = vmatpush1.bf16.msra.mxu0 %v372
    %389 = vmatprep.subr.bf16.mxu0 %v375
    %390 = vmatpush1.bf16.msra.mxu0 %v374
    %391 = vmatprep.subr.bf16.mxu0 %v377
    %392 = vmatpush1.bf16.msra.mxu0 %v376
    %393 = vmatprep.subr.bf16.mxu0 0
    %394 = vmatpush1.bf16.msra.mxu0 0
    %395 = vmatprep.subr.bf16.mxu0 0
    %396 = vmatpush1.bf16.msra.mxu0 0
    %397 = vmatprep.subr.bf16.mxu0 0
    %398 = vmatpush1.bf16.msra.mxu0 0
    %399 = vmatprep.subr.bf16.mxu0 0
    %400 = vmatpush1.bf16.msra.mxu0 0
    %401 = vmatprep.subr.bf16.mxu0 0
    %402 = vmatpush1.bf16.msra.mxu0 0
    %403 = vmatprep.subr.bf16.mxu0 0
    %404 = vmatpush1.bf16.msra.mxu0 0
    %405 = vmatprep.subr.bf16.mxu0 0
    %406 = vmatpush1.bf16.msra.mxu0 0
    %407 = vmatprep.subr.bf16.mxu0 0
    %408 = vmatpush1.bf16.msra.mxu0 0
    %409 = vmatprep.subr.bf16.mxu0 0
    %410 = vmatpush1.bf16.msra.mxu0 0
    %411 = vmatprep.subr.bf16.mxu0 0
    %412 = vmatpush1.bf16.msra.mxu0 0
    %413 = vmatprep.subr.bf16.mxu0 0
    %414 = vmatpush1.bf16.msra.mxu0 0
    %415 = vmatprep.subr.bf16.mxu0 0
    %416 = vmatpush1.bf16.msra.mxu0 0
    %417 = vmatprep.subr.bf16.mxu0 0
    %418 = vmatpush1.bf16.msra.mxu0 0
    %419 = vmatprep.mubr.bf16.mxu0 0
    %420 = vmatmul.mubr.bf16.gmra.mrb[0].mxu0 %v385
    %v421 = vpop.f32.mrb[0].mxu0
    %v422 = vadd.f32 %v347, %v421
    %v423 = vpop.f32.mrb[0].mxu0
    %v424 = vadd.f32 %v351, %v423
    %v425 = vpop.f32.mrb[0].mxu0
    %v426 = vadd.f32 %v347, %v425
    %v427 = vpop.f32.mrb[0].mxu0
    %v428 = vadd.f32 %v351, %v427
    %429 = vdwg.mxu0
    %v430 = vpack.c.bf16 %v426, %v422
    %432 = vrot.lane.b32.xlu0 %v430, 64
    %v433 = vpop.permute.xlu0 %432
    %vm434 = vcmask 130048
    %v436 = vsel %vm434, %v430, 0
    %v439 = vsel %vm434, %v433, 0
    %441 = vmatprep.subr.bf16.mxu0 0
    %442 = vmatpush1.bf16.xpose.msra.mxu0 %v439
    %443 = vmatprep.subr.bf16.mxu0 0
    %444 = vmatpush1.bf16.xpose.msra.mxu0 0
    %445 = vmatprep.subr.bf16.mxu0 0
    %446 = vmatpush1.bf16.xpose.msra.mxu0 0
    %447 = vmatprep.subr.bf16.mxu0 0
    %448 = vmatpush1.bf16.xpose.msra.mxu0 0
    %449 = vmatprep.subr.bf16.mxu0 0
    %450 = vmatpush1.bf16.xpose.msra.mxu0 0
    %451 = vmatprep.subr.bf16.mxu0 0
    %452 = vmatpush1.bf16.xpose.msra.mxu0 0
    %453 = vmatprep.subr.bf16.mxu0 0
    %454 = vmatpush1.bf16.xpose.msra.mxu0 0
    %455 = vmatprep.subr.bf16.mxu0 0
    %456 = vmatpush1.bf16.xpose.msra.mxu0 0
    %457 = vmatprep.subr.bf16.mxu0 0
    %458 = vmatpush1.bf16.xpose.msra.mxu0 0
    %459 = vmatprep.subr.bf16.mxu0 0
    %460 = vmatpush1.bf16.xpose.msra.mxu0 0
    %461 = vmatprep.subr.bf16.mxu0 0
    %462 = vmatpush1.bf16.xpose.msra.mxu0 0
    %463 = vmatprep.subr.bf16.mxu0 0
    %464 = vmatpush1.bf16.xpose.msra.mxu0 0
    %465 = vmatprep.subr.bf16.mxu0 0
    %466 = vmatpush1.bf16.xpose.msra.mxu0 0
    %467 = vmatprep.subr.bf16.mxu0 0
    %468 = vmatpush1.bf16.xpose.msra.mxu0 0
    %469 = vmatprep.subr.bf16.mxu0 0
    %470 = vmatpush1.bf16.xpose.msra.mxu0 0
    %471 = vmatprep.subr.bf16.mxu0 0
    %472 = vmatpush1.bf16.xpose.msra.mxu0 0
    %473 = vmatprep.mubr.bf16.mxu0 0
    %474 = vmatmul.mubr.bf16.gmra.mrb[0].mxu0 %v436
    %v475 = vpop.f32.mrb[0].mxu0
    %v476 = vadd.f32 0.0, %v475
    %v477 = vpop.f32.mrb[0].mxu0
    %v478 = vpop.f32.mrb[0].mxu0
    %v479 = vadd.f32 0.0, %v478
    %v480 = vpop.f32.mrb[0].mxu0
    %481 = vdwg.mxu0
    %v482 = vmul.f32 %v476, 0.28867513
    %v483 = vmul.f32 %v479, 0.28867513
    %v484 = vadd.f32 %v482, %v53
    %v485 = vadd.f32 %v483, %v54
    %vm486 = vcmask 80896
    %v487 = vsel %vm486, %v484, -inf
    %488 = vmax.xlane.f32.xlu0 %v487
    %v489 = vpop.xlane.xlu0 %488
    %vm490 = vcmask 74752
    %v491 = vsel %vm490, %v485, -inf
    %492 = vmax.xlane.f32.xlu0 %v491
    %v493 = vpop.xlane.xlu0 %492
    %v494 = vsub.f32 %v484, %v489
    %v495 = vsub.f32 %v485, %v493
    %v496 = vmul.f32 %v494, 1.442695
    %v497 = vpow.pop %v496
    %v498 = vmul.f32 %v495, 1.442695
    %v499 = vpow.pop %v498
    %v500 = vsel %vm486, %v497, 0.0
    %501 = vadd.xlane.f32.xlu0 %v500
    %v502 = vpop.xlane.xlu0 %501
    %v503 = vsel %vm490, %v499, 0.0
    %504 = vadd.xlane.f32.xlu0 %v503
    %v505 = vpop.xlane.xlu0 %504
    %v506 = vrcp.pop %v502
    %v507 = vmul.f32 %v497, %v506
    %v508 = vrcp.pop %v505
    %v509 = vmul.f32 %v499, %v508
    %v510 = vpack.c.bf16 %v509, %v507
    %v511 = vpack.c.bf16 %v428, %v424
    %v513 = vsel %vm486, %v510, 0
    %vm515 = vcmask 1044480
    %v517 = vsel %vm515, %v511, 0
    %519 = vmatprep.subr.bf16.mxu0 0
    %520 = vmatpush1.bf16.msra.mxu0 %v517
    %521 = vmatprep.subr.bf16.mxu0 0
    %522 = vmatpush1.bf16.msra.mxu0 0
    %523 = vmatprep.subr.bf16.mxu0 0
    %524 = vmatpush1.bf16.msra.mxu0 0
    %525 = vmatprep.subr.bf16.mxu0 0
    %526 = vmatpush1.bf16.msra.mxu0 0
    %527 = vmatprep.subr.bf16.mxu0 0
    %528 = vmatpush1.bf16.msra.mxu0 0
    %529 = vmatprep.subr.bf16.mxu0 0
    %530 = vmatpush1.bf16.msra.mxu0 0
    %531 = vmatprep.subr.bf16.mxu0 0
    %532 = vmatpush1.bf16.msra.mxu0 0
    %533 = vmatprep.subr.bf16.mxu0 0
    %534 = vmatpush1.bf16.msra.mxu0 0
    %535 = vmatprep.subr.bf16.mxu0 0
    %536 = vmatpush1.bf16.msra.mxu0 0
    %537 = vmatprep.subr.bf16.mxu0 0
    %538 = vmatpush1.bf16.msra.mxu0 0
    %539 = vmatprep.subr.bf16.mxu0 0
    %540 = vmatpush1.bf16.msra.mxu0 0
    %541 = vmatprep.subr.bf16.mxu0 0
    %542 = vmatpush1.bf16.msra.mxu0 0
    %543 = vmatprep.subr.bf16.mxu0 0
    %544 = vmatpush1.bf16.msra.mxu0 0
    %545 = vmatprep.subr.bf16.mxu0 0
    %546 = vmatpush1.bf16.msra.mxu0 0
    %547 = vmatprep.subr.bf16.mxu0 0
    %548 = vmatpush1.bf16.msra.mxu0 0
    %549 = vmatprep.subr.bf16.mxu0 0
    %550 = vmatpush1.bf16.msra.mxu0 0
    %551 = vmatprep.mubr.bf16.mxu0 0
    %552 = vmatmul.mubr.bf16.gmra.mrb[0].mxu0 %v513
    %v553 = vpop.f32.mrb[0].mxu0
    %v554 = vadd.f32 0.0, %v553
    %v555 = vpop.f32.mrb[0].mxu0
    %v556 = vpop.f32.mrb[0].mxu0
    %v557 = vadd.f32 0.0, %v556
    %v558 = vpop.f32.mrb[0].mxu0
    %559 = vdwg.mxu0
    %560 = vrot.lane.b32.xlu0 %v430, 112
    %v561 = vpop.permute.xlu0 %560
    %562 = vrot.lane.b32.xlu0 %v430, 48
    %v563 = vpop.permute.xlu0 %562
    %v565 = vsel %vm434, %v561, 0
    %v568 = vsel %vm434, %v563, 0
    %570 = vmatprep.subr.bf16.mxu0 0
    %571 = vmatpush1.bf16.xpose.msra.mxu0 %v568
    %572 = vmatprep.subr.bf16.mxu0 0
    %573 = vmatpush1.bf16.xpose.msra.mxu0 0
    %574 = vmatprep.subr.bf16.mxu0 0
    %575 = vmatpush1.bf16.xpose.msra.mxu0 0
    %576 = vmatprep.subr.bf16.mxu0 0
    %577 = vmatpush1.bf16.xpose.msra.mxu0 0
    %578 = vmatprep.subr.bf16.mxu0 0
    %579 = vmatpush1.bf16.xpose.msra.mxu0 0
    %580 = vmatprep.subr.bf16.mxu0 0
    %581 = vmatpush1.bf16.xpose.msra.mxu0 0
    %582 = vmatprep.subr.bf16.mxu0 0
    %583 = vmatpush1.bf16.xpose.msra.mxu0 0
    %584 = vmatprep.subr.bf16.mxu0 0
    %585 = vmatpush1.bf16.xpose.msra.mxu0 0
    %586 = vmatprep.subr.bf16.mxu0 0
    %587 = vmatpush1.bf16.xpose.msra.mxu0 0
    %588 = vmatprep.subr.bf16.mxu0 0
    %589 = vmatpush1.bf16.xpose.msra.mxu0 0
    %590 = vmatprep.subr.bf16.mxu0 0
    %591 = vmatpush1.bf16.xpose.msra.mxu0 0
    %592 = vmatprep.subr.bf16.mxu0 0
    %593 = vmatpush1.bf16.xpose.msra.mxu0 0
    %594 = vmatprep.subr.bf16.mxu0 0
    %595 = vmatpush1.bf16.xpose.msra.mxu0 0
    %596 = vmatprep.subr.bf16.mxu0 0
    %597 = vmatpush1.bf16.xpose.msra.mxu0 0
    %598 = vmatprep.subr.bf16.mxu0 0
    %599 = vmatpush1.bf16.xpose.msra.mxu0 0
    %600 = vmatprep.subr.bf16.mxu0 0
    %601 = vmatpush1.bf16.xpose.msra.mxu0 0
    %602 = vmatprep.mubr.bf16.mxu0 0
    %603 = vmatmul.mubr.bf16.gmra.mrb[0].mxu0 %v565
    %v604 = vpop.f32.mrb[0].mxu0
    %v605 = vadd.f32 0.0, %v604
    %v606 = vpop.f32.mrb[0].mxu0
    %v607 = vpop.f32.mrb[0].mxu0
    %v608 = vadd.f32 0.0, %v607
    %v609 = vpop.f32.mrb[0].mxu0
    %610 = vdwg.mxu0
    %v611 = vmul.f32 %v605, 0.28867513
    %v612 = vmul.f32 %v608, 0.28867513
    %v613 = vadd.f32 %v611, %v53
    %v614 = vadd.f32 %v612, %v54
    %v615 = vsel %vm486, %v613, -inf
    %616 = vmax.xlane.f32.xlu0 %v615
    %v617 = vpop.xlane.xlu0 %616
    %v618 = vsel %vm490, %v614, -inf
    %619 = vmax.xlane.f32.xlu0 %v618
    %v620 = vpop.xlane.xlu0 %619
    %v621 = vsub.f32 %v613, %v617
    %v622 = vsub.f32 %v614, %v620
    %v623 = vmul.f32 %v621, 1.442695
    %v624 = vpow.pop %v623
    %v625 = vmul.f32 %v622, 1.442695
    %v626 = vpow.pop %v625
    %v627 = vsel %vm486, %v624, 0.0
    %628 = vadd.xlane.f32.xlu0 %v627
    %v629 = vpop.xlane.xlu0 %628
    %v630 = vsel %vm490, %v626, 0.0
    %631 = vadd.xlane.f32.xlu0 %v630
    %v632 = vpop.xlane.xlu0 %631
    %v633 = vrcp.pop %v629
    %v634 = vmul.f32 %v624, %v633
    %v635 = vrcp.pop %v632
    %v636 = vmul.f32 %v626, %v635
    %v637 = vpack.c.bf16 %v636, %v634
    %639 = vrot.lane.b32.xlu0 %v511, 112
    %v640 = vpop.permute.xlu0 %639
    %v642 = vsel %vm486, %v637, 0
    %v645 = vsel %vm515, %v640, 0
    %647 = vmatprep.subr.bf16.mxu0 0
    %648 = vmatpush1.bf16.msra.mxu0 %v645
    %649 = vmatprep.subr.bf16.mxu0 0
    %650 = vmatpush1.bf16.msra.mxu0 0
    %651 = vmatprep.subr.bf16.mxu0 0
    %652 = vmatpush1.bf16.msra.mxu0 0
    %653 = vmatprep.subr.bf16.mxu0 0
    %654 = vmatpush1.bf16.msra.mxu0 0
    %655 = vmatprep.subr.bf16.mxu0 0
    %656 = vmatpush1.bf16.msra.mxu0 0
    %657 = vmatprep.subr.bf16.mxu0 0
    %658 = vmatpush1.bf16.msra.mxu0 0
    %659 = vmatprep.subr.bf16.mxu0 0
    %660 = vmatpush1.bf16.msra.mxu0 0
    %661 = vmatprep.subr.bf16.mxu0 0
    %662 = vmatpush1.bf16.msra.mxu0 0
    %663 = vmatprep.subr.bf16.mxu0 0
    %664 = vmatpush1.bf16.msra.mxu0 0
    %665 = vmatprep.subr.bf16.mxu0 0
    %666 = vmatpush1.bf16.msra.mxu0 0
    %667 = vmatprep.subr.bf16.mxu0 0
    %668 = vmatpush1.bf16.msra.mxu0 0
    %669 = vmatprep.subr.bf16.mxu0 0
    %670 = vmatpush1.bf16.msra.mxu0 0
    %671 = vmatprep.subr.bf16.mxu0 0
    %672 = vmatpush1.bf16.msra.mxu0 0
    %673 = vmatprep.subr.bf16.mxu0 0
    %674 = vmatpush1.bf16.msra.mxu0 0
    %675 = vmatprep.subr.bf16.mxu0 0
    %676 = vmatpush1.bf16.msra.mxu0 0
    %677 = vmatprep.subr.bf16.mxu0 0
    %678 = vmatpush1.bf16.msra.mxu0 0
    %679 = vmatprep.mubr.bf16.mxu0 0
    %680 = vmatmul.mubr.bf16.gmra.mrb[0].mxu0 %v642
    %v681 = vpop.f32.mrb[0].mxu0
    %v682 = vadd.f32 0.0, %v681
    %v683 = vpop.f32.mrb[0].mxu0
    %v684 = vpop.f32.mrb[0].mxu0
    %v685 = vadd.f32 0.0, %v684
    %v686 = vpop.f32.mrb[0].mxu0
    %687 = vdwg.mxu0
    %688 = vrot.lane.b32.xlu0 %v430, 96
    %v689 = vpop.permute.xlu0 %688
    %690 = vrot.lane.b32.xlu0 %v430, 32
    %v691 = vpop.permute.xlu0 %690
    %v693 = vsel %vm434, %v689, 0
    %v696 = vsel %vm434, %v691, 0
    %698 = vmatprep.subr.bf16.mxu0 0
    %699 = vmatpush1.bf16.xpose.msra.mxu0 %v696
    %700 = vmatprep.subr.bf16.mxu0 0
    %701 = vmatpush1.bf16.xpose.msra.mxu0 0
    %702 = vmatprep.subr.bf16.mxu0 0
    %703 = vmatpush1.bf16.xpose.msra.mxu0 0
    %704 = vmatprep.subr.bf16.mxu0 0
    %705 = vmatpush1.bf16.xpose.msra.mxu0 0
    %706 = vmatprep.subr.bf16.mxu0 0
    %707 = vmatpush1.bf16.xpose.msra.mxu0 0
    %708 = vmatprep.subr.bf16.mxu0 0
    %709 = vmatpush1.bf16.xpose.msra.mxu0 0
    %710 = vmatprep.subr.bf16.mxu0 0
    %711 = vmatpush1.bf16.xpose.msra.mxu0 0
    %712 = vmatprep.subr.bf16.mxu0 0
    %713 = vmatpush1.bf16.xpose.msra.mxu0 0
    %714 = vmatprep.subr.bf16.mxu0 0
    %715 = vmatpush1.bf16.xpose.msra.mxu0 0
    %716 = vmatprep.subr.bf16.mxu0 0
    %717 = vmatpush1.bf16.xpose.msra.mxu0 0
    %718 = vmatprep.subr.bf16.mxu0 0
    %719 = vmatpush1.bf16.xpose.msra.mxu0 0
    %720 = vmatprep.subr.bf16.mxu0 0
    %721 = vmatpush1.bf16.xpose.msra.mxu0 0
    %722 = vmatprep.subr.bf16.mxu0 0
    %723 = vmatpush1.bf16.xpose.msra.mxu0 0
    %724 = vmatprep.subr.bf16.mxu0 0
    %725 = vmatpush1.bf16.xpose.msra.mxu0 0
    %726 = vmatprep.subr.bf16.mxu0 0
    %727 = vmatpush1.bf16.xpose.msra.mxu0 0
    %728 = vmatprep.subr.bf16.mxu0 0
    %729 = vmatpush1.bf16.xpose.msra.mxu0 0
    %730 = vmatprep.mubr.bf16.mxu0 0
    %731 = vmatmul.mubr.bf16.gmra.mrb[0].mxu0 %v693
    %v732 = vpop.f32.mrb[0].mxu0
    %v733 = vadd.f32 0.0, %v732
    %v734 = vpop.f32.mrb[0].mxu0
    %v735 = vpop.f32.mrb[0].mxu0
    %v736 = vadd.f32 0.0, %v735
    %v737 = vpop.f32.mrb[0].mxu0
    %738 = vdwg.mxu0
    %v739 = vmul.f32 %v733, 0.28867513
    %v740 = vmul.f32 %v736, 0.28867513
    %v741 = vadd.f32 %v739, %v53
    %v742 = vadd.f32 %v740, %v54
    %v743 = vsel %vm486, %v741, -inf
    %744 = vmax.xlane.f32.xlu0 %v743
    %v745 = vpop.xlane.xlu0 %744
    %v746 = vsel %vm490, %v742, -inf
    %747 = vmax.xlane.f32.xlu0 %v746
    %v748 = vpop.xlane.xlu0 %747
    %v749 = vsub.f32 %v741, %v745
    %v750 = vsub.f32 %v742, %v748
    %v751 = vmul.f32 %v749, 1.442695
    %v752 = vpow.pop %v751
    %v753 = vmul.f32 %v750, 1.442695
    %v754 = vpow.pop %v753
    %v755 = vsel %vm486, %v752, 0.0
    %756 = vadd.xlane.f32.xlu0 %v755
    %v757 = vpop.xlane.xlu0 %756
    %v758 = vsel %vm490, %v754, 0.0
    %759 = vadd.xlane.f32.xlu0 %v758
    %v760 = vpop.xlane.xlu0 %759
    %v761 = vrcp.pop %v757
    %v762 = vmul.f32 %v752, %v761
    %v763 = vrcp.pop %v760
    %v764 = vmul.f32 %v754, %v763
    %v765 = vpack.c.bf16 %v764, %v762
    %766 = vrot.lane.b32.xlu0 %v511, 96
    %v767 = vpop.permute.xlu0 %766
    %v769 = vsel %vm486, %v765, 0
    %v772 = vsel %vm515, %v767, 0
    %774 = vmatprep.subr.bf16.mxu0 0
    %775 = vmatpush1.bf16.msra.mxu0 %v772
    %776 = vmatprep.subr.bf16.mxu0 0
    %777 = vmatpush1.bf16.msra.mxu0 0
    %778 = vmatprep.subr.bf16.mxu0 0
    %779 = vmatpush1.bf16.msra.mxu0 0
    %780 = vmatprep.subr.bf16.mxu0 0
    %781 = vmatpush1.bf16.msra.mxu0 0
    %782 = vmatprep.subr.bf16.mxu0 0
    %783 = vmatpush1.bf16.msra.mxu0 0
    %784 = vmatprep.subr.bf16.mxu0 0
    %785 = vmatpush1.bf16.msra.mxu0 0
    %786 = vmatprep.subr.bf16.mxu0 0
    %787 = vmatpush1.bf16.msra.mxu0 0
    %788 = vmatprep.subr.bf16.mxu0 0
    %789 = vmatpush1.bf16.msra.mxu0 0
    %790 = vmatprep.subr.bf16.mxu0 0
    %791 = vmatpush1.bf16.msra.mxu0 0
    %792 = vmatprep.subr.bf16.mxu0 0
    %793 = vmatpush1.bf16.msra.mxu0 0
    %794 = vmatprep.subr.bf16.mxu0 0
    %795 = vmatpush1.bf16.msra.mxu0 0
    %796 = vmatprep.subr.bf16.mxu0 0
    %797 = vmatpush1.bf16.msra.mxu0 0
    %798 = vmatprep.subr.bf16.mxu0 0
    %799 = vmatpush1.bf16.msra.mxu0 0
    %800 = vmatprep.subr.bf16.mxu0 0
    %801 = vmatpush1.bf16.msra.mxu0 0
    %802 = vmatprep.subr.bf16.mxu0 0
    %803 = vmatpush1.bf16.msra.mxu0 0
    %804 = vmatprep.subr.bf16.mxu0 0
    %805 = vmatpush1.bf16.msra.mxu0 0
    %806 = vmatprep.mubr.bf16.mxu0 0
    %807 = vmatmul.mubr.bf16.gmra.mrb[0].mxu0 %v769
    %v808 = vpop.f32.mrb[0].mxu0
    %v809 = vadd.f32 0.0, %v808
    %v810 = vpop.f32.mrb[0].mxu0
    %v811 = vpop.f32.mrb[0].mxu0
    %v812 = vadd.f32 0.0, %v811
    %v813 = vpop.f32.mrb[0].mxu0
    %814 = vdwg.mxu0
    %815 = vrot.lane.b32.xlu0 %v430, 80
    %v816 = vpop.permute.xlu0 %815
    %817 = vrot.lane.b32.xlu0 %v430, 16
    %v818 = vpop.permute.xlu0 %817
    %v820 = vsel %vm434, %v816, 0
    %v823 = vsel %vm434, %v818, 0
    %825 = vmatprep.subr.bf16.mxu0 0
    %826 = vmatpush1.bf16.xpose.msra.mxu0 %v823
    %827 = vmatprep.subr.bf16.mxu0 0
    %828 = vmatpush1.bf16.xpose.msra.mxu0 0
    %829 = vmatprep.subr.bf16.mxu0 0
    %830 = vmatpush1.bf16.xpose.msra.mxu0 0
    %831 = vmatprep.subr.bf16.mxu0 0
    %832 = vmatpush1.bf16.xpose.msra.mxu0 0
    %833 = vmatprep.subr.bf16.mxu0 0
    %834 = vmatpush1.bf16.xpose.msra.mxu0 0
    %835 = vmatprep.subr.bf16.mxu0 0
    %836 = vmatpush1.bf16.xpose.msra.mxu0 0
    %837 = vmatprep.subr.bf16.mxu0 0
    %838 = vmatpush1.bf16.xpose.msra.mxu0 0
    %839 = vmatprep.subr.bf16.mxu0 0
    %840 = vmatpush1.bf16.xpose.msra.mxu0 0
    %841 = vmatprep.subr.bf16.mxu0 0
    %842 = vmatpush1.bf16.xpose.msra.mxu0 0
    %843 = vmatprep.subr.bf16.mxu0 0
    %844 = vmatpush1.bf16.xpose.msra.mxu0 0
    %845 = vmatprep.subr.bf16.mxu0 0
    %846 = vmatpush1.bf16.xpose.msra.mxu0 0
    %847 = vmatprep.subr.bf16.mxu0 0
    %848 = vmatpush1.bf16.xpose.msra.mxu0 0
    %849 = vmatprep.subr.bf16.mxu0 0
    %850 = vmatpush1.bf16.xpose.msra.mxu0 0
    %851 = vmatprep.subr.bf16.mxu0 0
    %852 = vmatpush1.bf16.xpose.msra.mxu0 0
    %853 = vmatprep.subr.bf16.mxu0 0
    %854 = vmatpush1.bf16.xpose.msra.mxu0 0
    %855 = vmatprep.subr.bf16.mxu0 0
    %856 = vmatpush1.bf16.xpose.msra.mxu0 0
    %857 = vmatprep.mubr.bf16.mxu0 0
    %858 = vmatmul.mubr.bf16.gmra.mrb[0].mxu0 %v820
    %v859 = vpop.f32.mrb[0].mxu0
    %v860 = vadd.f32 0.0, %v859
    %v861 = vpop.f32.mrb[0].mxu0
    %v862 = vpop.f32.mrb[0].mxu0
    %v863 = vadd.f32 0.0, %v862
    %v864 = vpop.f32.mrb[0].mxu0
    %865 = vdwg.mxu0
    %v866 = vmul.f32 %v860, 0.28867513
    %v867 = vmul.f32 %v863, 0.28867513
    %v868 = vadd.f32 %v866, %v53
    %v869 = vadd.f32 %v867, %v54
    %v870 = vsel %vm486, %v868, -inf
    %871 = vmax.xlane.f32.xlu0 %v870
    %v872 = vpop.xlane.xlu0 %871
    %v873 = vsel %vm490, %v869, -inf
    %874 = vmax.xlane.f32.xlu0 %v873
    %v875 = vpop.xlane.xlu0 %874
    %v876 = vsub.f32 %v868, %v872
    %v877 = vsub.f32 %v869, %v875
    %v878 = vmul.f32 %v876, 1.442695
    %v879 = vpow.pop %v878
    %v880 = vmul.f32 %v877, 1.442695
    %v881 = vpow.pop %v880
    %v882 = vsel %vm486, %v879, 0.0
    %883 = vadd.xlane.f32.xlu0 %v882
    %v884 = vpop.xlane.xlu0 %883
    %v885 = vsel %vm490, %v881, 0.0
    %886 = vadd.xlane.f32.xlu0 %v885
    %v887 = vpop.xlane.xlu0 %886
    %v888 = vrcp.pop %v884
    %v889 = vmul.f32 %v879, %v888
    %v890 = vrcp.pop %v887
    %v891 = vmul.f32 %v881, %v890
    %v892 = vpack.c.bf16 %v891, %v889
    %893 = vrot.lane.b32.xlu0 %v511, 80
    %v894 = vpop.permute.xlu0 %893
    %v896 = vsel %vm486, %v892, 0
    %v899 = vsel %vm515, %v894, 0
    %901 = vmatprep.subr.bf16.mxu0 0
    %902 = vmatpush1.bf16.msra.mxu0 %v899
    %903 = vmatprep.subr.bf16.mxu0 0
    %904 = vmatpush1.bf16.msra.mxu0 0
    %905 = vmatprep.subr.bf16.mxu0 0
    %906 = vmatpush1.bf16.msra.mxu0 0
    %907 = vmatprep.subr.bf16.mxu0 0
    %908 = vmatpush1.bf16.msra.mxu0 0
    %909 = vmatprep.subr.bf16.mxu0 0
    %910 = vmatpush1.bf16.msra.mxu0 0
    %911 = vmatprep.subr.bf16.mxu0 0
    %912 = vmatpush1.bf16.msra.mxu0 0
    %913 = vmatprep.subr.bf16.mxu0 0
    %914 = vmatpush1.bf16.msra.mxu0 0
    %915 = vmatprep.subr.bf16.mxu0 0
    %916 = vmatpush1.bf16.msra.mxu0 0
    %917 = vmatprep.subr.bf16.mxu0 0
    %918 = vmatpush1.bf16.msra.mxu0 0
    %919 = vmatprep.subr.bf16.mxu0 0
    %920 = vmatpush1.bf16.msra.mxu0 0
    %921 = vmatprep.subr.bf16.mxu0 0
    %922 = vmatpush1.bf16.msra.mxu0 0
    %923 = vmatprep.subr.bf16.mxu0 0
    %924 = vmatpush1.bf16.msra.mxu0 0
    %925 = vmatprep.subr.bf16.mxu0 0
    %926 = vmatpush1.bf16.msra.mxu0 0
    %927 = vmatprep.subr.bf16.mxu0 0
    %928 = vmatpush1.bf16.msra.mxu0 0
    %929 = vmatprep.subr.bf16.mxu0 0
    %930 = vmatpush1.bf16.msra.mxu0 0
    %931 = vmatprep.subr.bf16.mxu0 0
    %932 = vmatpush1.bf16.msra.mxu0 0
    %933 = vmatprep.mubr.bf16.mxu0 0
    %934 = vmatmul.mubr.bf16.gmra.mrb[0].mxu0 %v896
    %v935 = vpop.f32.mrb[0].mxu0
    %v936 = vadd.f32 0.0, %v935
    %v937 = vpop.f32.mrb[0].mxu0
    %v938 = vpop.f32.mrb[0].mxu0
    %v939 = vadd.f32 0.0, %v938
    %v940 = vpop.f32.mrb[0].mxu0
    %941 = vdwg.mxu0
    %944 = vrot.lane.b32.xlu0 %v682, 16
    %v945 = vpop.permute.xlu0 %944
    %946 = vrot.lane.b32.xlu0 %v685, 16
    %v947 = vpop.permute.xlu0 %946
    %952 = vrot.lane.b32.xlu0 %v809, 32
    %v953 = vpop.permute.xlu0 %952
    %954 = vrot.lane.b32.xlu0 %v812, 32
    %v955 = vpop.permute.xlu0 %954
    %960 = vrot.lane.b32.xlu0 %v936, 48
    %v961 = vpop.permute.xlu0 %960
    %962 = vrot.lane.b32.xlu0 %v939, 48
    %v963 = vpop.permute.xlu0 %962
    %v966 = vsel %vm434, %v554, %v945
    %v967 = vsel %vm434, %v557, %v947
    %vm968 = vcmask 261120
    %v969 = vsel %vm968, %v966, %v953
    %v970 = vsel %vm968, %v967, %v955
    %v971 = vsel %vm254, %v969, %v961
    %v972 = vsel %vm254, %v970, %v963
    %v973 = vld [vmem:[%s3 + $0xf0] sm:$0xf]
    %v974 = vld [vmem:[%s3 + $0xf8] sm:$0xf]
    %v975 = vld [vmem:[%s3 + $0x100] sm:$0xf]
    %v976 = vld [vmem:[%s3 + $0x108] sm:$0xf]
    %v977 = vld [vmem:[%s3 + $0x110] sm:$0xf]
    %v978 = vld [vmem:[%s3 + $0x118] sm:$0xf]
    %v979 = vld [vmem:[%s3 + $0x120] sm:$0xf]
    %v980 = vld [vmem:[%s3 + $0x128] sm:$0xf]
    %v981 = vpack.c.bf16 %v972, %v971
    %v982 = vld [vmem:[%s4 + $0x50] ss:$0 sm:$0xff]
    %v991 = vunpack.c.l.b16 %v973
    %v992 = vunpack.c.l.b16 %v974
    %v993 = vunpack.c.l.b16 %v975
    %v994 = vunpack.c.l.b16 %v976
    %v995 = vunpack.c.l.b16 %v977
    %v996 = vunpack.c.l.b16 %v978
    %v997 = vunpack.c.l.b16 %v979
    %v998 = vunpack.c.l.b16 %v980
    %v999 = vpack.c.b16 %v992, %v991
    %v1000 = vpack.c.b16 %v994, %v993
    %v1001 = vpack.c.b16 %v996, %v995
    %v1002 = vpack.c.b16 %v998, %v997
    %v1008 = vsel %vm208, %v981, 0
    %1010 = vmatprep.subr.bf16.mxu0 0
    %1011 = vmatpush1.bf16.msra.mxu0 %v999
    %1012 = vmatprep.subr.bf16.mxu0 0
    %1013 = vmatpush1.bf16.msra.mxu0 %v1000
    %1014 = vmatprep.subr.bf16.mxu0 0
    %1015 = vmatpush1.bf16.msra.mxu0 %v1001
    %1016 = vmatprep.subr.bf16.mxu0 0
    %1017 = vmatpush1.bf16.msra.mxu0 %v1002
    %1018 = vmatprep.subr.bf16.mxu0 0
    %1019 = vmatpush1.bf16.msra.mxu0 0
    %1020 = vmatprep.subr.bf16.mxu0 0
    %1021 = vmatpush1.bf16.msra.mxu0 0
    %1022 = vmatprep.subr.bf16.mxu0 0
    %1023 = vmatpush1.bf16.msra.mxu0 0
    %1024 = vmatprep.subr.bf16.mxu0 0
    %1025 = vmatpush1.bf16.msra.mxu0 0
    %1026 = vmatprep.subr.bf16.mxu0 0
    %1027 = vmatpush1.bf16.msra.mxu0 0
    %1028 = vmatprep.subr.bf16.mxu0 0
    %1029 = vmatpush1.bf16.msra.mxu0 0
    %1030 = vmatprep.subr.bf16.mxu0 0
    %1031 = vmatpush1.bf16.msra.mxu0 0
    %1032 = vmatprep.subr.bf16.mxu0 0
    %1033 = vmatpush1.bf16.msra.mxu0 0
    %1034 = vmatprep.subr.bf16.mxu0 0
    %1035 = vmatpush1.bf16.msra.mxu0 0
    %1036 = vmatprep.subr.bf16.mxu0 0
    %1037 = vmatpush1.bf16.msra.mxu0 0
    %1038 = vmatprep.subr.bf16.mxu0 0
    %1039 = vmatpush1.bf16.msra.mxu0 0
    %1040 = vmatprep.subr.bf16.mxu0 0
    %1041 = vmatpush1.bf16.msra.mxu0 0
    %1042 = vmatprep.mubr.bf16.mxu0 0
    %1043 = vmatmul.mubr.bf16.gmra.mrb[0].mxu0 %v1008
    %v1044 = vpop.f32.mrb[0].mxu0
    %v1045 = vadd.f32 %v982, %v1044
    %v1046 = vpop.f32.mrb[0].mxu0
    %v1047 = vpop.f32.mrb[0].mxu0
    %v1048 = vadd.f32 %v982, %v1047
    %v1049 = vpop.f32.mrb[0].mxu0
    %1050 = vdwg.mxu0
    %v1051 = vadd.f32 %v293, %v1045
    %v1052 = vadd.f32 %v294, %v1048
    %v1053 = vld [vmem:[%s4 + $0x60] sm:$0x3]
    %v1054 = vsel %vm254, %v1051, 0.0
    %1055 = vadd.xlane.f32.xlu0 %v1054
    %v1056 = vpop.xlane.xlu0 %1055
    %v1057 = vsel %vm258, %v1052, 0.0
    %1058 = vadd.xlane.f32.xlu0 %v1057
    %v1059 = vpop.xlane.xlu0 %1058
    %v1060 = vmul.f32 %v1056, %v262
    %v1061 = vmul.f32 %v1059, %v262
    %v1062 = vsub.f32 %v1051, %v1060
    %v1063 = vsub.f32 %v1052, %v1061
    %v1064 = vmul.f32 %v1062, %v1062
    %v1065 = vmul.f32 %v1063, %v1063
    %v1066 = vsel %vm254, %v1064, 0.0
    %1067 = vadd.xlane.f32.xlu0 %v1066
    %v1068 = vpop.xlane.xlu0 %1067
    %v1069 = vsel %vm258, %v1065, 0.0
    %1070 = vadd.xlane.f32.xlu0 %v1069
    %v1071 = vpop.xlane.xlu0 %1070
    %v1072 = vmul.f32 %v1068, %v262
    %v1073 = vmul.f32 %v1071, %v262
    %v1074 = vadd.f32 %v1072, 1e-05
    %v1075 = vadd.f32 %v1073, 1e-05
    %v1076 = vrsqrt.pop %v1074
    %v1077 = vrsqrt.pop %v1075
    %v1078 = vmul.f32 %v1062, %v1076
    %v1079 = vmul.f32 %v1063, %v1077
    %v1080 = vlaneseq
    %v1081 = vshrl.u32 %v1080, 7
    %v1082 = vsub.s32 0, %v1081
    %v1083 = vrot.slane %v1053, %v1082
    %v1084 = vmul.f32 %v1078, %v1083
    %v1085 = vmul.f32 %v1079, %v1083
    %v1086 = vlaneseq
    %v1087 = vshrl.u32 %v1086, 7
    %v1088 = vsub.s32 1, %v1087
    %v1089 = vrot.slane %v1053, %v1088
    %v1090 = vadd.f32 %v1084, %v1089
    %v1091 = vadd.f32 %v1085, %v1089
    %v1092 = vld [vmem:[%s3 + $0x130] sm:$0xff]
    %v1093 = vld [vmem:[%s3 + $0x138] sm:$0xff]
    %v1094 = vld [vmem:[%s3 + $0x140] sm:$0xff]
    %v1095 = vld [vmem:[%s3 + $0x148] sm:$0xff]
    %v1096 = vld [vmem:[%s3 + $0x150] sm:$0xff]
    %v1097 = vld [vmem:[%s3 + $0x158] sm:$0xff]
    %v1098 = vpack.c.bf16 %v1091, %v1090
    %s1099 = scalar_lea.vmem %s4, 112
    %v1100 = vld [vmem:[%s1099] ss:$8 sm:$0x3]
    %v1102 = vlaneseq
    %v1103 = vshrl.u32 %v1102, 7
    %v1104 = vsub.s32 0, %v1103
    %v1105 = vrot.slane %v1100, %v1104
    %v1106 = vlaneseq
    %v1107 = vshrl.u32 %v1106, 7
    %v1108 = vsub.s32 1, %v1107
    %v1109 = vrot.slane %v1100, %v1108
    %v1118 = vunpack.c.l.b16 %v1092
    %v1119 = vunpack.c.h.b16 %v1092
    %v1120 = vunpack.c.l.b16 %v1093
    %v1121 = vunpack.c.h.b16 %v1093
    %v1122 = vunpack.c.l.b16 %v1094
    %v1123 = vunpack.c.h.b16 %v1094
    %v1124 = vunpack.c.l.b16 %v1095
    %v1125 = vunpack.c.h.b16 %v1095
    %v1126 = vunpack.c.l.b16 %v1096
    %v1127 = vunpack.c.h.b16 %v1096
    %v1128 = vunpack.c.l.b16 %v1097
    %v1129 = vunpack.c.h.b16 %v1097
    %v1130 = vpack.c.b16 %v1120, %v1118
    %v1131 = vpack.c.b16 %v1121, %v1119
    %v1132 = vpack.c.b16 %v1124, %v1122
    %v1133 = vpack.c.b16 %v1125, %v1123
    %v1134 = vpack.c.b16 %v1128, %v1126
    %v1135 = vpack.c.b16 %v1129, %v1127
    %v1143 = vsel %vm254, %v1098, 0
    %1145 = vmatprep.subr.bf16.mxu0 %v1131
    %1146 = vmatpush1.bf16.msra.mxu0 %v1130
    %1147 = vmatprep.subr.bf16.mxu0 %v1133
    %1148 = vmatpush1.bf16.msra.mxu0 %v1132
    %1149 = vmatprep.subr.bf16.mxu0 %v1135
    %1150 = vmatpush1.bf16.msra.mxu0 %v1134
    %1151 = vmatprep.subr.bf16.mxu0 0
    %1152 = vmatpush1.bf16.msra.mxu0 0
    %1153 = vmatprep.subr.bf16.mxu0 0
    %1154 = vmatpush1.bf16.msra.mxu0 0
    %1155 = vmatprep.subr.bf16.mxu0 0
    %1156 = vmatpush1.bf16.msra.mxu0 0
    %1157 = vmatprep.subr.bf16.mxu0 0
    %1158 = vmatpush1.bf16.msra.mxu0 0
    %1159 = vmatprep.subr.bf16.mxu0 0
    %1160 = vmatpush1.bf16.msra.mxu0 0
    %1161 = vmatprep.subr.bf16.mxu0 0
    %1162 = vmatpush1.bf16.msra.mxu0 0
    %1163 = vmatprep.subr.bf16.mxu0 0
    %1164 = vmatpush1.bf16.msra.mxu0 0
    %1165 = vmatprep.subr.bf16.mxu0 0
    %1166 = vmatpush1.bf16.msra.mxu0 0
    %1167 = vmatprep.subr.bf16.mxu0 0
    %1168 = vmatpush1.bf16.msra.mxu0 0
    %1169 = vmatprep.subr.bf16.mxu0 0
    %1170 = vmatpush1.bf16.msra.mxu0 0
    %1171 = vmatprep.subr.bf16.mxu0 0
    %1172 = vmatpush1.bf16.msra.mxu0 0
    %1173 = vmatprep.subr.bf16.mxu0 0
    %1174 = vmatpush1.bf16.msra.mxu0 0
    %1175 = vmatprep.subr.bf16.mxu0 0
    %1176 = vmatpush1.bf16.msra.mxu0 0
    %1177 = vmatprep.mubr.bf16.mxu0 0
    %1178 = vmatmul.mubr.bf16.gmra.mrb[0].mxu0 %v1143
    %v1179 = vpop.f32.mrb[0].mxu0
    %v1180 = vadd.f32 %v1105, %v1179
    %v1181 = vpop.f32.mrb[0].mxu0
    %v1182 = vadd.f32 %v1109, %v1181
    %v1183 = vpop.f32.mrb[0].mxu0
    %v1184 = vadd.f32 %v1105, %v1183
    %v1185 = vpop.f32.mrb[0].mxu0
    %v1186 = vadd.f32 %v1109, %v1185
    %1187 = vdwg.mxu0
    %v1188 = vmul.f32 %v1180, 1.702
    %v1189 = vmul.f32 %v1182, 1.702
    %v1190 = vmul.f32 %v1184, 1.702
    %v1191 = vmul.f32 %v1186, 1.702
    %v1192 = vxor.u32 %v1188, 2147483648
    %v1193 = vxor.u32 %v1189, 2147483648
    %v1194 = vxor.u32 %v1190, 2147483648
    %v1195 = vxor.u32 %v1191, 2147483648
    %v1196 = vmul.f32 %v1192, 1.442695
    %v1197 = vpow.pop %v1196
    %v1198 = vmul.f32 %v1193, 1.442695
    %v1199 = vpow.pop %v1198
    %v1200 = vmul.f32 %v1194, 1.442695
    %v1201 = vpow.pop %v1200
    %v1202 = vmul.f32 %v1195, 1.442695
    %v1203 = vpow.pop %v1202
    %v1204 = vadd.f32 %v1197, 1.0
    %v1205 = vadd.f32 %v1199, 1.0
    %v1206 = vadd.f32 %v1201, 1.0
    %v1207 = vadd.f32 %v1203, 1.0
    %v1208 = vrcp.pop %v1204
    %v1209 = vmul.f32 1.0, %v1208
    %v1210 = vrcp.pop %v1205
    %v1211 = vmul.f32 1.0, %v1210
    %v1212 = vrcp.pop %v1206
    %v1213 = vmul.f32 1.0, %v1212
    %v1214 = vrcp.pop %v1207
    %v1215 = vmul.f32 1.0, %v1214
    %v1216 = vmul.f32 %v1180, %v1209
    %v1217 = vmul.f32 %v1182, %v1211
    %v1218 = vmul.f32 %v1184, %v1213
    %v1219 = vmul.f32 %v1186, %v1215
    %v1220 = vld [vmem:[%s3 + $0x160] sm:$0xf]
    %v1221 = vld [vmem:[%s3 + $0x168] sm:$0xf]
    %v1222 = vld [vmem:[%s3 + $0x170] sm:$0xf]
    %v1223 = vld [vmem:[%s3 + $0x178] sm:$0xf]
    %v1224 = vld [vmem:[%s3 + $0x180] sm:$0xf]
    %v1225 = vld [vmem:[%s3 + $0x188] sm:$0xf]
    %v1226 = vld [vmem:[%s3 + $0x190] sm:$0xf]
    %v1227 = vld [vmem:[%s3 + $0x198] sm:$0xf]
    %v1228 = vld [vmem:[%s3 + $0x1a0] sm:$0xf]
    %v1229 = vld [vmem:[%s3 + $0x1a8] sm:$0xf]
    %v1230 = vld [vmem:[%s3 + $0x1b0] sm:$0xf]
    %v1231 = vld [vmem:[%s3 + $0x1b8] sm:$0xf]
    %v1232 = vld [vmem:[%s3 + $0x1c0] sm:$0xf]
    %v1233 = vld [vmem:[%s3 + $0x1c8] sm:$0xf]
    %v1234 = vld [vmem:[%s3 + $0x1d0] sm:$0xf]
    %v1235 = vld [vmem:[%s3 + $0x1d8] sm:$0xf]
    %v1236 = vld [vmem:[%s3 + $0x1e0] sm:$0xf]
    %v1237 = vld [vmem:[%s3 + $0x1e8] sm:$0xf]
    %v1238 = vld [vmem:[%s3 + $0x1f0] sm:$0xf]
    %v1239 = vld [vmem:[%s3 + $0x1f8] sm:$0xf]
    %v1240 = vld [vmem:[%s3 + $0x200] sm:$0xf]
    %v1241 = vld [vmem:[%s3 + $0x208] sm:$0xf]
    %v1242 = vld [vmem:[%s3 + $0x210] sm:$0xf]
    %v1243 = vld [vmem:[%s3 + $0x218] sm:$0xf]
    %v1244 = vpack.c.bf16 %v1218, %v1216
    %v1245 = vpack.c.bf16 %v1219, %v1217
    %v1246 = vld [vmem:[%s4 + $0x80] ss:$0 sm:$0xff]
    %v1271 = vunpack.c.l.b16 %v1220
    %v1272 = vunpack.c.l.b16 %v1221
    %v1273 = vunpack.c.l.b16 %v1222
    %v1274 = vunpack.c.l.b16 %v1223
    %v1275 = vunpack.c.l.b16 %v1224
    %v1276 = vunpack.c.l.b16 %v1225
    %v1277 = vunpack.c.l.b16 %v1226
    %v1278 = vunpack.c.l.b16 %v1227
    %v1279 = vunpack.c.l.b16 %v1228
    %v1280 = vunpack.c.l.b16 %v1229
    %v1281 = vunpack.c.l.b16 %v1230
    %v1282 = vunpack.c.l.b16 %v1231
    %v1283 = vunpack.c.l.b16 %v1232
    %v1284 = vunpack.c.l.b16 %v1233
    %v1285 = vunpack.c.l.b16 %v1234
    %v1286 = vunpack.c.l.b16 %v1235
    %v1287 = vunpack.c.l.b16 %v1236
    %v1288 = vunpack.c.l.b16 %v1237
    %v1289 = vunpack.c.l.b16 %v1238
    %v1290 = vunpack.c.l.b16 %v1239
    %v1291 = vunpack.c.l.b16 %v1240
    %v1292 = vunpack.c.l.b16 %v1241
    %v1293 = vunpack.c.l.b16 %v1242
    %v1294 = vunpack.c.l.b16 %v1243
    %v1295 = vpack.c.b16 %v1272, %v1271
    %v1296 = vpack.c.b16 %v1274, %v1273
    %v1297 = vpack.c.b16 %v1276, %v1275
    %v1298 = vpack.c.b16 %v1278, %v1277
    %v1299 = vpack.c.b16 %v1280, %v1279
    %v1300 = vpack.c.b16 %v1282, %v1281
    %v1301 = vpack.c.b16 %v1284, %v1283
    %v1302 = vpack.c.b16 %v1286, %v1285
    %v1303 = vpack.c.b16 %v1288, %v1287
    %v1304 = vpack.c.b16 %v1290, %v1289
    %v1305 = vpack.c.b16 %v1292, %v1291
    %v1306 = vpack.c.b16 %v1294, %v1293
    %v1320 = vsel %vm208, %v1245, 0
    %1322 = vmatprep.subr.bf16.mxu0 0
    %1323 = vmatpush1.bf16.msra.mxu0 %v1295
    %1324 = vmatprep.subr.bf16.mxu0 0
    %1325 = vmatpush1.bf16.msra.mxu0 %v1296
    %1326 = vmatprep.subr.bf16.mxu0 0
    %1327 = vmatpush1.bf16.msra.mxu0 %v1297
    %1328 = vmatprep.subr.bf16.mxu0 0
    %1329 = vmatpush1.bf16.msra.mxu0 %v1298
    %1330 = vmatprep.subr.bf16.mxu0 0
    %1331 = vmatpush1.bf16.msra.mxu0 %v1299
    %1332 = vmatprep.subr.bf16.mxu0 0
    %1333 = vmatpush1.bf16.msra.mxu0 %v1300
    %1334 = vmatprep.subr.bf16.mxu0 0
    %1335 = vmatpush1.bf16.msra.mxu0 %v1301
    %1336 = vmatprep.subr.bf16.mxu0 0
    %1337 = vmatpush1.bf16.msra.mxu0 %v1302
    %1338 = vmatprep.subr.bf16.mxu0 0
    %1339 = vmatpush1.bf16.msra.mxu0 %v1303
    %1340 = vmatprep.subr.bf16.mxu0 0
    %1341 = vmatpush1.bf16.msra.mxu0 %v1304
    %1342 = vmatprep.subr.bf16.mxu0 0
    %1343 = vmatpush1.bf16.msra.mxu0 %v1305
    %1344 = vmatprep.subr.bf16.mxu0 0
    %1345 = vmatpush1.bf16.msra.mxu0 %v1306
    %1346 = vmatprep.subr.bf16.mxu0 0
    %1347 = vmatpush1.bf16.msra.mxu0 0
    %1348 = vmatprep.subr.bf16.mxu0 0
    %1349 = vmatpush1.bf16.msra.mxu0 0
    %1350 = vmatprep.subr.bf16.mxu0 0
    %1351 = vmatpush1.bf16.msra.mxu0 0
    %1352 = vmatprep.subr.bf16.mxu0 0
    %1353 = vmatpush1.bf16.msra.mxu0 0
    %1354 = vmatprep.mubr.bf16.mxu0 %v1320
    %1355 = vmatmul.mubr.bf16.gmra.mrb[0].mxu0 %v1244
    %v1356 = vpop.f32.mrb[0].mxu0
    %v1357 = vadd.f32 %v1246, %v1356
    %v1358 = vpop.f32.mrb[0].mxu0
    %v1359 = vpop.f32.mrb[0].mxu0
    %v1360 = vadd.f32 %v1246, %v1359
    %v1361 = vpop.f32.mrb[0].mxu0
    %1362 = vdwg.mxu0
    %v1363 = vadd.f32 %v1051, %v1357
    %v1364 = vadd.f32 %v1052, %v1360
    %v1365 = vld [vmem:[%s4 + $0x90] sm:$0x3]
    %v1366 = vsel %vm254, %v1363, 0.0
    %1367 = vadd.xlane.f32.xlu0 %v1366
    %v1368 = vpop.xlane.xlu0 %1367
    %v1369 = vsel %vm258, %v1364, 0.0
    %1370 = vadd.xlane.f32.xlu0 %v1369
    %v1371 = vpop.xlane.xlu0 %1370
    %v1372 = vmul.f32 %v1368, %v262
    %v1373 = vmul.f32 %v1371, %v262
    %v1374 = vsub.f32 %v1363, %v1372
    %v1375 = vsub.f32 %v1364, %v1373
    %v1376 = vmul.f32 %v1374, %v1374
    %v1377 = vmul.f32 %v1375, %v1375
    %v1378 = vsel %vm254, %v1376, 0.0
    %1379 = vadd.xlane.f32.xlu0 %v1378
    %v1380 = vpop.xlane.xlu0 %1379
    %v1381 = vsel %vm258, %v1377, 0.0
    %1382 = vadd.xlane.f32.xlu0 %v1381
    %v1383 = vpop.xlane.xlu0 %1382
    %v1384 = vmul.f32 %v1380, %v262
    %v1385 = vmul.f32 %v1383, %v262
    %v1386 = vadd.f32 %v1384, 1e-05
    %v1387 = vadd.f32 %v1385, 1e-05
    %v1388 = vrsqrt.pop %v1386
    %v1389 = vrsqrt.pop %v1387
    %v1390 = vmul.f32 %v1374, %v1388
    %v1391 = vmul.f32 %v1375, %v1389
    %v1392 = vlaneseq
    %v1393 = vshrl.u32 %v1392, 7
    %v1394 = vsub.s32 0, %v1393
    %v1395 = vrot.slane %v1365, %v1394
    %v1396 = vmul.f32 %v1390, %v1395
    %v1397 = vmul.f32 %v1391, %v1395
    %v1398 = vlaneseq
    %v1399 = vshrl.u32 %v1398, 7
    %v1400 = vsub.s32 1, %v1399
    %v1401 = vrot.slane %v1365, %v1400
    %v1402 = vadd.f32 %v1396, %v1401
    %v1403 = vadd.f32 %v1397, %v1401
    %v1404 = vld [vmem:[%s3 + $0x220] sm:$0xff]
    %v1405 = vld [vmem:[%s3 + $0x228] sm:$0xff]
    %v1406 = vld [vmem:[%s3 + $0x230] sm:$0xff]
    %v1407 = vld [vmem:[%s3 + $0x238] sm:$0xff]
    %v1408 = vld [vmem:[%s3 + $0x240] sm:$0xff]
    %v1409 = vld [vmem:[%s3 + $0x248] sm:$0xff]
    %v1410 = vpack.c.bf16 %v1403, %v1402
    %s1411 = scalar_lea.vmem %s4, 160
    %v1412 = vld [vmem:[%s1411] ss:$8 sm:$0x3]
    %v1414 = vlaneseq
    %v1415 = vshrl.u32 %v1414, 7
    %v1416 = vsub.s32 0, %v1415
    %v1417 = vrot.slane %v1412, %v1416
    %v1418 = vlaneseq
    %v1419 = vshrl.u32 %v1418, 7
    %v1420 = vsub.s32 1, %v1419
    %v1421 = vrot.slane %v1412, %v1420
    %v1430 = vunpack.c.l.b16 %v1404
    %v1431 = vunpack.c.h.b16 %v1404
    %v1432 = vunpack.c.l.b16 %v1405
    %v1433 = vunpack.c.h.b16 %v1405
    %v1434 = vunpack.c.l.b16 %v1406
    %v1435 = vunpack.c.h.b16 %v1406
    %v1436 = vunpack.c.l.b16 %v1407
    %v1437 = vunpack.c.h.b16 %v1407
    %v1438 = vunpack.c.l.b16 %v1408
    %v1439 = vunpack.c.h.b16 %v1408
    %v1440 = vunpack.c.l.b16 %v1409
    %v1441 = vunpack.c.h.b16 %v1409
    %v1442 = vpack.c.b16 %v1432, %v1430
    %v1443 = vpack.c.b16 %v1433, %v1431
    %v1444 = vpack.c.b16 %v1436, %v1434
    %v1445 = vpack.c.b16 %v1437, %v1435
    %v1446 = vpack.c.b16 %v1440, %v1438
    %v1447 = vpack.c.b16 %v1441, %v1439
    %v1455 = vsel %vm254, %v1410, 0
    %1457 = vmatprep.subr.bf16.mxu0 %v1443
    %1458 = vmatpush1.bf16.msra.mxu0 %v1442
    %1459 = vmatprep.subr.bf16.mxu0 %v1445
    %1460 = vmatpush1.bf16.msra.mxu0 %v1444
    %1461 = vmatprep.subr.bf16.mxu0 %v1447
    %1462 = vmatpush1.bf16.msra.mxu0 %v1446
    %1463 = vmatprep.subr.bf16.mxu0 0
    %1464 = vmatpush1.bf16.msra.mxu0 0
    %1465 = vmatprep.subr.bf16.mxu0 0
    %1466 = vmatpush1.bf16.msra.mxu0 0
    %1467 = vmatprep.subr.bf16.mxu0 0
    %1468 = vmatpush1.bf16.msra.mxu0 0
    %1469 = vmatprep.subr.bf16.mxu0 0
    %1470 = vmatpush1.bf16.msra.mxu0 0
    %1471 = vmatprep.subr.bf16.mxu0 0
    %1472 = vmatpush1.bf16.msra.mxu0 0
    %1473 = vmatprep.subr.bf16.mxu0 0
    %1474 = vmatpush1.bf16.msra.mxu0 0
    %1475 = vmatprep.subr.bf16.mxu0 0
    %1476 = vmatpush1.bf16.msra.mxu0 0
    %1477 = vmatprep.subr.bf16.mxu0 0
    %1478 = vmatpush1.bf16.msra.mxu0 0
    %1479 = vmatprep.subr.bf16.mxu0 0
    %1480 = vmatpush1.bf16.msra.mxu0 0
    %1481 = vmatprep.subr.bf16.mxu0 0
    %1482 = vmatpush1.bf16.msra.mxu0 0
    %1483 = vmatprep.subr.bf16.mxu0 0
    %1484 = vmatpush1.bf16.msra.mxu0 0
    %1485 = vmatprep.subr.bf16.mxu0 0
    %1486 = vmatpush1.bf16.msra.mxu0 0
    %1487 = vmatprep.subr.bf16.mxu0 0
    %1488 = vmatpush1.bf16.msra.mxu0 0
    %1489 = vmatprep.mubr.bf16.mxu0 0
    %1490 = vmatmul.mubr.bf16.gmra.mrb[0].mxu0 %v1455
    %v1491 = vpop.f32.mrb[0].mxu0
    %v1492 = vadd.f32 %v1417, %v1491
    %v1493 = vpop.f32.mrb[0].mxu0
    %v1494 = vadd.f32 %v1421, %v1493
    %v1495 = vpop.f32.mrb[0].mxu0
    %v1496 = vadd.f32 %v1417, %v1495
    %v1497 = vpop.f32.mrb[0].mxu0
    %v1498 = vadd.f32 %v1421, %v1497
    %1499 = vdwg.mxu0
    %v1500 = vpack.c.bf16 %v1496, %v1492
    %1502 = vrot.lane.b32.xlu0 %v1500, 64
    %v1503 = vpop.permute.xlu0 %1502
    %v1505 = vsel %vm434, %v1500, 0
    %v1508 = vsel %vm434, %v1503, 0
    %1510 = vmatprep.subr.bf16.mxu0 0
    %1511 = vmatpush1.bf16.xpose.msra.mxu0 %v1508
    %1512 = vmatprep.subr.bf16.mxu0 0
    %1513 = vmatpush1.bf16.xpose.msra.mxu0 0
    %1514 = vmatprep.subr.bf16.mxu0 0
    %1515 = vmatpush1.bf16.xpose.msra.mxu0 0
    %1516 = vmatprep.subr.bf16.mxu0 0
    %1517 = vmatpush1.bf16.xpose.msra.mxu0 0
    %1518 = vmatprep.subr.bf16.mxu0 0
    %1519 = vmatpush1.bf16.xpose.msra.mxu0 0
    %1520 = vmatprep.subr.bf16.mxu0 0
    %1521 = vmatpush1.bf16.xpose.msra.mxu0 0
    %1522 = vmatprep.subr.bf16.mxu0 0
    %1523 = vmatpush1.bf16.xpose.msra.mxu0 0
    %1524 = vmatprep.subr.bf16.mxu0 0
    %1525 = vmatpush1.bf16.xpose.msra.mxu0 0
    %1526 = vmatprep.subr.bf16.mxu0 0
    %1527 = vmatpush1.bf16.xpose.msra.mxu0 0
    %1528 = vmatprep.subr.bf16.mxu0 0
    %1529 = vmatpush1.bf16.xpose.msra.mxu0 0
    %1530 = vmatprep.subr.bf16.mxu0 0
    %1531 = vmatpush1.bf16.xpose.msra.mxu0 0
    %1532 = vmatprep.subr.bf16.mxu0 0
    %1533 = vmatpush1.bf16.xpose.msra.mxu0 0
    %1534 = vmatprep.subr.bf16.mxu0 0
    %1535 = vmatpush1.bf16.xpose.msra.mxu0 0
    %1536 = vmatprep.subr.bf16.mxu0 0
    %1537 = vmatpush1.bf16.xpose.msra.mxu0 0
    %1538 = vmatprep.subr.bf16.mxu0 0
    %1539 = vmatpush1.bf16.xpose.msra.mxu0 0
    %1540 = vmatprep.subr.bf16.mxu0 0
    %1541 = vmatpush1.bf16.xpose.msra.mxu0 0
    %1542 = vmatprep.mubr.bf16.mxu0 0
    %1543 = vmatmul.mubr.bf16.gmra.mrb[0].mxu0 %v1505
    %v1544 = vpop.f32.mrb[0].mxu0
    %v1545 = vadd.f32 0.0, %v1544
    %v1546 = vpop.f32.mrb[0].mxu0
    %v1547 = vpop.f32.mrb[0].mxu0
    %v1548 = vadd.f32 0.0, %v1547
    %v1549 = vpop.f32.mrb[0].mxu0
    %1550 = vdwg.mxu0
    %v1551 = vmul.f32 %v1545, 0.28867513
    %v1552 = vmul.f32 %v1548, 0.28867513
    %v1553 = vadd.f32 %v1551, %v53
    %v1554 = vadd.f32 %v1552, %v54
    %v1555 = vsel %vm486, %v1553, -inf
    %1556 = vmax.xlane.f32.xlu0 %v1555
    %v1557 = vpop.xlane.xlu0 %1556
    %v1558 = vsel %vm490, %v1554, -inf
    %1559 = vmax.xlane.f32.xlu0 %v1558
    %v1560 = vpop.xlane.xlu0 %1559
    %v1561 = vsub.f32 %v1553, %v1557
    %v1562 = vsub.f32 %v1554, %v1560
    %v1563 = vmul.f32 %v1561, 1.442695
    %v1564 = vpow.pop %v1563
    %v1565 = vmul.f32 %v1562, 1.442695
    %v1566 = vpow.pop %v1565
    %v1567 = vsel %vm486, %v1564, 0.0
    %1568 = vadd.xlane.f32.xlu0 %v1567
    %v1569 = vpop.xlane.xlu0 %1568
    %v1570 = vsel %vm490, %v1566, 0.0
    %1571 = vadd.xlane.f32.xlu0 %v1570
    %v1572 = vpop.xlane.xlu0 %1571
    %v1573 = vrcp.pop %v1569
    %v1574 = vmul.f32 %v1564, %v1573
    %v1575 = vrcp.pop %v1572
    %v1576 = vmul.f32 %v1566, %v1575
    %v1577 = vpack.c.bf16 %v1576, %v1574
    %v1578 = vpack.c.bf16 %v1498, %v1494
    %v1580 = vsel %vm486, %v1577, 0
    %v1583 = vsel %vm515, %v1578, 0
    %1585 = vmatprep.subr.bf16.mxu0 0
    %1586 = vmatpush1.bf16.msra.mxu0 %v1583
    %1587 = vmatprep.subr.bf16.mxu0 0
    %1588 = vmatpush1.bf16.msra.mxu0 0
    %1589 = vmatprep.subr.bf16.mxu0 0
    %1590 = vmatpush1.bf16.msra.mxu0 0
    %1591 = vmatprep.subr.bf16.mxu0 0
    %1592 = vmatpush1.bf16.msra.mxu0 0
    %1593 = vmatprep.subr.bf16.mxu0 0
    %1594 = vmatpush1.bf16.msra.mxu0 0
    %1595 = vmatprep.subr.bf16.mxu0 0
    %1596 = vmatpush1.bf16.msra.mxu0 0
    %1597 = vmatprep.subr.bf16.mxu0 0
    %1598 = vmatpush1.bf16.msra.mxu0 0
    %1599 = vmatprep.subr.bf16.mxu0 0
    %1600 = vmatpush1.bf16.msra.mxu0 0
    %1601 = vmatprep.subr.bf16.mxu0 0
    %1602 = vmatpush1.bf16.msra.mxu0 0
    %1603 = vmatprep.subr.bf16.mxu0 0
    %1604 = vmatpush1.bf16.msra.mxu0 0
    %1605 = vmatprep.subr.bf16.mxu0 0
    %1606 = vmatpush1.bf16.msra.mxu0 0
    %1607 = vmatprep.subr.bf16.mxu0 0
    %1608 = vmatpush1.bf16.msra.mxu0 0
    %1609 = vmatprep.subr.bf16.mxu0 0
    %1610 = vmatpush1.bf16.msra.mxu0 0
    %1611 = vmatprep.subr.bf16.mxu0 0
    %1612 = vmatpush1.bf16.msra.mxu0 0
    %1613 = vmatprep.subr.bf16.mxu0 0
    %1614 = vmatpush1.bf16.msra.mxu0 0
    %1615 = vmatprep.subr.bf16.mxu0 0
    %1616 = vmatpush1.bf16.msra.mxu0 0
    %1617 = vmatprep.mubr.bf16.mxu0 0
    %1618 = vmatmul.mubr.bf16.gmra.mrb[0].mxu0 %v1580
    %v1619 = vpop.f32.mrb[0].mxu0
    %v1620 = vadd.f32 0.0, %v1619
    %v1621 = vpop.f32.mrb[0].mxu0
    %v1622 = vpop.f32.mrb[0].mxu0
    %v1623 = vadd.f32 0.0, %v1622
    %v1624 = vpop.f32.mrb[0].mxu0
    %1625 = vdwg.mxu0
    %1626 = vrot.lane.b32.xlu0 %v1500, 112
    %v1627 = vpop.permute.xlu0 %1626
    %1628 = vrot.lane.b32.xlu0 %v1500, 48
    %v1629 = vpop.permute.xlu0 %1628
    %v1631 = vsel %vm434, %v1627, 0
    %v1634 = vsel %vm434, %v1629, 0
    %1636 = vmatprep.subr.bf16.mxu0 0
    %1637 = vmatpush1.bf16.xpose.msra.mxu0 %v1634
    %1638 = vmatprep.subr.bf16.mxu0 0
    %1639 = vmatpush1.bf16.xpose.msra.mxu0 0
    %1640 = vmatprep.subr.bf16.mxu0 0
    %1641 = vmatpush1.bf16.xpose.msra.mxu0 0
    %1642 = vmatprep.subr.bf16.mxu0 0
    %1643 = vmatpush1.bf16.xpose.msra.mxu0 0
    %1644 = vmatprep.subr.bf16.mxu0 0
    %1645 = vmatpush1.bf16.xpose.msra.mxu0 0
    %1646 = vmatprep.subr.bf16.mxu0 0
    %1647 = vmatpush1.bf16.xpose.msra.mxu0 0
    %1648 = vmatprep.subr.bf16.mxu0 0
    %1649 = vmatpush1.bf16.xpose.msra.mxu0 0
    %1650 = vmatprep.subr.bf16.mxu0 0
    %1651 = vmatpush1.bf16.xpose.msra.mxu0 0
    %1652 = vmatprep.subr.bf16.mxu0 0
    %1653 = vmatpush1.bf16.xpose.msra.mxu0 0
    %1654 = vmatprep.subr.bf16.mxu0 0
    %1655 = vmatpush1.bf16.xpose.msra.mxu0 0
    %1656 = vmatprep.subr.bf16.mxu0 0
    %1657 = vmatpush1.bf16.xpose.msra.mxu0 0
    %1658 = vmatprep.subr.bf16.mxu0 0
    %1659 = vmatpush1.bf16.xpose.msra.mxu0 0
    %1660 = vmatprep.subr.bf16.mxu0 0
    %1661 = vmatpush1.bf16.xpose.msra.mxu0 0
    %1662 = vmatprep.subr.bf16.mxu0 0
    %1663 = vmatpush1.bf16.xpose.msra.mxu0 0
    %1664 = vmatprep.subr.bf16.mxu0 0
    %1665 = vmatpush1.bf16.xpose.msra.mxu0 0
    %1666 = vmatprep.subr.bf16.mxu0 0
    %1667 = vmatpush1.bf16.xpose.msra.mxu0 0
    %1668 = vmatprep.mubr.bf16.mxu0 0
    %1669 = vmatmul.mubr.bf16.gmra.mrb[0].mxu0 %v1631
    %v1670 = vpop.f32.mrb[0].mxu0
    %v1671 = vadd.f32 0.0, %v1670
    %v1672 = vpop.f32.mrb[0].mxu0
    %v1673 = vpop.f32.mrb[0].mxu0
    %v1674 = vadd.f32 0.0, %v1673
    %v1675 = vpop.f32.mrb[0].mxu0
    %1676 = vdwg.mxu0
    %v1677 = vmul.f32 %v1671, 0.28867513
    %v1678 = vmul.f32 %v1674, 0.28867513
    %v1679 = vadd.f32 %v1677, %v53
    %v1680 = vadd.f32 %v1678, %v54
    %v1681 = vsel %vm486, %v1679, -inf
    %1682 = vmax.xlane.f32.xlu0 %v1681
    %v1683 = vpop.xlane.xlu0 %1682
    %v1684 = vsel %vm490, %v1680, -inf
    %1685 = vmax.xlane.f32.xlu0 %v1684
    %v1686 = vpop.xlane.xlu0 %1685
    %v1687 = vsub.f32 %v1679, %v1683
    %v1688 = vsub.f32 %v1680, %v1686
    %v1689 = vmul.f32 %v1687, 1.442695
    %v1690 = vpow.pop %v1689
    %v1691 = vmul.f32 %v1688, 1.442695
    %v1692 = vpow.pop %v1691
    %v1693 = vsel %vm486, %v1690, 0.0
    %1694 = vadd.xlane.f32.xlu0 %v1693
    %v1695 = vpop.xlane.xlu0 %1694
    %v1696 = vsel %vm490, %v1692, 0.0
    %1697 = vadd.xlane.f32.xlu0 %v1696
    %v1698 = vpop.xlane.xlu0 %1697
    %v1699 = vrcp.pop %v1695
    %v1700 = vmul.f32 %v1690, %v1699
    %v1701 = vrcp.pop %v1698
    %v1702 = vmul.f32 %v1692, %v1701
    %v1703 = vpack.c.bf16 %v1702, %v1700
    %1705 = vrot.lane.b32.xlu0 %v1578, 112
    %v1706 = vpop.permute.xlu0 %1705
    %v1708 = vsel %vm486, %v1703, 0
    %v1711 = vsel %vm515, %v1706, 0
    %1713 = vmatprep.subr.bf16.mxu0 0
    %1714 = vmatpush1.bf16.msra.mxu0 %v1711
    %1715 = vmatprep.subr.bf16.mxu0 0
    %1716 = vmatpush1.bf16.msra.mxu0 0
    %1717 = vmatprep.subr.bf16.mxu0 0
    %1718 = vmatpush1.bf16.msra.mxu0 0
    %1719 = vmatprep.subr.bf16.mxu0 0
    %1720 = vmatpush1.bf16.msra.mxu0 0
    %1721 = vmatprep.subr.bf16.mxu0 0
    %1722 = vmatpush1.bf16.msra.mxu0 0
    %1723 = vmatprep.subr.bf16.mxu0 0
    %1724 = vmatpush1.bf16.msra.mxu0 0
    %1725 = vmatprep.subr.bf16.mxu0 0
    %1726 = vmatpush1.bf16.msra.mxu0 0
    %1727 = vmatprep.subr.bf16.mxu0 0
    %1728 = vmatpush1.bf16.msra.mxu0 0
    %1729 = vmatprep.subr.bf16.mxu0 0
    %1730 = vmatpush1.bf16.msra.mxu0 0
    %1731 = vmatprep.subr.bf16.mxu0 0
    %1732 = vmatpush1.bf16.msra.mxu0 0
    %1733 = vmatprep.subr.bf16.mxu0 0
    %1734 = vmatpush1.bf16.msra.mxu0 0
    %1735 = vmatprep.subr.bf16.mxu0 0
    %1736 = vmatpush1.bf16.msra.mxu0 0
    %1737 = vmatprep.subr.bf16.mxu0 0
    %1738 = vmatpush1.bf16.msra.mxu0 0
    %1739 = vmatprep.subr.bf16.mxu0 0
    %1740 = vmatpush1.bf16.msra.mxu0 0
    %1741 = vmatprep.subr.bf16.mxu0 0
    %1742 = vmatpush1.bf16.msra.mxu0 0
    %1743 = vmatprep.subr.bf16.mxu0 0
    %1744 = vmatpush1.bf16.msra.mxu0 0
    %1745 = vmatprep.mubr.bf16.mxu0 0
    %1746 = vmatmul.mubr.bf16.gmra.mrb[0].mxu0 %v1708
    %v1747 = vpop.f32.mrb[0].mxu0
    %v1748 = vadd.f32 0.0, %v1747
    %v1749 = vpop.f32.mrb[0].mxu0
    %v1750 = vpop.f32.mrb[0].mxu0
    %v1751 = vadd.f32 0.0, %v1750
    %v1752 = vpop.f32.mrb[0].mxu0
    %1753 = vdwg.mxu0
    %1754 = vrot.lane.b32.xlu0 %v1500, 96
    %v1755 = vpop.permute.xlu0 %1754
    %1756 = vrot.lane.b32.xlu0 %v1500, 32
    %v1757 = vpop.permute.xlu0 %1756
    %v1759 = vsel %vm434, %v1755, 0
    %v1762 = vsel %vm434, %v1757, 0
    %1764 = vmatprep.subr.bf16.mxu0 0
    %1765 = vmatpush1.bf16.xpose.msra.mxu0 %v1762
    %1766 = vmatprep.subr.bf16.mxu0 0
    %1767 = vmatpush1.bf16.xpose.msra.mxu0 0
    %1768 = vmatprep.subr.bf16.mxu0 0
    %1769 = vmatpush1.bf16.xpose.msra.mxu0 0
    %1770 = vmatprep.subr.bf16.mxu0 0
    %1771 = vmatpush1.bf16.xpose.msra.mxu0 0
    %1772 = vmatprep.subr.bf16.mxu0 0
    %1773 = vmatpush1.bf16.xpose.msra.mxu0 0
    %1774 = vmatprep.subr.bf16.mxu0 0
    %1775 = vmatpush1.bf16.xpose.msra.mxu0 0
    %1776 = vmatprep.subr.bf16.mxu0 0
    %1777 = vmatpush1.bf16.xpose.msra.mxu0 0
    %1778 = vmatprep.subr.bf16.mxu0 0
    %1779 = vmatpush1.bf16.xpose.msra.mxu0 0
    %1780 = vmatprep.subr.bf16.mxu0 0
    %1781 = vmatpush1.bf16.xpose.msra.mxu0 0
    %1782 = vmatprep.subr.bf16.mxu0 0
    %1783 = vmatpush1.bf16.xpose.msra.mxu0 0
    %1784 = vmatprep.subr.bf16.mxu0 0
    %1785 = vmatpush1.bf16.xpose.msra.mxu0 0
    %1786 = vmatprep.subr.bf16.mxu0 0
    %1787 = vmatpush1.bf16.xpose.msra.mxu0 0
    %1788 = vmatprep.subr.bf16.mxu0 0
    %1789 = vmatpush1.bf16.xpose.msra.mxu0 0
    %1790 = vmatprep.subr.bf16.mxu0 0
    %1791 = vmatpush1.bf16.xpose.msra.mxu0 0
    %1792 = vmatprep.subr.bf16.mxu0 0
    %1793 = vmatpush1.bf16.xpose.msra.mxu0 0
    %1794 = vmatprep.subr.bf16.mxu0 0
    %1795 = vmatpush1.bf16.xpose.msra.mxu0 0
    %1796 = vmatprep.mubr.bf16.mxu0 0
    %1797 = vmatmul.mubr.bf16.gmra.mrb[0].mxu0 %v1759
    %v1798 = vpop.f32.mrb[0].mxu0
    %v1799 = vadd.f32 0.0, %v1798
    %v1800 = vpop.f32.mrb[0].mxu0
    %v1801 = vpop.f32.mrb[0].mxu0
    %v1802 = vadd.f32 0.0, %v1801
    %v1803 = vpop.f32.mrb[0].mxu0
    %1804 = vdwg.mxu0
    %v1805 = vmul.f32 %v1799, 0.28867513
    %v1806 = vmul.f32 %v1802, 0.28867513
    %v1807 = vadd.f32 %v1805, %v53
    %v1808 = vadd.f32 %v1806, %v54
    %v1809 = vsel %vm486, %v1807, -inf
    %1810 = vmax.xlane.f32.xlu0 %v1809
    %v1811 = vpop.xlane.xlu0 %1810
    %v1812 = vsel %vm490, %v1808, -inf
    %1813 = vmax.xlane.f32.xlu0 %v1812
    %v1814 = vpop.xlane.xlu0 %1813
    %v1815 = vsub.f32 %v1807, %v1811
    %v1816 = vsub.f32 %v1808, %v1814
    %v1817 = vmul.f32 %v1815, 1.442695
    %v1818 = vpow.pop %v1817
    %v1819 = vmul.f32 %v1816, 1.442695
    %v1820 = vpow.pop %v1819
    %v1821 = vsel %vm486, %v1818, 0.0
    %1822 = vadd.xlane.f32.xlu0 %v1821
    %v1823 = vpop.xlane.xlu0 %1822
    %v1824 = vsel %vm490, %v1820, 0.0
    %1825 = vadd.xlane.f32.xlu0 %v1824
    %v1826 = vpop.xlane.xlu0 %1825
    %v1827 = vrcp.pop %v1823
    %v1828 = vmul.f32 %v1818, %v1827
    %v1829 = vrcp.pop %v1826
    %v1830 = vmul.f32 %v1820, %v1829
    %v1831 = vpack.c.bf16 %v1830, %v1828
    %1832 = vrot.lane.b32.xlu0 %v1578, 96
    %v1833 = vpop.permute.xlu0 %1832
    %v1835 = vsel %vm486, %v1831, 0
    %v1838 = vsel %vm515, %v1833, 0
    %1840 = vmatprep.subr.bf16.mxu0 0
    %1841 = vmatpush1.bf16.msra.mxu0 %v1838
    %1842 = vmatprep.subr.bf16.mxu0 0
    %1843 = vmatpush1.bf16.msra.mxu0 0
    %1844 = vmatprep.subr.bf16.mxu0 0
    %1845 = vmatpush1.bf16.msra.mxu0 0
    %1846 = vmatprep.subr.bf16.mxu0 0
    %1847 = vmatpush1.bf16.msra.mxu0 0
    %1848 = vmatprep.subr.bf16.mxu0 0
    %1849 = vmatpush1.bf16.msra.mxu0 0
    %1850 = vmatprep.subr.bf16.mxu0 0
    %1851 = vmatpush1.bf16.msra.mxu0 0
    %1852 = vmatprep.subr.bf16.mxu0 0
    %1853 = vmatpush1.bf16.msra.mxu0 0
    %1854 = vmatprep.subr.bf16.mxu0 0
    %1855 = vmatpush1.bf16.msra.mxu0 0
    %1856 = vmatprep.subr.bf16.mxu0 0
    %1857 = vmatpush1.bf16.msra.mxu0 0
    %1858 = vmatprep.subr.bf16.mxu0 0
    %1859 = vmatpush1.bf16.msra.mxu0 0
    %1860 = vmatprep.subr.bf16.mxu0 0
    %1861 = vmatpush1.bf16.msra.mxu0 0
    %1862 = vmatprep.subr.bf16.mxu0 0
    %1863 = vmatpush1.bf16.msra.mxu0 0
    %1864 = vmatprep.subr.bf16.mxu0 0
    %1865 = vmatpush1.bf16.msra.mxu0 0
    %1866 = vmatprep.subr.bf16.mxu0 0
    %1867 = vmatpush1.bf16.msra.mxu0 0
    %1868 = vmatprep.subr.bf16.mxu0 0
    %1869 = vmatpush1.bf16.msra.mxu0 0
    %1870 = vmatprep.subr.bf16.mxu0 0
    %1871 = vmatpush1.bf16.msra.mxu0 0
    %1872 = vmatprep.mubr.bf16.mxu0 0
    %1873 = vmatmul.mubr.bf16.gmra.mrb[0].mxu0 %v1835
    %v1874 = vpop.f32.mrb[0].mxu0
    %v1875 = vadd.f32 0.0, %v1874
    %v1876 = vpop.f32.mrb[0].mxu0
    %v1877 = vpop.f32.mrb[0].mxu0
    %v1878 = vadd.f32 0.0, %v1877
    %v1879 = vpop.f32.mrb[0].mxu0
    %1880 = vdwg.mxu0
    %1881 = vrot.lane.b32.xlu0 %v1500, 80
    %v1882 = vpop.permute.xlu0 %1881
    %1883 = vrot.lane.b32.xlu0 %v1500, 16
    %v1884 = vpop.permute.xlu0 %1883
    %v1886 = vsel %vm434, %v1882, 0
    %v1889 = vsel %vm434, %v1884, 0
    %1891 = vmatprep.subr.bf16.mxu0 0
    %1892 = vmatpush1.bf16.xpose.msra.mxu0 %v1889
    %1893 = vmatprep.subr.bf16.mxu0 0
    %1894 = vmatpush1.bf16.xpose.msra.mxu0 0
    %1895 = vmatprep.subr.bf16.mxu0 0
    %1896 = vmatpush1.bf16.xpose.msra.mxu0 0
    %1897 = vmatprep.subr.bf16.mxu0 0
    %1898 = vmatpush1.bf16.xpose.msra.mxu0 0
    %1899 = vmatprep.subr.bf16.mxu0 0
    %1900 = vmatpush1.bf16.xpose.msra.mxu0 0
    %1901 = vmatprep.subr.bf16.mxu0 0
    %1902 = vmatpush1.bf16.xpose.msra.mxu0 0
    %1903 = vmatprep.subr.bf16.mxu0 0
    %1904 = vmatpush1.bf16.xpose.msra.mxu0 0
    %1905 = vmatprep.subr.bf16.mxu0 0
    %1906 = vmatpush1.bf16.xpose.msra.mxu0 0
    %1907 = vmatprep.subr.bf16.mxu0 0
    %1908 = vmatpush1.bf16.xpose.msra.mxu0 0
    %1909 = vmatprep.subr.bf16.mxu0 0
    %1910 = vmatpush1.bf16.xpose.msra.mxu0 0
    %1911 = vmatprep.subr.bf16.mxu0 0
    %1912 = vmatpush1.bf16.xpose.msra.mxu0 0
    %1913 = vmatprep.subr.bf16.mxu0 0
    %1914 = vmatpush1.bf16.xpose.msra.mxu0 0
    %1915 = vmatprep.subr.bf16.mxu0 0
    %1916 = vmatpush1.bf16.xpose.msra.mxu0 0
    %1917 = vmatprep.subr.bf16.mxu0 0
    %1918 = vmatpush1.bf16.xpose.msra.mxu0 0
    %1919 = vmatprep.subr.bf16.mxu0 0
    %1920 = vmatpush1.bf16.xpose.msra.mxu0 0
    %1921 = vmatprep.subr.bf16.mxu0 0
    %1922 = vmatpush1.bf16.xpose.msra.mxu0 0
    %1923 = vmatprep.mubr.bf16.mxu0 0
    %1924 = vmatmul.mubr.bf16.gmra.mrb[0].mxu0 %v1886
    %v1925 = vpop.f32.mrb[0].mxu0
    %v1926 = vadd.f32 0.0, %v1925
    %v1927 = vpop.f32.mrb[0].mxu0
    %v1928 = vpop.f32.mrb[0].mxu0
    %v1929 = vadd.f32 0.0, %v1928
    %v1930 = vpop.f32.mrb[0].mxu0
    %1931 = vdwg.mxu0
    %v1932 = vmul.f32 %v1926, 0.28867513
    %v1933 = vmul.f32 %v1929, 0.28867513
    %v1934 = vadd.f32 %v1932, %v53
    %v1935 = vadd.f32 %v1933, %v54
    %v1936 = vsel %vm486, %v1934, -inf
    %1937 = vmax.xlane.f32.xlu0 %v1936
    %v1938 = vpop.xlane.xlu0 %1937
    %v1939 = vsel %vm490, %v1935, -inf
    %1940 = vmax.xlane.f32.xlu0 %v1939
    %v1941 = vpop.xlane.xlu0 %1940
    %v1942 = vsub.f32 %v1934, %v1938
    %v1943 = vsub.f32 %v1935, %v1941
    %v1944 = vmul.f32 %v1942, 1.442695
    %v1945 = vpow.pop %v1944
    %v1946 = vmul.f32 %v1943, 1.442695
    %v1947 = vpow.pop %v1946
    %v1948 = vsel %vm486, %v1945, 0.0
    %1949 = vadd.xlane.f32.xlu0 %v1948
    %v1950 = vpop.xlane.xlu0 %1949
    %v1951 = vsel %vm490, %v1947, 0.0
    %1952 = vadd.xlane.f32.xlu0 %v1951
    %v1953 = vpop.xlane.xlu0 %1952
    %v1954 = vrcp.pop %v1950
    %v1955 = vmul.f32 %v1945, %v1954
    %v1956 = vrcp.pop %v1953
    %v1957 = vmul.f32 %v1947, %v1956
    %v1958 = vpack.c.bf16 %v1957, %v1955
    %1959 = vrot.lane.b32.xlu0 %v1578, 80
    %v1960 = vpop.permute.xlu0 %1959
    %v1962 = vsel %vm486, %v1958, 0
    %v1965 = vsel %vm515, %v1960, 0
    %1967 = vmatprep.subr.bf16.mxu0 0
    %1968 = vmatpush1.bf16.msra.mxu0 %v1965
    %1969 = vmatprep.subr.bf16.mxu0 0
    %1970 = vmatpush1.bf16.msra.mxu0 0
    %1971 = vmatprep.subr.bf16.mxu0 0
    %1972 = vmatpush1.bf16.msra.mxu0 0
    %1973 = vmatprep.subr.bf16.mxu0 0
    %1974 = vmatpush1.bf16.msra.mxu0 0
    %1975 = vmatprep.subr.bf16.mxu0 0
    %1976 = vmatpush1.bf16.msra.mxu0 0
    %1977 = vmatprep.subr.bf16.mxu0 0
    %1978 = vmatpush1.bf16.msra.mxu0 0
    %1979 = vmatprep.subr.bf16.mxu0 0
    %1980 = vmatpush1.bf16.msra.mxu0 0
    %1981 = vmatprep.subr.bf16.mxu0 0
    %1982 = vmatpush1.bf16.msra.mxu0 0
    %1983 = vmatprep.subr.bf16.mxu0 0
    %1984 = vmatpush1.bf16.msra.mxu0 0
    %1985 = vmatprep.subr.bf16.mxu0 0
    %1986 = vmatpush1.bf16.msra.mxu0 0
    %1987 = vmatprep.subr.bf16.mxu0 0
    %1988 = vmatpush1.bf16.msra.mxu0 0
    %1989 = vmatprep.subr.bf16.mxu0 0
    %1990 = vmatpush1.bf16.msra.mxu0 0
    %1991 = vmatprep.subr.bf16.mxu0 0
    %1992 = vmatpush1.bf16.msra.mxu0 0
    %1993 = vmatprep.subr.bf16.mxu0 0
    %1994 = vmatpush1.bf16.msra.mxu0 0
    %1995 = vmatprep.subr.bf16.mxu0 0
    %1996 = vmatpush1.bf16.msra.mxu0 0
    %1997 = vmatprep.subr.bf16.mxu0 0
    %1998 = vmatpush1.bf16.msra.mxu0 0
    %1999 = vmatprep.mubr.bf16.mxu0 0
    %2000 = vmatmul.mubr.bf16.gmra.mrb[0].mxu0 %v1962
    %v2001 = vpop.f32.mrb[0].mxu0
    %v2002 = vadd.f32 0.0, %v2001
    %v2003 = vpop.f32.mrb[0].mxu0
    %v2004 = vpop.f32.mrb[0].mxu0
    %v2005 = vadd.f32 0.0, %v2004
    %v2006 = vpop.f32.mrb[0].mxu0
    %2007 = vdwg.mxu0
    %2010 = vrot.lane.b32.xlu0 %v1748, 16
    %v2011 = vpop.permute.xlu0 %2010
    %2012 = vrot.lane.b32.xlu0 %v1751, 16
    %v2013 = vpop.permute.xlu0 %2012
    %2018 = vrot.lane.b32.xlu0 %v1875, 32
    %v2019 = vpop.permute.xlu0 %2018
    %2020 = vrot.lane.b32.xlu0 %v1878, 32
    %v2021 = vpop.permute.xlu0 %2020
    %2026 = vrot.lane.b32.xlu0 %v2002, 48
    %v2027 = vpop.permute.xlu0 %2026
    %2028 = vrot.lane.b32.xlu0 %v2005, 48
    %v2029 = vpop.permute.xlu0 %2028
    %v2032 = vsel %vm434, %v1620, %v2011
    %v2033 = vsel %vm434, %v1623, %v2013
    %v2034 = vsel %vm968, %v2032, %v2019
    %v2035 = vsel %vm968, %v2033, %v2021
    %v2036 = vsel %vm254, %v2034, %v2027
    %v2037 = vsel %vm254, %v2035, %v2029
    %v2038 = vld [vmem:[%s3 + $0x250] sm:$0xf]
    %v2039 = vld [vmem:[%s3 + $0x258] sm:$0xf]
    %v2040 = vld [vmem:[%s3 + $0x260] sm:$0xf]
    %v2041 = vld [vmem:[%s3 + $0x268] sm:$0xf]
    %v2042 = vld [vmem:[%s3 + $0x270] sm:$0xf]
    %v2043 = vld [vmem:[%s3 + $0x278] sm:$0xf]
    %v2044 = vld [vmem:[%s3 + $0x280] sm:$0xf]
    %v2045 = vld [vmem:[%s3 + $0x288] sm:$0xf]
    %v2046 = vpack.c.bf16 %v2037, %v2036
    %v2047 = vld [vmem:[%s4 + $0xb0] ss:$0 sm:$0xff]
    %v2056 = vunpack.c.l.b16 %v2038
    %v2057 = vunpack.c.l.b16 %v2039
    %v2058 = vunpack.c.l.b16 %v2040
    %v2059 = vunpack.c.l.b16 %v2041
    %v2060 = vunpack.c.l.b16 %v2042
    %v2061 = vunpack.c.l.b16 %v2043
    %v2062 = vunpack.c.l.b16 %v2044
    %v2063 = vunpack.c.l.b16 %v2045
    %v2064 = vpack.c.b16 %v2057, %v2056
    %v2065 = vpack.c.b16 %v2059, %v2058
    %v2066 = vpack.c.b16 %v2061, %v2060
    %v2067 = vpack.c.b16 %v2063, %v2062
    %v2073 = vsel %vm208, %v2046, 0
    %2075 = vmatprep.subr.bf16.mxu0 0
    %2076 = vmatpush1.bf16.msra.mxu0 %v2064
    %2077 = vmatprep.subr.bf16.mxu0 0
    %2078 = vmatpush1.bf16.msra.mxu0 %v2065
    %2079 = vmatprep.subr.bf16.mxu0 0
    %2080 = vmatpush1.bf16.msra.mxu0 %v2066
    %2081 = vmatprep.subr.bf16.mxu0 0
    %2082 = vmatpush1.bf16.msra.mxu0 %v2067
    %2083 = vmatprep.subr.bf16.mxu0 0
    %2084 = vmatpush1.bf16.msra.mxu0 0
    %2085 = vmatprep.subr.bf16.mxu0 0
    %2086 = vmatpush1.bf16.msra.mxu0 0
    %2087 = vmatprep.subr.bf16.mxu0 0
    %2088 = vmatpush1.bf16.msra.mxu0 0
    %2089 = vmatprep.subr.bf16.mxu0 0
    %2090 = vmatpush1.bf16.msra.mxu0 0
    %2091 = vmatprep.subr.bf16.mxu0 0
    %2092 = vmatpush1.bf16.msra.mxu0 0
    %2093 = vmatprep.subr.bf16.mxu0 0
    %2094 = vmatpush1.bf16.msra.mxu0 0
    %2095 = vmatprep.subr.bf16.mxu0 0
    %2096 = vmatpush1.bf16.msra.mxu0 0
    %2097 = vmatprep.subr.bf16.mxu0 0
    %2098 = vmatpush1.bf16.msra.mxu0 0
    %2099 = vmatprep.subr.bf16.mxu0 0
    %2100 = vmatpush1.bf16.msra.mxu0 0
    %2101 = vmatprep.subr.bf16.mxu0 0
    %2102 = vmatpush1.bf16.msra.mxu0 0
    %2103 = vmatprep.subr.bf16.mxu0 0
    %2104 = vmatpush1.bf16.msra.mxu0 0
    %2105 = vmatprep.subr.bf16.mxu0 0
    %2106 = vmatpush1.bf16.msra.mxu0 0
    %2107 = vmatprep.mubr.bf16.mxu0 0
    %2108 = vmatmul.mubr.bf16.gmra.mrb[0].mxu0 %v2073
    %v2109 = vpop.f32.mrb[0].mxu0
    %v2110 = vadd.f32 %v2047, %v2109
    %v2111 = vpop.f32.mrb[0].mxu0
    %v2112 = vpop.f32.mrb[0].mxu0
    %v2113 = vadd.f32 %v2047, %v2112
    %v2114 = vpop.f32.mrb[0].mxu0
    %2115 = vdwg.mxu0
    %v2116 = vadd.f32 %v1363, %v2110
    %v2117 = vadd.f32 %v1364, %v2113
    %v2118 = vld [vmem:[%s4 + $0xc0] sm:$0x3]
    %v2119 = vsel %vm254, %v2116, 0.0
    %2120 = vadd.xlane.f32.xlu0 %v2119
    %v2121 = vpop.xlane.xlu0 %2120
    %v2122 = vsel %vm258, %v2117, 0.0
    %2123 = vadd.xlane.f32.xlu0 %v2122
    %v2124 = vpop.xlane.xlu0 %2123
    %v2125 = vmul.f32 %v2121, %v262
    %v2126 = vmul.f32 %v2124, %v262
    %v2127 = vsub.f32 %v2116, %v2125
    %v2128 = vsub.f32 %v2117, %v2126
    %v2129 = vmul.f32 %v2127, %v2127
    %v2130 = vmul.f32 %v2128, %v2128
    %v2131 = vsel %vm254, %v2129, 0.0
    %2132 = vadd.xlane.f32.xlu0 %v2131
    %v2133 = vpop.xlane.xlu0 %2132
    %v2134 = vsel %vm258, %v2130, 0.0
    %2135 = vadd.xlane.f32.xlu0 %v2134
    %v2136 = vpop.xlane.xlu0 %2135
    %v2137 = vmul.f32 %v2133, %v262
    %v2138 = vmul.f32 %v2136, %v262
    %v2139 = vadd.f32 %v2137, 1e-05
    %v2140 = vadd.f32 %v2138, 1e-05
    %v2141 = vrsqrt.pop %v2139
    %v2142 = vrsqrt.pop %v2140
    %v2143 = vmul.f32 %v2127, %v2141
    %v2144 = vmul.f32 %v2128, %v2142
    %v2145 = vlaneseq
    %v2146 = vshrl.u32 %v2145, 7
    %v2147 = vsub.s32 0, %v2146
    %v2148 = vrot.slane %v2118, %v2147
    %v2149 = vmul.f32 %v2143, %v2148
    %v2150 = vmul.f32 %v2144, %v2148
    %v2151 = vlaneseq
    %v2152 = vshrl.u32 %v2151, 7
    %v2153 = vsub.s32 1, %v2152
    %v2154 = vrot.slane %v2118, %v2153
    %v2155 = vadd.f32 %v2149, %v2154
    %v2156 = vadd.f32 %v2150, %v2154
    %v2157 = vld [vmem:[%s3 + $0x290] sm:$0xff]
    %v2158 = vld [vmem:[%s3 + $0x298] sm:$0xff]
    %v2159 = vld [vmem:[%s3 + $0x2a0] sm:$0xff]
    %v2160 = vld [vmem:[%s3 + $0x2a8] sm:$0xff]
    %v2161 = vld [vmem:[%s3 + $0x2b0] sm:$0xff]
    %v2162 = vld [vmem:[%s3 + $0x2b8] sm:$0xff]
    %v2163 = vpack.c.bf16 %v2156, %v2155
    %s2164 = scalar_lea.vmem %s4, 208
    %v2165 = vld [vmem:[%s2164] ss:$8 sm:$0x3]
    %v2167 = vlaneseq
    %v2168 = vshrl.u32 %v2167, 7
    %v2169 = vsub.s32 0, %v2168
    %v2170 = vrot.slane %v2165, %v2169
    %v2171 = vlaneseq
    %v2172 = vshrl.u32 %v2171, 7
    %v2173 = vsub.s32 1, %v2172
    %v2174 = vrot.slane %v2165, %v2173
    %v2183 = vunpack.c.l.b16 %v2157
    %v2184 = vunpack.c.h.b16 %v2157
    %v2185 = vunpack.c.l.b16 %v2158
    %v2186 = vunpack.c.h.b16 %v2158
    %v2187 = vunpack.c.l.b16 %v2159
    %v2188 = vunpack.c.h.b16 %v2159
    %v2189 = vunpack.c.l.b16 %v2160
    %v2190 = vunpack.c.h.b16 %v2160
    %v2191 = vunpack.c.l.b16 %v2161
    %v2192 = vunpack.c.h.b16 %v2161
    %v2193 = vunpack.c.l.b16 %v2162
    %v2194 = vunpack.c.h.b16 %v2162
    %v2195 = vpack.c.b16 %v2185, %v2183
    %v2196 = vpack.c.b16 %v2186, %v2184
    %v2197 = vpack.c.b16 %v2189, %v2187
    %v2198 = vpack.c.b16 %v2190, %v2188
    %v2199 = vpack.c.b16 %v2193, %v2191
    %v2200 = vpack.c.b16 %v2194, %v2192
    %v2208 = vsel %vm254, %v2163, 0
    %2210 = vmatprep.subr.bf16.mxu0 %v2196
    %2211 = vmatpush1.bf16.msra.mxu0 %v2195
    %2212 = vmatprep.subr.bf16.mxu0 %v2198
    %2213 = vmatpush1.bf16.msra.mxu0 %v2197
    %2214 = vmatprep.subr.bf16.mxu0 %v2200
    %2215 = vmatpush1.bf16.msra.mxu0 %v2199
    %2216 = vmatprep.subr.bf16.mxu0 0
    %2217 = vmatpush1.bf16.msra.mxu0 0
    %2218 = vmatprep.subr.bf16.mxu0 0
    %2219 = vmatpush1.bf16.msra.mxu0 0
    %2220 = vmatprep.subr.bf16.mxu0 0
    %2221 = vmatpush1.bf16.msra.mxu0 0
    %2222 = vmatprep.subr.bf16.mxu0 0
    %2223 = vmatpush1.bf16.msra.mxu0 0
    %2224 = vmatprep.subr.bf16.mxu0 0
    %2225 = vmatpush1.bf16.msra.mxu0 0
    %2226 = vmatprep.subr.bf16.mxu0 0
    %2227 = vmatpush1.bf16.msra.mxu0 0
    %2228 = vmatprep.subr.bf16.mxu0 0
    %2229 = vmatpush1.bf16.msra.mxu0 0
    %2230 = vmatprep.subr.bf16.mxu0 0
    %2231 = vmatpush1.bf16.msra.mxu0 0
    %2232 = vmatprep.subr.bf16.mxu0 0
    %2233 = vmatpush1.bf16.msra.mxu0 0
    %2234 = vmatprep.subr.bf16.mxu0 0
    %2235 = vmatpush1.bf16.msra.mxu0 0
    %2236 = vmatprep.subr.bf16.mxu0 0
    %2237 = vmatpush1.bf16.msra.mxu0 0
    %2238 = vmatprep.subr.bf16.mxu0 0
    %2239 = vmatpush1.bf16.msra.mxu0 0
    %2240 = vmatprep.subr.bf16.mxu0 0
    %2241 = vmatpush1.bf16.msra.mxu0 0
    %2242 = vmatprep.mubr.bf16.mxu0 0
    %2243 = vmatmul.mubr.bf16.gmra.mrb[0].mxu0 %v2208
    %v2244 = vpop.f32.mrb[0].mxu0
    %v2245 = vadd.f32 %v2170, %v2244
    %v2246 = vpop.f32.mrb[0].mxu0
    %v2247 = vadd.f32 %v2174, %v2246
    %v2248 = vpop.f32.mrb[0].mxu0
    %v2249 = vadd.f32 %v2170, %v2248
    %v2250 = vpop.f32.mrb[0].mxu0
    %v2251 = vadd.f32 %v2174, %v2250
    %2252 = vdwg.mxu0
    %v2253 = vmul.f32 %v2245, 1.702
    %v2254 = vmul.f32 %v2247, 1.702
    %v2255 = vmul.f32 %v2249, 1.702
    %v2256 = vmul.f32 %v2251, 1.702
    %v2257 = vxor.u32 %v2253, 2147483648
    %v2258 = vxor.u32 %v2254, 2147483648
    %v2259 = vxor.u32 %v2255, 2147483648
    %v2260 = vxor.u32 %v2256, 2147483648
    %v2261 = vmul.f32 %v2257, 1.442695
    %v2262 = vpow.pop %v2261
    %v2263 = vmul.f32 %v2258, 1.442695
    %v2264 = vpow.pop %v2263
    %v2265 = vmul.f32 %v2259, 1.442695
    %v2266 = vpow.pop %v2265
    %v2267 = vmul.f32 %v2260, 1.442695
    %v2268 = vpow.pop %v2267
    %v2269 = vadd.f32 %v2262, 1.0
    %v2270 = vadd.f32 %v2264, 1.0
    %v2271 = vadd.f32 %v2266, 1.0
    %v2272 = vadd.f32 %v2268, 1.0
    %v2273 = vrcp.pop %v2269
    %v2274 = vmul.f32 1.0, %v2273
    %v2275 = vrcp.pop %v2270
    %v2276 = vmul.f32 1.0, %v2275
    %v2277 = vrcp.pop %v2271
    %v2278 = vmul.f32 1.0, %v2277
    %v2279 = vrcp.pop %v2272
    %v2280 = vmul.f32 1.0, %v2279
    %v2281 = vmul.f32 %v2245, %v2274
    %v2282 = vmul.f32 %v2247, %v2276
    %v2283 = vmul.f32 %v2249, %v2278
    %v2284 = vmul.f32 %v2251, %v2280
    %v2285 = vld [vmem:[%s3 + $0x2c0] sm:$0xf]
    %v2286 = vld [vmem:[%s3 + $0x2c8] sm:$0xf]
    %v2287 = vld [vmem:[%s3 + $0x2d0] sm:$0xf]
    %v2288 = vld [vmem:[%s3 + $0x2d8] sm:$0xf]
    %v2289 = vld [vmem:[%s3 + $0x2e0] sm:$0xf]
    %v2290 = vld [vmem:[%s3 + $0x2e8] sm:$0xf]
    %v2291 = vld [vmem:[%s3 + $0x2f0] sm:$0xf]
    %v2292 = vld [vmem:[%s3 + $0x2f8] sm:$0xf]
    %v2293 = vld [vmem:[%s3 + $0x300] sm:$0xf]
    %v2294 = vld [vmem:[%s3 + $0x308] sm:$0xf]
    %v2295 = vld [vmem:[%s3 + $0x310] sm:$0xf]
    %v2296 = vld [vmem:[%s3 + $0x318] sm:$0xf]
    %v2297 = vld [vmem:[%s3 + $0x320] sm:$0xf]
    %v2298 = vld [vmem:[%s3 + $0x328] sm:$0xf]
    %v2299 = vld [vmem:[%s3 + $0x330] sm:$0xf]
    %v2300 = vld [vmem:[%s3 + $0x338] sm:$0xf]
    %v2301 = vld [vmem:[%s3 + $0x340] sm:$0xf]
    %v2302 = vld [vmem:[%s3 + $0x348] sm:$0xf]
    %v2303 = vld [vmem:[%s3 + $0x350] sm:$0xf]
    %v2304 = vld [vmem:[%s3 + $0x358] sm:$0xf]
    %v2305 = vld [vmem:[%s3 + $0x360] sm:$0xf]
    %v2306 = vld [vmem:[%s3 + $0x368] sm:$0xf]
    %v2307 = vld [vmem:[%s3 + $0x370] sm:$0xf]
    %v2308 = vld [vmem:[%s3 + $0x378] sm:$0xf]
    %v2309 = vpack.c.bf16 %v2283, %v2281
    %v2310 = vpack.c.bf16 %v2284, %v2282
    %v2311 = vld [vmem:[%s4 + $0xe0] ss:$0 sm:$0xff]
    %v2336 = vunpack.c.l.b16 %v2285
    %v2337 = vunpack.c.l.b16 %v2286
    %v2338 = vunpack.c.l.b16 %v2287
    %v2339 = vunpack.c.l.b16 %v2288
    %v2340 = vunpack.c.l.b16 %v2289
    %v2341 = vunpack.c.l.b16 %v2290
    %v2342 = vunpack.c.l.b16 %v2291
    %v2343 = vunpack.c.l.b16 %v2292
    %v2344 = vunpack.c.l.b16 %v2293
    %v2345 = vunpack.c.l.b16 %v2294
    %v2346 = vunpack.c.l.b16 %v2295
    %v2347 = vunpack.c.l.b16 %v2296
    %v2348 = vunpack.c.l.b16 %v2297
    %v2349 = vunpack.c.l.b16 %v2298
    %v2350 = vunpack.c.l.b16 %v2299
    %v2351 = vunpack.c.l.b16 %v2300
    %v2352 = vunpack.c.l.b16 %v2301
    %v2353 = vunpack.c.l.b16 %v2302
    %v2354 = vunpack.c.l.b16 %v2303
    %v2355 = vunpack.c.l.b16 %v2304
    %v2356 = vunpack.c.l.b16 %v2305
    %v2357 = vunpack.c.l.b16 %v2306
    %v2358 = vunpack.c.l.b16 %v2307
    %v2359 = vunpack.c.l.b16 %v2308
    %v2360 = vpack.c.b16 %v2337, %v2336
    %v2361 = vpack.c.b16 %v2339, %v2338
    %v2362 = vpack.c.b16 %v2341, %v2340
    %v2363 = vpack.c.b16 %v2343, %v2342
    %v2364 = vpack.c.b16 %v2345, %v2344
    %v2365 = vpack.c.b16 %v2347, %v2346
    %v2366 = vpack.c.b16 %v2349, %v2348
    %v2367 = vpack.c.b16 %v2351, %v2350
    %v2368 = vpack.c.b16 %v2353, %v2352
    %v2369 = vpack.c.b16 %v2355, %v2354
    %v2370 = vpack.c.b16 %v2357, %v2356
    %v2371 = vpack.c.b16 %v2359, %v2358
    %v2385 = vsel %vm208, %v2310, 0
    %2387 = vmatprep.subr.bf16.mxu0 0
    %2388 = vmatpush1.bf16.msra.mxu0 %v2360
    %2389 = vmatprep.subr.bf16.mxu0 0
    %2390 = vmatpush1.bf16.msra.mxu0 %v2361
    %2391 = vmatprep.subr.bf16.mxu0 0
    %2392 = vmatpush1.bf16.msra.mxu0 %v2362
    %2393 = vmatprep.subr.bf16.mxu0 0
    %2394 = vmatpush1.bf16.msra.mxu0 %v2363
    %2395 = vmatprep.subr.bf16.mxu0 0
    %2396 = vmatpush1.bf16.msra.mxu0 %v2364
    %2397 = vmatprep.subr.bf16.mxu0 0
    %2398 = vmatpush1.bf16.msra.mxu0 %v2365
    %2399 = vmatprep.subr.bf16.mxu0 0
    %2400 = vmatpush1.bf16.msra.mxu0 %v2366
    %2401 = vmatprep.subr.bf16.mxu0 0
    %2402 = vmatpush1.bf16.msra.mxu0 %v2367
    %2403 = vmatprep.subr.bf16.mxu0 0
    %2404 = vmatpush1.bf16.msra.mxu0 %v2368
    %2405 = vmatprep.subr.bf16.mxu0 0
    %2406 = vmatpush1.bf16.msra.mxu0 %v2369
    %2407 = vmatprep.subr.bf16.mxu0 0
    %2408 = vmatpush1.bf16.msra.mxu0 %v2370
    %2409 = vmatprep.subr.bf16.mxu0 0
    %2410 = vmatpush1.bf16.msra.mxu0 %v2371
    %2411 = vmatprep.subr.bf16.mxu0 0
    %2412 = vmatpush1.bf16.msra.mxu0 0
    %2413 = vmatprep.subr.bf16.mxu0 0
    %2414 = vmatpush1.bf16.msra.mxu0 0
    %2415 = vmatprep.subr.bf16.mxu0 0
    %2416 = vmatpush1.bf16.msra.mxu0 0
    %2417 = vmatprep.subr.bf16.mxu0 0
    %2418 = vmatpush1.bf16.msra.mxu0 0
    %2419 = vmatprep.mubr.bf16.mxu0 %v2385
    %2420 = vmatmul.mubr.bf16.gmra.mrb[0].mxu0 %v2309
    %v2421 = vpop.f32.mrb[0].mxu0
    %v2422 = vadd.f32 %v2311, %v2421
    %v2423 = vpop.f32.mrb[0].mxu0
    %v2424 = vpop.f32.mrb[0].mxu0
    %v2425 = vadd.f32 %v2311, %v2424
    %v2426 = vpop.f32.mrb[0].mxu0
    %2427 = vdwg.mxu0
    %v2428 = vadd.f32 %v2116, %v2422
    %v2429 = vadd.f32 %v2117, %v2425
    %v2430 = vld [vmem:[%s3 + $0x380] sm:$0xf]
    %v2431 = vld [vmem:[%s3 + $0x388] sm:$0xf]
    %v2432 = vld [vmem:[%s3 + $0x390] sm:$0xf]
    %v2433 = vld [vmem:[%s3 + $0x398] sm:$0xf]
    %v2434 = vld [vmem:[%s3 + $0x3a0] sm:$0xf]
    %v2435 = vld [vmem:[%s3 + $0x3a8] sm:$0xf]
    %v2436 = vpack.c.bf16 %v2429, %v2428
    %v2437 = vld [vmem:[%s4 + $0xf0] ss:$0 sm:$0xff]
    %v2444 = vunpack.c.l.b16 %v2430
    %v2445 = vunpack.c.l.b16 %v2431
    %v2446 = vunpack.c.l.b16 %v2432
    %v2447 = vunpack.c.l.b16 %v2433
    %v2448 = vunpack.c.l.b16 %v2434
    %v2449 = vunpack.c.l.b16 %v2435
    %v2450 = vpack.c.b16 %v2445, %v2444
    %v2451 = vpack.c.b16 %v2447, %v2446
    %v2452 = vpack.c.b16 %v2449, %v2448
    %v2457 = vsel %vm254, %v2436, 0
    %2459 = vmatprep.subr.bf16.mxu0 0
    %2460 = vmatpush1.bf16.msra.mxu0 %v2450
    %2461 = vmatprep.subr.bf16.mxu0 0
    %2462 = vmatpush1.bf16.msra.mxu0 %v2451
    %2463 = vmatprep.subr.bf16.mxu0 0
    %2464 = vmatpush1.bf16.msra.mxu0 %v2452
    %2465 = vmatprep.subr.bf16.mxu0 0
    %2466 = vmatpush1.bf16.msra.mxu0 0
    %2467 = vmatprep.subr.bf16.mxu0 0
    %2468 = vmatpush1.bf16.msra.mxu0 0
    %2469 = vmatprep.subr.bf16.mxu0 0
    %2470 = vmatpush1.bf16.msra.mxu0 0
    %2471 = vmatprep.subr.bf16.mxu0 0
    %2472 = vmatpush1.bf16.msra.mxu0 0
    %2473 = vmatprep.subr.bf16.mxu0 0
    %2474 = vmatpush1.bf16.msra.mxu0 0
    %2475 = vmatprep.subr.bf16.mxu0 0
    %2476 = vmatpush1.bf16.msra.mxu0 0
    %2477 = vmatprep.subr.bf16.mxu0 0
    %2478 = vmatpush1.bf16.msra.mxu0 0
    %2479 = vmatprep.subr.bf16.mxu0 0
    %2480 = vmatpush1.bf16.msra.mxu0 0
    %2481 = vmatprep.subr.bf16.mxu0 0
    %2482 = vmatpush1.bf16.msra.mxu0 0
    %2483 = vmatprep.subr.bf16.mxu0 0
    %2484 = vmatpush1.bf16.msra.mxu0 0
    %2485 = vmatprep.subr.bf16.mxu0 0
    %2486 = vmatpush1.bf16.msra.mxu0 0
    %2487 = vmatprep.subr.bf16.mxu0 0
    %2488 = vmatpush1.bf16.msra.mxu0 0
    %2489 = vmatprep.subr.bf16.mxu0 0
    %2490 = vmatpush1.bf16.msra.mxu0 0
    %2491 = vmatprep.mubr.bf16.mxu0 0
    %2492 = vmatmul.mubr.bf16.gmra.mrb[0].mxu0 %v2457
    %v2493 = vpop.f32.mrb[0].mxu0
    %v2494 = vadd.f32 %v2437, %v2493
    %v2495 = vpop.f32.mrb[0].mxu0
    %v2496 = vpop.f32.mrb[0].mxu0
    %v2497 = vadd.f32 %v2437, %v2496
    %v2498 = vpop.f32.mrb[0].mxu0
    %2499 = vdwg.mxu0
    %v2500 = vld [vmem:[%s4 + $0x100] sm:$0x3]
    %v2501 = vsel %vm968, %v2494, 0.0
    %2502 = vadd.xlane.f32.xlu0 %v2501
    %v2503 = vpop.xlane.xlu0 %2502
    %vm2504 = vcmask 254976
    %v2505 = vsel %vm2504, %v2497, 0.0
    %2506 = vadd.xlane.f32.xlu0 %v2505
    %v2507 = vpop.xlane.xlu0 %2506
    %v2508 = vrcp.pop 32.0
    %v2509 = vmul.f32 %v2503, %v2508
    %v2510 = vmul.f32 %v2507, %v2508
    %v2511 = vsub.f32 %v2494, %v2509
    %v2512 = vsub.f32 %v2497, %v2510
    %v2513 = vmul.f32 %v2511, %v2511
    %v2514 = vmul.f32 %v2512, %v2512
    %v2515 = vsel %vm968, %v2513, 0.0
    %2516 = vadd.xlane.f32.xlu0 %v2515
    %v2517 = vpop.xlane.xlu0 %2516
    %v2518 = vsel %vm2504, %v2514, 0.0
    %2519 = vadd.xlane.f32.xlu0 %v2518
    %v2520 = vpop.xlane.xlu0 %2519
    %v2521 = vmul.f32 %v2517, %v2508
    %v2522 = vmul.f32 %v2520, %v2508
    %v2523 = vadd.f32 %v2521, 1e-12
    %v2524 = vadd.f32 %v2522, 1e-12
    %v2525 = vrsqrt.pop %v2523
    %v2526 = vrsqrt.pop %v2524
    %v2527 = vmul.f32 %v2511, %v2525
    %v2528 = vmul.f32 %v2512, %v2526
    %v2529 = vlaneseq
    %v2530 = vshrl.u32 %v2529, 7
    %v2531 = vsub.s32 0, %v2530
    %v2532 = vrot.slane %v2500, %v2531
    %v2533 = vmul.f32 %v2527, %v2532
    %v2534 = vmul.f32 %v2528, %v2532
    %v2535 = vlaneseq
    %v2536 = vshrl.u32 %v2535, 7
    %v2537 = vsub.s32 1, %v2536
    %v2538 = vrot.slane %v2500, %v2537
    %v2539 = vadd.f32 %v2533, %v2538
    %v2540 = vadd.f32 %v2534, %v2538
    %v2541 = vld [vmem:[%s1] sm:$0xff]
    %v2542 = vld [vmem:[%s1 + $0x8] sm:$0xff]
    %2543 = vset.pattern.permute.xlu0 0
    %2544 = vperm.xlu0 %2543, %v2541
    %v2545 = vpop.permute.xlu0 %2544
    %2546 = vset.pattern.permute.xlu0 0
    %2547 = vperm.xlu0 %2546, %v2542
    %v2548 = vpop.permute.xlu0 %2547
    %vm2549 = vcmp.eq.s32.totalorder %v26, %v2545
    %vm2550 = vcmp.eq.s32.totalorder %v26, %v2548
    %v2551 = vld [vmem:[%s3 + $0x3b0] sm:$0xf]
    %v2552 = vld [vmem:[%s3 + $0x3b8] sm:$0xf]
    %v2553 = vld [vmem:[%s3 + $0x3c0] sm:$0xf]
    %v2554 = vld [vmem:[%s3 + $0x3c8] sm:$0xf]
    %v2555 = vld [vmem:[%s3 + $0x3d0] sm:$0xf]
    %v2556 = vld [vmem:[%s3 + $0x3d8] sm:$0xf]
    %v2557 = vld [vmem:[%s3 + $0x3e0] sm:$0xf]
    %v2558 = vld [vmem:[%s3 + $0x3e8] sm:$0xf]
    %v2559 = vsel %vm2549, 1, 0
    %v2560 = vsel %vm2550, 1, 0
    %v2561 = vcvt.s32.f32 %v2559
    %v2562 = vcvt.s32.f32 %v2560
    %v2563 = vpack.c.bf16 %v2562, %v2561
    %v2564 = vld [vmem:[%s4 + $0x110] sm:$0xff]
    %v2565 = vld [vmem:[%s4 + $0x120] sm:$0xff]
    %v2574 = vunpack.c.l.b16 %v2551
    %v2575 = vunpack.c.l.b16 %v2552
    %v2576 = vunpack.c.l.b16 %v2553
    %v2577 = vunpack.c.l.b16 %v2554
    %v2578 = vunpack.c.l.b16 %v2555
    %v2579 = vunpack.c.l.b16 %v2556
    %v2580 = vunpack.c.l.b16 %v2557
    %v2581 = vunpack.c.l.b16 %v2558
    %v2582 = vpack.c.b16 %v2575, %v2574
    %v2583 = vpack.c.b16 %v2577, %v2576
    %v2584 = vpack.c.b16 %v2579, %v2578
    %v2585 = vpack.c.b16 %v2581, %v2580
    %v2591 = vsel %vm208, %v2563, 0
    %2593 = vmatprep.subr.bf16.mxu0 0
    %2594 = vmatpush1.bf16.msra.mxu0 %v2582
    %2595 = vmatprep.subr.bf16.mxu0 0
    %2596 = vmatpush1.bf16.msra.mxu0 %v2583
    %2597 = vmatprep.subr.bf16.mxu0 0
    %2598 = vmatpush1.bf16.msra.mxu0 %v2584
    %2599 = vmatprep.subr.bf16.mxu0 0
    %2600 = vmatpush1.bf16.msra.mxu0 %v2585
    %2601 = vmatprep.subr.bf16.mxu0 0
    %2602 = vmatpush1.bf16.msra.mxu0 0
    %2603 = vmatprep.subr.bf16.mxu0 0
    %2604 = vmatpush1.bf16.msra.mxu0 0
    %2605 = vmatprep.subr.bf16.mxu0 0
    %2606 = vmatpush1.bf16.msra.mxu0 0
    %2607 = vmatprep.subr.bf16.mxu0 0
    %2608 = vmatpush1.bf16.msra.mxu0 0
    %2609 = vmatprep.subr.bf16.mxu0 0
    %2610 = vmatpush1.bf16.msra.mxu0 0
    %2611 = vmatprep.subr.bf16.mxu0 0
    %2612 = vmatpush1.bf16.msra.mxu0 0
    %2613 = vmatprep.subr.bf16.mxu0 0
    %2614 = vmatpush1.bf16.msra.mxu0 0
    %2615 = vmatprep.subr.bf16.mxu0 0
    %2616 = vmatpush1.bf16.msra.mxu0 0
    %2617 = vmatprep.subr.bf16.mxu0 0
    %2618 = vmatpush1.bf16.msra.mxu0 0
    %2619 = vmatprep.subr.bf16.mxu0 0
    %2620 = vmatpush1.bf16.msra.mxu0 0
    %2621 = vmatprep.subr.bf16.mxu0 0
    %2622 = vmatpush1.bf16.msra.mxu0 0
    %2623 = vmatprep.subr.bf16.mxu0 0
    %2624 = vmatpush1.bf16.msra.mxu0 0
    %2625 = vmatprep.mubr.bf16.mxu0 0
    %2626 = vmatmul.mubr.bf16.gmra.mrb[0].mxu0 %v2591
    %v2627 = vpop.f32.mrb[0].mxu0
    %v2628 = vadd.f32 %v2564, %v2627
    %v2629 = vpop.f32.mrb[0].mxu0
    %v2630 = vpop.f32.mrb[0].mxu0
    %v2631 = vadd.f32 %v2565, %v2630
    %v2632 = vpop.f32.mrb[0].mxu0
    %2633 = vdwg.mxu0
    %v2634 = vld [vmem:[%s4 + $0x130] sm:$0x3]
    %v2635 = vsel %vm968, %v2628, 0.0
    %2636 = vadd.xlane.f32.xlu0 %v2635
    %v2637 = vpop.xlane.xlu0 %2636
    %v2638 = vsel %vm968, %v2631, 0.0
    %2639 = vadd.xlane.f32.xlu0 %v2638
    %v2640 = vpop.xlane.xlu0 %2639
    %v2641 = vmul.f32 %v2637, %v2508
    %v2642 = vmul.f32 %v2640, %v2508
    %v2643 = vsub.f32 %v2628, %v2641
    %v2644 = vsub.f32 %v2631, %v2642
    %v2645 = vmul.f32 %v2643, %v2643
    %v2646 = vmul.f32 %v2644, %v2644
    %v2647 = vsel %vm968, %v2645, 0.0
    %2648 = vadd.xlane.f32.xlu0 %v2647
    %v2649 = vpop.xlane.xlu0 %2648
    %v2650 = vsel %vm968, %v2646, 0.0
    %2651 = vadd.xlane.f32.xlu0 %v2650
    %v2652 = vpop.xlane.xlu0 %2651
    %v2653 = vmul.f32 %v2649, %v2508
    %v2654 = vmul.f32 %v2652, %v2508
    %v2655 = vadd.f32 %v2653, 1e-12
    %v2656 = vadd.f32 %v2654, 1e-12
    %v2657 = vrsqrt.pop %v2655
    %v2658 = vrsqrt.pop %v2656
    %v2659 = vmul.f32 %v2643, %v2657
    %v2660 = vmul.f32 %v2644, %v2658
    %v2661 = vlaneseq
    %v2662 = vshrl.u32 %v2661, 7
    %v2663 = vsub.s32 0, %v2662
    %v2664 = vrot.slane %v2634, %v2663
    %v2665 = vmul.f32 %v2659, %v2664
    %v2666 = vmul.f32 %v2660, %v2664
    %v2667 = vlaneseq
    %v2668 = vshrl.u32 %v2667, 7
    %v2669 = vsub.s32 1, %v2668
    %v2670 = vrot.slane %v2634, %v2669
    %v2671 = vadd.f32 %v2665, %v2670
    %v2672 = vadd.f32 %v2666, %v2670
    %v2673 = vld [vmem:[%s3 + $0x3f0] sm:$0xf]
    %v2674 = vld [vmem:[%s3 + $0x3f8] sm:$0xf]
    %v2675 = vld [vmem:[%s3 + $0x400] sm:$0xf]
    %v2676 = vld [vmem:[%s3 + $0x408] sm:$0xf]
    %v2677 = vpack.c.bf16 %v2672, %v2671
    %v2678 = vld [vmem:[%s4 + $0x140] ss:$0 sm:$0xff]
    %v2683 = vunpack.c.l.b16 %v2673
    %v2684 = vunpack.c.l.b16 %v2674
    %v2685 = vunpack.c.l.b16 %v2675
    %v2686 = vunpack.c.l.b16 %v2676
    %v2687 = vpack.c.b16 %v2684, %v2683
    %v2688 = vpack.c.b16 %v2686, %v2685
    %v2692 = vsel %vm968, %v2677, 0
    %2694 = vmatprep.subr.bf16.mxu0 0
    %2695 = vmatpush1.bf16.msra.mxu0 %v2687
    %2696 = vmatprep.subr.bf16.mxu0 0
    %2697 = vmatpush1.bf16.msra.mxu0 %v2688
    %2698 = vmatprep.subr.bf16.mxu0 0
    %2699 = vmatpush1.bf16.msra.mxu0 0
    %2700 = vmatprep.subr.bf16.mxu0 0
    %2701 = vmatpush1.bf16.msra.mxu0 0
    %2702 = vmatprep.subr.bf16.mxu0 0
    %2703 = vmatpush1.bf16.msra.mxu0 0
    %2704 = vmatprep.subr.bf16.mxu0 0
    %2705 = vmatpush1.bf16.msra.mxu0 0
    %2706 = vmatprep.subr.bf16.mxu0 0
    %2707 = vmatpush1.bf16.msra.mxu0 0
    %2708 = vmatprep.subr.bf16.mxu0 0
    %2709 = vmatpush1.bf16.msra.mxu0 0
    %2710 = vmatprep.subr.bf16.mxu0 0
    %2711 = vmatpush1.bf16.msra.mxu0 0
    %2712 = vmatprep.subr.bf16.mxu0 0
    %2713 = vmatpush1.bf16.msra.mxu0 0
    %2714 = vmatprep.subr.bf16.mxu0 0
    %2715 = vmatpush1.bf16.msra.mxu0 0
    %2716 = vmatprep.subr.bf16.mxu0 0
    %2717 = vmatpush1.bf16.msra.mxu0 0
    %2718 = vmatprep.subr.bf16.mxu0 0
    %2719 = vmatpush1.bf16.msra.mxu0 0
    %2720 = vmatprep.subr.bf16.mxu0 0
    %2721 = vmatpush1.bf16.msra.mxu0 0
    %2722 = vmatprep.subr.bf16.mxu0 0
    %2723 = vmatpush1.bf16.msra.mxu0 0
    %2724 = vmatprep.subr.bf16.mxu0 0
    %2725 = vmatpush1.bf16.msra.mxu0 0
    %2726 = vmatprep.mubr.bf16.mxu0 0
    %2727 = vmatmul.mubr.bf16.gmra.mrb[0].mxu0 %v2692
    %v2728 = vpop.f32.mrb[0].mxu0
    %v2729 = vadd.f32 %v2678, %v2728
    %v2730 = vpop.f32.mrb[0].mxu0
    %v2731 = vpop.f32.mrb[0].mxu0
    %v2732 = vadd.f32 %v2678, %v2731
    %v2733 = vpop.f32.mrb[0].mxu0
    %2734 = vdwg.mxu0
    %v2735 = vpack.c.bf16 %v2732, %v2729
    %2737 = vrot.lane.b32.xlu0 %v2735, 96
    %v2738 = vpop.permute.xlu0 %2737
    %vm2739 = vcmask 64512
    %v2741 = vsel %vm2739, %v2735, 0
    %v2744 = vsel %vm2739, %v2738, 0
    %2746 = vmatprep.subr.bf16.mxu0 0
    %2747 = vmatpush1.bf16.xpose.msra.mxu0 %v2744
    %2748 = vmatprep.subr.bf16.mxu0 0
    %2749 = vmatpush1.bf16.xpose.msra.mxu0 0
    %2750 = vmatprep.subr.bf16.mxu0 0
    %2751 = vmatpush1.bf16.xpose.msra.mxu0 0
    %2752 = vmatprep.subr.bf16.mxu0 0
    %2753 = vmatpush1.bf16.xpose.msra.mxu0 0
    %2754 = vmatprep.subr.bf16.mxu0 0
    %2755 = vmatpush1.bf16.xpose.msra.mxu0 0
    %2756 = vmatprep.subr.bf16.mxu0 0
    %2757 = vmatpush1.bf16.xpose.msra.mxu0 0
    %2758 = vmatprep.subr.bf16.mxu0 0
    %2759 = vmatpush1.bf16.xpose.msra.mxu0 0
    %2760 = vmatprep.subr.bf16.mxu0 0
    %2761 = vmatpush1.bf16.xpose.msra.mxu0 0
    %2762 = vmatprep.subr.bf16.mxu0 0
    %2763 = vmatpush1.bf16.xpose.msra.mxu0 0
    %2764 = vmatprep.subr.bf16.mxu0 0
    %2765 = vmatpush1.bf16.xpose.msra.mxu0 0
    %2766 = vmatprep.subr.bf16.mxu0 0
    %2767 = vmatpush1.bf16.xpose.msra.mxu0 0
    %2768 = vmatprep.subr.bf16.mxu0 0
    %2769 = vmatpush1.bf16.xpose.msra.mxu0 0
    %2770 = vmatprep.subr.bf16.mxu0 0
    %2771 = vmatpush1.bf16.xpose.msra.mxu0 0
    %2772 = vmatprep.subr.bf16.mxu0 0
    %2773 = vmatpush1.bf16.xpose.msra.mxu0 0
    %2774 = vmatprep.subr.bf16.mxu0 0
    %2775 = vmatpush1.bf16.xpose.msra.mxu0 0
    %2776 = vmatprep.subr.bf16.mxu0 0
    %2777 = vmatpush1.bf16.xpose.msra.mxu0 0
    %2778 = vmatprep.mubr.bf16.mxu0 0
    %2779 = vmatmul.mubr.bf16.gmra.mrb[0].mxu0 %v2741
    %v2780 = vpop.f32.mrb[0].mxu0
    %v2781 = vadd.f32 0.0, %v2780
    %v2782 = vpop.f32.mrb[0].mxu0
    %v2783 = vpop.f32.mrb[0].mxu0
    %v2784 = vadd.f32 0.0, %v2783
    %v2785 = vpop.f32.mrb[0].mxu0
    %2786 = vdwg.mxu0
    %v2787 = vmul.f32 %v2781, 0.35355338
    %v2788 = vmul.f32 %v2784, 0.35355338
    %v2789 = vadd.f32 %v2787, %v92
    %v2790 = vadd.f32 %v2788, %v93
    %v2791 = vsel %vm434, %v2789, -inf
    %2792 = vmax.xlane.f32.xlu0 %v2791
    %v2793 = vpop.xlane.xlu0 %2792
    %v2794 = vsel %vm434, %v2790, -inf
    %2795 = vmax.xlane.f32.xlu0 %v2794
    %v2796 = vpop.xlane.xlu0 %2795
    %v2797 = vsub.f32 %v2789, %v2793
    %v2798 = vsub.f32 %v2790, %v2796
    %v2799 = vmul.f32 %v2797, 1.442695
    %v2800 = vpow.pop %v2799
    %v2801 = vmul.f32 %v2798, 1.442695
    %v2802 = vpow.pop %v2801
    %v2803 = vsel %vm434, %v2800, 0.0
    %2804 = vadd.xlane.f32.xlu0 %v2803
    %v2805 = vpop.xlane.xlu0 %2804
    %v2806 = vsel %vm434, %v2802, 0.0
    %2807 = vadd.xlane.f32.xlu0 %v2806
    %v2808 = vpop.xlane.xlu0 %2807
    %v2809 = vrcp.pop %v2805
    %v2810 = vmul.f32 %v2800, %v2809
    %v2811 = vrcp.pop %v2808
    %v2812 = vmul.f32 %v2802, %v2811
    %v2813 = vpack.c.bf16 %v2812, %v2810
    %2814 = vrot.lane.b32.xlu0 %v2735, 64
    %v2815 = vpop.permute.xlu0 %2814
    %v2818 = vsel %vm434, %v2813, 0
    %2820 = vmatprep.subr.bf16.mxu0 0
    %2821 = vmatpush1.bf16.msra.mxu0 %v2815
    %2822 = vmatprep.subr.bf16.mxu0 0
    %2823 = vmatpush1.bf16.msra.mxu0 0
    %2824 = vmatprep.subr.bf16.mxu0 0
    %2825 = vmatpush1.bf16.msra.mxu0 0
    %2826 = vmatprep.subr.bf16.mxu0 0
    %2827 = vmatpush1.bf16.msra.mxu0 0
    %2828 = vmatprep.subr.bf16.mxu0 0
    %2829 = vmatpush1.bf16.msra.mxu0 0
    %2830 = vmatprep.subr.bf16.mxu0 0
    %2831 = vmatpush1.bf16.msra.mxu0 0
    %2832 = vmatprep.subr.bf16.mxu0 0
    %2833 = vmatpush1.bf16.msra.mxu0 0
    %2834 = vmatprep.subr.bf16.mxu0 0
    %2835 = vmatpush1.bf16.msra.mxu0 0
    %2836 = vmatprep.subr.bf16.mxu0 0
    %2837 = vmatpush1.bf16.msra.mxu0 0
    %2838 = vmatprep.subr.bf16.mxu0 0
    %2839 = vmatpush1.bf16.msra.mxu0 0
    %2840 = vmatprep.subr.bf16.mxu0 0
    %2841 = vmatpush1.bf16.msra.mxu0 0
    %2842 = vmatprep.subr.bf16.mxu0 0
    %2843 = vmatpush1.bf16.msra.mxu0 0
    %2844 = vmatprep.subr.bf16.mxu0 0
    %2845 = vmatpush1.bf16.msra.mxu0 0
    %2846 = vmatprep.subr.bf16.mxu0 0
    %2847 = vmatpush1.bf16.msra.mxu0 0
    %2848 = vmatprep.subr.bf16.mxu0 0
    %2849 = vmatpush1.bf16.msra.mxu0 0
    %2850 = vmatprep.subr.bf16.mxu0 0
    %2851 = vmatpush1.bf16.msra.mxu0 0
    %2852 = vmatprep.mubr.bf16.mxu0 0
    %2853 = vmatmul.mubr.bf16.gmra.mrb[0].mxu0 %v2818
    %v2854 = vpop.f32.mrb[0].mxu0
    %v2855 = vadd.f32 0.0, %v2854
    %v2856 = vpop.f32.mrb[0].mxu0
    %v2857 = vpop.f32.mrb[0].mxu0
    %v2858 = vadd.f32 0.0, %v2857
    %v2859 = vpop.f32.mrb[0].mxu0
    %2860 = vdwg.mxu0
    %2861 = vrot.lane.b32.xlu0 %v2735, 120
    %v2862 = vpop.permute.xlu0 %2861
    %2863 = vrot.lane.b32.xlu0 %v2735, 88
    %v2864 = vpop.permute.xlu0 %2863
    %v2866 = vsel %vm2739, %v2862, 0
    %v2869 = vsel %vm2739, %v2864, 0
    %2871 = vmatprep.subr.bf16.mxu0 0
    %2872 = vmatpush1.bf16.xpose.msra.mxu0 %v2869
    %2873 = vmatprep.subr.bf16.mxu0 0
    %2874 = vmatpush1.bf16.xpose.msra.mxu0 0
    %2875 = vmatprep.subr.bf16.mxu0 0
    %2876 = vmatpush1.bf16.xpose.msra.mxu0 0
    %2877 = vmatprep.subr.bf16.mxu0 0
    %2878 = vmatpush1.bf16.xpose.msra.mxu0 0
    %2879 = vmatprep.subr.bf16.mxu0 0
    %2880 = vmatpush1.bf16.xpose.msra.mxu0 0
    %2881 = vmatprep.subr.bf16.mxu0 0
    %2882 = vmatpush1.bf16.xpose.msra.mxu0 0
    %2883 = vmatprep.subr.bf16.mxu0 0
    %2884 = vmatpush1.bf16.xpose.msra.mxu0 0
    %2885 = vmatprep.subr.bf16.mxu0 0
    %2886 = vmatpush1.bf16.xpose.msra.mxu0 0
    %2887 = vmatprep.subr.bf16.mxu0 0
    %2888 = vmatpush1.bf16.xpose.msra.mxu0 0
    %2889 = vmatprep.subr.bf16.mxu0 0
    %2890 = vmatpush1.bf16.xpose.msra.mxu0 0
    %2891 = vmatprep.subr.bf16.mxu0 0
    %2892 = vmatpush1.bf16.xpose.msra.mxu0 0
    %2893 = vmatprep.subr.bf16.mxu0 0
    %2894 = vmatpush1.bf16.xpose.msra.mxu0 0
    %2895 = vmatprep.subr.bf16.mxu0 0
    %2896 = vmatpush1.bf16.xpose.msra.mxu0 0
    %2897 = vmatprep.subr.bf16.mxu0 0
    %2898 = vmatpush1.bf16.xpose.msra.mxu0 0
    %2899 = vmatprep.subr.bf16.mxu0 0
    %2900 = vmatpush1.bf16.xpose.msra.mxu0 0
    %2901 = vmatprep.subr.bf16.mxu0 0
    %2902 = vmatpush1.bf16.xpose.msra.mxu0 0
    %2903 = vmatprep.mubr.bf16.mxu0 0
    %2904 = vmatmul.mubr.bf16.gmra.mrb[0].mxu0 %v2866
    %v2905 = vpop.f32.mrb[0].mxu0
    %v2906 = vadd.f32 0.0, %v2905
    %v2907 = vpop.f32.mrb[0].mxu0
    %v2908 = vpop.f32.mrb[0].mxu0
    %v2909 = vadd.f32 0.0, %v2908
    %v2910 = vpop.f32.mrb[0].mxu0
    %2911 = vdwg.mxu0
    %v2912 = vmul.f32 %v2906, 0.35355338
    %v2913 = vmul.f32 %v2909, 0.35355338
    %v2914 = vadd.f32 %v2912, %v92
    %v2915 = vadd.f32 %v2913, %v93
    %v2916 = vsel %vm434, %v2914, -inf
    %2917 = vmax.xlane.f32.xlu0 %v2916
    %v2918 = vpop.xlane.xlu0 %2917
    %v2919 = vsel %vm434, %v2915, -inf
    %2920 = vmax.xlane.f32.xlu0 %v2919
    %v2921 = vpop.xlane.xlu0 %2920
    %v2922 = vsub.f32 %v2914, %v2918
    %v2923 = vsub.f32 %v2915, %v2921
    %v2924 = vmul.f32 %v2922, 1.442695
    %v2925 = vpow.pop %v2924
    %v2926 = vmul.f32 %v2923, 1.442695
    %v2927 = vpow.pop %v2926
    %v2928 = vsel %vm434, %v2925, 0.0
    %2929 = vadd.xlane.f32.xlu0 %v2928
    %v2930 = vpop.xlane.xlu0 %2929
    %v2931 = vsel %vm434, %v2927, 0.0
    %2932 = vadd.xlane.f32.xlu0 %v2931
    %v2933 = vpop.xlane.xlu0 %2932
    %v2934 = vrcp.pop %v2930
    %v2935 = vmul.f32 %v2925, %v2934
    %v2936 = vrcp.pop %v2933
    %v2937 = vmul.f32 %v2927, %v2936
    %v2938 = vpack.c.bf16 %v2937, %v2935
    %2939 = vrot.lane.b32.xlu0 %v2735, 56
    %v2940 = vpop.permute.xlu0 %2939
    %v2943 = vsel %vm434, %v2938, 0
    %2945 = vmatprep.subr.bf16.mxu0 0
    %2946 = vmatpush1.bf16.msra.mxu0 %v2940
    %2947 = vmatprep.subr.bf16.mxu0 0
    %2948 = vmatpush1.bf16.msra.mxu0 0
    %2949 = vmatprep.subr.bf16.mxu0 0
    %2950 = vmatpush1.bf16.msra.mxu0 0
    %2951 = vmatprep.subr.bf16.mxu0 0
    %2952 = vmatpush1.bf16.msra.mxu0 0
    %2953 = vmatprep.subr.bf16.mxu0 0
    %2954 = vmatpush1.bf16.msra.mxu0 0
    %2955 = vmatprep.subr.bf16.mxu0 0
    %2956 = vmatpush1.bf16.msra.mxu0 0
    %2957 = vmatprep.subr.bf16.mxu0 0
    %2958 = vmatpush1.bf16.msra.mxu0 0
    %2959 = vmatprep.subr.bf16.mxu0 0
    %2960 = vmatpush1.bf16.msra.mxu0 0
    %2961 = vmatprep.subr.bf16.mxu0 0
    %2962 = vmatpush1.bf16.msra.mxu0 0
    %2963 = vmatprep.subr.bf16.mxu0 0
    %2964 = vmatpush1.bf16.msra.mxu0 0
    %2965 = vmatprep.subr.bf16.mxu0 0
    %2966 = vmatpush1.bf16.msra.mxu0 0
    %2967 = vmatprep.subr.bf16.mxu0 0
    %2968 = vmatpush1.bf16.msra.mxu0 0
    %2969 = vmatprep.subr.bf16.mxu0 0
    %2970 = vmatpush1.bf16.msra.mxu0 0
    %2971 = vmatprep.subr.bf16.mxu0 0
    %2972 = vmatpush1.bf16.msra.mxu0 0
    %2973 = vmatprep.subr.bf16.mxu0 0
    %2974 = vmatpush1.bf16.msra.mxu0 0
    %2975 = vmatprep.subr.bf16.mxu0 0
    %2976 = vmatpush1.bf16.msra.mxu0 0
    %2977 = vmatprep.mubr.bf16.mxu0 0
    %2978 = vmatmul.mubr.bf16.gmra.mrb[0].mxu0 %v2943
    %v2979 = vpop.f32.mrb[0].mxu0
    %v2980 = vadd.f32 0.0, %v2979
    %v2981 = vpop.f32.mrb[0].mxu0
    %v2982 = vpop.f32.mrb[0].mxu0
    %v2983 = vadd.f32 0.0, %v2982
    %v2984 = vpop.f32.mrb[0].mxu0
    %2985 = vdwg.mxu0
    %2986 = vrot.lane.b32.xlu0 %v2735, 112
    %v2987 = vpop.permute.xlu0 %2986
    %2988 = vrot.lane.b32.xlu0 %v2735, 80
    %v2989 = vpop.permute.xlu0 %2988
    %v2991 = vsel %vm2739, %v2987, 0
    %v2994 = vsel %vm2739, %v2989, 0
    %2996 = vmatprep.subr.bf16.mxu0 0
    %2997 = vmatpush1.bf16.xpose.msra.mxu0 %v2994
    %2998 = vmatprep.subr.bf16.mxu0 0
    %2999 = vmatpush1.bf16.xpose.msra.mxu0 0
    %3000 = vmatprep.subr.bf16.mxu0 0
    %3001 = vmatpush1.bf16.xpose.msra.mxu0 0
    %3002 = vmatprep.subr.bf16.mxu0 0
    %3003 = vmatpush1.bf16.xpose.msra.mxu0 0
    %3004 = vmatprep.subr.bf16.mxu0 0
    %3005 = vmatpush1.bf16.xpose.msra.mxu0 0
    %3006 = vmatprep.subr.bf16.mxu0 0
    %3007 = vmatpush1.bf16.xpose.msra.mxu0 0
    %3008 = vmatprep.subr.bf16.mxu0 0
    %3009 = vmatpush1.bf16.xpose.msra.mxu0 0
    %3010 = vmatprep.subr.bf16.mxu0 0
    %3011 = vmatpush1.bf16.xpose.msra.mxu0 0
    %3012 = vmatprep.subr.bf16.mxu0 0
    %3013 = vmatpush1.bf16.xpose.msra.mxu0 0
    %3014 = vmatprep.subr.bf16.mxu0 0
    %3015 = vmatpush1.bf16.xpose.msra.mxu0 0
    %3016 = vmatprep.subr.bf16.mxu0 0
    %3017 = vmatpush1.bf16.xpose.msra.mxu0 0
    %3018 = vmatprep.subr.bf16.mxu0 0
    %3019 = vmatpush1.bf16.xpose.msra.mxu0 0
    %3020 = vmatprep.subr.bf16.mxu0 0
    %3021 = vmatpush1.bf16.xpose.msra.mxu0 0
    %3022 = vmatprep.subr.bf16.mxu0 0
    %3023 = vmatpush1.bf16.xpose.msra.mxu0 0
    %3024 = vmatprep.subr.bf16.mxu0 0
    %3025 = vmatpush1.bf16.xpose.msra.mxu0 0
    %3026 = vmatprep.subr.bf16.mxu0 0
    %3027 = vmatpush1.bf16.xpose.msra.mxu0 0
    %3028 = vmatprep.mubr.bf16.mxu0 0
    %3029 = vmatmul.mubr.bf16.gmra.mrb[0].mxu0 %v2991
    %v3030 = vpop.f32.mrb[0].mxu0
    %v3031 = vadd.f32 0.0, %v3030
    %v3032 = vpop.f32.mrb[0].mxu0
    %v3033 = vpop.f32.mrb[0].mxu0
    %v3034 = vadd.f32 0.0, %v3033
    %v3035 = vpop.f32.mrb[0].mxu0
    %3036 = vdwg.mxu0
    %v3037 = vmul.f32 %v3031, 0.35355338
    %v3038 = vmul.f32 %v3034, 0.35355338
    %v3039 = vadd.f32 %v3037, %v92
    %v3040 = vadd.f32 %v3038, %v93
    %v3041 = vsel %vm434, %v3039, -inf
    %3042 = vmax.xlane.f32.xlu0 %v3041
    %v3043 = vpop.xlane.xlu0 %3042
    %v3044 = vsel %vm434, %v3040, -inf
    %3045 = vmax.xlane.f32.xlu0 %v3044
    %v3046 = vpop.xlane.xlu0 %3045
    %v3047 = vsub.f32 %v3039, %v3043
    %v3048 = vsub.f32 %v3040, %v3046
    %v3049 = vmul.f32 %v3047, 1.442695
    %v3050 = vpow.pop %v3049
    %v3051 = vmul.f32 %v3048, 1.442695
    %v3052 = vpow.pop %v3051
    %v3053 = vsel %vm434, %v3050, 0.0
    %3054 = vadd.xlane.f32.xlu0 %v3053
    %v3055 = vpop.xlane.xlu0 %3054
    %v3056 = vsel %vm434, %v3052, 0.0
    %3057 = vadd.xlane.f32.xlu0 %v3056
    %v3058 = vpop.xlane.xlu0 %3057
    %v3059 = vrcp.pop %v3055
    %v3060 = vmul.f32 %v3050, %v3059
    %v3061 = vrcp.pop %v3058
    %v3062 = vmul.f32 %v3052, %v3061
    %v3063 = vpack.c.bf16 %v3062, %v3060
    %3064 = vrot.lane.b32.xlu0 %v2735, 48
    %v3065 = vpop.permute.xlu0 %3064
    %v3068 = vsel %vm434, %v3063, 0
    %3070 = vmatprep.subr.bf16.mxu0 0
    %3071 = vmatpush1.bf16.msra.mxu0 %v3065
    %3072 = vmatprep.subr.bf16.mxu0 0
    %3073 = vmatpush1.bf16.msra.mxu0 0
    %3074 = vmatprep.subr.bf16.mxu0 0
    %3075 = vmatpush1.bf16.msra.mxu0 0
    %3076 = vmatprep.subr.bf16.mxu0 0
    %3077 = vmatpush1.bf16.msra.mxu0 0
    %3078 = vmatprep.subr.bf16.mxu0 0
    %3079 = vmatpush1.bf16.msra.mxu0 0
    %3080 = vmatprep.subr.bf16.mxu0 0
    %3081 = vmatpush1.bf16.msra.mxu0 0
    %3082 = vmatprep.subr.bf16.mxu0 0
    %3083 = vmatpush1.bf16.msra.mxu0 0
    %3084 = vmatprep.subr.bf16.mxu0 0
    %3085 = vmatpush1.bf16.msra.mxu0 0
    %3086 = vmatprep.subr.bf16.mxu0 0
    %3087 = vmatpush1.bf16.msra.mxu0 0
    %3088 = vmatprep.subr.bf16.mxu0 0
    %3089 = vmatpush1.bf16.msra.mxu0 0
    %3090 = vmatprep.subr.bf16.mxu0 0
    %3091 = vmatpush1.bf16.msra.mxu0 0
    %3092 = vmatprep.subr.bf16.mxu0 0
    %3093 = vmatpush1.bf16.msra.mxu0 0
    %3094 = vmatprep.subr.bf16.mxu0 0
    %3095 = vmatpush1.bf16.msra.mxu0 0
    %3096 = vmatprep.subr.bf16.mxu0 0
    %3097 = vmatpush1.bf16.msra.mxu0 0
    %3098 = vmatprep.subr.bf16.mxu0 0
    %3099 = vmatpush1.bf16.msra.mxu0 0
    %3100 = vmatprep.subr.bf16.mxu0 0
    %3101 = vmatpush1.bf16.msra.mxu0 0
    %3102 = vmatprep.mubr.bf16.mxu0 0
    %3103 = vmatmul.mubr.bf16.gmra.mrb[0].mxu0 %v3068
    %v3104 = vpop.f32.mrb[0].mxu0
    %v3105 = vadd.f32 0.0, %v3104
    %v3106 = vpop.f32.mrb[0].mxu0
    %v3107 = vpop.f32.mrb[0].mxu0
    %v3108 = vadd.f32 0.0, %v3107
    %v3109 = vpop.f32.mrb[0].mxu0
    %3110 = vdwg.mxu0
    %3111 = vrot.lane.b32.xlu0 %v2735, 104
    %v3112 = vpop.permute.xlu0 %3111
    %3113 = vrot.lane.b32.xlu0 %v2735, 72
    %v3114 = vpop.permute.xlu0 %3113
    %v3116 = vsel %vm2739, %v3112, 0
    %v3119 = vsel %vm2739, %v3114, 0
    %3121 = vmatprep.subr.bf16.mxu0 0
    %3122 = vmatpush1.bf16.xpose.msra.mxu0 %v3119
    %3123 = vmatprep.subr.bf16.mxu0 0
    %3124 = vmatpush1.bf16.xpose.msra.mxu0 0
    %3125 = vmatprep.subr.bf16.mxu0 0
    %3126 = vmatpush1.bf16.xpose.msra.mxu0 0
    %3127 = vmatprep.subr.bf16.mxu0 0
    %3128 = vmatpush1.bf16.xpose.msra.mxu0 0
    %3129 = vmatprep.subr.bf16.mxu0 0
    %3130 = vmatpush1.bf16.xpose.msra.mxu0 0
    %3131 = vmatprep.subr.bf16.mxu0 0
    %3132 = vmatpush1.bf16.xpose.msra.mxu0 0
    %3133 = vmatprep.subr.bf16.mxu0 0
    %3134 = vmatpush1.bf16.xpose.msra.mxu0 0
    %3135 = vmatprep.subr.bf16.mxu0 0
    %3136 = vmatpush1.bf16.xpose.msra.mxu0 0
    %3137 = vmatprep.subr.bf16.mxu0 0
    %3138 = vmatpush1.bf16.xpose.msra.mxu0 0
    %3139 = vmatprep.subr.bf16.mxu0 0
    %3140 = vmatpush1.bf16.xpose.msra.mxu0 0
    %3141 = vmatprep.subr.bf16.mxu0 0
    %3142 = vmatpush1.bf16.xpose.msra.mxu0 0
    %3143 = vmatprep.subr.bf16.mxu0 0
    %3144 = vmatpush1.bf16.xpose.msra.mxu0 0
    %3145 = vmatprep.subr.bf16.mxu0 0
    %3146 = vmatpush1.bf16.xpose.msra.mxu0 0
    %3147 = vmatprep.subr.bf16.mxu0 0
    %3148 = vmatpush1.bf16.xpose.msra.mxu0 0
    %3149 = vmatprep.subr.bf16.mxu0 0
    %3150 = vmatpush1.bf16.xpose.msra.mxu0 0
    %3151 = vmatprep.subr.bf16.mxu0 0
    %3152 = vmatpush1.bf16.xpose.msra.mxu0 0
    %3153 = vmatprep.mubr.bf16.mxu0 0
    %3154 = vmatmul.mubr.bf16.gmra.mrb[0].mxu0 %v3116
    %v3155 = vpop.f32.mrb[0].mxu0
    %v3156 = vadd.f32 0.0, %v3155
    %v3157 = vpop.f32.mrb[0].mxu0
    %v3158 = vpop.f32.mrb[0].mxu0
    %v3159 = vadd.f32 0.0, %v3158
    %v3160 = vpop.f32.mrb[0].mxu0
    %3161 = vdwg.mxu0
    %v3162 = vmul.f32 %v3156, 0.35355338
    %v3163 = vmul.f32 %v3159, 0.35355338
    %v3164 = vadd.f32 %v3162, %v92
    %v3165 = vadd.f32 %v3163, %v93
    %v3166 = vsel %vm434, %v3164, -inf
    %3167 = vmax.xlane.f32.xlu0 %v3166
    %v3168 = vpop.xlane.xlu0 %3167
    %v3169 = vsel %vm434, %v3165, -inf
    %3170 = vmax.xlane.f32.xlu0 %v3169
    %v3171 = vpop.xlane.xlu0 %3170
    %v3172 = vsub.f32 %v3164, %v3168
    %v3173 = vsub.f32 %v3165, %v3171
    %v3174 = vmul.f32 %v3172, 1.442695
    %v3175 = vpow.pop %v3174
    %v3176 = vmul.f32 %v3173, 1.442695
    %v3177 = vpow.pop %v3176
    %v3178 = vsel %vm434, %v3175, 0.0
    %3179 = vadd.xlane.f32.xlu0 %v3178
    %v3180 = vpop.xlane.xlu0 %3179
    %v3181 = vsel %vm434, %v3177, 0.0
    %3182 = vadd.xlane.f32.xlu0 %v3181
    %v3183 = vpop.xlane.xlu0 %3182
    %v3184 = vrcp.pop %v3180
    %v3185 = vmul.f32 %v3175, %v3184
    %v3186 = vrcp.pop %v3183
    %v3187 = vmul.f32 %v3177, %v3186
    %v3188 = vpack.c.bf16 %v3187, %v3185
    %3189 = vrot.lane.b32.xlu0 %v2735, 40
    %v3190 = vpop.permute.xlu0 %3189
    %v3193 = vsel %vm434, %v3188, 0
    %3195 = vmatprep.subr.bf16.mxu0 0
    %3196 = vmatpush1.bf16.msra.mxu0 %v3190
    %3197 = vmatprep.subr.bf16.mxu0 0
    %3198 = vmatpush1.bf16.msra.mxu0 0
    %3199 = vmatprep.subr.bf16.mxu0 0
    %3200 = vmatpush1.bf16.msra.mxu0 0
    %3201 = vmatprep.subr.bf16.mxu0 0
    %3202 = vmatpush1.bf16.msra.mxu0 0
    %3203 = vmatprep.subr.bf16.mxu0 0
    %3204 = vmatpush1.bf16.msra.mxu0 0
    %3205 = vmatprep.subr.bf16.mxu0 0
    %3206 = vmatpush1.bf16.msra.mxu0 0
    %3207 = vmatprep.subr.bf16.mxu0 0
    %3208 = vmatpush1.bf16.msra.mxu0 0
    %3209 = vmatprep.subr.bf16.mxu0 0
    %3210 = vmatpush1.bf16.msra.mxu0 0
    %3211 = vmatprep.subr.bf16.mxu0 0
    %3212 = vmatpush1.bf16.msra.mxu0 0
    %3213 = vmatprep.subr.bf16.mxu0 0
    %3214 = vmatpush1.bf16.msra.mxu0 0
    %3215 = vmatprep.subr.bf16.mxu0 0
    %3216 = vmatpush1.bf16.msra.mxu0 0
    %3217 = vmatprep.subr.bf16.mxu0 0
    %3218 = vmatpush1.bf16.msra.mxu0 0
    %3219 = vmatprep.subr.bf16.mxu0 0
    %3220 = vmatpush1.bf16.msra.mxu0 0
    %3221 = vmatprep.subr.bf16.mxu0 0
    %3222 = vmatpush1.bf16.msra.mxu0 0
    %3223 = vmatprep.subr.bf16.mxu0 0
    %3224 = vmatpush1.bf16.msra.mxu0 0
    %3225 = vmatprep.subr.bf16.mxu0 0
    %3226 = vmatpush1.bf16.msra.mxu0 0
    %3227 = vmatprep.mubr.bf16.mxu0 0
    %3228 = vmatmul.mubr.bf16.gmra.mrb[0].mxu0 %v3193
    %v3229 = vpop.f32.mrb[0].mxu0
    %v3230 = vadd.f32 0.0, %v3229
    %v3231 = vpop.f32.mrb[0].mxu0
    %v3232 = vpop.f32.mrb[0].mxu0
    %v3233 = vadd.f32 0.0, %v3232
    %v3234 = vpop.f32.mrb[0].mxu0
    %3235 = vdwg.mxu0
    %3238 = vrot.lane.b32.xlu0 %v2980, 8
    %v3239 = vpop.permute.xlu0 %3238
    %3240 = vrot.lane.b32.xlu0 %v2983, 8
    %v3241 = vpop.permute.xlu0 %3240
    %3246 = vrot.lane.b32.xlu0 %v3105, 16
    %v3247 = vpop.permute.xlu0 %3246
    %3248 = vrot.lane.b32.xlu0 %v3108, 16
    %v3249 = vpop.permute.xlu0 %3248
    %3254 = vrot.lane.b32.xlu0 %v3230, 24
    %v3255 = vpop.permute.xlu0 %3254
    %3256 = vrot.lane.b32.xlu0 %v3233, 24
    %v3257 = vpop.permute.xlu0 %3256
    %v3260 = vsel %vm2739, %v2855, %v3239
    %v3261 = vsel %vm2739, %v2858, %v3241
    %v3262 = vsel %vm434, %v3260, %v3247
    %v3263 = vsel %vm434, %v3261, %v3249
    %vm3264 = vcmask 195584
    %v3265 = vsel %vm3264, %v3262, %v3255
    %v3266 = vsel %vm3264, %v3263, %v3257
    %v3267 = vld [vmem:[%s3 + $0x410] sm:$0xf]
    %v3268 = vld [vmem:[%s3 + $0x418] sm:$0xf]
    %v3269 = vld [vmem:[%s3 + $0x420] sm:$0xf]
    %v3270 = vld [vmem:[%s3 + $0x428] sm:$0xf]
    %v3271 = vpack.c.bf16 %v3266, %v3265
    %v3272 = vld [vmem:[%s4 + $0x150] ss:$0 sm:$0xff]
    %v3277 = vunpack.c.l.b16 %v3267
    %v3278 = vunpack.c.l.b16 %v3268
    %v3279 = vunpack.c.l.b16 %v3269
    %v3280 = vunpack.c.l.b16 %v3270
    %v3281 = vpack.c.b16 %v3278, %v3277
    %v3282 = vpack.c.b16 %v3280, %v3279
    %v3286 = vsel %vm968, %v3271, 0
    %3288 = vmatprep.subr.bf16.mxu0 0
    %3289 = vmatpush1.bf16.msra.mxu0 %v3281
    %3290 = vmatprep.subr.bf16.mxu0 0
    %3291 = vmatpush1.bf16.msra.mxu0 %v3282
    %3292 = vmatprep.subr.bf16.mxu0 0
    %3293 = vmatpush1.bf16.msra.mxu0 0
    %3294 = vmatprep.subr.bf16.mxu0 0
    %3295 = vmatpush1.bf16.msra.mxu0 0
    %3296 = vmatprep.subr.bf16.mxu0 0
    %3297 = vmatpush1.bf16.msra.mxu0 0
    %3298 = vmatprep.subr.bf16.mxu0 0
    %3299 = vmatpush1.bf16.msra.mxu0 0
    %3300 = vmatprep.subr.bf16.mxu0 0
    %3301 = vmatpush1.bf16.msra.mxu0 0
    %3302 = vmatprep.subr.bf16.mxu0 0
    %3303 = vmatpush1.bf16.msra.mxu0 0
    %3304 = vmatprep.subr.bf16.mxu0 0
    %3305 = vmatpush1.bf16.msra.mxu0 0
    %3306 = vmatprep.subr.bf16.mxu0 0
    %3307 = vmatpush1.bf16.msra.mxu0 0
    %3308 = vmatprep.subr.bf16.mxu0 0
    %3309 = vmatpush1.bf16.msra.mxu0 0
    %3310 = vmatprep.subr.bf16.mxu0 0
    %3311 = vmatpush1.bf16.msra.mxu0 0
    %3312 = vmatprep.subr.bf16.mxu0 0
    %3313 = vmatpush1.bf16.msra.mxu0 0
    %3314 = vmatprep.subr.bf16.mxu0 0
    %3315 = vmatpush1.bf16.msra.mxu0 0
    %3316 = vmatprep.subr.bf16.mxu0 0
    %3317 = vmatpush1.bf16.msra.mxu0 0
    %3318 = vmatprep.subr.bf16.mxu0 0
    %3319 = vmatpush1.bf16.msra.mxu0 0
    %3320 = vmatprep.mubr.bf16.mxu0 0
    %3321 = vmatmul.mubr.bf16.gmra.mrb[0].mxu0 %v3286
    %v3322 = vpop.f32.mrb[0].mxu0
    %v3323 = vadd.f32 %v3272, %v3322
    %v3324 = vpop.f32.mrb[0].mxu0
    %v3325 = vpop.f32.mrb[0].mxu0
    %v3326 = vadd.f32 %v3272, %v3325
    %v3327 = vpop.f32.mrb[0].mxu0
    %3328 = vdwg.mxu0
    %v3329 = vadd.f32 %v2671, %v3323
    %v3330 = vadd.f32 %v2672, %v3326
    %v3331 = vld [vmem:[%s4 + $0x160] sm:$0x3]
    %v3332 = vsel %vm968, %v3329, 0.0
    %3333 = vadd.xlane.f32.xlu0 %v3332
    %v3334 = vpop.xlane.xlu0 %3333
    %v3335 = vsel %vm968, %v3330, 0.0
    %3336 = vadd.xlane.f32.xlu0 %v3335
    %v3337 = vpop.xlane.xlu0 %3336
    %v3338 = vmul.f32 %v3334, %v2508
    %v3339 = vmul.f32 %v3337, %v2508
    %v3340 = vsub.f32 %v3329, %v3338
    %v3341 = vsub.f32 %v3330, %v3339
    %v3342 = vmul.f32 %v3340, %v3340
    %v3343 = vmul.f32 %v3341, %v3341
    %v3344 = vsel %vm968, %v3342, 0.0
    %3345 = vadd.xlane.f32.xlu0 %v3344
    %v3346 = vpop.xlane.xlu0 %3345
    %v3347 = vsel %vm968, %v3343, 0.0
    %3348 = vadd.xlane.f32.xlu0 %v3347
    %v3349 = vpop.xlane.xlu0 %3348
    %v3350 = vmul.f32 %v3346, %v2508
    %v3351 = vmul.f32 %v3349, %v2508
    %v3352 = vadd.f32 %v3350, 1e-12
    %v3353 = vadd.f32 %v3351, 1e-12
    %v3354 = vrsqrt.pop %v3352
    %v3355 = vrsqrt.pop %v3353
    %v3356 = vmul.f32 %v3340, %v3354
    %v3357 = vmul.f32 %v3341, %v3355
    %v3358 = vlaneseq
    %v3359 = vshrl.u32 %v3358, 7
    %v3360 = vsub.s32 0, %v3359
    %v3361 = vrot.slane %v3331, %v3360
    %v3362 = vmul.f32 %v3356, %v3361
    %v3363 = vmul.f32 %v3357, %v3361
    %v3364 = vlaneseq
    %v3365 = vshrl.u32 %v3364, 7
    %v3366 = vsub.s32 1, %v3365
    %v3367 = vrot.slane %v3331, %v3366
    %v3368 = vadd.f32 %v3362, %v3367
    %v3369 = vadd.f32 %v3363, %v3367
    %v3370 = vld [vmem:[%s3 + $0x430] sm:$0xf]
    %v3371 = vld [vmem:[%s3 + $0x438] sm:$0xf]
    %v3372 = vld [vmem:[%s3 + $0x440] sm:$0xf]
    %v3373 = vld [vmem:[%s3 + $0x448] sm:$0xf]
    %v3374 = vpack.c.bf16 %v3369, %v3368
    %v3375 = vld [vmem:[%s4 + $0x170] ss:$0 sm:$0xff]
    %v3380 = vunpack.c.l.b16 %v3370
    %v3381 = vunpack.c.l.b16 %v3371
    %v3382 = vunpack.c.l.b16 %v3372
    %v3383 = vunpack.c.l.b16 %v3373
    %v3384 = vpack.c.b16 %v3381, %v3380
    %v3385 = vpack.c.b16 %v3383, %v3382
    %v3389 = vsel %vm968, %v3374, 0
    %3391 = vmatprep.subr.bf16.mxu0 0
    %3392 = vmatpush1.bf16.msra.mxu0 %v3384
    %3393 = vmatprep.subr.bf16.mxu0 0
    %3394 = vmatpush1.bf16.msra.mxu0 %v3385
    %3395 = vmatprep.subr.bf16.mxu0 0
    %3396 = vmatpush1.bf16.msra.mxu0 0
    %3397 = vmatprep.subr.bf16.mxu0 0
    %3398 = vmatpush1.bf16.msra.mxu0 0
    %3399 = vmatprep.subr.bf16.mxu0 0
    %3400 = vmatpush1.bf16.msra.mxu0 0
    %3401 = vmatprep.subr.bf16.mxu0 0
    %3402 = vmatpush1.bf16.msra.mxu0 0
    %3403 = vmatprep.subr.bf16.mxu0 0
    %3404 = vmatpush1.bf16.msra.mxu0 0
    %3405 = vmatprep.subr.bf16.mxu0 0
    %3406 = vmatpush1.bf16.msra.mxu0 0
    %3407 = vmatprep.subr.bf16.mxu0 0
    %3408 = vmatpush1.bf16.msra.mxu0 0
    %3409 = vmatprep.subr.bf16.mxu0 0
    %3410 = vmatpush1.bf16.msra.mxu0 0
    %3411 = vmatprep.subr.bf16.mxu0 0
    %3412 = vmatpush1.bf16.msra.mxu0 0
    %3413 = vmatprep.subr.bf16.mxu0 0
    %3414 = vmatpush1.bf16.msra.mxu0 0
    %3415 = vmatprep.subr.bf16.mxu0 0
    %3416 = vmatpush1.bf16.msra.mxu0 0
    %3417 = vmatprep.subr.bf16.mxu0 0
    %3418 = vmatpush1.bf16.msra.mxu0 0
    %3419 = vmatprep.subr.bf16.mxu0 0
    %3420 = vmatpush1.bf16.msra.mxu0 0
    %3421 = vmatprep.subr.bf16.mxu0 0
    %3422 = vmatpush1.bf16.msra.mxu0 0
    %3423 = vmatprep.mubr.bf16.mxu0 0
    %3424 = vmatmul.mubr.bf16.gmra.mrb[0].mxu0 %v3389
    %v3425 = vpop.f32.mrb[0].mxu0
    %v3426 = vadd.f32 %v3375, %v3425
    %v3427 = vpop.f32.mrb[0].mxu0
    %v3428 = vpop.f32.mrb[0].mxu0
    %v3429 = vadd.f32 %v3375, %v3428
    %v3430 = vpop.f32.mrb[0].mxu0
    %3431 = vdwg.mxu0
    %v3432 = vld [vmem:[%s3 + $0x450] sm:$0xf]
    %v3433 = vld [vmem:[%s3 + $0x458] sm:$0xf]
    %v3434 = vld [vmem:[%s3 + $0x460] sm:$0xf]
    %v3435 = vld [vmem:[%s3 + $0x468] sm:$0xf]
    %v3436 = vpack.c.bf16 %v2540, %v2539
    %v3437 = vld [vmem:[%s4 + $0x180] ss:$0 sm:$0xff]
    %v3442 = vunpack.c.l.b16 %v3432
    %v3443 = vunpack.c.l.b16 %v3433
    %v3444 = vunpack.c.l.b16 %v3434
    %v3445 = vunpack.c.l.b16 %v3435
    %v3446 = vpack.c.b16 %v3443, %v3442
    %v3447 = vpack.c.b16 %v3445, %v3444
    %v3451 = vsel %vm968, %v3436, 0
    %3453 = vmatprep.subr.bf16.mxu0 0
    %3454 = vmatpush1.bf16.msra.mxu0 %v3446
    %3455 = vmatprep.subr.bf16.mxu0 0
    %3456 = vmatpush1.bf16.msra.mxu0 %v3447
    %3457 = vmatprep.subr.bf16.mxu0 0
    %3458 = vmatpush1.bf16.msra.mxu0 0
    %3459 = vmatprep.subr.bf16.mxu0 0
    %3460 = vmatpush1.bf16.msra.mxu0 0
    %3461 = vmatprep.subr.bf16.mxu0 0
    %3462 = vmatpush1.bf16.msra.mxu0 0
    %3463 = vmatprep.subr.bf16.mxu0 0
    %3464 = vmatpush1.bf16.msra.mxu0 0
    %3465 = vmatprep.subr.bf16.mxu0 0
    %3466 = vmatpush1.bf16.msra.mxu0 0
    %3467 = vmatprep.subr.bf16.mxu0 0
    %3468 = vmatpush1.bf16.msra.mxu0 0
    %3469 = vmatprep.subr.bf16.mxu0 0
    %3470 = vmatpush1.bf16.msra.mxu0 0
    %3471 = vmatprep.subr.bf16.mxu0 0
    %3472 = vmatpush1.bf16.msra.mxu0 0
    %3473 = vmatprep.subr.bf16.mxu0 0
    %3474 = vmatpush1.bf16.msra.mxu0 0
    %3475 = vmatprep.subr.bf16.mxu0 0
    %3476 = vmatpush1.bf16.msra.mxu0 0
    %3477 = vmatprep.subr.bf16.mxu0 0
    %3478 = vmatpush1.bf16.msra.mxu0 0
    %3479 = vmatprep.subr.bf16.mxu0 0
    %3480 = vmatpush1.bf16.msra.mxu0 0
    %3481 = vmatprep.subr.bf16.mxu0 0
    %3482 = vmatpush1.bf16.msra.mxu0 0
    %3483 = vmatprep.subr.bf16.mxu0 0
    %3484 = vmatpush1.bf16.msra.mxu0 0
    %3485 = vmatprep.mubr.bf16.mxu0 0
    %3486 = vmatmul.mubr.bf16.gmra.mrb[0].mxu0 %v3451
    %v3487 = vpop.f32.mrb[0].mxu0
    %v3488 = vadd.f32 %v3437, %v3487
    %v3489 = vpop.f32.mrb[0].mxu0
    %v3490 = vpop.f32.mrb[0].mxu0
    %v3491 = vadd.f32 %v3437, %v3490
    %v3492 = vpop.f32.mrb[0].mxu0
    %3493 = vdwg.mxu0
    %v3494 = vpack.c.bf16 %v3429, %v3426
    %v3495 = vpack.c.bf16 %v3491, %v3488
    %v3497 = vsel %vm2739, %v3494, 0
    %v3500 = vsel %vm2739, %v3495, 0
    %3502 = vmatprep.subr.bf16.mxu0 0
    %3503 = vmatpush1.bf16.xpose.msra.mxu0 %v3500
    %3504 = vmatprep.subr.bf16.mxu0 0
    %3505 = vmatpush1.bf16.xpose.msra.mxu0 0
    %3506 = vmatprep.subr.bf16.mxu0 0
    %3507 = vmatpush1.bf16.xpose.msra.mxu0 0
    %3508 = vmatprep.subr.bf16.mxu0 0
    %3509 = vmatpush1.bf16.xpose.msra.mxu0 0
    %3510 = vmatprep.subr.bf16.mxu0 0
    %3511 = vmatpush1.bf16.xpose.msra.mxu0 0
    %3512 = vmatprep.subr.bf16.mxu0 0
    %3513 = vmatpush1.bf16.xpose.msra.mxu0 0
    %3514 = vmatprep.subr.bf16.mxu0 0
    %3515 = vmatpush1.bf16.xpose.msra.mxu0 0
    %3516 = vmatprep.subr.bf16.mxu0 0
    %3517 = vmatpush1.bf16.xpose.msra.mxu0 0
    %3518 = vmatprep.subr.bf16.mxu0 0
    %3519 = vmatpush1.bf16.xpose.msra.mxu0 0
    %3520 = vmatprep.subr.bf16.mxu0 0
    %3521 = vmatpush1.bf16.xpose.msra.mxu0 0
    %3522 = vmatprep.subr.bf16.mxu0 0
    %3523 = vmatpush1.bf16.xpose.msra.mxu0 0
    %3524 = vmatprep.subr.bf16.mxu0 0
    %3525 = vmatpush1.bf16.xpose.msra.mxu0 0
    %3526 = vmatprep.subr.bf16.mxu0 0
    %3527 = vmatpush1.bf16.xpose.msra.mxu0 0
    %3528 = vmatprep.subr.bf16.mxu0 0
    %3529 = vmatpush1.bf16.xpose.msra.mxu0 0
    %3530 = vmatprep.subr.bf16.mxu0 0
    %3531 = vmatpush1.bf16.xpose.msra.mxu0 0
    %3532 = vmatprep.subr.bf16.mxu0 0
    %3533 = vmatpush1.bf16.xpose.msra.mxu0 0
    %3534 = vmatprep.mubr.bf16.mxu0 0
    %3535 = vmatmul.mubr.bf16.gmra.mrb[0].mxu0 %v3497
    %v3536 = vpop.f32.mrb[0].mxu0
    %v3537 = vadd.f32 0.0, %v3536
    %v3538 = vpop.f32.mrb[0].mxu0
    %v3539 = vpop.f32.mrb[0].mxu0
    %v3540 = vadd.f32 0.0, %v3539
    %v3541 = vpop.f32.mrb[0].mxu0
    %3542 = vdwg.mxu0
    %v3543 = vmul.f32 %v3537, 0.35355338
    %v3544 = vmul.f32 %v3540, 0.35355338
    %v3545 = vadd.f32 %v3543, %v102
    %v3546 = vadd.f32 %v3544, %v103
    %v3547 = vsel %vm486, %v3545, -inf
    %3548 = vmax.xlane.f32.xlu0 %v3547
    %v3549 = vpop.xlane.xlu0 %3548
    %v3550 = vsel %vm486, %v3546, -inf
    %3551 = vmax.xlane.f32.xlu0 %v3550
    %v3552 = vpop.xlane.xlu0 %3551
    %v3553 = vsub.f32 %v3545, %v3549
    %v3554 = vsub.f32 %v3546, %v3552
    %v3555 = vmul.f32 %v3553, 1.442695
    %v3556 = vpow.pop %v3555
    %v3557 = vmul.f32 %v3554, 1.442695
    %v3558 = vpow.pop %v3557
    %v3559 = vsel %vm486, %v3556, 0.0
    %3560 = vadd.xlane.f32.xlu0 %v3559
    %v3561 = vpop.xlane.xlu0 %3560
    %v3562 = vsel %vm486, %v3558, 0.0
    %3563 = vadd.xlane.f32.xlu0 %v3562
    %v3564 = vpop.xlane.xlu0 %3563
    %v3565 = vrcp.pop %v3561
    %v3566 = vmul.f32 %v3556, %v3565
    %v3567 = vrcp.pop %v3564
    %v3568 = vmul.f32 %v3558, %v3567
    %v3569 = vpack.c.bf16 %v3568, %v3566
    %3571 = vrot.lane.b32.xlu0 %v3495, 96
    %v3572 = vpop.permute.xlu0 %3571
    %v3574 = vsel %vm486, %v3569, 0
    %v3577 = vsel %vm515, %v3572, 0
    %3579 = vmatprep.subr.bf16.mxu0 0
    %3580 = vmatpush1.bf16.msra.mxu0 %v3577
    %3581 = vmatprep.subr.bf16.mxu0 0
    %3582 = vmatpush1.bf16.msra.mxu0 0
    %3583 = vmatprep.subr.bf16.mxu0 0
    %3584 = vmatpush1.bf16.msra.mxu0 0
    %3585 = vmatprep.subr.bf16.mxu0 0
    %3586 = vmatpush1.bf16.msra.mxu0 0
    %3587 = vmatprep.subr.bf16.mxu0 0
    %3588 = vmatpush1.bf16.msra.mxu0 0
    %3589 = vmatprep.subr.bf16.mxu0 0
    %3590 = vmatpush1.bf16.msra.mxu0 0
    %3591 = vmatprep.subr.bf16.mxu0 0
    %3592 = vmatpush1.bf16.msra.mxu0 0
    %3593 = vmatprep.subr.bf16.mxu0 0
    %3594 = vmatpush1.bf16.msra.mxu0 0
    %3595 = vmatprep.subr.bf16.mxu0 0
    %3596 = vmatpush1.bf16.msra.mxu0 0
    %3597 = vmatprep.subr.bf16.mxu0 0
    %3598 = vmatpush1.bf16.msra.mxu0 0
    %3599 = vmatprep.subr.bf16.mxu0 0
    %3600 = vmatpush1.bf16.msra.mxu0 0
    %3601 = vmatprep.subr.bf16.mxu0 0
    %3602 = vmatpush1.bf16.msra.mxu0 0
    %3603 = vmatprep.subr.bf16.mxu0 0
    %3604 = vmatpush1.bf16.msra.mxu0 0
    %3605 = vmatprep.subr.bf16.mxu0 0
    %3606 = vmatpush1.bf16.msra.mxu0 0
    %3607 = vmatprep.subr.bf16.mxu0 0
    %3608 = vmatpush1.bf16.msra.mxu0 0
    %3609 = vmatprep.subr.bf16.mxu0 0
    %3610 = vmatpush1.bf16.msra.mxu0 0
    %3611 = vmatprep.mubr.bf16.mxu0 0
    %3612 = vmatmul.mubr.bf16.gmra.mrb[0].mxu0 %v3574
    %v3613 = vpop.f32.mrb[0].mxu0
    %v3614 = vadd.f32 0.0, %v3613
    %v3615 = vpop.f32.mrb[0].mxu0
    %v3616 = vpop.f32.mrb[0].mxu0
    %v3617 = vadd.f32 0.0, %v3616
    %v3618 = vpop.f32.mrb[0].mxu0
    %3619 = vdwg.mxu0
    %3621 = vrot.lane.b32.xlu0 %v3494, 120
    %v3622 = vpop.permute.xlu0 %3621
    %3623 = vrot.lane.b32.xlu0 %v3495, 120
    %v3624 = vpop.permute.xlu0 %3623
    %v3626 = vsel %vm2739, %v3622, 0
    %v3629 = vsel %vm2739, %v3624, 0
    %3631 = vmatprep.subr.bf16.mxu0 0
    %3632 = vmatpush1.bf16.xpose.msra.mxu0 %v3629
    %3633 = vmatprep.subr.bf16.mxu0 0
    %3634 = vmatpush1.bf16.xpose.msra.mxu0 0
    %3635 = vmatprep.subr.bf16.mxu0 0
    %3636 = vmatpush1.bf16.xpose.msra.mxu0 0
    %3637 = vmatprep.subr.bf16.mxu0 0
    %3638 = vmatpush1.bf16.xpose.msra.mxu0 0
    %3639 = vmatprep.subr.bf16.mxu0 0
    %3640 = vmatpush1.bf16.xpose.msra.mxu0 0
    %3641 = vmatprep.subr.bf16.mxu0 0
    %3642 = vmatpush1.bf16.xpose.msra.mxu0 0
    %3643 = vmatprep.subr.bf16.mxu0 0
    %3644 = vmatpush1.bf16.xpose.msra.mxu0 0
    %3645 = vmatprep.subr.bf16.mxu0 0
    %3646 = vmatpush1.bf16.xpose.msra.mxu0 0
    %3647 = vmatprep.subr.bf16.mxu0 0
    %3648 = vmatpush1.bf16.xpose.msra.mxu0 0
    %3649 = vmatprep.subr.bf16.mxu0 0
    %3650 = vmatpush1.bf16.xpose.msra.mxu0 0
    %3651 = vmatprep.subr.bf16.mxu0 0
    %3652 = vmatpush1.bf16.xpose.msra.mxu0 0
    %3653 = vmatprep.subr.bf16.mxu0 0
    %3654 = vmatpush1.bf16.xpose.msra.mxu0 0
    %3655 = vmatprep.subr.bf16.mxu0 0
    %3656 = vmatpush1.bf16.xpose.msra.mxu0 0
    %3657 = vmatprep.subr.bf16.mxu0 0
    %3658 = vmatpush1.bf16.xpose.msra.mxu0 0
    %3659 = vmatprep.subr.bf16.mxu0 0
    %3660 = vmatpush1.bf16.xpose.msra.mxu0 0
    %3661 = vmatprep.subr.bf16.mxu0 0
    %3662 = vmatpush1.bf16.xpose.msra.mxu0 0
    %3663 = vmatprep.mubr.bf16.mxu0 0
    %3664 = vmatmul.mubr.bf16.gmra.mrb[0].mxu0 %v3626
    %v3665 = vpop.f32.mrb[0].mxu0
    %v3666 = vadd.f32 0.0, %v3665
    %v3667 = vpop.f32.mrb[0].mxu0
    %v3668 = vpop.f32.mrb[0].mxu0
    %v3669 = vadd.f32 0.0, %v3668
    %v3670 = vpop.f32.mrb[0].mxu0
    %3671 = vdwg.mxu0
    %v3672 = vmul.f32 %v3666, 0.35355338
    %v3673 = vmul.f32 %v3669, 0.35355338
    %v3674 = vadd.f32 %v3672, %v102
    %v3675 = vadd.f32 %v3673, %v103
    %v3676 = vsel %vm486, %v3674, -inf
    %3677 = vmax.xlane.f32.xlu0 %v3676
    %v3678 = vpop.xlane.xlu0 %3677
    %v3679 = vsel %vm486, %v3675, -inf
    %3680 = vmax.xlane.f32.xlu0 %v3679
    %v3681 = vpop.xlane.xlu0 %3680
    %v3682 = vsub.f32 %v3674, %v3678
    %v3683 = vsub.f32 %v3675, %v3681
    %v3684 = vmul.f32 %v3682, 1.442695
    %v3685 = vpow.pop %v3684
    %v3686 = vmul.f32 %v3683, 1.442695
    %v3687 = vpow.pop %v3686
    %v3688 = vsel %vm486, %v3685, 0.0
    %3689 = vadd.xlane.f32.xlu0 %v3688
    %v3690 = vpop.xlane.xlu0 %3689
    %v3691 = vsel %vm486, %v3687, 0.0
    %3692 = vadd.xlane.f32.xlu0 %v3691
    %v3693 = vpop.xlane.xlu0 %3692
    %v3694 = vrcp.pop %v3690
    %v3695 = vmul.f32 %v3685, %v3694
    %v3696 = vrcp.pop %v3693
    %v3697 = vmul.f32 %v3687, %v3696
    %v3698 = vpack.c.bf16 %v3697, %v3695
    %3699 = vrot.lane.b32.xlu0 %v3495, 88
    %v3700 = vpop.permute.xlu0 %3699
    %v3702 = vsel %vm486, %v3698, 0
    %v3705 = vsel %vm515, %v3700, 0
    %3707 = vmatprep.subr.bf16.mxu0 0
    %3708 = vmatpush1.bf16.msra.mxu0 %v3705
    %3709 = vmatprep.subr.bf16.mxu0 0
    %3710 = vmatpush1.bf16.msra.mxu0 0
    %3711 = vmatprep.subr.bf16.mxu0 0
    %3712 = vmatpush1.bf16.msra.mxu0 0
    %3713 = vmatprep.subr.bf16.mxu0 0
    %3714 = vmatpush1.bf16.msra.mxu0 0
    %3715 = vmatprep.subr.bf16.mxu0 0
    %3716 = vmatpush1.bf16.msra.mxu0 0
    %3717 = vmatprep.subr.bf16.mxu0 0
    %3718 = vmatpush1.bf16.msra.mxu0 0
    %3719 = vmatprep.subr.bf16.mxu0 0
    %3720 = vmatpush1.bf16.msra.mxu0 0
    %3721 = vmatprep.subr.bf16.mxu0 0
    %3722 = vmatpush1.bf16.msra.mxu0 0
    %3723 = vmatprep.subr.bf16.mxu0 0
    %3724 = vmatpush1.bf16.msra.mxu0 0
    %3725 = vmatprep.subr.bf16.mxu0 0
    %3726 = vmatpush1.bf16.msra.mxu0 0
    %3727 = vmatprep.subr.bf16.mxu0 0
    %3728 = vmatpush1.bf16.msra.mxu0 0
    %3729 = vmatprep.subr.bf16.mxu0 0
    %3730 = vmatpush1.bf16.msra.mxu0 0
    %3731 = vmatprep.subr.bf16.mxu0 0
    %3732 = vmatpush1.bf16.msra.mxu0 0
    %3733 = vmatprep.subr.bf16.mxu0 0
    %3734 = vmatpush1.bf16.msra.mxu0 0
    %3735 = vmatprep.subr.bf16.mxu0 0
    %3736 = vmatpush1.bf16.msra.mxu0 0
    %3737 = vmatprep.subr.bf16.mxu0 0
    %3738 = vmatpush1.bf16.msra.mxu0 0
    %3739 = vmatprep.mubr.bf16.mxu0 0
    %3740 = vmatmul.mubr.bf16.gmra.mrb[0].mxu0 %v3702
    %v3741 = vpop.f32.mrb[0].mxu0
    %v3742 = vadd.f32 0.0, %v3741
    %v3743 = vpop.f32.mrb[0].mxu0
    %v3744 = vpop.f32.mrb[0].mxu0
    %v3745 = vadd.f32 0.0, %v3744
    %v3746 = vpop.f32.mrb[0].mxu0
    %3747 = vdwg.mxu0
    %3748 = vrot.lane.b32.xlu0 %v3494, 112
    %v3749 = vpop.permute.xlu0 %3748
    %3750 = vrot.lane.b32.xlu0 %v3495, 112
    %v3751 = vpop.permute.xlu0 %3750
    %v3753 = vsel %vm2739, %v3749, 0
    %v3756 = vsel %vm2739, %v3751, 0
    %3758 = vmatprep.subr.bf16.mxu0 0
    %3759 = vmatpush1.bf16.xpose.msra.mxu0 %v3756
    %3760 = vmatprep.subr.bf16.mxu0 0
    %3761 = vmatpush1.bf16.xpose.msra.mxu0 0
    %3762 = vmatprep.subr.bf16.mxu0 0
    %3763 = vmatpush1.bf16.xpose.msra.mxu0 0
    %3764 = vmatprep.subr.bf16.mxu0 0
    %3765 = vmatpush1.bf16.xpose.msra.mxu0 0
    %3766 = vmatprep.subr.bf16.mxu0 0
    %3767 = vmatpush1.bf16.xpose.msra.mxu0 0
    %3768 = vmatprep.subr.bf16.mxu0 0
    %3769 = vmatpush1.bf16.xpose.msra.mxu0 0
    %3770 = vmatprep.subr.bf16.mxu0 0
    %3771 = vmatpush1.bf16.xpose.msra.mxu0 0
    %3772 = vmatprep.subr.bf16.mxu0 0
    %3773 = vmatpush1.bf16.xpose.msra.mxu0 0
    %3774 = vmatprep.subr.bf16.mxu0 0
    %3775 = vmatpush1.bf16.xpose.msra.mxu0 0
    %3776 = vmatprep.subr.bf16.mxu0 0
    %3777 = vmatpush1.bf16.xpose.msra.mxu0 0
    %3778 = vmatprep.subr.bf16.mxu0 0
    %3779 = vmatpush1.bf16.xpose.msra.mxu0 0
    %3780 = vmatprep.subr.bf16.mxu0 0
    %3781 = vmatpush1.bf16.xpose.msra.mxu0 0
    %3782 = vmatprep.subr.bf16.mxu0 0
    %3783 = vmatpush1.bf16.xpose.msra.mxu0 0
    %3784 = vmatprep.subr.bf16.mxu0 0
    %3785 = vmatpush1.bf16.xpose.msra.mxu0 0
    %3786 = vmatprep.subr.bf16.mxu0 0
    %3787 = vmatpush1.bf16.xpose.msra.mxu0 0
    %3788 = vmatprep.subr.bf16.mxu0 0
    %3789 = vmatpush1.bf16.xpose.msra.mxu0 0
    %3790 = vmatprep.mubr.bf16.mxu0 0
    %3791 = vmatmul.mubr.bf16.gmra.mrb[0].mxu0 %v3753
    %v3792 = vpop.f32.mrb[0].mxu0
    %v3793 = vadd.f32 0.0, %v3792
    %v3794 = vpop.f32.mrb[0].mxu0
    %v3795 = vpop.f32.mrb[0].mxu0
    %v3796 = vadd.f32 0.0, %v3795
    %v3797 = vpop.f32.mrb[0].mxu0
    %3798 = vdwg.mxu0
    %v3799 = vmul.f32 %v3793, 0.35355338
    %v3800 = vmul.f32 %v3796, 0.35355338
    %v3801 = vadd.f32 %v3799, %v102
    %v3802 = vadd.f32 %v3800, %v103
    %v3803 = vsel %vm486, %v3801, -inf
    %3804 = vmax.xlane.f32.xlu0 %v3803
    %v3805 = vpop.xlane.xlu0 %3804
    %v3806 = vsel %vm486, %v3802, -inf
    %3807 = vmax.xlane.f32.xlu0 %v3806
    %v3808 = vpop.xlane.xlu0 %3807
    %v3809 = vsub.f32 %v3801, %v3805
    %v3810 = vsub.f32 %v3802, %v3808
    %v3811 = vmul.f32 %v3809, 1.442695
    %v3812 = vpow.pop %v3811
    %v3813 = vmul.f32 %v3810, 1.442695
    %v3814 = vpow.pop %v3813
    %v3815 = vsel %vm486, %v3812, 0.0
    %3816 = vadd.xlane.f32.xlu0 %v3815
    %v3817 = vpop.xlane.xlu0 %3816
    %v3818 = vsel %vm486, %v3814, 0.0
    %3819 = vadd.xlane.f32.xlu0 %v3818
    %v3820 = vpop.xlane.xlu0 %3819
    %v3821 = vrcp.pop %v3817
    %v3822 = vmul.f32 %v3812, %v3821
    %v3823 = vrcp.pop %v3820
    %v3824 = vmul.f32 %v3814, %v3823
    %v3825 = vpack.c.bf16 %v3824, %v3822
    %3826 = vrot.lane.b32.xlu0 %v3495, 80
    %v3827 = vpop.permute.xlu0 %3826
    %v3829 = vsel %vm486, %v3825, 0
    %v3832 = vsel %vm515, %v3827, 0
    %3834 = vmatprep.subr.bf16.mxu0 0
    %3835 = vmatpush1.bf16.msra.mxu0 %v3832
    %3836 = vmatprep.subr.bf16.mxu0 0
    %3837 = vmatpush1.bf16.msra.mxu0 0
    %3838 = vmatprep.subr.bf16.mxu0 0
    %3839 = vmatpush1.bf16.msra.mxu0 0
    %3840 = vmatprep.subr.bf16.mxu0 0
    %3841 = vmatpush1.bf16.msra.mxu0 0
    %3842 = vmatprep.subr.bf16.mxu0 0
    %3843 = vmatpush1.bf16.msra.mxu0 0
    %3844 = vmatprep.subr.bf16.mxu0 0
    %3845 = vmatpush1.bf16.msra.mxu0 0
    %3846 = vmatprep.subr.bf16.mxu0 0
    %3847 = vmatpush1.bf16.msra.mxu0 0
    %3848 = vmatprep.subr.bf16.mxu0 0
    %3849 = vmatpush1.bf16.msra.mxu0 0
    %3850 = vmatprep.subr.bf16.mxu0 0
    %3851 = vmatpush1.bf16.msra.mxu0 0
    %3852 = vmatprep.subr.bf16.mxu0 0
    %3853 = vmatpush1.bf16.msra.mxu0 0
    %3854 = vmatprep.subr.bf16.mxu0 0
    %3855 = vmatpush1.bf16.msra.mxu0 0
    %3856 = vmatprep.subr.bf16.mxu0 0
    %3857 = vmatpush1.bf16.msra.mxu0 0
    %3858 = vmatprep.subr.bf16.mxu0 0
    %3859 = vmatpush1.bf16.msra.mxu0 0
    %3860 = vmatprep.subr.bf16.mxu0 0
    %3861 = vmatpush1.bf16.msra.mxu0 0
    %3862 = vmatprep.subr.bf16.mxu0 0
    %3863 = vmatpush1.bf16.msra.mxu0 0
    %3864 = vmatprep.subr.bf16.mxu0 0
    %3865 = vmatpush1.bf16.msra.mxu0 0
    %3866 = vmatprep.mubr.bf16.mxu0 0
    %3867 = vmatmul.mubr.bf16.gmra.mrb[0].mxu0 %v3829
    %v3868 = vpop.f32.mrb[0].mxu0
    %v3869 = vadd.f32 0.0, %v3868
    %v3870 = vpop.f32.mrb[0].mxu0
    %v3871 = vpop.f32.mrb[0].mxu0
    %v3872 = vadd.f32 0.0, %v3871
    %v3873 = vpop.f32.mrb[0].mxu0
    %3874 = vdwg.mxu0
    %3875 = vrot.lane.b32.xlu0 %v3494, 104
    %v3876 = vpop.permute.xlu0 %3875
    %3877 = vrot.lane.b32.xlu0 %v3495, 104
    %v3878 = vpop.permute.xlu0 %3877
    %v3880 = vsel %vm2739, %v3876, 0
    %v3883 = vsel %vm2739, %v3878, 0
    %3885 = vmatprep.subr.bf16.mxu0 0
    %3886 = vmatpush1.bf16.xpose.msra.mxu0 %v3883
    %3887 = vmatprep.subr.bf16.mxu0 0
    %3888 = vmatpush1.bf16.xpose.msra.mxu0 0
    %3889 = vmatprep.subr.bf16.mxu0 0
    %3890 = vmatpush1.bf16.xpose.msra.mxu0 0
    %3891 = vmatprep.subr.bf16.mxu0 0
    %3892 = vmatpush1.bf16.xpose.msra.mxu0 0
    %3893 = vmatprep.subr.bf16.mxu0 0
    %3894 = vmatpush1.bf16.xpose.msra.mxu0 0
    %3895 = vmatprep.subr.bf16.mxu0 0
    %3896 = vmatpush1.bf16.xpose.msra.mxu0 0
    %3897 = vmatprep.subr.bf16.mxu0 0
    %3898 = vmatpush1.bf16.xpose.msra.mxu0 0
    %3899 = vmatprep.subr.bf16.mxu0 0
    %3900 = vmatpush1.bf16.xpose.msra.mxu0 0
    %3901 = vmatprep.subr.bf16.mxu0 0
    %3902 = vmatpush1.bf16.xpose.msra.mxu0 0
    %3903 = vmatprep.subr.bf16.mxu0 0
    %3904 = vmatpush1.bf16.xpose.msra.mxu0 0
    %3905 = vmatprep.subr.bf16.mxu0 0
    %3906 = vmatpush1.bf16.xpose.msra.mxu0 0
    %3907 = vmatprep.subr.bf16.mxu0 0
    %3908 = vmatpush1.bf16.xpose.msra.mxu0 0
    %3909 = vmatprep.subr.bf16.mxu0 0
    %3910 = vmatpush1.bf16.xpose.msra.mxu0 0
    %3911 = vmatprep.subr.bf16.mxu0 0
    %3912 = vmatpush1.bf16.xpose.msra.mxu0 0
    %3913 = vmatprep.subr.bf16.mxu0 0
    %3914 = vmatpush1.bf16.xpose.msra.mxu0 0
    %3915 = vmatprep.subr.bf16.mxu0 0
    %3916 = vmatpush1.bf16.xpose.msra.mxu0 0
    %3917 = vmatprep.mubr.bf16.mxu0 0
    %3918 = vmatmul.mubr.bf16.gmra.mrb[0].mxu0 %v3880
    %v3919 = vpop.f32.mrb[0].mxu0
    %v3920 = vadd.f32 0.0, %v3919
    %v3921 = vpop.f32.mrb[0].mxu0
    %v3922 = vpop.f32.mrb[0].mxu0
    %v3923 = vadd.f32 0.0, %v3922
    %v3924 = vpop.f32.mrb[0].mxu0
    %3925 = vdwg.mxu0
    %v3926 = vmul.f32 %v3920, 0.35355338
    %v3927 = vmul.f32 %v3923, 0.35355338
    %v3928 = vadd.f32 %v3926, %v102
    %v3929 = vadd.f32 %v3927, %v103
    %v3930 = vsel %vm486, %v3928, -inf
    %3931 = vmax.xlane.f32.xlu0 %v3930
    %v3932 = vpop.xlane.xlu0 %3931
    %v3933 = vsel %vm486, %v3929, -inf
    %3934 = vmax.xlane.f32.xlu0 %v3933
    %v3935 = vpop.xlane.xlu0 %3934
    %v3936 = vsub.f32 %v3928, %v3932
    %v3937 = vsub.f32 %v3929, %v3935
    %v3938 = vmul.f32 %v3936, 1.442695
    %v3939 = vpow.pop %v3938
    %v3940 = vmul.f32 %v3937, 1.442695
    %v3941 = vpow.pop %v3940
    %v3942 = vsel %vm486, %v3939, 0.0
    %3943 = vadd.xlane.f32.xlu0 %v3942
    %v3944 = vpop.xlane.xlu0 %3943
    %v3945 = vsel %vm486, %v3941, 0.0
    %3946 = vadd.xlane.f32.xlu0 %v3945
    %v3947 = vpop.xlane.xlu0 %3946
    %v3948 = vrcp.pop %v3944
    %v3949 = vmul.f32 %v3939, %v3948
    %v3950 = vrcp.pop %v3947
    %v3951 = vmul.f32 %v3941, %v3950
    %v3952 = vpack.c.bf16 %v3951, %v3949
    %3953 = vrot.lane.b32.xlu0 %v3495, 72
    %v3954 = vpop.permute.xlu0 %3953
    %v3956 = vsel %vm486, %v3952, 0
    %v3959 = vsel %vm515, %v3954, 0
    %3961 = vmatprep.subr.bf16.mxu0 0
    %3962 = vmatpush1.bf16.msra.mxu0 %v3959
    %3963 = vmatprep.subr.bf16.mxu0 0
    %3964 = vmatpush1.bf16.msra.mxu0 0
    %3965 = vmatprep.subr.bf16.mxu0 0
    %3966 = vmatpush1.bf16.msra.mxu0 0
    %3967 = vmatprep.subr.bf16.mxu0 0
    %3968 = vmatpush1.bf16.msra.mxu0 0
    %3969 = vmatprep.subr.bf16.mxu0 0
    %3970 = vmatpush1.bf16.msra.mxu0 0
    %3971 = vmatprep.subr.bf16.mxu0 0
    %3972 = vmatpush1.bf16.msra.mxu0 0
    %3973 = vmatprep.subr.bf16.mxu0 0
    %3974 = vmatpush1.bf16.msra.mxu0 0
    %3975 = vmatprep.subr.bf16.mxu0 0
    %3976 = vmatpush1.bf16.msra.mxu0 0
    %3977 = vmatprep.subr.bf16.mxu0 0
    %3978 = vmatpush1.bf16.msra.mxu0 0
    %3979 = vmatprep.subr.bf16.mxu0 0
    %3980 = vmatpush1.bf16.msra.mxu0 0
    %3981 = vmatprep.subr.bf16.mxu0 0
    %3982 = vmatpush1.bf16.msra.mxu0 0
    %3983 = vmatprep.subr.bf16.mxu0 0
    %3984 = vmatpush1.bf16.msra.mxu0 0
    %3985 = vmatprep.subr.bf16.mxu0 0
    %3986 = vmatpush1.bf16.msra.mxu0 0
    %3987 = vmatprep.subr.bf16.mxu0 0
    %3988 = vmatpush1.bf16.msra.mxu0 0
    %3989 = vmatprep.subr.bf16.mxu0 0
    %3990 = vmatpush1.bf16.msra.mxu0 0
    %3991 = vmatprep.subr.bf16.mxu0 0
    %3992 = vmatpush1.bf16.msra.mxu0 0
    %3993 = vmatprep.mubr.bf16.mxu0 0
    %3994 = vmatmul.mubr.bf16.gmra.mrb[0].mxu0 %v3956
    %v3995 = vpop.f32.mrb[0].mxu0
    %v3996 = vadd.f32 0.0, %v3995
    %v3997 = vpop.f32.mrb[0].mxu0
    %v3998 = vpop.f32.mrb[0].mxu0
    %v3999 = vadd.f32 0.0, %v3998
    %v4000 = vpop.f32.mrb[0].mxu0
    %4001 = vdwg.mxu0
    %4004 = vrot.lane.b32.xlu0 %v3742, 8
    %v4005 = vpop.permute.xlu0 %4004
    %4006 = vrot.lane.b32.xlu0 %v3745, 8
    %v4007 = vpop.permute.xlu0 %4006
    %4012 = vrot.lane.b32.xlu0 %v3869, 16
    %v4013 = vpop.permute.xlu0 %4012
    %4014 = vrot.lane.b32.xlu0 %v3872, 16
    %v4015 = vpop.permute.xlu0 %4014
    %4020 = vrot.lane.b32.xlu0 %v3996, 24
    %v4021 = vpop.permute.xlu0 %4020
    %4022 = vrot.lane.b32.xlu0 %v3999, 24
    %v4023 = vpop.permute.xlu0 %4022
    %v4026 = vsel %vm2739, %v3614, %v4005
    %v4027 = vsel %vm2739, %v3617, %v4007
    %v4028 = vsel %vm434, %v4026, %v4013
    %v4029 = vsel %vm434, %v4027, %v4015
    %v4030 = vsel %vm3264, %v4028, %v4021
    %v4031 = vsel %vm3264, %v4029, %v4023
    %v4032 = vld [vmem:[%s3 + $0x470] sm:$0xf]
    %v4033 = vld [vmem:[%s3 + $0x478] sm:$0xf]
    %v4034 = vld [vmem:[%s3 + $0x480] sm:$0xf]
    %v4035 = vld [vmem:[%s3 + $0x488] sm:$0xf]
    %v4036 = vpack.c.bf16 %v4031, %v4030
    %v4037 = vld [vmem:[%s4 + $0x190] ss:$0 sm:$0xff]
    %v4042 = vunpack.c.l.b16 %v4032
    %v4043 = vunpack.c.l.b16 %v4033
    %v4044 = vunpack.c.l.b16 %v4034
    %v4045 = vunpack.c.l.b16 %v4035
    %v4046 = vpack.c.b16 %v4043, %v4042
    %v4047 = vpack.c.b16 %v4045, %v4044
    %v4051 = vsel %vm968, %v4036, 0
    %4053 = vmatprep.subr.bf16.mxu0 0
    %4054 = vmatpush1.bf16.msra.mxu0 %v4046
    %4055 = vmatprep.subr.bf16.mxu0 0
    %4056 = vmatpush1.bf16.msra.mxu0 %v4047
    %4057 = vmatprep.subr.bf16.mxu0 0
    %4058 = vmatpush1.bf16.msra.mxu0 0
    %4059 = vmatprep.subr.bf16.mxu0 0
    %4060 = vmatpush1.bf16.msra.mxu0 0
    %4061 = vmatprep.subr.bf16.mxu0 0
    %4062 = vmatpush1.bf16.msra.mxu0 0
    %4063 = vmatprep.subr.bf16.mxu0 0
    %4064 = vmatpush1.bf16.msra.mxu0 0
    %4065 = vmatprep.subr.bf16.mxu0 0
    %4066 = vmatpush1.bf16.msra.mxu0 0
    %4067 = vmatprep.subr.bf16.mxu0 0
    %4068 = vmatpush1.bf16.msra.mxu0 0
    %4069 = vmatprep.subr.bf16.mxu0 0
    %4070 = vmatpush1.bf16.msra.mxu0 0
    %4071 = vmatprep.subr.bf16.mxu0 0
    %4072 = vmatpush1.bf16.msra.mxu0 0
    %4073 = vmatprep.subr.bf16.mxu0 0
    %4074 = vmatpush1.bf16.msra.mxu0 0
    %4075 = vmatprep.subr.bf16.mxu0 0
    %4076 = vmatpush1.bf16.msra.mxu0 0
    %4077 = vmatprep.subr.bf16.mxu0 0
    %4078 = vmatpush1.bf16.msra.mxu0 0
    %4079 = vmatprep.subr.bf16.mxu0 0
    %4080 = vmatpush1.bf16.msra.mxu0 0
    %4081 = vmatprep.subr.bf16.mxu0 0
    %4082 = vmatpush1.bf16.msra.mxu0 0
    %4083 = vmatprep.subr.bf16.mxu0 0
    %4084 = vmatpush1.bf16.msra.mxu0 0
    %4085 = vmatprep.mubr.bf16.mxu0 0
    %4086 = vmatmul.mubr.bf16.gmra.mrb[0].mxu0 %v4051
    %v4087 = vpop.f32.mrb[0].mxu0
    %v4088 = vadd.f32 %v4037, %v4087
    %v4089 = vpop.f32.mrb[0].mxu0
    %v4090 = vpop.f32.mrb[0].mxu0
    %v4091 = vadd.f32 %v4037, %v4090
    %v4092 = vpop.f32.mrb[0].mxu0
    %4093 = vdwg.mxu0
    %v4094 = vadd.f32 %v3368, %v4088
    %v4095 = vadd.f32 %v3369, %v4091
    %v4096 = vld [vmem:[%s4 + $0x1a0] sm:$0x3]
    %v4097 = vsel %vm968, %v4094, 0.0
    %4098 = vadd.xlane.f32.xlu0 %v4097
    %v4099 = vpop.xlane.xlu0 %4098
    %v4100 = vsel %vm968, %v4095, 0.0
    %4101 = vadd.xlane.f32.xlu0 %v4100
    %v4102 = vpop.xlane.xlu0 %4101
    %v4103 = vmul.f32 %v4099, %v2508
    %v4104 = vmul.f32 %v4102, %v2508
    %v4105 = vsub.f32 %v4094, %v4103
    %v4106 = vsub.f32 %v4095, %v4104
    %v4107 = vmul.f32 %v4105, %v4105
    %v4108 = vmul.f32 %v4106, %v4106
    %v4109 = vsel %vm968, %v4107, 0.0
    %4110 = vadd.xlane.f32.xlu0 %v4109
    %v4111 = vpop.xlane.xlu0 %4110
    %v4112 = vsel %vm968, %v4108, 0.0
    %4113 = vadd.xlane.f32.xlu0 %v4112
    %v4114 = vpop.xlane.xlu0 %4113
    %v4115 = vmul.f32 %v4111, %v2508
    %v4116 = vmul.f32 %v4114, %v2508
    %v4117 = vadd.f32 %v4115, 1e-12
    %v4118 = vadd.f32 %v4116, 1e-12
    %v4119 = vrsqrt.pop %v4117
    %v4120 = vrsqrt.pop %v4118
    %v4121 = vmul.f32 %v4105, %v4119
    %v4122 = vmul.f32 %v4106, %v4120
    %v4123 = vlaneseq
    %v4124 = vshrl.u32 %v4123, 7
    %v4125 = vsub.s32 0, %v4124
    %v4126 = vrot.slane %v4096, %v4125
    %v4127 = vmul.f32 %v4121, %v4126
    %v4128 = vmul.f32 %v4122, %v4126
    %v4129 = vlaneseq
    %v4130 = vshrl.u32 %v4129, 7
    %v4131 = vsub.s32 1, %v4130
    %v4132 = vrot.slane %v4096, %v4131
    %v4133 = vadd.f32 %v4127, %v4132
    %v4134 = vadd.f32 %v4128, %v4132
    %v4135 = vld [vmem:[%s3 + $0x490] sm:$0xf]
    %v4136 = vld [vmem:[%s3 + $0x498] sm:$0xf]
    %v4137 = vld [vmem:[%s3 + $0x4a0] sm:$0xf]
    %v4138 = vld [vmem:[%s3 + $0x4a8] sm:$0xf]
    %v4139 = vpack.c.bf16 %v4134, %v4133
    %v4140 = vld [vmem:[%s4 + $0x1b0] ss:$0 sm:$0xff]
    %v4145 = vunpack.c.l.b16 %v4135
    %v4146 = vunpack.c.l.b16 %v4136
    %v4147 = vunpack.c.l.b16 %v4137
    %v4148 = vunpack.c.l.b16 %v4138
    %v4149 = vpack.c.b16 %v4146, %v4145
    %v4150 = vpack.c.b16 %v4148, %v4147
    %v4154 = vsel %vm968, %v4139, 0
    %4156 = vmatprep.subr.bf16.mxu0 0
    %4157 = vmatpush1.bf16.msra.mxu0 %v4149
    %4158 = vmatprep.subr.bf16.mxu0 0
    %4159 = vmatpush1.bf16.msra.mxu0 %v4150
    %4160 = vmatprep.subr.bf16.mxu0 0
    %4161 = vmatpush1.bf16.msra.mxu0 0
    %4162 = vmatprep.subr.bf16.mxu0 0
    %4163 = vmatpush1.bf16.msra.mxu0 0
    %4164 = vmatprep.subr.bf16.mxu0 0
    %4165 = vmatpush1.bf16.msra.mxu0 0
    %4166 = vmatprep.subr.bf16.mxu0 0
    %4167 = vmatpush1.bf16.msra.mxu0 0
    %4168 = vmatprep.subr.bf16.mxu0 0
    %4169 = vmatpush1.bf16.msra.mxu0 0
    %4170 = vmatprep.subr.bf16.mxu0 0
    %4171 = vmatpush1.bf16.msra.mxu0 0
    %4172 = vmatprep.subr.bf16.mxu0 0
    %4173 = vmatpush1.bf16.msra.mxu0 0
    %4174 = vmatprep.subr.bf16.mxu0 0
    %4175 = vmatpush1.bf16.msra.mxu0 0
    %4176 = vmatprep.subr.bf16.mxu0 0
    %4177 = vmatpush1.bf16.msra.mxu0 0
    %4178 = vmatprep.subr.bf16.mxu0 0
    %4179 = vmatpush1.bf16.msra.mxu0 0
    %4180 = vmatprep.subr.bf16.mxu0 0
    %4181 = vmatpush1.bf16.msra.mxu0 0
    %4182 = vmatprep.subr.bf16.mxu0 0
    %4183 = vmatpush1.bf16.msra.mxu0 0
    %4184 = vmatprep.subr.bf16.mxu0 0
    %4185 = vmatpush1.bf16.msra.mxu0 0
    %4186 = vmatprep.subr.bf16.mxu0 0
    %4187 = vmatpush1.bf16.msra.mxu0 0
    %4188 = vmatprep.mubr.bf16.mxu0 0
    %4189 = vmatmul.mubr.bf16.gmra.mrb[0].mxu0 %v4154
    %v4190 = vpop.f32.mrb[0].mxu0
    %v4191 = vadd.f32 %v4140, %v4190
    %v4192 = vpop.f32.mrb[0].mxu0
    %v4193 = vpop.f32.mrb[0].mxu0
    %v4194 = vadd.f32 %v4140, %v4193
    %v4195 = vpop.f32.mrb[0].mxu0
    %4196 = vdwg.mxu0
    %v4197 = vmul.f32 %v4191, %v4191
    %v4198 = vmul.f32 %v4194, %v4194
    %v4199 = vmul.f32 %v4191, %v4197
    %v4200 = vmul.f32 %v4194, %v4198
    %v4201 = vmul.f32 %v4199, 0.044715
    %v4202 = vmul.f32 %v4200, 0.044715
    %v4203 = vadd.f32 %v4191, %v4201
    %v4204 = vadd.f32 %v4194, %v4202
    %v4205 = vmul.f32 %v4203, 0.7978846
    %v4206 = vmul.f32 %v4204, 0.7978846
    %v4207 = vtanh.pop %v4205
    %v4208 = vtanh.pop %v4206
    %v4209 = vadd.f32 %v4207, 1.0
    %v4210 = vadd.f32 %v4208, 1.0
    %v4211 = vmul.f32 %v4209, 0.5
    %v4212 = vmul.f32 %v4210, 0.5
    %v4213 = vmul.f32 %v4191, %v4211
    %v4214 = vmul.f32 %v4194, %v4212
    %v4215 = vld [vmem:[%s3 + $0x4b0] sm:$0xf]
    %v4216 = vld [vmem:[%s3 + $0x4b8] sm:$0xf]
    %v4217 = vld [vmem:[%s3 + $0x4c0] sm:$0xf]
    %v4218 = vld [vmem:[%s3 + $0x4c8] sm:$0xf]
    %v4219 = vld [vmem:[%s3 + $0x4d0] sm:$0xf]
    %v4220 = vld [vmem:[%s3 + $0x4d8] sm:$0xf]
    %v4221 = vld [vmem:[%s3 + $0x4e0] sm:$0xf]
    %v4222 = vld [vmem:[%s3 + $0x4e8] sm:$0xf]
    %v4223 = vld [vmem:[%s3 + $0x4f0] sm:$0xf]
    %v4224 = vld [vmem:[%s3 + $0x4f8] sm:$0xf]
    %v4225 = vld [vmem:[%s3 + $0x500] sm:$0xf]
    %v4226 = vld [vmem:[%s3 + $0x508] sm:$0xf]
    %v4227 = vld [vmem:[%s3 + $0x510] sm:$0xf]
    %v4228 = vld [vmem:[%s3 + $0x518] sm:$0xf]
    %v4229 = vld [vmem:[%s3 + $0x520] sm:$0xf]
    %v4230 = vld [vmem:[%s3 + $0x528] sm:$0xf]
    %v4231 = vpack.c.bf16 %v4214, %v4213
    %v4232 = vld [vmem:[%s4 + $0x1c0] ss:$0 sm:$0xff]
    %v4249 = vunpack.c.l.b16 %v4215
    %v4250 = vunpack.c.l.b16 %v4216
    %v4251 = vunpack.c.l.b16 %v4217
    %v4252 = vunpack.c.l.b16 %v4218
    %v4253 = vunpack.c.l.b16 %v4219
    %v4254 = vunpack.c.l.b16 %v4220
    %v4255 = vunpack.c.l.b16 %v4221
    %v4256 = vunpack.c.l.b16 %v4222
    %v4257 = vunpack.c.l.b16 %v4223
    %v4258 = vunpack.c.l.b16 %v4224
    %v4259 = vunpack.c.l.b16 %v4225
    %v4260 = vunpack.c.l.b16 %v4226
    %v4261 = vunpack.c.l.b16 %v4227
    %v4262 = vunpack.c.l.b16 %v4228
    %v4263 = vunpack.c.l.b16 %v4229
    %v4264 = vunpack.c.l.b16 %v4230
    %v4265 = vpack.c.b16 %v4250, %v4249
    %v4266 = vpack.c.b16 %v4252, %v4251
    %v4267 = vpack.c.b16 %v4254, %v4253
    %v4268 = vpack.c.b16 %v4256, %v4255
    %v4269 = vpack.c.b16 %v4258, %v4257
    %v4270 = vpack.c.b16 %v4260, %v4259
    %v4271 = vpack.c.b16 %v4262, %v4261
    %v4272 = vpack.c.b16 %v4264, %v4263
    %4281 = vmatprep.subr.bf16.mxu0 0
    %4282 = vmatpush1.bf16.msra.mxu0 %v4265
    %4283 = vmatprep.subr.bf16.mxu0 0
    %4284 = vmatpush1.bf16.msra.mxu0 %v4266
    %4285 = vmatprep.subr.bf16.mxu0 0
    %4286 = vmatpush1.bf16.msra.mxu0 %v4267
    %4287 = vmatprep.subr.bf16.mxu0 0
    %4288 = vmatpush1.bf16.msra.mxu0 %v4268
    %4289 = vmatprep.subr.bf16.mxu0 0
    %4290 = vmatpush1.bf16.msra.mxu0 %v4269
    %4291 = vmatprep.subr.bf16.mxu0 0
    %4292 = vmatpush1.bf16.msra.mxu0 %v4270
    %4293 = vmatprep.subr.bf16.mxu0 0
    %4294 = vmatpush1.bf16.msra.mxu0 %v4271
    %4295 = vmatprep.subr.bf16.mxu0 0
    %4296 = vmatpush1.bf16.msra.mxu0 %v4272
    %4297 = vmatprep.subr.bf16.mxu0 0
    %4298 = vmatpush1.bf16.msra.mxu0 0
    %4299 = vmatprep.subr.bf16.mxu0 0
    %4300 = vmatpush1.bf16.msra.mxu0 0
    %4301 = vmatprep.subr.bf16.mxu0 0
    %4302 = vmatpush1.bf16.msra.mxu0 0
    %4303 = vmatprep.subr.bf16.mxu0 0
    %4304 = vmatpush1.bf16.msra.mxu0 0
    %4305 = vmatprep.subr.bf16.mxu0 0
    %4306 = vmatpush1.bf16.msra.mxu0 0
    %4307 = vmatprep.subr.bf16.mxu0 0
    %4308 = vmatpush1.bf16.msra.mxu0 0
    %4309 = vmatprep.subr.bf16.mxu0 0
    %4310 = vmatpush1.bf16.msra.mxu0 0
    %4311 = vmatprep.subr.bf16.mxu0 0
    %4312 = vmatpush1.bf16.msra.mxu0 0
    %4313 = vmatprep.mubr.bf16.mxu0 0
    %4314 = vmatmul.mubr.bf16.gmra.mrb[0].mxu0 %v4231
    %v4315 = vpop.f32.mrb[0].mxu0
    %v4316 = vadd.f32 %v4232, %v4315
    %v4317 = vpop.f32.mrb[0].mxu0
    %v4318 = vpop.f32.mrb[0].mxu0
    %v4319 = vadd.f32 %v4232, %v4318
    %v4320 = vpop.f32.mrb[0].mxu0
    %4321 = vdwg.mxu0
    %v4322 = vadd.f32 %v4133, %v4316
    %v4323 = vadd.f32 %v4134, %v4319
    %v4324 = vld [vmem:[%s4 + $0x1d0] sm:$0x3]
    %v4325 = vsel %vm968, %v4322, 0.0
    %4326 = vadd.xlane.f32.xlu0 %v4325
    %v4327 = vpop.xlane.xlu0 %4326
    %v4328 = vsel %vm968, %v4323, 0.0
    %4329 = vadd.xlane.f32.xlu0 %v4328
    %v4330 = vpop.xlane.xlu0 %4329
    %v4331 = vmul.f32 %v4327, %v2508
    %v4332 = vmul.f32 %v4330, %v2508
    %v4333 = vsub.f32 %v4322, %v4331
    %v4334 = vsub.f32 %v4323, %v4332
    %v4335 = vmul.f32 %v4333, %v4333
    %v4336 = vmul.f32 %v4334, %v4334
    %v4337 = vsel %vm968, %v4335, 0.0
    %4338 = vadd.xlane.f32.xlu0 %v4337
    %v4339 = vpop.xlane.xlu0 %4338
    %v4340 = vsel %vm968, %v4336, 0.0
    %4341 = vadd.xlane.f32.xlu0 %v4340
    %v4342 = vpop.xlane.xlu0 %4341
    %v4343 = vmul.f32 %v4339, %v2508
    %v4344 = vmul.f32 %v4342, %v2508
    %v4345 = vadd.f32 %v4343, 1e-12
    %v4346 = vadd.f32 %v4344, 1e-12
    %v4347 = vrsqrt.pop %v4345
    %v4348 = vrsqrt.pop %v4346
    %v4349 = vmul.f32 %v4333, %v4347
    %v4350 = vmul.f32 %v4334, %v4348
    %v4351 = vlaneseq
    %v4352 = vshrl.u32 %v4351, 7
    %v4353 = vsub.s32 0, %v4352
    %v4354 = vrot.slane %v4324, %v4353
    %v4355 = vmul.f32 %v4349, %v4354
    %v4356 = vmul.f32 %v4350, %v4354
    %v4357 = vlaneseq
    %v4358 = vshrl.u32 %v4357, 7
    %v4359 = vsub.s32 1, %v4358
    %v4360 = vrot.slane %v4324, %v4359
    %v4361 = vadd.f32 %v4355, %v4360
    %v4362 = vadd.f32 %v4356, %v4360
    %v4363 = vld [vmem:[%s3 + $0x530] sm:$0xf]
    %v4364 = vld [vmem:[%s3 + $0x538] sm:$0xf]
    %v4365 = vld [vmem:[%s3 + $0x540] sm:$0xf]
    %v4366 = vld [vmem:[%s3 + $0x548] sm:$0xf]
    %v4367 = vpack.c.bf16 %v4362, %v4361
    %v4368 = vld [vmem:[%s4 + $0x1e0] ss:$0 sm:$0xff]
    %v4373 = vunpack.c.l.b16 %v4363
    %v4374 = vunpack.c.l.b16 %v4364
    %v4375 = vunpack.c.l.b16 %v4365
    %v4376 = vunpack.c.l.b16 %v4366
    %v4377 = vpack.c.b16 %v4374, %v4373
    %v4378 = vpack.c.b16 %v4376, %v4375
    %v4382 = vsel %vm968, %v4367, 0
    %4384 = vmatprep.subr.bf16.mxu0 0
    %4385 = vmatpush1.bf16.msra.mxu0 %v4377
    %4386 = vmatprep.subr.bf16.mxu0 0
    %4387 = vmatpush1.bf16.msra.mxu0 %v4378
    %4388 = vmatprep.subr.bf16.mxu0 0
    %4389 = vmatpush1.bf16.msra.mxu0 0
    %4390 = vmatprep.subr.bf16.mxu0 0
    %4391 = vmatpush1.bf16.msra.mxu0 0
    %4392 = vmatprep.subr.bf16.mxu0 0
    %4393 = vmatpush1.bf16.msra.mxu0 0
    %4394 = vmatprep.subr.bf16.mxu0 0
    %4395 = vmatpush1.bf16.msra.mxu0 0
    %4396 = vmatprep.subr.bf16.mxu0 0
    %4397 = vmatpush1.bf16.msra.mxu0 0
    %4398 = vmatprep.subr.bf16.mxu0 0
    %4399 = vmatpush1.bf16.msra.mxu0 0
    %4400 = vmatprep.subr.bf16.mxu0 0
    %4401 = vmatpush1.bf16.msra.mxu0 0
    %4402 = vmatprep.subr.bf16.mxu0 0
    %4403 = vmatpush1.bf16.msra.mxu0 0
    %4404 = vmatprep.subr.bf16.mxu0 0
    %4405 = vmatpush1.bf16.msra.mxu0 0
    %4406 = vmatprep.subr.bf16.mxu0 0
    %4407 = vmatpush1.bf16.msra.mxu0 0
    %4408 = vmatprep.subr.bf16.mxu0 0
    %4409 = vmatpush1.bf16.msra.mxu0 0
    %4410 = vmatprep.subr.bf16.mxu0 0
    %4411 = vmatpush1.bf16.msra.mxu0 0
    %4412 = vmatprep.subr.bf16.mxu0 0
    %4413 = vmatpush1.bf16.msra.mxu0 0
    %4414 = vmatprep.subr.bf16.mxu0 0
    %4415 = vmatpush1.bf16.msra.mxu0 0
    %4416 = vmatprep.mubr.bf16.mxu0 0
    %4417 = vmatmul.mubr.bf16.gmra.mrb[0].mxu0 %v4382
    %v4418 = vpop.f32.mrb[0].mxu0
    %v4419 = vadd.f32 %v4368, %v4418
    %v4420 = vpop.f32.mrb[0].mxu0
    %v4421 = vpop.f32.mrb[0].mxu0
    %v4422 = vadd.f32 %v4368, %v4421
    %v4423 = vpop.f32.mrb[0].mxu0
    %4424 = vdwg.mxu0
    %v4425 = vpack.c.bf16 %v4422, %v4419
    %4427 = vrot.lane.b32.xlu0 %v4425, 96
    %v4428 = vpop.permute.xlu0 %4427
    %v4430 = vsel %vm2739, %v4425, 0
    %v4433 = vsel %vm2739, %v4428, 0
    %4435 = vmatprep.subr.bf16.mxu0 0
    %4436 = vmatpush1.bf16.xpose.msra.mxu0 %v4433
    %4437 = vmatprep.subr.bf16.mxu0 0
    %4438 = vmatpush1.bf16.xpose.msra.mxu0 0
    %4439 = vmatprep.subr.bf16.mxu0 0
    %4440 = vmatpush1.bf16.xpose.msra.mxu0 0
    %4441 = vmatprep.subr.bf16.mxu0 0
    %4442 = vmatpush1.bf16.xpose.msra.mxu0 0
    %4443 = vmatprep.subr.bf16.mxu0 0
    %4444 = vmatpush1.bf16.xpose.msra.mxu0 0
    %4445 = vmatprep.subr.bf16.mxu0 0
    %4446 = vmatpush1.bf16.xpose.msra.mxu0 0
    %4447 = vmatprep.subr.bf16.mxu0 0
    %4448 = vmatpush1.bf16.xpose.msra.mxu0 0
    %4449 = vmatprep.subr.bf16.mxu0 0
    %4450 = vmatpush1.bf16.xpose.msra.mxu0 0
    %4451 = vmatprep.subr.bf16.mxu0 0
    %4452 = vmatpush1.bf16.xpose.msra.mxu0 0
    %4453 = vmatprep.subr.bf16.mxu0 0
    %4454 = vmatpush1.bf16.xpose.msra.mxu0 0
    %4455 = vmatprep.subr.bf16.mxu0 0
    %4456 = vmatpush1.bf16.xpose.msra.mxu0 0
    %4457 = vmatprep.subr.bf16.mxu0 0
    %4458 = vmatpush1.bf16.xpose.msra.mxu0 0
    %4459 = vmatprep.subr.bf16.mxu0 0
    %4460 = vmatpush1.bf16.xpose.msra.mxu0 0
    %4461 = vmatprep.subr.bf16.mxu0 0
    %4462 = vmatpush1.bf16.xpose.msra.mxu0 0
    %4463 = vmatprep.subr.bf16.mxu0 0
    %4464 = vmatpush1.bf16.xpose.msra.mxu0 0
    %4465 = vmatprep.subr.bf16.mxu0 0
    %4466 = vmatpush1.bf16.xpose.msra.mxu0 0
    %4467 = vmatprep.mubr.bf16.mxu0 0
    %4468 = vmatmul.mubr.bf16.gmra.mrb[0].mxu0 %v4430
    %v4469 = vpop.f32.mrb[0].mxu0
    %v4470 = vadd.f32 0.0, %v4469
    %v4471 = vpop.f32.mrb[0].mxu0
    %v4472 = vpop.f32.mrb[0].mxu0
    %v4473 = vadd.f32 0.0, %v4472
    %v4474 = vpop.f32.mrb[0].mxu0
    %4475 = vdwg.mxu0
    %v4476 = vmul.f32 %v4470, 0.35355338
    %v4477 = vmul.f32 %v4473, 0.35355338
    %v4478 = vadd.f32 %v4476, %v92
    %v4479 = vadd.f32 %v4477, %v93
    %v4480 = vsel %vm434, %v4478, -inf
    %4481 = vmax.xlane.f32.xlu0 %v4480
    %v4482 = vpop.xlane.xlu0 %4481
    %v4483 = vsel %vm434, %v4479, -inf
    %4484 = vmax.xlane.f32.xlu0 %v4483
    %v4485 = vpop.xlane.xlu0 %4484
    %v4486 = vsub.f32 %v4478, %v4482
    %v4487 = vsub.f32 %v4479, %v4485
    %v4488 = vmul.f32 %v4486, 1.442695
    %v4489 = vpow.pop %v4488
    %v4490 = vmul.f32 %v4487, 1.442695
    %v4491 = vpow.pop %v4490
    %v4492 = vsel %vm434, %v4489, 0.0
    %4493 = vadd.xlane.f32.xlu0 %v4492
    %v4494 = vpop.xlane.xlu0 %4493
    %v4495 = vsel %vm434, %v4491, 0.0
    %4496 = vadd.xlane.f32.xlu0 %v4495
    %v4497 = vpop.xlane.xlu0 %4496
    %v4498 = vrcp.pop %v4494
    %v4499 = vmul.f32 %v4489, %v4498
    %v4500 = vrcp.pop %v4497
    %v4501 = vmul.f32 %v4491, %v4500
    %v4502 = vpack.c.bf16 %v4501, %v4499
    %4503 = vrot.lane.b32.xlu0 %v4425, 64
    %v4504 = vpop.permute.xlu0 %4503
    %v4507 = vsel %vm434, %v4502, 0
    %4509 = vmatprep.subr.bf16.mxu0 0
    %4510 = vmatpush1.bf16.msra.mxu0 %v4504
    %4511 = vmatprep.subr.bf16.mxu0 0
    %4512 = vmatpush1.bf16.msra.mxu0 0
    %4513 = vmatprep.subr.bf16.mxu0 0
    %4514 = vmatpush1.bf16.msra.mxu0 0
    %4515 = vmatprep.subr.bf16.mxu0 0
    %4516 = vmatpush1.bf16.msra.mxu0 0
    %4517 = vmatprep.subr.bf16.mxu0 0
    %4518 = vmatpush1.bf16.msra.mxu0 0
    %4519 = vmatprep.subr.bf16.mxu0 0
    %4520 = vmatpush1.bf16.msra.mxu0 0
    %4521 = vmatprep.subr.bf16.mxu0 0
    %4522 = vmatpush1.bf16.msra.mxu0 0
    %4523 = vmatprep.subr.bf16.mxu0 0
    %4524 = vmatpush1.bf16.msra.mxu0 0
    %4525 = vmatprep.subr.bf16.mxu0 0
    %4526 = vmatpush1.bf16.msra.mxu0 0
    %4527 = vmatprep.subr.bf16.mxu0 0
    %4528 = vmatpush1.bf16.msra.mxu0 0
    %4529 = vmatprep.subr.bf16.mxu0 0
    %4530 = vmatpush1.bf16.msra.mxu0 0
    %4531 = vmatprep.subr.bf16.mxu0 0
    %4532 = vmatpush1.bf16.msra.mxu0 0
    %4533 = vmatprep.subr.bf16.mxu0 0
    %4534 = vmatpush1.bf16.msra.mxu0 0
    %4535 = vmatprep.subr.bf16.mxu0 0
    %4536 = vmatpush1.bf16.msra.mxu0 0
    %4537 = vmatprep.subr.bf16.mxu0 0
    %4538 = vmatpush1.bf16.msra.mxu0 0
    %4539 = vmatprep.subr.bf16.mxu0 0
    %4540 = vmatpush1.bf16.msra.mxu0 0
    %4541 = vmatprep.mubr.bf16.mxu0 0
    %4542 = vmatmul.mubr.bf16.gmra.mrb[0].mxu0 %v4507
    %v4543 = vpop.f32.mrb[0].mxu0
    %v4544 = vadd.f32 0.0, %v4543
    %v4545 = vpop.f32.mrb[0].mxu0
    %v4546 = vpop.f32.mrb[0].mxu0
    %v4547 = vadd.f32 0.0, %v4546
    %v4548 = vpop.f32.mrb[0].mxu0
    %4549 = vdwg.mxu0
    %4550 = vrot.lane.b32.xlu0 %v4425, 120
    %v4551 = vpop.permute.xlu0 %4550
    %4552 = vrot.lane.b32.xlu0 %v4425, 88
    %v4553 = vpop.permute.xlu0 %4552
    %v4555 = vsel %vm2739, %v4551, 0
    %v4558 = vsel %vm2739, %v4553, 0
    %4560 = vmatprep.subr.bf16.mxu0 0
    %4561 = vmatpush1.bf16.xpose.msra.mxu0 %v4558
    %4562 = vmatprep.subr.bf16.mxu0 0
    %4563 = vmatpush1.bf16.xpose.msra.mxu0 0
    %4564 = vmatprep.subr.bf16.mxu0 0
    %4565 = vmatpush1.bf16.xpose.msra.mxu0 0
    %4566 = vmatprep.subr.bf16.mxu0 0
    %4567 = vmatpush1.bf16.xpose.msra.mxu0 0
    %4568 = vmatprep.subr.bf16.mxu0 0
    %4569 = vmatpush1.bf16.xpose.msra.mxu0 0
    %4570 = vmatprep.subr.bf16.mxu0 0
    %4571 = vmatpush1.bf16.xpose.msra.mxu0 0
    %4572 = vmatprep.subr.bf16.mxu0 0
    %4573 = vmatpush1.bf16.xpose.msra.mxu0 0
    %4574 = vmatprep.subr.bf16.mxu0 0
    %4575 = vmatpush1.bf16.xpose.msra.mxu0 0
    %4576 = vmatprep.subr.bf16.mxu0 0
    %4577 = vmatpush1.bf16.xpose.msra.mxu0 0
    %4578 = vmatprep.subr.bf16.mxu0 0
    %4579 = vmatpush1.bf16.xpose.msra.mxu0 0
    %4580 = vmatprep.subr.bf16.mxu0 0
    %4581 = vmatpush1.bf16.xpose.msra.mxu0 0
    %4582 = vmatprep.subr.bf16.mxu0 0
    %4583 = vmatpush1.bf16.xpose.msra.mxu0 0
    %4584 = vmatprep.subr.bf16.mxu0 0
    %4585 = vmatpush1.bf16.xpose.msra.mxu0 0
    %4586 = vmatprep.subr.bf16.mxu0 0
    %4587 = vmatpush1.bf16.xpose.msra.mxu0 0
    %4588 = vmatprep.subr.bf16.mxu0 0
    %4589 = vmatpush1.bf16.xpose.msra.mxu0 0
    %4590 = vmatprep.subr.bf16.mxu0 0
    %4591 = vmatpush1.bf16.xpose.msra.mxu0 0
    %4592 = vmatprep.mubr.bf16.mxu0 0
    %4593 = vmatmul.mubr.bf16.gmra.mrb[0].mxu0 %v4555
    %v4594 = vpop.f32.mrb[0].mxu0
    %v4595 = vadd.f32 0.0, %v4594
    %v4596 = vpop.f32.mrb[0].mxu0
    %v4597 = vpop.f32.mrb[0].mxu0
    %v4598 = vadd.f32 0.0, %v4597
    %v4599 = vpop.f32.mrb[0].mxu0
    %4600 = vdwg.mxu0
    %v4601 = vmul.f32 %v4595, 0.35355338
    %v4602 = vmul.f32 %v4598, 0.35355338
    %v4603 = vadd.f32 %v4601, %v92
    %v4604 = vadd.f32 %v4602, %v93
    %v4605 = vsel %vm434, %v4603, -inf
    %4606 = vmax.xlane.f32.xlu0 %v4605
    %v4607 = vpop.xlane.xlu0 %4606
    %v4608 = vsel %vm434, %v4604, -inf
    %4609 = vmax.xlane.f32.xlu0 %v4608
    %v4610 = vpop.xlane.xlu0 %4609
    %v4611 = vsub.f32 %v4603, %v4607
    %v4612 = vsub.f32 %v4604, %v4610
    %v4613 = vmul.f32 %v4611, 1.442695
    %v4614 = vpow.pop %v4613
    %v4615 = vmul.f32 %v4612, 1.442695
    %v4616 = vpow.pop %v4615
    %v4617 = vsel %vm434, %v4614, 0.0
    %4618 = vadd.xlane.f32.xlu0 %v4617
    %v4619 = vpop.xlane.xlu0 %4618
    %v4620 = vsel %vm434, %v4616, 0.0
    %4621 = vadd.xlane.f32.xlu0 %v4620
    %v4622 = vpop.xlane.xlu0 %4621
    %v4623 = vrcp.pop %v4619
    %v4624 = vmul.f32 %v4614, %v4623
    %v4625 = vrcp.pop %v4622
    %v4626 = vmul.f32 %v4616, %v4625
    %v4627 = vpack.c.bf16 %v4626, %v4624
    %4628 = vrot.lane.b32.xlu0 %v4425, 56
    %v4629 = vpop.permute.xlu0 %4628
    %v4632 = vsel %vm434, %v4627, 0
    %4634 = vmatprep.subr.bf16.mxu0 0
    %4635 = vmatpush1.bf16.msra.mxu0 %v4629
    %4636 = vmatprep.subr.bf16.mxu0 0
    %4637 = vmatpush1.bf16.msra.mxu0 0
    %4638 = vmatprep.subr.bf16.mxu0 0
    %4639 = vmatpush1.bf16.msra.mxu0 0
    %4640 = vmatprep.subr.bf16.mxu0 0
    %4641 = vmatpush1.bf16.msra.mxu0 0
    %4642 = vmatprep.subr.bf16.mxu0 0
    %4643 = vmatpush1.bf16.msra.mxu0 0
    %4644 = vmatprep.subr.bf16.mxu0 0
    %4645 = vmatpush1.bf16.msra.mxu0 0
    %4646 = vmatprep.subr.bf16.mxu0 0
    %4647 = vmatpush1.bf16.msra.mxu0 0
    %4648 = vmatprep.subr.bf16.mxu0 0
    %4649 = vmatpush1.bf16.msra.mxu0 0
    %4650 = vmatprep.subr.bf16.mxu0 0
    %4651 = vmatpush1.bf16.msra.mxu0 0
    %4652 = vmatprep.subr.bf16.mxu0 0
    %4653 = vmatpush1.bf16.msra.mxu0 0
    %4654 = vmatprep.subr.bf16.mxu0 0
    %4655 = vmatpush1.bf16.msra.mxu0 0
    %4656 = vmatprep.subr.bf16.mxu0 0
    %4657 = vmatpush1.bf16.msra.mxu0 0
    %4658 = vmatprep.subr.bf16.mxu0 0
    %4659 = vmatpush1.bf16.msra.mxu0 0
    %4660 = vmatprep.subr.bf16.mxu0 0
    %4661 = vmatpush1.bf16.msra.mxu0 0
    %4662 = vmatprep.subr.bf16.mxu0 0
    %4663 = vmatpush1.bf16.msra.mxu0 0
    %4664 = vmatprep.subr.bf16.mxu0 0
    %4665 = vmatpush1.bf16.msra.mxu0 0
    %4666 = vmatprep.mubr.bf16.mxu0 0
    %4667 = vmatmul.mubr.bf16.gmra.mrb[0].mxu0 %v4632
    %v4668 = vpop.f32.mrb[0].mxu0
    %v4669 = vadd.f32 0.0, %v4668
    %v4670 = vpop.f32.mrb[0].mxu0
    %v4671 = vpop.f32.mrb[0].mxu0
    %v4672 = vadd.f32 0.0, %v4671
    %v4673 = vpop.f32.mrb[0].mxu0
    %4674 = vdwg.mxu0
    %4675 = vrot.lane.b32.xlu0 %v4425, 112
    %v4676 = vpop.permute.xlu0 %4675
    %4677 = vrot.lane.b32.xlu0 %v4425, 80
    %v4678 = vpop.permute.xlu0 %4677
    %v4680 = vsel %vm2739, %v4676, 0
    %v4683 = vsel %vm2739, %v4678, 0
    %4685 = vmatprep.subr.bf16.mxu0 0
    %4686 = vmatpush1.bf16.xpose.msra.mxu0 %v4683
    %4687 = vmatprep.subr.bf16.mxu0 0
    %4688 = vmatpush1.bf16.xpose.msra.mxu0 0
    %4689 = vmatprep.subr.bf16.mxu0 0
    %4690 = vmatpush1.bf16.xpose.msra.mxu0 0
    %4691 = vmatprep.subr.bf16.mxu0 0
    %4692 = vmatpush1.bf16.xpose.msra.mxu0 0
    %4693 = vmatprep.subr.bf16.mxu0 0
    %4694 = vmatpush1.bf16.xpose.msra.mxu0 0
    %4695 = vmatprep.subr.bf16.mxu0 0
    %4696 = vmatpush1.bf16.xpose.msra.mxu0 0
    %4697 = vmatprep.subr.bf16.mxu0 0
    %4698 = vmatpush1.bf16.xpose.msra.mxu0 0
    %4699 = vmatprep.subr.bf16.mxu0 0
    %4700 = vmatpush1.bf16.xpose.msra.mxu0 0
    %4701 = vmatprep.subr.bf16.mxu0 0
    %4702 = vmatpush1.bf16.xpose.msra.mxu0 0
    %4703 = vmatprep.subr.bf16.mxu0 0
    %4704 = vmatpush1.bf16.xpose.msra.mxu0 0
    %4705 = vmatprep.subr.bf16.mxu0 0
    %4706 = vmatpush1.bf16.xpose.msra.mxu0 0
    %4707 = vmatprep.subr.bf16.mxu0 0
    %4708 = vmatpush1.bf16.xpose.msra.mxu0 0
    %4709 = vmatprep.subr.bf16.mxu0 0
    %4710 = vmatpush1.bf16.xpose.msra.mxu0 0
    %4711 = vmatprep.subr.bf16.mxu0 0
    %4712 = vmatpush1.bf16.xpose.msra.mxu0 0
    %4713 = vmatprep.subr.bf16.mxu0 0
    %4714 = vmatpush1.bf16.xpose.msra.mxu0 0
    %4715 = vmatprep.subr.bf16.mxu0 0
    %4716 = vmatpush1.bf16.xpose.msra.mxu0 0
    %4717 = vmatprep.mubr.bf16.mxu0 0
    %4718 = vmatmul.mubr.bf16.gmra.mrb[0].mxu0 %v4680
    %v4719 = vpop.f32.mrb[0].mxu0
    %v4720 = vadd.f32 0.0, %v4719
    %v4721 = vpop.f32.mrb[0].mxu0
    %v4722 = vpop.f32.mrb[0].mxu0
    %v4723 = vadd.f32 0.0, %v4722
    %v4724 = vpop.f32.mrb[0].mxu0
    %4725 = vdwg.mxu0
    %v4726 = vmul.f32 %v4720, 0.35355338
    %v4727 = vmul.f32 %v4723, 0.35355338
    %v4728 = vadd.f32 %v4726, %v92
    %v4729 = vadd.f32 %v4727, %v93
    %v4730 = vsel %vm434, %v4728, -inf
    %4731 = vmax.xlane.f32.xlu0 %v4730
    %v4732 = vpop.xlane.xlu0 %4731
    %v4733 = vsel %vm434, %v4729, -inf
    %4734 = vmax.xlane.f32.xlu0 %v4733
    %v4735 = vpop.xlane.xlu0 %4734
    %v4736 = vsub.f32 %v4728, %v4732
    %v4737 = vsub.f32 %v4729, %v4735
    %v4738 = vmul.f32 %v4736, 1.442695
    %v4739 = vpow.pop %v4738
    %v4740 = vmul.f32 %v4737, 1.442695
    %v4741 = vpow.pop %v4740
    %v4742 = vsel %vm434, %v4739, 0.0
    %4743 = vadd.xlane.f32.xlu0 %v4742
    %v4744 = vpop.xlane.xlu0 %4743
    %v4745 = vsel %vm434, %v4741, 0.0
    %4746 = vadd.xlane.f32.xlu0 %v4745
    %v4747 = vpop.xlane.xlu0 %4746
    %v4748 = vrcp.pop %v4744
    %v4749 = vmul.f32 %v4739, %v4748
    %v4750 = vrcp.pop %v4747
    %v4751 = vmul.f32 %v4741, %v4750
    %v4752 = vpack.c.bf16 %v4751, %v4749
    %4753 = vrot.lane.b32.xlu0 %v4425, 48
    %v4754 = vpop.permute.xlu0 %4753
    %v4757 = vsel %vm434, %v4752, 0
    %4759 = vmatprep.subr.bf16.mxu0 0
    %4760 = vmatpush1.bf16.msra.mxu0 %v4754
    %4761 = vmatprep.subr.bf16.mxu0 0
    %4762 = vmatpush1.bf16.msra.mxu0 0
    %4763 = vmatprep.subr.bf16.mxu0 0
    %4764 = vmatpush1.bf16.msra.mxu0 0
    %4765 = vmatprep.subr.bf16.mxu0 0
    %4766 = vmatpush1.bf16.msra.mxu0 0
    %4767 = vmatprep.subr.bf16.mxu0 0
    %4768 = vmatpush1.bf16.msra.mxu0 0
    %4769 = vmatprep.subr.bf16.mxu0 0
    %4770 = vmatpush1.bf16.msra.mxu0 0
    %4771 = vmatprep.subr.bf16.mxu0 0
    %4772 = vmatpush1.bf16.msra.mxu0 0
    %4773 = vmatprep.subr.bf16.mxu0 0
    %4774 = vmatpush1.bf16.msra.mxu0 0
    %4775 = vmatprep.subr.bf16.mxu0 0
    %4776 = vmatpush1.bf16.msra.mxu0 0
    %4777 = vmatprep.subr.bf16.mxu0 0
    %4778 = vmatpush1.bf16.msra.mxu0 0
    %4779 = vmatprep.subr.bf16.mxu0 0
    %4780 = vmatpush1.bf16.msra.mxu0 0
    %4781 = vmatprep.subr.bf16.mxu0 0
    %4782 = vmatpush1.bf16.msra.mxu0 0
    %4783 = vmatprep.subr.bf16.mxu0 0
    %4784 = vmatpush1.bf16.msra.mxu0 0
    %4785 = vmatprep.subr.bf16.mxu0 0
    %4786 = vmatpush1.bf16.msra.mxu0 0
    %4787 = vmatprep.subr.bf16.mxu0 0
    %4788 = vmatpush1.bf16.msra.mxu0 0
    %4789 = vmatprep.subr.bf16.mxu0 0
    %4790 = vmatpush1.bf16.msra.mxu0 0
    %4791 = vmatprep.mubr.bf16.mxu0 0
    %4792 = vmatmul.mubr.bf16.gmra.mrb[0].mxu0 %v4757
    %v4793 = vpop.f32.mrb[0].mxu0
    %v4794 = vadd.f32 0.0, %v4793
    %v4795 = vpop.f32.mrb[0].mxu0
    %v4796 = vpop.f32.mrb[0].mxu0
    %v4797 = vadd.f32 0.0, %v4796
    %v4798 = vpop.f32.mrb[0].mxu0
    %4799 = vdwg.mxu0
    %4800 = vrot.lane.b32.xlu0 %v4425, 104
    %v4801 = vpop.permute.xlu0 %4800
    %4802 = vrot.lane.b32.xlu0 %v4425, 72
    %v4803 = vpop.permute.xlu0 %4802
    %v4805 = vsel %vm2739, %v4801, 0
    %v4808 = vsel %vm2739, %v4803, 0
    %4810 = vmatprep.subr.bf16.mxu0 0
    %4811 = vmatpush1.bf16.xpose.msra.mxu0 %v4808
    %4812 = vmatprep.subr.bf16.mxu0 0
    %4813 = vmatpush1.bf16.xpose.msra.mxu0 0
    %4814 = vmatprep.subr.bf16.mxu0 0
    %4815 = vmatpush1.bf16.xpose.msra.mxu0 0
    %4816 = vmatprep.subr.bf16.mxu0 0
    %4817 = vmatpush1.bf16.xpose.msra.mxu0 0
    %4818 = vmatprep.subr.bf16.mxu0 0
    %4819 = vmatpush1.bf16.xpose.msra.mxu0 0
    %4820 = vmatprep.subr.bf16.mxu0 0
    %4821 = vmatpush1.bf16.xpose.msra.mxu0 0
    %4822 = vmatprep.subr.bf16.mxu0 0
    %4823 = vmatpush1.bf16.xpose.msra.mxu0 0
    %4824 = vmatprep.subr.bf16.mxu0 0
    %4825 = vmatpush1.bf16.xpose.msra.mxu0 0
    %4826 = vmatprep.subr.bf16.mxu0 0
    %4827 = vmatpush1.bf16.xpose.msra.mxu0 0
    %4828 = vmatprep.subr.bf16.mxu0 0
    %4829 = vmatpush1.bf16.xpose.msra.mxu0 0
    %4830 = vmatprep.subr.bf16.mxu0 0
    %4831 = vmatpush1.bf16.xpose.msra.mxu0 0
    %4832 = vmatprep.subr.bf16.mxu0 0
    %4833 = vmatpush1.bf16.xpose.msra.mxu0 0
    %4834 = vmatprep.subr.bf16.mxu0 0
    %4835 = vmatpush1.bf16.xpose.msra.mxu0 0
    %4836 = vmatprep.subr.bf16.mxu0 0
    %4837 = vmatpush1.bf16.xpose.msra.mxu0 0
    %4838 = vmatprep.subr.bf16.mxu0 0
    %4839 = vmatpush1.bf16.xpose.msra.mxu0 0
    %4840 = vmatprep.subr.bf16.mxu0 0
    %4841 = vmatpush1.bf16.xpose.msra.mxu0 0
    %4842 = vmatprep.mubr.bf16.mxu0 0
    %4843 = vmatmul.mubr.bf16.gmra.mrb[0].mxu0 %v4805
    %v4844 = vpop.f32.mrb[0].mxu0
    %v4845 = vadd.f32 0.0, %v4844
    %v4846 = vpop.f32.mrb[0].mxu0
    %v4847 = vpop.f32.mrb[0].mxu0
    %v4848 = vadd.f32 0.0, %v4847
    %v4849 = vpop.f32.mrb[0].mxu0
    %4850 = vdwg.mxu0
    %v4851 = vmul.f32 %v4845, 0.35355338
    %v4852 = vmul.f32 %v4848, 0.35355338
    %v4853 = vadd.f32 %v4851, %v92
    %v4854 = vadd.f32 %v4852, %v93
    %v4855 = vsel %vm434, %v4853, -inf
    %4856 = vmax.xlane.f32.xlu0 %v4855
    %v4857 = vpop.xlane.xlu0 %4856
    %v4858 = vsel %vm434, %v4854, -inf
    %4859 = vmax.xlane.f32.xlu0 %v4858
    %v4860 = vpop.xlane.xlu0 %4859
    %v4861 = vsub.f32 %v4853, %v4857
    %v4862 = vsub.f32 %v4854, %v4860
    %v4863 = vmul.f32 %v4861, 1.442695
    %v4864 = vpow.pop %v4863
    %v4865 = vmul.f32 %v4862, 1.442695
    %v4866 = vpow.pop %v4865
    %v4867 = vsel %vm434, %v4864, 0.0
    %4868 = vadd.xlane.f32.xlu0 %v4867
    %v4869 = vpop.xlane.xlu0 %4868
    %v4870 = vsel %vm434, %v4866, 0.0
    %4871 = vadd.xlane.f32.xlu0 %v4870
    %v4872 = vpop.xlane.xlu0 %4871
    %v4873 = vrcp.pop %v4869
    %v4874 = vmul.f32 %v4864, %v4873
    %v4875 = vrcp.pop %v4872
    %v4876 = vmul.f32 %v4866, %v4875
    %v4877 = vpack.c.bf16 %v4876, %v4874
    %4878 = vrot.lane.b32.xlu0 %v4425, 40
    %v4879 = vpop.permute.xlu0 %4878
    %v4882 = vsel %vm434, %v4877, 0
    %4884 = vmatprep.subr.bf16.mxu0 0
    %4885 = vmatpush1.bf16.msra.mxu0 %v4879
    %4886 = vmatprep.subr.bf16.mxu0 0
    %4887 = vmatpush1.bf16.msra.mxu0 0
    %4888 = vmatprep.subr.bf16.mxu0 0
    %4889 = vmatpush1.bf16.msra.mxu0 0
    %4890 = vmatprep.subr.bf16.mxu0 0
    %4891 = vmatpush1.bf16.msra.mxu0 0
    %4892 = vmatprep.subr.bf16.mxu0 0
    %4893 = vmatpush1.bf16.msra.mxu0 0
    %4894 = vmatprep.subr.bf16.mxu0 0
    %4895 = vmatpush1.bf16.msra.mxu0 0
    %4896 = vmatprep.subr.bf16.mxu0 0
    %4897 = vmatpush1.bf16.msra.mxu0 0
    %4898 = vmatprep.subr.bf16.mxu0 0
    %4899 = vmatpush1.bf16.msra.mxu0 0
    %4900 = vmatprep.subr.bf16.mxu0 0
    %4901 = vmatpush1.bf16.msra.mxu0 0
    %4902 = vmatprep.subr.bf16.mxu0 0
    %4903 = vmatpush1.bf16.msra.mxu0 0
    %4904 = vmatprep.subr.bf16.mxu0 0
    %4905 = vmatpush1.bf16.msra.mxu0 0
    %4906 = vmatprep.subr.bf16.mxu0 0
    %4907 = vmatpush1.bf16.msra.mxu0 0
    %4908 = vmatprep.subr.bf16.mxu0 0
    %4909 = vmatpush1.bf16.msra.mxu0 0
    %4910 = vmatprep.subr.bf16.mxu0 0
    %4911 = vmatpush1.bf16.msra.mxu0 0
    %4912 = vmatprep.subr.bf16.mxu0 0
    %4913 = vmatpush1.bf16.msra.mxu0 0
    %4914 = vmatprep.subr.bf16.mxu0 0
    %4915 = vmatpush1.bf16.msra.mxu0 0
    %4916 = vmatprep.mubr.bf16.mxu0 0
    %4917 = vmatmul.mubr.bf16.gmra.mrb[0].mxu0 %v4882
    %v4918 = vpop.f32.mrb[0].mxu0
    %v4919 = vadd.f32 0.0, %v4918
    %v4920 = vpop.f32.mrb[0].mxu0
    %v4921 = vpop.f32.mrb[0].mxu0
    %v4922 = vadd.f32 0.0, %v4921
    %v4923 = vpop.f32.mrb[0].mxu0
    %4924 = vdwg.mxu0
    %4927 = vrot.lane.b32.xlu0 %v4669, 8
    %v4928 = vpop.permute.xlu0 %4927
    %4929 = vrot.lane.b32.xlu0 %v4672, 8
    %v4930 = vpop.permute.xlu0 %4929
    %4935 = vrot.lane.b32.xlu0 %v4794, 16
    %v4936 = vpop.permute.xlu0 %4935
    %4937 = vrot.lane.b32.xlu0 %v4797, 16
    %v4938 = vpop.permute.xlu0 %4937
    %4943 = vrot.lane.b32.xlu0 %v4919, 24
    %v4944 = vpop.permute.xlu0 %4943
    %4945 = vrot.lane.b32.xlu0 %v4922, 24
    %v4946 = vpop.permute.xlu0 %4945
    %v4949 = vsel %vm2739, %v4544, %v4928
    %v4950 = vsel %vm2739, %v4547, %v4930
    %v4951 = vsel %vm434, %v4949, %v4936
    %v4952 = vsel %vm434, %v4950, %v4938
    %v4953 = vsel %vm3264, %v4951, %v4944
    %v4954 = vsel %vm3264, %v4952, %v4946
    %v4955 = vld [vmem:[%s3 + $0x550] sm:$0xf]
    %v4956 = vld [vmem:[%s3 + $0x558] sm:$0xf]
    %v4957 = vld [vmem:[%s3 + $0x560] sm:$0xf]
    %v4958 = vld [vmem:[%s3 + $0x568] sm:$0xf]
    %v4959 = vpack.c.bf16 %v4954, %v4953
    %v4960 = vld [vmem:[%s4 + $0x1f0] ss:$0 sm:$0xff]
    %v4965 = vunpack.c.l.b16 %v4955
    %v4966 = vunpack.c.l.b16 %v4956
    %v4967 = vunpack.c.l.b16 %v4957
    %v4968 = vunpack.c.l.b16 %v4958
    %v4969 = vpack.c.b16 %v4966, %v4965
    %v4970 = vpack.c.b16 %v4968, %v4967
    %v4974 = vsel %vm968, %v4959, 0
    %4976 = vmatprep.subr.bf16.mxu0 0
    %4977 = vmatpush1.bf16.msra.mxu0 %v4969
    %4978 = vmatprep.subr.bf16.mxu0 0
    %4979 = vmatpush1.bf16.msra.mxu0 %v4970
    %4980 = vmatprep.subr.bf16.mxu0 0
    %4981 = vmatpush1.bf16.msra.mxu0 0
    %4982 = vmatprep.subr.bf16.mxu0 0
    %4983 = vmatpush1.bf16.msra.mxu0 0
    %4984 = vmatprep.subr.bf16.mxu0 0
    %4985 = vmatpush1.bf16.msra.mxu0 0
    %4986 = vmatprep.subr.bf16.mxu0 0
    %4987 = vmatpush1.bf16.msra.mxu0 0
    %4988 = vmatprep.subr.bf16.mxu0 0
    %4989 = vmatpush1.bf16.msra.mxu0 0
    %4990 = vmatprep.subr.bf16.mxu0 0
    %4991 = vmatpush1.bf16.msra.mxu0 0
    %4992 = vmatprep.subr.bf16.mxu0 0
    %4993 = vmatpush1.bf16.msra.mxu0 0
    %4994 = vmatprep.subr.bf16.mxu0 0
    %4995 = vmatpush1.bf16.msra.mxu0 0
    %4996 = vmatprep.subr.bf16.mxu0 0
    %4997 = vmatpush1.bf16.msra.mxu0 0
    %4998 = vmatprep.subr.bf16.mxu0 0
    %4999 = vmatpush1.bf16.msra.mxu0 0
    %5000 = vmatprep.subr.bf16.mxu0 0
    %5001 = vmatpush1.bf16.msra.mxu0 0
    %5002 = vmatprep.subr.bf16.mxu0 0
    %5003 = vmatpush1.bf16.msra.mxu0 0
    %5004 = vmatprep.subr.bf16.mxu0 0
    %5005 = vmatpush1.bf16.msra.mxu0 0
    %5006 = vmatprep.subr.bf16.mxu0 0
    %5007 = vmatpush1.bf16.msra.mxu0 0
    %5008 = vmatprep.mubr.bf16.mxu0 0
    %5009 = vmatmul.mubr.bf16.gmra.mrb[0].mxu0 %v4974
    %v5010 = vpop.f32.mrb[0].mxu0
    %v5011 = vadd.f32 %v4960, %v5010
    %v5012 = vpop.f32.mrb[0].mxu0
    %v5013 = vpop.f32.mrb[0].mxu0
    %v5014 = vadd.f32 %v4960, %v5013
    %v5015 = vpop.f32.mrb[0].mxu0
    %5016 = vdwg.mxu0
    %v5017 = vadd.f32 %v4361, %v5011
    %v5018 = vadd.f32 %v4362, %v5014
    %v5019 = vld [vmem:[%s4 + $0x200] sm:$0x3]
    %v5020 = vsel %vm968, %v5017, 0.0
    %5021 = vadd.xlane.f32.xlu0 %v5020
    %v5022 = vpop.xlane.xlu0 %5021
    %v5023 = vsel %vm968, %v5018, 0.0
    %5024 = vadd.xlane.f32.xlu0 %v5023
    %v5025 = vpop.xlane.xlu0 %5024
    %v5026 = vmul.f32 %v5022, %v2508
    %v5027 = vmul.f32 %v5025, %v2508
    %v5028 = vsub.f32 %v5017, %v5026
    %v5029 = vsub.f32 %v5018, %v5027
    %v5030 = vmul.f32 %v5028, %v5028
    %v5031 = vmul.f32 %v5029, %v5029
    %v5032 = vsel %vm968, %v5030, 0.0
    %5033 = vadd.xlane.f32.xlu0 %v5032
    %v5034 = vpop.xlane.xlu0 %5033
    %v5035 = vsel %vm968, %v5031, 0.0
    %5036 = vadd.xlane.f32.xlu0 %v5035
    %v5037 = vpop.xlane.xlu0 %5036
    %v5038 = vmul.f32 %v5034, %v2508
    %v5039 = vmul.f32 %v5037, %v2508
    %v5040 = vadd.f32 %v5038, 1e-12
    %v5041 = vadd.f32 %v5039, 1e-12
    %v5042 = vrsqrt.pop %v5040
    %v5043 = vrsqrt.pop %v5041
    %v5044 = vmul.f32 %v5028, %v5042
    %v5045 = vmul.f32 %v5029, %v5043
    %v5046 = vlaneseq
    %v5047 = vshrl.u32 %v5046, 7
    %v5048 = vsub.s32 0, %v5047
    %v5049 = vrot.slane %v5019, %v5048
    %v5050 = vmul.f32 %v5044, %v5049
    %v5051 = vmul.f32 %v5045, %v5049
    %v5052 = vlaneseq
    %v5053 = vshrl.u32 %v5052, 7
    %v5054 = vsub.s32 1, %v5053
    %v5055 = vrot.slane %v5019, %v5054
    %v5056 = vadd.f32 %v5050, %v5055
    %v5057 = vadd.f32 %v5051, %v5055
    %v5058 = vld [vmem:[%s3 + $0x570] sm:$0xf]
    %v5059 = vld [vmem:[%s3 + $0x578] sm:$0xf]
    %v5060 = vld [vmem:[%s3 + $0x580] sm:$0xf]
    %v5061 = vld [vmem:[%s3 + $0x588] sm:$0xf]
    %v5062 = vpack.c.bf16 %v5057, %v5056
    %v5063 = vld [vmem:[%s4 + $0x210] ss:$0 sm:$0xff]
    %v5068 = vunpack.c.l.b16 %v5058
    %v5069 = vunpack.c.l.b16 %v5059
    %v5070 = vunpack.c.l.b16 %v5060
    %v5071 = vunpack.c.l.b16 %v5061
    %v5072 = vpack.c.b16 %v5069, %v5068
    %v5073 = vpack.c.b16 %v5071, %v5070
    %v5077 = vsel %vm968, %v5062, 0
    %5079 = vmatprep.subr.bf16.mxu0 0
    %5080 = vmatpush1.bf16.msra.mxu0 %v5072
    %5081 = vmatprep.subr.bf16.mxu0 0
    %5082 = vmatpush1.bf16.msra.mxu0 %v5073
    %5083 = vmatprep.subr.bf16.mxu0 0
    %5084 = vmatpush1.bf16.msra.mxu0 0
    %5085 = vmatprep.subr.bf16.mxu0 0
    %5086 = vmatpush1.bf16.msra.mxu0 0
    %5087 = vmatprep.subr.bf16.mxu0 0
    %5088 = vmatpush1.bf16.msra.mxu0 0
    %5089 = vmatprep.subr.bf16.mxu0 0
    %5090 = vmatpush1.bf16.msra.mxu0 0
    %5091 = vmatprep.subr.bf16.mxu0 0
    %5092 = vmatpush1.bf16.msra.mxu0 0
    %5093 = vmatprep.subr.bf16.mxu0 0
    %5094 = vmatpush1.bf16.msra.mxu0 0
    %5095 = vmatprep.subr.bf16.mxu0 0
    %5096 = vmatpush1.bf16.msra.mxu0 0
    %5097 = vmatprep.subr.bf16.mxu0 0
    %5098 = vmatpush1.bf16.msra.mxu0 0
    %5099 = vmatprep.subr.bf16.mxu0 0
    %5100 = vmatpush1.bf16.msra.mxu0 0
    %5101 = vmatprep.subr.bf16.mxu0 0
    %5102 = vmatpush1.bf16.msra.mxu0 0
    %5103 = vmatprep.subr.bf16.mxu0 0
    %5104 = vmatpush1.bf16.msra.mxu0 0
    %5105 = vmatprep.subr.bf16.mxu0 0
    %5106 = vmatpush1.bf16.msra.mxu0 0
    %5107 = vmatprep.subr.bf16.mxu0 0
    %5108 = vmatpush1.bf16.msra.mxu0 0
    %5109 = vmatprep.subr.bf16.mxu0 0
    %5110 = vmatpush1.bf16.msra.mxu0 0
    %5111 = vmatprep.mubr.bf16.mxu0 0
    %5112 = vmatmul.mubr.bf16.gmra.mrb[0].mxu0 %v5077
    %v5113 = vpop.f32.mrb[0].mxu0
    %v5114 = vadd.f32 %v5063, %v5113
    %v5115 = vpop.f32.mrb[0].mxu0
    %v5116 = vpop.f32.mrb[0].mxu0
    %v5117 = vadd.f32 %v5063, %v5116
    %v5118 = vpop.f32.mrb[0].mxu0
    %5119 = vdwg.mxu0
    %v5120 = vld [vmem:[%s3 + $0x590] sm:$0xf]
    %v5121 = vld [vmem:[%s3 + $0x598] sm:$0xf]
    %v5122 = vld [vmem:[%s3 + $0x5a0] sm:$0xf]
    %v5123 = vld [vmem:[%s3 + $0x5a8] sm:$0xf]
    %v5124 = vld [vmem:[%s4 + $0x220] ss:$0 sm:$0xff]
    %v5129 = vunpack.c.l.b16 %v5120
    %v5130 = vunpack.c.l.b16 %v5121
    %v5131 = vunpack.c.l.b16 %v5122
    %v5132 = vunpack.c.l.b16 %v5123
    %v5133 = vpack.c.b16 %v5130, %v5129
    %v5134 = vpack.c.b16 %v5132, %v5131
    %5137 = vmatprep.subr.bf16.mxu0 0
    %5138 = vmatpush1.bf16.msra.mxu0 %v5133
    %5139 = vmatprep.subr.bf16.mxu0 0
    %5140 = vmatpush1.bf16.msra.mxu0 %v5134
    %5141 = vmatprep.subr.bf16.mxu0 0
    %5142 = vmatpush1.bf16.msra.mxu0 0
    %5143 = vmatprep.subr.bf16.mxu0 0
    %5144 = vmatpush1.bf16.msra.mxu0 0
    %5145 = vmatprep.subr.bf16.mxu0 0
    %5146 = vmatpush1.bf16.msra.mxu0 0
    %5147 = vmatprep.subr.bf16.mxu0 0
    %5148 = vmatpush1.bf16.msra.mxu0 0
    %5149 = vmatprep.subr.bf16.mxu0 0
    %5150 = vmatpush1.bf16.msra.mxu0 0
    %5151 = vmatprep.subr.bf16.mxu0 0
    %5152 = vmatpush1.bf16.msra.mxu0 0
    %5153 = vmatprep.subr.bf16.mxu0 0
    %5154 = vmatpush1.bf16.msra.mxu0 0
    %5155 = vmatprep.subr.bf16.mxu0 0
    %5156 = vmatpush1.bf16.msra.mxu0 0
    %5157 = vmatprep.subr.bf16.mxu0 0
    %5158 = vmatpush1.bf16.msra.mxu0 0
    %5159 = vmatprep.subr.bf16.mxu0 0
    %5160 = vmatpush1.bf16.msra.mxu0 0
    %5161 = vmatprep.subr.bf16.mxu0 0
    %5162 = vmatpush1.bf16.msra.mxu0 0
    %5163 = vmatprep.subr.bf16.mxu0 0
    %5164 = vmatpush1.bf16.msra.mxu0 0
    %5165 = vmatprep.subr.bf16.mxu0 0
    %5166 = vmatpush1.bf16.msra.mxu0 0
    %5167 = vmatprep.subr.bf16.mxu0 0
    %5168 = vmatpush1.bf16.msra.mxu0 0
    %5169 = vmatprep.mubr.bf16.mxu0 0
    %5170 = vmatmul.mubr.bf16.gmra.mrb[0].mxu0 %v3451
    %v5171 = vpop.f32.mrb[0].mxu0
    %v5172 = vadd.f32 %v5124, %v5171
    %v5173 = vpop.f32.mrb[0].mxu0
    %v5174 = vpop.f32.mrb[0].mxu0
    %v5175 = vadd.f32 %v5124, %v5174
    %v5176 = vpop.f32.mrb[0].mxu0
    %5177 = vdwg.mxu0
    %v5178 = vpack.c.bf16 %v5117, %v5114
    %v5179 = vpack.c.bf16 %v5175, %v5172
    %v5181 = vsel %vm2739, %v5178, 0
    %v5184 = vsel %vm2739, %v5179, 0
    %5186 = vmatprep.subr.bf16.mxu0 0
    %5187 = vmatpush1.bf16.xpose.msra.mxu0 %v5184
    %5188 = vmatprep.subr.bf16.mxu0 0
    %5189 = vmatpush1.bf16.xpose.msra.mxu0 0
    %5190 = vmatprep.subr.bf16.mxu0 0
    %5191 = vmatpush1.bf16.xpose.msra.mxu0 0
    %5192 = vmatprep.subr.bf16.mxu0 0
    %5193 = vmatpush1.bf16.xpose.msra.mxu0 0
    %5194 = vmatprep.subr.bf16.mxu0 0
    %5195 = vmatpush1.bf16.xpose.msra.mxu0 0
    %5196 = vmatprep.subr.bf16.mxu0 0
    %5197 = vmatpush1.bf16.xpose.msra.mxu0 0
    %5198 = vmatprep.subr.bf16.mxu0 0
    %5199 = vmatpush1.bf16.xpose.msra.mxu0 0
    %5200 = vmatprep.subr.bf16.mxu0 0
    %5201 = vmatpush1.bf16.xpose.msra.mxu0 0
    %5202 = vmatprep.subr.bf16.mxu0 0
    %5203 = vmatpush1.bf16.xpose.msra.mxu0 0
    %5204 = vmatprep.subr.bf16.mxu0 0
    %5205 = vmatpush1.bf16.xpose.msra.mxu0 0
    %5206 = vmatprep.subr.bf16.mxu0 0
    %5207 = vmatpush1.bf16.xpose.msra.mxu0 0
    %5208 = vmatprep.subr.bf16.mxu0 0
    %5209 = vmatpush1.bf16.xpose.msra.mxu0 0
    %5210 = vmatprep.subr.bf16.mxu0 0
    %5211 = vmatpush1.bf16.xpose.msra.mxu0 0
    %5212 = vmatprep.subr.bf16.mxu0 0
    %5213 = vmatpush1.bf16.xpose.msra.mxu0 0
    %5214 = vmatprep.subr.bf16.mxu0 0
    %5215 = vmatpush1.bf16.xpose.msra.mxu0 0
    %5216 = vmatprep.subr.bf16.mxu0 0
    %5217 = vmatpush1.bf16.xpose.msra.mxu0 0
    %5218 = vmatprep.mubr.bf16.mxu0 0
    %5219 = vmatmul.mubr.bf16.gmra.mrb[0].mxu0 %v5181
    %v5220 = vpop.f32.mrb[0].mxu0
    %v5221 = vadd.f32 0.0, %v5220
    %v5222 = vpop.f32.mrb[0].mxu0
    %v5223 = vpop.f32.mrb[0].mxu0
    %v5224 = vadd.f32 0.0, %v5223
    %v5225 = vpop.f32.mrb[0].mxu0
    %5226 = vdwg.mxu0
    %v5227 = vmul.f32 %v5221, 0.35355338
    %v5228 = vmul.f32 %v5224, 0.35355338
    %v5229 = vadd.f32 %v5227, %v102
    %v5230 = vadd.f32 %v5228, %v103
    %v5231 = vsel %vm486, %v5229, -inf
    %5232 = vmax.xlane.f32.xlu0 %v5231
    %v5233 = vpop.xlane.xlu0 %5232
    %v5234 = vsel %vm486, %v5230, -inf
    %5235 = vmax.xlane.f32.xlu0 %v5234
    %v5236 = vpop.xlane.xlu0 %5235
    %v5237 = vsub.f32 %v5229, %v5233
    %v5238 = vsub.f32 %v5230, %v5236
    %v5239 = vmul.f32 %v5237, 1.442695
    %v5240 = vpow.pop %v5239
    %v5241 = vmul.f32 %v5238, 1.442695
    %v5242 = vpow.pop %v5241
    %v5243 = vsel %vm486, %v5240, 0.0
    %5244 = vadd.xlane.f32.xlu0 %v5243
    %v5245 = vpop.xlane.xlu0 %5244
    %v5246 = vsel %vm486, %v5242, 0.0
    %5247 = vadd.xlane.f32.xlu0 %v5246
    %v5248 = vpop.xlane.xlu0 %5247
    %v5249 = vrcp.pop %v5245
    %v5250 = vmul.f32 %v5240, %v5249
    %v5251 = vrcp.pop %v5248
    %v5252 = vmul.f32 %v5242, %v5251
    %v5253 = vpack.c.bf16 %v5252, %v5250
    %5255 = vrot.lane.b32.xlu0 %v5179, 96
    %v5256 = vpop.permute.xlu0 %5255
    %v5258 = vsel %vm486, %v5253, 0
    %v5261 = vsel %vm515, %v5256, 0
    %5263 = vmatprep.subr.bf16.mxu0 0
    %5264 = vmatpush1.bf16.msra.mxu0 %v5261
    %5265 = vmatprep.subr.bf16.mxu0 0
    %5266 = vmatpush1.bf16.msra.mxu0 0
    %5267 = vmatprep.subr.bf16.mxu0 0
    %5268 = vmatpush1.bf16.msra.mxu0 0
    %5269 = vmatprep.subr.bf16.mxu0 0
    %5270 = vmatpush1.bf16.msra.mxu0 0
    %5271 = vmatprep.subr.bf16.mxu0 0
    %5272 = vmatpush1.bf16.msra.mxu0 0
    %5273 = vmatprep.subr.bf16.mxu0 0
    %5274 = vmatpush1.bf16.msra.mxu0 0
    %5275 = vmatprep.subr.bf16.mxu0 0
    %5276 = vmatpush1.bf16.msra.mxu0 0
    %5277 = vmatprep.subr.bf16.mxu0 0
    %5278 = vmatpush1.bf16.msra.mxu0 0
    %5279 = vmatprep.subr.bf16.mxu0 0
    %5280 = vmatpush1.bf16.msra.mxu0 0
    %5281 = vmatprep.subr.bf16.mxu0 0
    %5282 = vmatpush1.bf16.msra.mxu0 0
    %5283 = vmatprep.subr.bf16.mxu0 0
    %5284 = vmatpush1.bf16.msra.mxu0 0
    %5285 = vmatprep.subr.bf16.mxu0 0
    %5286 = vmatpush1.bf16.msra.mxu0 0
    %5287 = vmatprep.subr.bf16.mxu0 0
    %5288 = vmatpush1.bf16.msra.mxu0 0
    %5289 = vmatprep.subr.bf16.mxu0 0
    %5290 = vmatpush1.bf16.msra.mxu0 0
    %5291 = vmatprep.subr.bf16.mxu0 0
    %5292 = vmatpush1.bf16.msra.mxu0 0
    %5293 = vmatprep.subr.bf16.mxu0 0
    %5294 = vmatpush1.bf16.msra.mxu0 0
    %5295 = vmatprep.mubr.bf16.mxu0 0
    %5296 = vmatmul.mubr.bf16.gmra.mrb[0].mxu0 %v5258
    %v5297 = vpop.f32.mrb[0].mxu0
    %v5298 = vadd.f32 0.0, %v5297
    %v5299 = vpop.f32.mrb[0].mxu0
    %v5300 = vpop.f32.mrb[0].mxu0
    %v5301 = vadd.f32 0.0, %v5300
    %v5302 = vpop.f32.mrb[0].mxu0
    %5303 = vdwg.mxu0
    %5305 = vrot.lane.b32.xlu0 %v5178, 120
    %v5306 = vpop.permute.xlu0 %5305
    %5307 = vrot.lane.b32.xlu0 %v5179, 120
    %v5308 = vpop.permute.xlu0 %5307
    %v5310 = vsel %vm2739, %v5306, 0
    %v5313 = vsel %vm2739, %v5308, 0
    %5315 = vmatprep.subr.bf16.mxu0 0
    %5316 = vmatpush1.bf16.xpose.msra.mxu0 %v5313
    %5317 = vmatprep.subr.bf16.mxu0 0
    %5318 = vmatpush1.bf16.xpose.msra.mxu0 0
    %5319 = vmatprep.subr.bf16.mxu0 0
    %5320 = vmatpush1.bf16.xpose.msra.mxu0 0
    %5321 = vmatprep.subr.bf16.mxu0 0
    %5322 = vmatpush1.bf16.xpose.msra.mxu0 0
    %5323 = vmatprep.subr.bf16.mxu0 0
    %5324 = vmatpush1.bf16.xpose.msra.mxu0 0
    %5325 = vmatprep.subr.bf16.mxu0 0
    %5326 = vmatpush1.bf16.xpose.msra.mxu0 0
    %5327 = vmatprep.subr.bf16.mxu0 0
    %5328 = vmatpush1.bf16.xpose.msra.mxu0 0
    %5329 = vmatprep.subr.bf16.mxu0 0
    %5330 = vmatpush1.bf16.xpose.msra.mxu0 0
    %5331 = vmatprep.subr.bf16.mxu0 0
    %5332 = vmatpush1.bf16.xpose.msra.mxu0 0
    %5333 = vmatprep.subr.bf16.mxu0 0
    %5334 = vmatpush1.bf16.xpose.msra.mxu0 0
    %5335 = vmatprep.subr.bf16.mxu0 0
    %5336 = vmatpush1.bf16.xpose.msra.mxu0 0
    %5337 = vmatprep.subr.bf16.mxu0 0
    %5338 = vmatpush1.bf16.xpose.msra.mxu0 0
    %5339 = vmatprep.subr.bf16.mxu0 0
    %5340 = vmatpush1.bf16.xpose.msra.mxu0 0
    %5341 = vmatprep.subr.bf16.mxu0 0
    %5342 = vmatpush1.bf16.xpose.msra.mxu0 0
    %5343 = vmatprep.subr.bf16.mxu0 0
    %5344 = vmatpush1.bf16.xpose.msra.mxu0 0
    %5345 = vmatprep.subr.bf16.mxu0 0
    %5346 = vmatpush1.bf16.xpose.msra.mxu0 0
    %5347 = vmatprep.mubr.bf16.mxu0 0
    %5348 = vmatmul.mubr.bf16.gmra.mrb[0].mxu0 %v5310
    %v5349 = vpop.f32.mrb[0].mxu0
    %v5350 = vadd.f32 0.0, %v5349
    %v5351 = vpop.f32.mrb[0].mxu0
    %v5352 = vpop.f32.mrb[0].mxu0
    %v5353 = vadd.f32 0.0, %v5352
    %v5354 = vpop.f32.mrb[0].mxu0
    %5355 = vdwg.mxu0
    %v5356 = vmul.f32 %v5350, 0.35355338
    %v5357 = vmul.f32 %v5353, 0.35355338
    %v5358 = vadd.f32 %v5356, %v102
    %v5359 = vadd.f32 %v5357, %v103
    %v5360 = vsel %vm486, %v5358, -inf
    %5361 = vmax.xlane.f32.xlu0 %v5360
    %v5362 = vpop.xlane.xlu0 %5361
    %v5363 = vsel %vm486, %v5359, -inf
    %5364 = vmax.xlane.f32.xlu0 %v5363
    %v5365 = vpop.xlane.xlu0 %5364
    %v5366 = vsub.f32 %v5358, %v5362
    %v5367 = vsub.f32 %v5359, %v5365
    %v5368 = vmul.f32 %v5366, 1.442695
    %v5369 = vpow.pop %v5368
    %v5370 = vmul.f32 %v5367, 1.442695
    %v5371 = vpow.pop %v5370
    %v5372 = vsel %vm486, %v5369, 0.0
    %5373 = vadd.xlane.f32.xlu0 %v5372
    %v5374 = vpop.xlane.xlu0 %5373
    %v5375 = vsel %vm486, %v5371, 0.0
    %5376 = vadd.xlane.f32.xlu0 %v5375
    %v5377 = vpop.xlane.xlu0 %5376
    %v5378 = vrcp.pop %v5374
    %v5379 = vmul.f32 %v5369, %v5378
    %v5380 = vrcp.pop %v5377
    %v5381 = vmul.f32 %v5371, %v5380
    %v5382 = vpack.c.bf16 %v5381, %v5379
    %5383 = vrot.lane.b32.xlu0 %v5179, 88
    %v5384 = vpop.permute.xlu0 %5383
    %v5386 = vsel %vm486, %v5382, 0
    %v5389 = vsel %vm515, %v5384, 0
    %5391 = vmatprep.subr.bf16.mxu0 0
    %5392 = vmatpush1.bf16.msra.mxu0 %v5389
    %5393 = vmatprep.subr.bf16.mxu0 0
    %5394 = vmatpush1.bf16.msra.mxu0 0
    %5395 = vmatprep.subr.bf16.mxu0 0
    %5396 = vmatpush1.bf16.msra.mxu0 0
    %5397 = vmatprep.subr.bf16.mxu0 0
    %5398 = vmatpush1.bf16.msra.mxu0 0
    %5399 = vmatprep.subr.bf16.mxu0 0
    %5400 = vmatpush1.bf16.msra.mxu0 0
    %5401 = vmatprep.subr.bf16.mxu0 0
    %5402 = vmatpush1.bf16.msra.mxu0 0
    %5403 = vmatprep.subr.bf16.mxu0 0
    %5404 = vmatpush1.bf16.msra.mxu0 0
    %5405 = vmatprep.subr.bf16.mxu0 0
    %5406 = vmatpush1.bf16.msra.mxu0 0
    %5407 = vmatprep.subr.bf16.mxu0 0
    %5408 = vmatpush1.bf16.msra.mxu0 0
    %5409 = vmatprep.subr.bf16.mxu0 0
    %5410 = vmatpush1.bf16.msra.mxu0 0
    %5411 = vmatprep.subr.bf16.mxu0 0
    %5412 = vmatpush1.bf16.msra.mxu0 0
    %5413 = vmatprep.subr.bf16.mxu0 0
    %5414 = vmatpush1.bf16.msra.mxu0 0
    %5415 = vmatprep.subr.bf16.mxu0 0
    %5416 = vmatpush1.bf16.msra.mxu0 0
    %5417 = vmatprep.subr.bf16.mxu0 0
    %5418 = vmatpush1.bf16.msra.mxu0 0
    %5419 = vmatprep.subr.bf16.mxu0 0
    %5420 = vmatpush1.bf16.msra.mxu0 0
    %5421 = vmatprep.subr.bf16.mxu0 0
    %5422 = vmatpush1.bf16.msra.mxu0 0
    %5423 = vmatprep.mubr.bf16.mxu0 0
    %5424 = vmatmul.mubr.bf16.gmra.mrb[0].mxu0 %v5386
    %v5425 = vpop.f32.mrb[0].mxu0
    %v5426 = vadd.f32 0.0, %v5425
    %v5427 = vpop.f32.mrb[0].mxu0
    %v5428 = vpop.f32.mrb[0].mxu0
    %v5429 = vadd.f32 0.0, %v5428
    %v5430 = vpop.f32.mrb[0].mxu0
    %5431 = vdwg.mxu0
    %5432 = vrot.lane.b32.xlu0 %v5178, 112
    %v5433 = vpop.permute.xlu0 %5432
    %5434 = vrot.lane.b32.xlu0 %v5179, 112
    %v5435 = vpop.permute.xlu0 %5434
    %v5437 = vsel %vm2739, %v5433, 0
    %v5440 = vsel %vm2739, %v5435, 0
    %5442 = vmatprep.subr.bf16.mxu0 0
    %5443 = vmatpush1.bf16.xpose.msra.mxu0 %v5440
    %5444 = vmatprep.subr.bf16.mxu0 0
    %5445 = vmatpush1.bf16.xpose.msra.mxu0 0
    %5446 = vmatprep.subr.bf16.mxu0 0
    %5447 = vmatpush1.bf16.xpose.msra.mxu0 0
    %5448 = vmatprep.subr.bf16.mxu0 0
    %5449 = vmatpush1.bf16.xpose.msra.mxu0 0
    %5450 = vmatprep.subr.bf16.mxu0 0
    %5451 = vmatpush1.bf16.xpose.msra.mxu0 0
    %5452 = vmatprep.subr.bf16.mxu0 0
    %5453 = vmatpush1.bf16.xpose.msra.mxu0 0
    %5454 = vmatprep.subr.bf16.mxu0 0
    %5455 = vmatpush1.bf16.xpose.msra.mxu0 0
    %5456 = vmatprep.subr.bf16.mxu0 0
    %5457 = vmatpush1.bf16.xpose.msra.mxu0 0
    %5458 = vmatprep.subr.bf16.mxu0 0
    %5459 = vmatpush1.bf16.xpose.msra.mxu0 0
    %5460 = vmatprep.subr.bf16.mxu0 0
    %5461 = vmatpush1.bf16.xpose.msra.mxu0 0
    %5462 = vmatprep.subr.bf16.mxu0 0
    %5463 = vmatpush1.bf16.xpose.msra.mxu0 0
    %5464 = vmatprep.subr.bf16.mxu0 0
    %5465 = vmatpush1.bf16.xpose.msra.mxu0 0
    %5466 = vmatprep.subr.bf16.mxu0 0
    %5467 = vmatpush1.bf16.xpose.msra.mxu0 0
    %5468 = vmatprep.subr.bf16.mxu0 0
    %5469 = vmatpush1.bf16.xpose.msra.mxu0 0
    %5470 = vmatprep.subr.bf16.mxu0 0
    %5471 = vmatpush1.bf16.xpose.msra.mxu0 0
    %5472 = vmatprep.subr.bf16.mxu0 0
    %5473 = vmatpush1.bf16.xpose.msra.mxu0 0
    %5474 = vmatprep.mubr.bf16.mxu0 0
    %5475 = vmatmul.mubr.bf16.gmra.mrb[0].mxu0 %v5437
    %v5476 = vpop.f32.mrb[0].mxu0
    %v5477 = vadd.f32 0.0, %v5476
    %v5478 = vpop.f32.mrb[0].mxu0
    %v5479 = vpop.f32.mrb[0].mxu0
    %v5480 = vadd.f32 0.0, %v5479
    %v5481 = vpop.f32.mrb[0].mxu0
    %5482 = vdwg.mxu0
    %v5483 = vmul.f32 %v5477, 0.35355338
    %v5484 = vmul.f32 %v5480, 0.35355338
    %v5485 = vadd.f32 %v5483, %v102
    %v5486 = vadd.f32 %v5484, %v103
    %v5487 = vsel %vm486, %v5485, -inf
    %5488 = vmax.xlane.f32.xlu0 %v5487
    %v5489 = vpop.xlane.xlu0 %5488
    %v5490 = vsel %vm486, %v5486, -inf
    %5491 = vmax.xlane.f32.xlu0 %v5490
    %v5492 = vpop.xlane.xlu0 %5491
    %v5493 = vsub.f32 %v5485, %v5489
    %v5494 = vsub.f32 %v5486, %v5492
    %v5495 = vmul.f32 %v5493, 1.442695
    %v5496 = vpow.pop %v5495
    %v5497 = vmul.f32 %v5494, 1.442695
    %v5498 = vpow.pop %v5497
    %v5499 = vsel %vm486, %v5496, 0.0
    %5500 = vadd.xlane.f32.xlu0 %v5499
    %v5501 = vpop.xlane.xlu0 %5500
    %v5502 = vsel %vm486, %v5498, 0.0
    %5503 = vadd.xlane.f32.xlu0 %v5502
    %v5504 = vpop.xlane.xlu0 %5503
    %v5505 = vrcp.pop %v5501
    %v5506 = vmul.f32 %v5496, %v5505
    %v5507 = vrcp.pop %v5504
    %v5508 = vmul.f32 %v5498, %v5507
    %v5509 = vpack.c.bf16 %v5508, %v5506
    %5510 = vrot.lane.b32.xlu0 %v5179, 80
    %v5511 = vpop.permute.xlu0 %5510
    %v5513 = vsel %vm486, %v5509, 0
    %v5516 = vsel %vm515, %v5511, 0
    %5518 = vmatprep.subr.bf16.mxu0 0
    %5519 = vmatpush1.bf16.msra.mxu0 %v5516
    %5520 = vmatprep.subr.bf16.mxu0 0
    %5521 = vmatpush1.bf16.msra.mxu0 0
    %5522 = vmatprep.subr.bf16.mxu0 0
    %5523 = vmatpush1.bf16.msra.mxu0 0
    %5524 = vmatprep.subr.bf16.mxu0 0
    %5525 = vmatpush1.bf16.msra.mxu0 0
    %5526 = vmatprep.subr.bf16.mxu0 0
    %5527 = vmatpush1.bf16.msra.mxu0 0
    %5528 = vmatprep.subr.bf16.mxu0 0
    %5529 = vmatpush1.bf16.msra.mxu0 0
    %5530 = vmatprep.subr.bf16.mxu0 0
    %5531 = vmatpush1.bf16.msra.mxu0 0
    %5532 = vmatprep.subr.bf16.mxu0 0
    %5533 = vmatpush1.bf16.msra.mxu0 0
    %5534 = vmatprep.subr.bf16.mxu0 0
    %5535 = vmatpush1.bf16.msra.mxu0 0
    %5536 = vmatprep.subr.bf16.mxu0 0
    %5537 = vmatpush1.bf16.msra.mxu0 0
    %5538 = vmatprep.subr.bf16.mxu0 0
    %5539 = vmatpush1.bf16.msra.mxu0 0
    %5540 = vmatprep.subr.bf16.mxu0 0
    %5541 = vmatpush1.bf16.msra.mxu0 0
    %5542 = vmatprep.subr.bf16.mxu0 0
    %5543 = vmatpush1.bf16.msra.mxu0 0
    %5544 = vmatprep.subr.bf16.mxu0 0
    %5545 = vmatpush1.bf16.msra.mxu0 0
    %5546 = vmatprep.subr.bf16.mxu0 0
    %5547 = vmatpush1.bf16.msra.mxu0 0
    %5548 = vmatprep.subr.bf16.mxu0 0
    %5549 = vmatpush1.bf16.msra.mxu0 0
    %5550 = vmatprep.mubr.bf16.mxu0 0
    %5551 = vmatmul.mubr.bf16.gmra.mrb[0].mxu0 %v5513
    %v5552 = vpop.f32.mrb[0].mxu0
    %v5553 = vadd.f32 0.0, %v5552
    %v5554 = vpop.f32.mrb[0].mxu0
    %v5555 = vpop.f32.mrb[0].mxu0
    %v5556 = vadd.f32 0.0, %v5555
    %v5557 = vpop.f32.mrb[0].mxu0
    %5558 = vdwg.mxu0
    %5559 = vrot.lane.b32.xlu0 %v5178, 104
    %v5560 = vpop.permute.xlu0 %5559
    %5561 = vrot.lane.b32.xlu0 %v5179, 104
    %v5562 = vpop.permute.xlu0 %5561
    %v5564 = vsel %vm2739, %v5560, 0
    %v5567 = vsel %vm2739, %v5562, 0
    %5569 = vmatprep.subr.bf16.mxu0 0
    %5570 = vmatpush1.bf16.xpose.msra.mxu0 %v5567
    %5571 = vmatprep.subr.bf16.mxu0 0
    %5572 = vmatpush1.bf16.xpose.msra.mxu0 0
    %5573 = vmatprep.subr.bf16.mxu0 0
    %5574 = vmatpush1.bf16.xpose.msra.mxu0 0
    %5575 = vmatprep.subr.bf16.mxu0 0
    %5576 = vmatpush1.bf16.xpose.msra.mxu0 0
    %5577 = vmatprep.subr.bf16.mxu0 0
    %5578 = vmatpush1.bf16.xpose.msra.mxu0 0
    %5579 = vmatprep.subr.bf16.mxu0 0
    %5580 = vmatpush1.bf16.xpose.msra.mxu0 0
    %5581 = vmatprep.subr.bf16.mxu0 0
    %5582 = vmatpush1.bf16.xpose.msra.mxu0 0
    %5583 = vmatprep.subr.bf16.mxu0 0
    %5584 = vmatpush1.bf16.xpose.msra.mxu0 0
    %5585 = vmatprep.subr.bf16.mxu0 0
    %5586 = vmatpush1.bf16.xpose.msra.mxu0 0
    %5587 = vmatprep.subr.bf16.mxu0 0
    %5588 = vmatpush1.bf16.xpose.msra.mxu0 0
    %5589 = vmatprep.subr.bf16.mxu0 0
    %5590 = vmatpush1.bf16.xpose.msra.mxu0 0
    %5591 = vmatprep.subr.bf16.mxu0 0
    %5592 = vmatpush1.bf16.xpose.msra.mxu0 0
    %5593 = vmatprep.subr.bf16.mxu0 0
    %5594 = vmatpush1.bf16.xpose.msra.mxu0 0
    %5595 = vmatprep.subr.bf16.mxu0 0
    %5596 = vmatpush1.bf16.xpose.msra.mxu0 0
    %5597 = vmatprep.subr.bf16.mxu0 0
    %5598 = vmatpush1.bf16.xpose.msra.mxu0 0
    %5599 = vmatprep.subr.bf16.mxu0 0
    %5600 = vmatpush1.bf16.xpose.msra.mxu0 0
    %5601 = vmatprep.mubr.bf16.mxu0 0
    %5602 = vmatmul.mubr.bf16.gmra.mrb[0].mxu0 %v5564
    %v5603 = vpop.f32.mrb[0].mxu0
    %v5604 = vadd.f32 0.0, %v5603
    %v5605 = vpop.f32.mrb[0].mxu0
    %v5606 = vpop.f32.mrb[0].mxu0
    %v5607 = vadd.f32 0.0, %v5606
    %v5608 = vpop.f32.mrb[0].mxu0
    %5609 = vdwg.mxu0
    %v5610 = vmul.f32 %v5604, 0.35355338
    %v5611 = vmul.f32 %v5607, 0.35355338
    %v5612 = vadd.f32 %v5610, %v102
    %v5613 = vadd.f32 %v5611, %v103
    %v5614 = vsel %vm486, %v5612, -inf
    %5615 = vmax.xlane.f32.xlu0 %v5614
    %v5616 = vpop.xlane.xlu0 %5615
    %v5617 = vsel %vm486, %v5613, -inf
    %5618 = vmax.xlane.f32.xlu0 %v5617
    %v5619 = vpop.xlane.xlu0 %5618
    %v5620 = vsub.f32 %v5612, %v5616
    %v5621 = vsub.f32 %v5613, %v5619
    %v5622 = vmul.f32 %v5620, 1.442695
    %v5623 = vpow.pop %v5622
    %v5624 = vmul.f32 %v5621, 1.442695
    %v5625 = vpow.pop %v5624
    %v5626 = vsel %vm486, %v5623, 0.0
    %5627 = vadd.xlane.f32.xlu0 %v5626
    %v5628 = vpop.xlane.xlu0 %5627
    %v5629 = vsel %vm486, %v5625, 0.0
    %5630 = vadd.xlane.f32.xlu0 %v5629
    %v5631 = vpop.xlane.xlu0 %5630
    %v5632 = vrcp.pop %v5628
    %v5633 = vmul.f32 %v5623, %v5632
    %v5634 = vrcp.pop %v5631
    %v5635 = vmul.f32 %v5625, %v5634
    %v5636 = vpack.c.bf16 %v5635, %v5633
    %5637 = vrot.lane.b32.xlu0 %v5179, 72
    %v5638 = vpop.permute.xlu0 %5637
    %v5640 = vsel %vm486, %v5636, 0
    %v5643 = vsel %vm515, %v5638, 0
    %5645 = vmatprep.subr.bf16.mxu0 0
    %5646 = vmatpush1.bf16.msra.mxu0 %v5643
    %5647 = vmatprep.subr.bf16.mxu0 0
    %5648 = vmatpush1.bf16.msra.mxu0 0
    %5649 = vmatprep.subr.bf16.mxu0 0
    %5650 = vmatpush1.bf16.msra.mxu0 0
    %5651 = vmatprep.subr.bf16.mxu0 0
    %5652 = vmatpush1.bf16.msra.mxu0 0
    %5653 = vmatprep.subr.bf16.mxu0 0
    %5654 = vmatpush1.bf16.msra.mxu0 0
    %5655 = vmatprep.subr.bf16.mxu0 0
    %5656 = vmatpush1.bf16.msra.mxu0 0
    %5657 = vmatprep.subr.bf16.mxu0 0
    %5658 = vmatpush1.bf16.msra.mxu0 0
    %5659 = vmatprep.subr.bf16.mxu0 0
    %5660 = vmatpush1.bf16.msra.mxu0 0
    %5661 = vmatprep.subr.bf16.mxu0 0
    %5662 = vmatpush1.bf16.msra.mxu0 0
    %5663 = vmatprep.subr.bf16.mxu0 0
    %5664 = vmatpush1.bf16.msra.mxu0 0
    %5665 = vmatprep.subr.bf16.mxu0 0
    %5666 = vmatpush1.bf16.msra.mxu0 0
    %5667 = vmatprep.subr.bf16.mxu0 0
    %5668 = vmatpush1.bf16.msra.mxu0 0
    %5669 = vmatprep.subr.bf16.mxu0 0
    %5670 = vmatpush1.bf16.msra.mxu0 0
    %5671 = vmatprep.subr.bf16.mxu0 0
    %5672 = vmatpush1.bf16.msra.mxu0 0
    %5673 = vmatprep.subr.bf16.mxu0 0
    %5674 = vmatpush1.bf16.msra.mxu0 0
    %5675 = vmatprep.subr.bf16.mxu0 0
    %5676 = vmatpush1.bf16.msra.mxu0 0
    %5677 = vmatprep.mubr.bf16.mxu0 0
    %5678 = vmatmul.mubr.bf16.gmra.mrb[0].mxu0 %v5640
    %v5679 = vpop.f32.mrb[0].mxu0
    %v5680 = vadd.f32 0.0, %v5679
    %v5681 = vpop.f32.mrb[0].mxu0
    %v5682 = vpop.f32.mrb[0].mxu0
    %v5683 = vadd.f32 0.0, %v5682
    %v5684 = vpop.f32.mrb[0].mxu0
    %5685 = vdwg.mxu0
    %5688 = vrot.lane.b32.xlu0 %v5426, 8
    %v5689 = vpop.permute.xlu0 %5688
    %5690 = vrot.lane.b32.xlu0 %v5429, 8
    %v5691 = vpop.permute.xlu0 %5690
    %5696 = vrot.lane.b32.xlu0 %v5553, 16
    %v5697 = vpop.permute.xlu0 %5696
    %5698 = vrot.lane.b32.xlu0 %v5556, 16
    %v5699 = vpop.permute.xlu0 %5698
    %5704 = vrot.lane.b32.xlu0 %v5680, 24
    %v5705 = vpop.permute.xlu0 %5704
    %5706 = vrot.lane.b32.xlu0 %v5683, 24
    %v5707 = vpop.permute.xlu0 %5706
    %v5710 = vsel %vm2739, %v5298, %v5689
    %v5711 = vsel %vm2739, %v5301, %v5691
    %v5712 = vsel %vm434, %v5710, %v5697
    %v5713 = vsel %vm434, %v5711, %v5699
    %v5714 = vsel %vm3264, %v5712, %v5705
    %v5715 = vsel %vm3264, %v5713, %v5707
    %v5716 = vld [vmem:[%s3 + $0x5b0] sm:$0xf]
    %v5717 = vld [vmem:[%s3 + $0x5b8] sm:$0xf]
    %v5718 = vld [vmem:[%s3 + $0x5c0] sm:$0xf]
    %v5719 = vld [vmem:[%s3 + $0x5c8] sm:$0xf]
    %v5720 = vpack.c.bf16 %v5715, %v5714
    %v5721 = vld [vmem:[%s4 + $0x230] ss:$0 sm:$0xff]
    %v5726 = vunpack.c.l.b16 %v5716
    %v5727 = vunpack.c.l.b16 %v5717
    %v5728 = vunpack.c.l.b16 %v5718
    %v5729 = vunpack.c.l.b16 %v5719
    %v5730 = vpack.c.b16 %v5727, %v5726
    %v5731 = vpack.c.b16 %v5729, %v5728
    %v5735 = vsel %vm968, %v5720, 0
    %5737 = vmatprep.subr.bf16.mxu0 0
    %5738 = vmatpush1.bf16.msra.mxu0 %v5730
    %5739 = vmatprep.subr.bf16.mxu0 0
    %5740 = vmatpush1.bf16.msra.mxu0 %v5731
    %5741 = vmatprep.subr.bf16.mxu0 0
    %5742 = vmatpush1.bf16.msra.mxu0 0
    %5743 = vmatprep.subr.bf16.mxu0 0
    %5744 = vmatpush1.bf16.msra.mxu0 0
    %5745 = vmatprep.subr.bf16.mxu0 0
    %5746 = vmatpush1.bf16.msra.mxu0 0
    %5747 = vmatprep.subr.bf16.mxu0 0
    %5748 = vmatpush1.bf16.msra.mxu0 0
    %5749 = vmatprep.subr.bf16.mxu0 0
    %5750 = vmatpush1.bf16.msra.mxu0 0
    %5751 = vmatprep.subr.bf16.mxu0 0
    %5752 = vmatpush1.bf16.msra.mxu0 0
    %5753 = vmatprep.subr.bf16.mxu0 0
    %5754 = vmatpush1.bf16.msra.mxu0 0
    %5755 = vmatprep.subr.bf16.mxu0 0
    %5756 = vmatpush1.bf16.msra.mxu0 0
    %5757 = vmatprep.subr.bf16.mxu0 0
    %5758 = vmatpush1.bf16.msra.mxu0 0
    %5759 = vmatprep.subr.bf16.mxu0 0
    %5760 = vmatpush1.bf16.msra.mxu0 0
    %5761 = vmatprep.subr.bf16.mxu0 0
    %5762 = vmatpush1.bf16.msra.mxu0 0
    %5763 = vmatprep.subr.bf16.mxu0 0
    %5764 = vmatpush1.bf16.msra.mxu0 0
    %5765 = vmatprep.subr.bf16.mxu0 0
    %5766 = vmatpush1.bf16.msra.mxu0 0
    %5767 = vmatprep.subr.bf16.mxu0 0
    %5768 = vmatpush1.bf16.msra.mxu0 0
    %5769 = vmatprep.mubr.bf16.mxu0 0
    %5770 = vmatmul.mubr.bf16.gmra.mrb[0].mxu0 %v5735
    %v5771 = vpop.f32.mrb[0].mxu0
    %v5772 = vadd.f32 %v5721, %v5771
    %v5773 = vpop.f32.mrb[0].mxu0
    %v5774 = vpop.f32.mrb[0].mxu0
    %v5775 = vadd.f32 %v5721, %v5774
    %v5776 = vpop.f32.mrb[0].mxu0
    %5777 = vdwg.mxu0
    %v5778 = vadd.f32 %v5056, %v5772
    %v5779 = vadd.f32 %v5057, %v5775
    %v5780 = vld [vmem:[%s4 + $0x240] sm:$0x3]
    %v5781 = vsel %vm968, %v5778, 0.0
    %5782 = vadd.xlane.f32.xlu0 %v5781
    %v5783 = vpop.xlane.xlu0 %5782
    %v5784 = vsel %vm968, %v5779, 0.0
    %5785 = vadd.xlane.f32.xlu0 %v5784
    %v5786 = vpop.xlane.xlu0 %5785
    %v5787 = vmul.f32 %v5783, %v2508
    %v5788 = vmul.f32 %v5786, %v2508
    %v5789 = vsub.f32 %v5778, %v5787
    %v5790 = vsub.f32 %v5779, %v5788
    %v5791 = vmul.f32 %v5789, %v5789
    %v5792 = vmul.f32 %v5790, %v5790
    %v5793 = vsel %vm968, %v5791, 0.0
    %5794 = vadd.xlane.f32.xlu0 %v5793
    %v5795 = vpop.xlane.xlu0 %5794
    %v5796 = vsel %vm968, %v5792, 0.0
    %5797 = vadd.xlane.f32.xlu0 %v5796
    %v5798 = vpop.xlane.xlu0 %5797
    %v5799 = vmul.f32 %v5795, %v2508
    %v5800 = vmul.f32 %v5798, %v2508
    %v5801 = vadd.f32 %v5799, 1e-12
    %v5802 = vadd.f32 %v5800, 1e-12
    %v5803 = vrsqrt.pop %v5801
    %v5804 = vrsqrt.pop %v5802
    %v5805 = vmul.f32 %v5789, %v5803
    %v5806 = vmul.f32 %v5790, %v5804
    %v5807 = vlaneseq
    %v5808 = vshrl.u32 %v5807, 7
    %v5809 = vsub.s32 0, %v5808
    %v5810 = vrot.slane %v5780, %v5809
    %v5811 = vmul.f32 %v5805, %v5810
    %v5812 = vmul.f32 %v5806, %v5810
    %v5813 = vlaneseq
    %v5814 = vshrl.u32 %v5813, 7
    %v5815 = vsub.s32 1, %v5814
    %v5816 = vrot.slane %v5780, %v5815
    %v5817 = vadd.f32 %v5811, %v5816
    %v5818 = vadd.f32 %v5812, %v5816
    %v5819 = vld [vmem:[%s3 + $0x5d0] sm:$0xf]
    %v5820 = vld [vmem:[%s3 + $0x5d8] sm:$0xf]
    %v5821 = vld [vmem:[%s3 + $0x5e0] sm:$0xf]
    %v5822 = vld [vmem:[%s3 + $0x5e8] sm:$0xf]
    %v5823 = vpack.c.bf16 %v5818, %v5817
    %v5824 = vld [vmem:[%s4 + $0x250] ss:$0 sm:$0xff]
    %v5829 = vunpack.c.l.b16 %v5819
    %v5830 = vunpack.c.l.b16 %v5820
    %v5831 = vunpack.c.l.b16 %v5821
    %v5832 = vunpack.c.l.b16 %v5822
    %v5833 = vpack.c.b16 %v5830, %v5829
    %v5834 = vpack.c.b16 %v5832, %v5831
    %v5838 = vsel %vm968, %v5823, 0
    %5840 = vmatprep.subr.bf16.mxu0 0
    %5841 = vmatpush1.bf16.msra.mxu0 %v5833
    %5842 = vmatprep.subr.bf16.mxu0 0
    %5843 = vmatpush1.bf16.msra.mxu0 %v5834
    %5844 = vmatprep.subr.bf16.mxu0 0
    %5845 = vmatpush1.bf16.msra.mxu0 0
    %5846 = vmatprep.subr.bf16.mxu0 0
    %5847 = vmatpush1.bf16.msra.mxu0 0
    %5848 = vmatprep.subr.bf16.mxu0 0
    %5849 = vmatpush1.bf16.msra.mxu0 0
    %5850 = vmatprep.subr.bf16.mxu0 0
    %5851 = vmatpush1.bf16.msra.mxu0 0
    %5852 = vmatprep.subr.bf16.mxu0 0
    %5853 = vmatpush1.bf16.msra.mxu0 0
    %5854 = vmatprep.subr.bf16.mxu0 0
    %5855 = vmatpush1.bf16.msra.mxu0 0
    %5856 = vmatprep.subr.bf16.mxu0 0
    %5857 = vmatpush1.bf16.msra.mxu0 0
    %5858 = vmatprep.subr.bf16.mxu0 0
    %5859 = vmatpush1.bf16.msra.mxu0 0
    %5860 = vmatprep.subr.bf16.mxu0 0
    %5861 = vmatpush1.bf16.msra.mxu0 0
    %5862 = vmatprep.subr.bf16.mxu0 0
    %5863 = vmatpush1.bf16.msra.mxu0 0
    %5864 = vmatprep.subr.bf16.mxu0 0
    %5865 = vmatpush1.bf16.msra.mxu0 0
    %5866 = vmatprep.subr.bf16.mxu0 0
    %5867 = vmatpush1.bf16.msra.mxu0 0
    %5868 = vmatprep.subr.bf16.mxu0 0
    %5869 = vmatpush1.bf16.msra.mxu0 0
    %5870 = vmatprep.subr.bf16.mxu0 0
    %5871 = vmatpush1.bf16.msra.mxu0 0
    %5872 = vmatprep.mubr.bf16.mxu0 0
    %5873 = vmatmul.mubr.bf16.gmra.mrb[0].mxu0 %v5838
    %v5874 = vpop.f32.mrb[0].mxu0
    %v5875 = vadd.f32 %v5824, %v5874
    %v5876 = vpop.f32.mrb[0].mxu0
    %v5877 = vpop.f32.mrb[0].mxu0
    %v5878 = vadd.f32 %v5824, %v5877
    %v5879 = vpop.f32.mrb[0].mxu0
    %5880 = vdwg.mxu0
    %v5881 = vmul.f32 %v5875, %v5875
    %v5882 = vmul.f32 %v5878, %v5878
    %v5883 = vmul.f32 %v5875, %v5881
    %v5884 = vmul.f32 %v5878, %v5882
    %v5885 = vmul.f32 %v5883, 0.044715
    %v5886 = vmul.f32 %v5884, 0.044715
    %v5887 = vadd.f32 %v5875, %v5885
    %v5888 = vadd.f32 %v5878, %v5886
    %v5889 = vmul.f32 %v5887, 0.7978846
    %v5890 = vmul.f32 %v5888, 0.7978846
    %v5891 = vtanh.pop %v5889
    %v5892 = vtanh.pop %v5890
    %v5893 = vadd.f32 %v5891, 1.0
    %v5894 = vadd.f32 %v5892, 1.0
    %v5895 = vmul.f32 %v5893, 0.5
    %v5896 = vmul.f32 %v5894, 0.5
    %v5897 = vmul.f32 %v5875, %v5895
    %v5898 = vmul.f32 %v5878, %v5896
    %v5899 = vld [vmem:[%s3 + $0x5f0] sm:$0xf]
    %v5900 = vld [vmem:[%s3 + $0x5f8] sm:$0xf]
    %v5901 = vld [vmem:[%s3 + $0x600] sm:$0xf]
    %v5902 = vld [vmem:[%s3 + $0x608] sm:$0xf]
    %v5903 = vld [vmem:[%s3 + $0x610] sm:$0xf]
    %v5904 = vld [vmem:[%s3 + $0x618] sm:$0xf]
    %v5905 = vld [vmem:[%s3 + $0x620] sm:$0xf]
    %v5906 = vld [vmem:[%s3 + $0x628] sm:$0xf]
    %v5907 = vld [vmem:[%s3 + $0x630] sm:$0xf]
    %v5908 = vld [vmem:[%s3 + $0x638] sm:$0xf]
    %v5909 = vld [vmem:[%s3 + $0x640] sm:$0xf]
    %v5910 = vld [vmem:[%s3 + $0x648] sm:$0xf]
    %v5911 = vld [vmem:[%s3 + $0x650] sm:$0xf]
    %v5912 = vld [vmem:[%s3 + $0x658] sm:$0xf]
    %v5913 = vld [vmem:[%s3 + $0x660] sm:$0xf]
    %v5914 = vld [vmem:[%s3 + $0x668] sm:$0xf]
    %v5915 = vpack.c.bf16 %v5898, %v5897
    %v5916 = vld [vmem:[%s4 + $0x260] ss:$0 sm:$0xff]
    %v5933 = vunpack.c.l.b16 %v5899
    %v5934 = vunpack.c.l.b16 %v5900
    %v5935 = vunpack.c.l.b16 %v5901
    %v5936 = vunpack.c.l.b16 %v5902
    %v5937 = vunpack.c.l.b16 %v5903
    %v5938 = vunpack.c.l.b16 %v5904
    %v5939 = vunpack.c.l.b16 %v5905
    %v5940 = vunpack.c.l.b16 %v5906
    %v5941 = vunpack.c.l.b16 %v5907
    %v5942 = vunpack.c.l.b16 %v5908
    %v5943 = vunpack.c.l.b16 %v5909
    %v5944 = vunpack.c.l.b16 %v5910
    %v5945 = vunpack.c.l.b16 %v5911
    %v5946 = vunpack.c.l.b16 %v5912
    %v5947 = vunpack.c.l.b16 %v5913
    %v5948 = vunpack.c.l.b16 %v5914
    %v5949 = vpack.c.b16 %v5934, %v5933
    %v5950 = vpack.c.b16 %v5936, %v5935
    %v5951 = vpack.c.b16 %v5938, %v5937
    %v5952 = vpack.c.b16 %v5940, %v5939
    %v5953 = vpack.c.b16 %v5942, %v5941
    %v5954 = vpack.c.b16 %v5944, %v5943
    %v5955 = vpack.c.b16 %v5946, %v5945
    %v5956 = vpack.c.b16 %v5948, %v5947
    %5965 = vmatprep.subr.bf16.mxu0 0
    %5966 = vmatpush1.bf16.msra.mxu0 %v5949
    %5967 = vmatprep.subr.bf16.mxu0 0
    %5968 = vmatpush1.bf16.msra.mxu0 %v5950
    %5969 = vmatprep.subr.bf16.mxu0 0
    %5970 = vmatpush1.bf16.msra.mxu0 %v5951
    %5971 = vmatprep.subr.bf16.mxu0 0
    %5972 = vmatpush1.bf16.msra.mxu0 %v5952
    %5973 = vmatprep.subr.bf16.mxu0 0
    %5974 = vmatpush1.bf16.msra.mxu0 %v5953
    %5975 = vmatprep.subr.bf16.mxu0 0
    %5976 = vmatpush1.bf16.msra.mxu0 %v5954
    %5977 = vmatprep.subr.bf16.mxu0 0
    %5978 = vmatpush1.bf16.msra.mxu0 %v5955
    %5979 = vmatprep.subr.bf16.mxu0 0
    %5980 = vmatpush1.bf16.msra.mxu0 %v5956
    %5981 = vmatprep.subr.bf16.mxu0 0
    %5982 = vmatpush1.bf16.msra.mxu0 0
    %5983 = vmatprep.subr.bf16.mxu0 0
    %5984 = vmatpush1.bf16.msra.mxu0 0
    %5985 = vmatprep.subr.bf16.mxu0 0
    %5986 = vmatpush1.bf16.msra.mxu0 0
    %5987 = vmatprep.subr.bf16.mxu0 0
    %5988 = vmatpush1.bf16.msra.mxu0 0
    %5989 = vmatprep.subr.bf16.mxu0 0
    %5990 = vmatpush1.bf16.msra.mxu0 0
    %5991 = vmatprep.subr.bf16.mxu0 0
    %5992 = vmatpush1.bf16.msra.mxu0 0
    %5993 = vmatprep.subr.bf16.mxu0 0
    %5994 = vmatpush1.bf16.msra.mxu0 0
    %5995 = vmatprep.subr.bf16.mxu0 0
    %5996 = vmatpush1.bf16.msra.mxu0 0
    %5997 = vmatprep.mubr.bf16.mxu0 0
    %5998 = vmatmul.mubr.bf16.gmra.mrb[0].mxu0 %v5915
    %v5999 = vpop.f32.mrb[0].mxu0
    %v6000 = vadd.f32 %v5916, %v5999
    %v6001 = vpop.f32.mrb[0].mxu0
    %v6002 = vpop.f32.mrb[0].mxu0
    %v6003 = vadd.f32 %v5916, %v6002
    %v6004 = vpop.f32.mrb[0].mxu0
    %6005 = vdwg.mxu0
    %v6006 = vadd.f32 %v5817, %v6000
    %v6007 = vadd.f32 %v5818, %v6003
    %v6008 = vld [vmem:[%s4 + $0x270] sm:$0x3]
    %v6009 = vsel %vm968, %v6006, 0.0
    %6010 = vadd.xlane.f32.xlu0 %v6009
    %v6011 = vpop.xlane.xlu0 %6010
    %v6012 = vsel %vm968, %v6007, 0.0
    %6013 = vadd.xlane.f32.xlu0 %v6012
    %v6014 = vpop.xlane.xlu0 %6013
    %v6015 = vmul.f32 %v6011, %v2508
    %v6016 = vmul.f32 %v6014, %v2508
    %v6017 = vsub.f32 %v6006, %v6015
    %v6018 = vsub.f32 %v6007, %v6016
    %v6019 = vmul.f32 %v6017, %v6017
    %v6020 = vmul.f32 %v6018, %v6018
    %v6021 = vsel %vm968, %v6019, 0.0
    %6022 = vadd.xlane.f32.xlu0 %v6021
    %v6023 = vpop.xlane.xlu0 %6022
    %v6024 = vsel %vm968, %v6020, 0.0
    %6025 = vadd.xlane.f32.xlu0 %v6024
    %v6026 = vpop.xlane.xlu0 %6025
    %v6027 = vmul.f32 %v6023, %v2508
    %v6028 = vmul.f32 %v6026, %v2508
    %v6029 = vadd.f32 %v6027, 1e-12
    %v6030 = vadd.f32 %v6028, 1e-12
    %v6031 = vrsqrt.pop %v6029
    %v6032 = vrsqrt.pop %v6030
    %v6033 = vmul.f32 %v6017, %v6031
    %v6034 = vmul.f32 %v6018, %v6032
    %v6035 = vlaneseq
    %v6036 = vshrl.u32 %v6035, 7
    %v6037 = vsub.s32 0, %v6036
    %v6038 = vrot.slane %v6008, %v6037
    %v6039 = vmul.f32 %v6033, %v6038
    %v6040 = vmul.f32 %v6034, %v6038
    %v6041 = vlaneseq
    %v6042 = vshrl.u32 %v6041, 7
    %v6043 = vsub.s32 1, %v6042
    %v6044 = vrot.slane %v6008, %v6043
    %v6045 = vadd.f32 %v6039, %v6044
    %v6046 = vadd.f32 %v6040, %v6044
    %v6047 = vld [vmem:[%s3 + $0x670] sm:$0xf]
    %v6048 = vld [vmem:[%s3 + $0x678] sm:$0xf]
    %v6049 = vld [vmem:[%s3 + $0x680] sm:$0xf]
    %v6050 = vld [vmem:[%s3 + $0x688] sm:$0xf]
    %v6051 = vpack.c.bf16 %v6046, %v6045
    %v6052 = vld [vmem:[%s4 + $0x280] ss:$0 sm:$0xff]
    %v6057 = vunpack.c.l.b16 %v6047
    %v6058 = vunpack.c.l.b16 %v6048
    %v6059 = vunpack.c.l.b16 %v6049
    %v6060 = vunpack.c.l.b16 %v6050
    %v6061 = vpack.c.b16 %v6058, %v6057
    %v6062 = vpack.c.b16 %v6060, %v6059
    %v6066 = vsel %vm968, %v6051, 0
    %6068 = vmatprep.subr.bf16.mxu0 0
    %6069 = vmatpush1.bf16.msra.mxu0 %v6061
    %6070 = vmatprep.subr.bf16.mxu0 0
    %6071 = vmatpush1.bf16.msra.mxu0 %v6062
    %6072 = vmatprep.subr.bf16.mxu0 0
    %6073 = vmatpush1.bf16.msra.mxu0 0
    %6074 = vmatprep.subr.bf16.mxu0 0
    %6075 = vmatpush1.bf16.msra.mxu0 0
    %6076 = vmatprep.subr.bf16.mxu0 0
    %6077 = vmatpush1.bf16.msra.mxu0 0
    %6078 = vmatprep.subr.bf16.mxu0 0
    %6079 = vmatpush1.bf16.msra.mxu0 0
    %6080 = vmatprep.subr.bf16.mxu0 0
    %6081 = vmatpush1.bf16.msra.mxu0 0
    %6082 = vmatprep.subr.bf16.mxu0 0
    %6083 = vmatpush1.bf16.msra.mxu0 0
    %6084 = vmatprep.subr.bf16.mxu0 0
    %6085 = vmatpush1.bf16.msra.mxu0 0
    %6086 = vmatprep.subr.bf16.mxu0 0
    %6087 = vmatpush1.bf16.msra.mxu0 0
    %6088 = vmatprep.subr.bf16.mxu0 0
    %6089 = vmatpush1.bf16.msra.mxu0 0
    %6090 = vmatprep.subr.bf16.mxu0 0
    %6091 = vmatpush1.bf16.msra.mxu0 0
    %6092 = vmatprep.subr.bf16.mxu0 0
    %6093 = vmatpush1.bf16.msra.mxu0 0
    %6094 = vmatprep.subr.bf16.mxu0 0
    %6095 = vmatpush1.bf16.msra.mxu0 0
    %6096 = vmatprep.subr.bf16.mxu0 0
    %6097 = vmatpush1.bf16.msra.mxu0 0
    %6098 = vmatprep.subr.bf16.mxu0 0
    %6099 = vmatpush1.bf16.msra.mxu0 0
    %6100 = vmatprep.mubr.bf16.mxu0 0
    %6101 = vmatmul.mubr.bf16.gmra.mrb[0].mxu0 %v6066
    %v6102 = vpop.f32.mrb[0].mxu0
    %v6103 = vadd.f32 %v6052, %v6102
    %v6104 = vpop.f32.mrb[0].mxu0
    %v6105 = vpop.f32.mrb[0].mxu0
    %v6106 = vadd.f32 %v6052, %v6105
    %v6107 = vpop.f32.mrb[0].mxu0
    %6108 = vdwg.mxu0
    %v6109 = vmul.f32 %v6103, %v6103
    %v6110 = vmul.f32 %v6106, %v6106
    %v6111 = vmul.f32 %v6103, %v6109
    %v6112 = vmul.f32 %v6106, %v6110
    %v6113 = vmul.f32 %v6111, 0.044715
    %v6114 = vmul.f32 %v6112, 0.044715
    %v6115 = vadd.f32 %v6103, %v6113
    %v6116 = vadd.f32 %v6106, %v6114
    %v6117 = vmul.f32 %v6115, 0.7978846
    %v6118 = vmul.f32 %v6116, 0.7978846
    %v6119 = vtanh.pop %v6117
    %v6120 = vtanh.pop %v6118
    %v6121 = vadd.f32 %v6119, 1.0
    %v6122 = vadd.f32 %v6120, 1.0
    %v6123 = vmul.f32 %v6121, 0.5
    %v6124 = vmul.f32 %v6122, 0.5
    %v6125 = vmul.f32 %v6103, %v6123
    %v6126 = vmul.f32 %v6106, %v6124
    %v6127 = vld [vmem:[%s4 + $0x290] sm:$0x3]
    %v6128 = vsel %vm968, %v6125, 0.0
    %6129 = vadd.xlane.f32.xlu0 %v6128
    %v6130 = vpop.xlane.xlu0 %6129
    %v6131 = vsel %vm968, %v6126, 0.0
    %6132 = vadd.xlane.f32.xlu0 %v6131
    %v6133 = vpop.xlane.xlu0 %6132
    %v6134 = vmul.f32 %v6130, %v2508
    %v6135 = vmul.f32 %v6133, %v2508
    %v6136 = vsub.f32 %v6125, %v6134
    %v6137 = vsub.f32 %v6126, %v6135
    %v6138 = vmul.f32 %v6136, %v6136
    %v6139 = vmul.f32 %v6137, %v6137
    %v6140 = vsel %vm968, %v6138, 0.0
    %6141 = vadd.xlane.f32.xlu0 %v6140
    %v6142 = vpop.xlane.xlu0 %6141
    %v6143 = vsel %vm968, %v6139, 0.0
    %6144 = vadd.xlane.f32.xlu0 %v6143
    %v6145 = vpop.xlane.xlu0 %6144
    %v6146 = vmul.f32 %v6142, %v2508
    %v6147 = vmul.f32 %v6145, %v2508
    %v6148 = vadd.f32 %v6146, 1e-12
    %v6149 = vadd.f32 %v6147, 1e-12
    %v6150 = vrsqrt.pop %v6148
    %v6151 = vrsqrt.pop %v6149
    %v6152 = vmul.f32 %v6136, %v6150
    %v6153 = vmul.f32 %v6137, %v6151
    %v6154 = vlaneseq
    %v6155 = vshrl.u32 %v6154, 7
    %v6156 = vsub.s32 0, %v6155
    %v6157 = vrot.slane %v6127, %v6156
    %v6158 = vmul.f32 %v6152, %v6157
    %v6159 = vmul.f32 %v6153, %v6157
    %v6160 = vlaneseq
    %v6161 = vshrl.u32 %v6160, 7
    %v6162 = vsub.s32 1, %v6161
    %v6163 = vrot.slane %v6127, %v6162
    %v6164 = vadd.f32 %v6158, %v6163
    %v6165 = vadd.f32 %v6159, %v6163
    %v6166 = vld [vmem:[%s3 + $0x690] sm:$0xf]
    %v6167 = vld [vmem:[%s3 + $0x698] sm:$0xf]
    %v6168 = vld [vmem:[%s3 + $0x6a0] sm:$0xf]
    %v6169 = vld [vmem:[%s3 + $0x6a8] sm:$0xf]
    %v6170 = vpack.c.bf16 %v6165, %v6164
    %v6171 = vld [vmem:[%s4 + $0x2a0] ss:$0 sm:$0xff]
    %v6176 = vunpack.c.l.b16 %v6166
    %v6177 = vunpack.c.l.b16 %v6167
    %v6178 = vunpack.c.l.b16 %v6168
    %v6179 = vunpack.c.l.b16 %v6169
    %v6180 = vpack.c.b16 %v6177, %v6176
    %v6181 = vpack.c.b16 %v6179, %v6178
    %v6185 = vsel %vm968, %v6170, 0
    %6187 = vmatprep.subr.bf16.mxu0 0
    %6188 = vmatpush1.bf16.msra.mxu0 %v6180
    %6189 = vmatprep.subr.bf16.mxu0 0
    %6190 = vmatpush1.bf16.msra.mxu0 %v6181
    %6191 = vmatprep.subr.bf16.mxu0 0
    %6192 = vmatpush1.bf16.msra.mxu0 0
    %6193 = vmatprep.subr.bf16.mxu0 0
    %6194 = vmatpush1.bf16.msra.mxu0 0
    %6195 = vmatprep.subr.bf16.mxu0 0
    %6196 = vmatpush1.bf16.msra.mxu0 0
    %6197 = vmatprep.subr.bf16.mxu0 0
    %6198 = vmatpush1.bf16.msra.mxu0 0
    %6199 = vmatprep.subr.bf16.mxu0 0
    %6200 = vmatpush1.bf16.msra.mxu0 0
    %6201 = vmatprep.subr.bf16.mxu0 0
    %6202 = vmatpush1.bf16.msra.mxu0 0
    %6203 = vmatprep.subr.bf16.mxu0 0
    %6204 = vmatpush1.bf16.msra.mxu0 0
    %6205 = vmatprep.subr.bf16.mxu0 0
    %6206 = vmatpush1.bf16.msra.mxu0 0
    %6207 = vmatprep.subr.bf16.mxu0 0
    %6208 = vmatpush1.bf16.msra.mxu0 0
    %6209 = vmatprep.subr.bf16.mxu0 0
    %6210 = vmatpush1.bf16.msra.mxu0 0
    %6211 = vmatprep.subr.bf16.mxu0 0
    %6212 = vmatpush1.bf16.msra.mxu0 0
    %6213 = vmatprep.subr.bf16.mxu0 0
    %6214 = vmatpush1.bf16.msra.mxu0 0
    %6215 = vmatprep.subr.bf16.mxu0 0
    %6216 = vmatpush1.bf16.msra.mxu0 0
    %6217 = vmatprep.subr.bf16.mxu0 0
    %6218 = vmatpush1.bf16.msra.mxu0 0
    %6219 = vmatprep.mubr.bf16.mxu0 0
    %6220 = vmatmul.mubr.bf16.gmra.mrb[0].mxu0 %v6185
    %v6221 = vpop.f32.mrb[0].mxu0
    %v6222 = vadd.f32 %v6171, %v6221
    %v6223 = vpop.f32.mrb[0].mxu0
    %v6224 = vpop.f32.mrb[0].mxu0
    %v6225 = vadd.f32 %v6171, %v6224
    %v6226 = vpop.f32.mrb[0].mxu0
    %6227 = vdwg.mxu0
    %v6228 = vsel %vm208, %v6222, -inf
    %6229 = vmax.xlane.f32.xlu0 %v6228
    %v6230 = vpop.xlane.xlu0 %6229
    %v6231 = vsel %vm208, %v6225, -inf
    %6232 = vmax.xlane.f32.xlu0 %v6231
    %v6233 = vpop.xlane.xlu0 %6232
    %v6234 = vsub.f32 %v6222, %v6230
    %v6235 = vsub.f32 %v6225, %v6233
    %v6236 = vmul.f32 %v6234, 1.442695
    %v6237 = vpow.pop %v6236
    %v6238 = vmul.f32 %v6235, 1.442695
    %v6239 = vpow.pop %v6238
    %v6240 = vsel %vm208, %v6237, 0.0
    %6241 = vadd.xlane.f32.xlu0 %v6240
    %v6242 = vpop.xlane.xlu0 %6241
    %v6243 = vsel %vm208, %v6239, 0.0
    %6244 = vadd.xlane.f32.xlu0 %v6243
    %v6245 = vpop.xlane.xlu0 %6244
    %v6246 = vlog2.pop %v6242
    %v6247 = vmul.f32 %v6246, 0.6931472
    %v6248 = vlog2.pop %v6245
    %v6249 = vmul.f32 %v6248, 0.6931472
    %v6250 = vsub.f32 %v6234, %v6247
    %v6251 = vsub.f32 %v6235, %v6249
    %6252 = vset.pattern.permute.xlu0 1
    %6253 = vperm.xlu0 %6252, %v2541
    %v6254 = vpop.permute.xlu0 %6253
    %6255 = vset.pattern.permute.xlu0 1
    %6256 = vperm.xlu0 %6255, %v2542
    %v6257 = vpop.permute.xlu0 %6256
    %vm6258 = vcmp.eq.s32.totalorder %v26, %v6254
    %vm6259 = vcmp.eq.s32.totalorder %v26, %v6257
    %v6260 = vsel %vm6258, 1, 0
    %v6261 = vsel %vm6259, 1, 0
    %v6262 = vcvt.s32.f32 %v6260
    %v6263 = vcvt.s32.f32 %v6261
    %v6264 = vmul.f32 %v6262, %v6250
    %v6265 = vmul.f32 %v6263, %v6251
    %v6266 = vsel %vm208, %v6264, 0.0
    %6267 = vadd.xlane.f32.xlu0 %v6266
    %v6268 = vpop.xlane.xlu0 %6267
    %v6269 = vsel %vm208, %v6265, 0.0
    %6270 = vadd.xlane.f32.xlu0 %v6269
    %v6271 = vpop.xlane.xlu0 %6270
    %v6272 = vsub.f32 0.0, %v6268
    %v6273 = vsub.f32 0.0, %v6271
    %vm6274 = vcmp.eq.s32.totalorder %v23, 7
    %vm6275 = vcmp.eq.s32.totalorder %v24, 7
    %vm6276 = vcmp.eq.s32.totalorder %v23, 15
    %vm6277 = vcmp.eq.s32.totalorder %v24, 15
    %vm6278 = vmor %vm6274, %vm6276
    %vm6279 = vmor %vm6275, %vm6277
    %vm6280 = vmxor %vm6278, 1
    %vm6281 = vmxor %vm6279, 1
    %vm6282 = vcmp.ne.s32.totalorder %v2541, 0
    %vm6283 = vcmp.ne.s32.totalorder %v2542, 0
    %vm6284 = vmand %vm6280, %vm6282
    %vm6285 = vmand %vm6281, %vm6283
    %vm6286 = vcmp.eq.s32.totalorder %v26, 0
    %vm6287 = vmand %vm57, %vm6286
    %vm6288 = vmand %vm58, %vm6286
    %vm6289 = vcmp.eq.s32.totalorder %v26, 1
    %vm6290 = vmand %vm68, %vm6289
    %vm6291 = vmand %vm69, %vm6289
    %vm6292 = vmor %vm6287, %vm6290
    %vm6293 = vmor %vm6288, %vm6291
    %v6294 = vsel %vm6284, %v6272, 0.0
    %v6295 = vsel %vm6285, %v6273, 0.0
    %v6296 = vsel %vm6292, 1, 0
    %v6297 = vsel %vm6293, 1, 0
    %v6298 = vcvt.s32.f32 %v6296
    %v6299 = vcvt.s32.f32 %v6297
    %6301 = vset.pattern.permute.xlu0 1
    %6302 = vperm.xlu0 %6301, %v6294
    %v6303 = vpop.permute.xlu0 %6302
    %6306 = vset.pattern.permute.xlu0 1
    %6307 = vperm.xlu0 %6306, %v6295
    %v6308 = vpop.permute.xlu0 %6307
    %v6310 = vmul.f32 %v6303, %v6298
    %v6311 = vmul.f32 %v6308, %v6299
    %vm6312 = vcmask 15360
    %v6313 = vsel %vm6312, %v6310, 0.0
    %v6314 = vsel %vm6312, %v6311, 0.0
    %v6315 = vadd.f32 %v6313, %v6314
    %v6316 = vrot.slane %v6315, 4
    %v6317 = vadd.f32 %v6315, %v6316
    %v6318 = vrot.slane %v6317, 2
    %v6319 = vadd.f32 %v6317, %v6318
    %v6320 = vrot.slane %v6319, 1
    %v6321 = vadd.f32 %v6319, %v6320
    %vm6322 = vcmask 8192
    %6323 = vst.msk [vmem:[#allocation2] sm:$0x1] %vm6322, %v6321
    // Predicated region
    $region22: #{mplug_forward.1} parent=1 // pred_check
      _
    $region23: #{mplug_forward.1} parent=1 // pred_check_branch
      %6325 = sbr.rel (0) target = $region25
    $region24: #{mplug_forward.1} parent=1 // pred_region
      %s6327 = ssub.s32 16, 16
      %6328 = vsyncadd [#allocation3], %s6327
      %s6330 = sshll.u32 [#allocation2], 4
      %s6331 = int_to_ptr.vmem [resolvable:$true] %s6330
      %6333 = dma.vmem_to_hbm [thread:$0]  %s6331, 16, %s5, [#allocation3]
    $region25: #{mplug_forward.1} parent=1 // pred_fallthru
      _
    // Predicated region
    $region26: #{mplug_forward.1} parent=1 // pred_check
      _
    $region27: #{mplug_forward.1} parent=1 // pred_check_branch
      %6335 = sbr.rel (0) target = $region29
    $region28: #{mplug_forward.1} parent=1 // pred_region
      %6336 = dma.done [#allocation3], 16
    $region29: #{mplug_forward.1} parent=1 // pred_fallthru
      _
    %6337 = vsyncpa [#allocation3], 1

</llo_original>
